<compile_context>
chip_gen: v6e
topology: v6e:2x2x1
jax: 0.10.0
libtpu: 0.0.40
codegen_flags: <defaults>
</compile_context>

<pallas_src>
import jax
import jax.numpy as jnp
from jax.experimental import pallas as pl
from jax.experimental.pallas import tpu as pltpu


def _round_up(v, m):
    return (v + m - 1) // m * m


# -----------------------------------------------------------------------------
# Kernel: fused bidirectional LSTM recurrence + output projection
# -----------------------------------------------------------------------------
def _make_kernel(T, B, Cp, Hp, Np):
    def kernel(x_ref, wf_ref, bf_ref, wb_ref, bb_ref,
               wef_ref, web_ref, be_ref, out_ref):
        mm_dtype = x_ref.dtype

        # Hoisted, loop-invariant bias broadcasts (tiny; stay in vregs).
        b_f = jnp.broadcast_to(bf_ref[...], (B, 4 * Hp))
        b_b = jnp.broadcast_to(bb_ref[...], (B, 4 * Hp))

        # Initialise the output with the projection bias (lane-dense (T,B,Np) store).
        out_ref[...] = jnp.broadcast_to(be_ref[...].reshape(1, 1, Np), (T, B, Np))

        def cell(x_t, h, c, w_ref, b):
            # Fused [x, h] @ [W_ih; W_hh]; PyTorch gate order (i, f, g, o).
            z = jnp.concatenate([x_t, h.astype(mm_dtype)], axis=-1)
            gates = jnp.dot(z, w_ref[...], preferred_element_type=jnp.float32) + b
            i = jax.nn.sigmoid(gates[:, 0 * Hp:1 * Hp])
            f = jax.nn.sigmoid(gates[:, 1 * Hp:2 * Hp])
            g = jnp.tanh(gates[:, 2 * Hp:3 * Hp])
            o = jax.nn.sigmoid(gates[:, 3 * Hp:4 * Hp])
            c_new = f * c + i * g
            h_new = o * jnp.tanh(c_new)
            return h_new, c_new

        def step(t, carry):
            hf, cf, hb, cb = carry

            # ---- forward direction: time index t ----
            hf, cf = cell(x_ref[t], hf, cf, wf_ref, b_f)
            out_ref[t] = out_ref[t] + jnp.dot(
                hf.astype(mm_dtype), wef_ref[...],
                preferred_element_type=jnp.float32)

            # ---- backward direction: time index T-1-t ----
            hb, cb = cell(x_ref[T - 1 - t], hb, cb, wb_ref, b_b)
            out_ref[T - 1 - t] = out_ref[T - 1 - t] + jnp.dot(
                hb.astype(mm_dtype), web_ref[...],
                preferred_element_type=jnp.float32)

            return hf, cf, hb, cb

        zeros = jnp.zeros((B, Hp), jnp.float32)
        _ = jax.lax.fori_loop(0, T, step, (zeros, zeros, zeros, zeros),
                              unroll=bool(T <= 32))

    return kernel


# -----------------------------------------------------------------------------
# Host-side parameter packing (PyTorch layout -> padded fused layout)
# -----------------------------------------------------------------------------
def _pad_gate_cols(w_t, H, Hp):
    """(rows, 4H) -> (rows, 4Hp); gate g occupies lanes [g*Hp, g*Hp+H), rest zero."""
    rows = w_t.shape[0]
    out = jnp.zeros((rows, 4 * Hp), jnp.float32)
    for g in range(4):
        out = out.at[:, g * Hp:g * Hp + H].set(w_t[:, g * H:(g + 1) * H])
    return out


def pack_params(raw, nIn, H, nOut):
    Cp = _round_up(nIn, 128)
    Hp = _round_up(H, 128)
    Np = _round_up(nOut, 128)

    def pack_dir(w_ih, w_hh, b_ih, b_hh):
        w = jnp.zeros((Cp + Hp, 4 * Hp), jnp.float32)
        w = w.at[:nIn, :].set(_pad_gate_cols(w_ih.T, H, Hp))
        w = w.at[Cp:Cp + H, :].set(_pad_gate_cols(w_hh.T, H, Hp))
        b = _pad_gate_cols((b_ih + b_hh).reshape(1, 4 * H), H, Hp)
        return w, b

    w_cat_f, b_f = pack_dir(raw["w_ih_f"], raw["w_hh_f"], raw["b_ih_f"], raw["b_hh_f"])
    w_cat_b, b_b = pack_dir(raw["w_ih_b"], raw["w_hh_b"], raw["b_ih_b"], raw["b_hh_b"])

    w_emb_t = raw["w_emb"].T  # (2H, nOut): rows [:H] forward, [H:] backward
    w_emb_f = jnp.zeros((Hp, Np), jnp.float32).at[:H, :nOut].set(w_emb_t[:H])
    w_emb_b = jnp.zeros((Hp, Np), jnp.float32).at[:H, :nOut].set(w_emb_t[H:])
    b_emb = jnp.zeros((1, Np), jnp.float32).at[0, :nOut].set(raw["b_emb"])

    return {"w_cat_f": w_cat_f, "b_f": b_f,
            "w_cat_b": w_cat_b, "b_b": b_b,
            "w_emb_f": w_emb_f, "w_emb_b": w_emb_b, "b_emb": b_emb}


def bidirectional_lstm_pallas(x, packed, nOut, matmul_dtype=jnp.float32):
    """x: (T, B, nIn) float32 -> (T, B, nOut) float32 (PyTorch module semantics)."""
    T, B, nIn = x.shape
    Hp, Np = packed["w_emb_f"].shape
    Cp = packed["w_cat_f"].shape[0] - Hp

    # Pad the feature axis to the 128-lane boundary (padded columns are zero).
    x_p = jnp.zeros((T, B, Cp), matmul_dtype).at[:, :, :nIn].set(x.astype(matmul_dtype))

    w_cat_f = packed["w_cat_f"].astype(matmul_dtype)
    w_cat_b = packed["w_cat_b"].astype(matmul_dtype)
    w_emb_f = packed["w_emb_f"].astype(matmul_dtype)
    w_emb_b = packed["w_emb_b"].astype(matmul_dtype)

    # Explicit VMEM budget: everything is resident, no grid, no double buffering.
    itemsz = jnp.dtype(matmul_dtype).itemsize
    needed = (x_p.size * itemsz                      # input
              + T * B * Np * 4                       # output
              + (w_cat_f.size + w_cat_b.size) * itemsz
              + (w_emb_f.size + w_emb_b.size) * itemsz
              + (packed["b_f"].size + packed["b_b"].size + packed["b_emb"].size) * 4
              + (1 << 20))                           # headroom for temporaries
    vmem_limit = int(min(100 * 1024 * 1024, max(4 * 1024 * 1024, 2 * needed)))

    out_p = pl.pallas_call(
        _make_kernel(T, B, Cp, Hp, Np),
        out_shape=jax.ShapeDtypeStruct((T, B, Np), jnp.float32),
        compiler_params=pltpu.CompilerParams(vmem_limit_bytes=vmem_limit),
    )(x_p, w_cat_f, packed["b_f"], w_cat_b, packed["b_b"],
      w_emb_f, w_emb_b, packed["b_emb"])

    return out_p[:, :, :nOut]


# -----------------------------------------------------------------------------
# Pure-JAX reference (PyTorch-layout params) for correctness check
# -----------------------------------------------------------------------------
def _lstm_dir_ref(x, w_ih, w_hh, b_ih, b_hh, H):
    B = x.shape[1]

    def scan_fn(carry, x_t):
        h, c = carry
        gates = x_t @ w_ih.T + h @ w_hh.T + b_ih + b_hh
        i = jax.nn.sigmoid(gates[:, :H])
        f = jax.nn.sigmoid(gates[:, H:2 * H])
        g = jnp.tanh(gates[:, 2 * H:3 * H])
        o = jax.nn.sigmoid(gates[:, 3 * H:])
        c = f * c + i * g
        h = o * jnp.tanh(c)
        return (h, c), h

    init = (jnp.zeros((B, H), jnp.float32), jnp.zeros((B, H), jnp.float32))
    _, hs = jax.lax.scan(scan_fn, init, x)
    return hs


def bidirectional_lstm_ref(x, raw):
    T, B, _ = x.shape
    H = raw["w_hh_f"].shape[1]
    hf = _lstm_dir_ref(x, raw["w_ih_f"], raw["w_hh_f"], raw["b_ih_f"], raw["b_hh_f"], H)
    hb = _lstm_dir_ref(x[::-1], raw["w_ih_b"], raw["w_hh_b"],
                       raw["b_ih_b"], raw["b_hh_b"], H)[::-1]
    rec = jnp.concatenate([hf, hb], axis=-1).reshape(T * B, 2 * H)
    out = rec @ raw["w_emb"].T + raw["b_emb"]
    return out.reshape(T, B, -1)


def init_raw_params(key, nIn, H, nOut):
    """Deterministic PyTorch-layout params, uniform(-1/sqrt(H), 1/sqrt(H))."""
    k = 1.0 / jnp.sqrt(jnp.float32(H))
    keys = jax.random.split(key, 10)
    u = lambda kk, shape: jax.random.uniform(kk, shape, jnp.float32, -k, k)
    return {
        "w_ih_f": u(keys[0], (4 * H, nIn)), "w_hh_f": u(keys[1], (4 * H, H)),
        "b_ih_f": u(keys[2], (4 * H,)),     "b_hh_f": u(keys[3], (4 * H,)),
        "w_ih_b": u(keys[4], (4 * H, nIn)), "w_hh_b": u(keys[5], (4 * H, H)),
        "b_ih_b": u(keys[6], (4 * H,)),     "b_hh_b": u(keys[7], (4 * H,)),
        "w_emb":  u(keys[8], (nOut, 2 * H)), "b_emb": u(keys[9], (nOut,)),
    }


if __name__ == "__main__":
    T, B, nIn, H, nOut = 8, 2, 16, 32, 16

    key = jax.random.PRNGKey(0)
    kx, kp = jax.random.split(key)
    x = jax.random.normal(kx, (T, B, nIn), jnp.float32)

    raw = init_raw_params(kp, nIn, H, nOut)
    packed = pack_params(raw, nIn, H, nOut)

    out = jax.block_until_ready(bidirectional_lstm_pallas(x, packed, nOut))
    ref = jax.block_until_ready(bidirectional_lstm_ref(x, raw))

    assert out.shape == (T, B, nOut), out.shape
    max_err = float(jnp.max(jnp.abs(out - ref)))
    assert jnp.allclose(out, ref, atol=5e-3, rtol=5e-3), f"max abs err {max_err:e}"

    print("KERNEL_OK")
</pallas_src>

<mosaic_0001>
module attributes {stable_mosaic.version = 11 : i64} {
  func.func @kernel(%arg0: memref<8x2x128xf32, #tpu.memory_space<vmem>>, %arg1: memref<256x512xf32, #tpu.memory_space<vmem>>, %arg2: memref<1x512xf32, #tpu.memory_space<vmem>>, %arg3: memref<256x512xf32, #tpu.memory_space<vmem>>, %arg4: memref<1x512xf32, #tpu.memory_space<vmem>>, %arg5: memref<128x128xf32, #tpu.memory_space<vmem>>, %arg6: memref<128x128xf32, #tpu.memory_space<vmem>>, %arg7: memref<1x128xf32, #tpu.memory_space<vmem>>, %arg8: memref<8x2x128xf32, #tpu.memory_space<vmem>>) attributes {dimension_semantics = [], scalar_prefetch = 0 : i64, scratch_operands = 0 : i64, tpu.core_type = #tpu.core_type<tc>} {
    %c0 = arith.constant 0 : index
    %c0_0 = arith.constant 0 : index
    %0 = vector.load %arg2[%c0, %c0_0] : memref<1x512xf32, #tpu.memory_space<vmem>>, vector<1x512xf32>
    %1 = vector.shape_cast %0 : vector<1x512xf32> to vector<1x512xf32>
    %2 = vector.broadcast %1 : vector<1x512xf32> to vector<2x512xf32>
    %c0_1 = arith.constant 0 : index
    %c0_2 = arith.constant 0 : index
    %3 = vector.load %arg4[%c0_1, %c0_2] : memref<1x512xf32, #tpu.memory_space<vmem>>, vector<1x512xf32>
    %4 = vector.shape_cast %3 : vector<1x512xf32> to vector<1x512xf32>
    %5 = vector.broadcast %4 : vector<1x512xf32> to vector<2x512xf32>
    %c0_3 = arith.constant 0 : index
    %c0_4 = arith.constant 0 : index
    %6 = vector.load %arg7[%c0_3, %c0_4] : memref<1x128xf32, #tpu.memory_space<vmem>>, vector<1x128xf32>
    %7 = vector.shape_cast %6 : vector<1x128xf32> to vector<1x1x128xf32>
    %8 = vector.shape_cast %7 : vector<1x1x128xf32> to vector<1x1x128xf32>
    %9 = vector.broadcast %8 : vector<1x1x128xf32> to vector<8x2x128xf32>
    %c0_5 = arith.constant 0 : index
    %c0_6 = arith.constant 0 : index
    %c0_7 = arith.constant 0 : index
    %10 = vector.load %arg8[%c0_5, %c0_6, %c0_7] : memref<8x2x128xf32, #tpu.memory_space<vmem>>, vector<8x2x128xf32>
    tpu.vector_store %arg8[%c0_5, %c0_6, %c0_7], %9 {strides = array<i32>} : memref<8x2x128xf32, #tpu.memory_space<vmem>>, vector<8x2x128xf32>,
    %cst = arith.constant 0.000000e+00 : f32
    %11 = vector.broadcast %cst : f32 to vector<2x128xf32>
    %c0_i32 = arith.constant 0 : i32
    %12 = arith.index_cast %c0_i32 : i32 to index
    %c0_8 = arith.constant 0 : index
    %c0_9 = arith.constant 0 : index
    %13 = vector.load %arg0[%12, %c0_8, %c0_9] : memref<8x2x128xf32, #tpu.memory_space<vmem>>, vector<1x2x128xf32>
    %14 = vector.shape_cast %13 : vector<1x2x128xf32> to vector<2x128xf32>
    %15 = tpu.concatenate %14, %11 in 1 : vector<2x128xf32>, vector<2x128xf32> -> vector<2x256xf32>
    %c0_10 = arith.constant 0 : index
    %c0_11 = arith.constant 0 : index
    %16 = vector.load %arg1[%c0_10, %c0_11] : memref<256x512xf32, #tpu.memory_space<vmem>>, vector<256x512xf32>
    %cst_12 = arith.constant dense<0.000000e+00> : vector<2x512xf32>
    %17 = tpu.matmul %15, %16, %cst_12 {dimension_numbers = #tpu.dot_dimension_numbers<[1], [0], [0], [1], [0, 0, 1, 1], [], []>} : vector<2x256xf32>, vector<256x512xf32>, vector<2x512xf32> -> vector<2x512xf32>
    %18 = arith.addf %17, %2 : vector<2x512xf32>
    %19 = vector.extract_strided_slice %18 {offsets = [0, 0], sizes = [2, 128], strides = [1, 1]} : vector<2x512xf32> to vector<2x128xf32>
    %20 = arith.negf %19 : vector<2x128xf32>
    %21 = math.exp %20 : vector<2x128xf32>
    %cst_13 = arith.constant 1.000000e+00 : f32
    %22 = vector.broadcast %cst_13 : f32 to vector<2x128xf32>
    %23 = arith.addf %22, %21 : vector<2x128xf32>
    %24 = arith.divf %22, %23 : vector<2x128xf32>
    %25 = vector.extract_strided_slice %18 {offsets = [0, 128], sizes = [2, 128], strides = [1, 1]} : vector<2x512xf32> to vector<2x128xf32>
    %26 = arith.negf %25 : vector<2x128xf32>
    %27 = math.exp %26 : vector<2x128xf32>
    %cst_14 = arith.constant 1.000000e+00 : f32
    %28 = vector.broadcast %cst_14 : f32 to vector<2x128xf32>
    %29 = arith.addf %28, %27 : vector<2x128xf32>
    %30 = arith.divf %28, %29 : vector<2x128xf32>
    %31 = vector.extract_strided_slice %18 {offsets = [0, 256], sizes = [2, 128], strides = [1, 1]} : vector<2x512xf32> to vector<2x128xf32>
    %32 = math.tanh %31 : vector<2x128xf32>
    %33 = vector.extract_strided_slice %18 {offsets = [0, 384], sizes = [2, 128], strides = [1, 1]} : vector<2x512xf32> to vector<2x128xf32>
    %34 = arith.negf %33 : vector<2x128xf32>
    %35 = math.exp %34 : vector<2x128xf32>
    %cst_15 = arith.constant 1.000000e+00 : f32
    %36 = vector.broadcast %cst_15 : f32 to vector<2x128xf32>
    %37 = arith.addf %36, %35 : vector<2x128xf32>
    %38 = arith.divf %36, %37 : vector<2x128xf32>
    %39 = arith.mulf %30, %11 : vector<2x128xf32>
    %40 = arith.mulf %24, %32 : vector<2x128xf32>
    %41 = arith.addf %39, %40 : vector<2x128xf32>
    %42 = math.tanh %41 : vector<2x128xf32>
    %43 = arith.mulf %38, %42 : vector<2x128xf32>
    %44 = arith.index_cast %c0_i32 : i32 to index
    %c0_16 = arith.constant 0 : index
    %c0_17 = arith.constant 0 : index
    %45 = vector.load %arg8[%44, %c0_16, %c0_17] : memref<8x2x128xf32, #tpu.memory_space<vmem>>, vector<1x2x128xf32>
    %46 = vector.shape_cast %45 : vector<1x2x128xf32> to vector<2x128xf32>
    %c0_18 = arith.constant 0 : index
    %c0_19 = arith.constant 0 : index
    %47 = vector.load %arg5[%c0_18, %c0_19] : memref<128x128xf32, #tpu.memory_space<vmem>>, vector<128x128xf32>
    %cst_20 = arith.constant dense<0.000000e+00> : vector<2x128xf32>
    %48 = tpu.matmul %43, %47, %cst_20 {dimension_numbers = #tpu.dot_dimension_numbers<[1], [0], [0], [1], [0, 0, 1, 1], [], []>} : vector<2x128xf32>, vector<128x128xf32>, vector<2x128xf32> -> vector<2x128xf32>
    %49 = arith.addf %46, %48 : vector<2x128xf32>
    %50 = arith.index_cast %c0_i32 : i32 to index
    %c0_21 = arith.constant 0 : index
    %c0_22 = arith.constant 0 : index
    %51 = vector.load %arg8[%50, %c0_21, %c0_22] : memref<8x2x128xf32, #tpu.memory_space<vmem>>, vector<1x2x128xf32>
    %52 = vector.shape_cast %51 : vector<1x2x128xf32> to vector<2x128xf32>
    %53 = vector.shape_cast %49 : vector<2x128xf32> to vector<1x2x128xf32>
    tpu.vector_store %arg8[%50, %c0_21, %c0_22], %53 {strides = array<i32>} : memref<8x2x128xf32, #tpu.memory_space<vmem>>, vector<1x2x128xf32>,
    %c7_i32 = arith.constant 7 : i32
    %54 = arith.subi %c7_i32, %c0_i32 : i32
    %55 = arith.index_cast %54 : i32 to index
    %c0_23 = arith.constant 0 : index
    %c0_24 = arith.constant 0 : index
    %56 = vector.load %arg0[%55, %c0_23, %c0_24] : memref<8x2x128xf32, #tpu.memory_space<vmem>>, vector<1x2x128xf32>
    %57 = vector.shape_cast %56 : vector<1x2x128xf32> to vector<2x128xf32>
    %58 = tpu.concatenate %57, %11 in 1 : vector<2x128xf32>, vector<2x128xf32> -> vector<2x256xf32>
    %c0_25 = arith.constant 0 : index
    %c0_26 = arith.constant 0 : index
    %59 = vector.load %arg3[%c0_25, %c0_26] : memref<256x512xf32, #tpu.memory_space<vmem>>, vector<256x512xf32>
    %cst_27 = arith.constant dense<0.000000e+00> : vector<2x512xf32>
    %60 = tpu.matmul %58, %59, %cst_27 {dimension_numbers = #tpu.dot_dimension_numbers<[1], [0], [0], [1], [0, 0, 1, 1], [], []>} : vector<2x256xf32>, vector<256x512xf32>, vector<2x512xf32> -> vector<2x512xf32>
    %61 = arith.addf %60, %5 : vector<2x512xf32>
    %62 = vector.extract_strided_slice %61 {offsets = [0, 0], sizes = [2, 128], strides = [1, 1]} : vector<2x512xf32> to vector<2x128xf32>
    %63 = arith.negf %62 : vector<2x128xf32>
    %64 = math.exp %63 : vector<2x128xf32>
    %cst_28 = arith.constant 1.000000e+00 : f32
    %65 = vector.broadcast %cst_28 : f32 to vector<2x128xf32>
    %66 = arith.addf %65, %64 : vector<2x128xf32>
    %67 = arith.divf %65, %66 : vector<2x128xf32>
    %68 = vector.extract_strided_slice %61 {offsets = [0, 128], sizes = [2, 128], strides = [1, 1]} : vector<2x512xf32> to vector<2x128xf32>
    %69 = arith.negf %68 : vector<2x128xf32>
    %70 = math.exp %69 : vector<2x128xf32>
    %cst_29 = arith.constant 1.000000e+00 : f32
    %71 = vector.broadcast %cst_29 : f32 to vector<2x128xf32>
    %72 = arith.addf %71, %70 : vector<2x128xf32>
    %73 = arith.divf %71, %72 : vector<2x128xf32>
    %74 = vector.extract_strided_slice %61 {offsets = [0, 256], sizes = [2, 128], strides = [1, 1]} : vector<2x512xf32> to vector<2x128xf32>
    %75 = math.tanh %74 : vector<2x128xf32>
    %76 = vector.extract_strided_slice %61 {offsets = [0, 384], sizes = [2, 128], strides = [1, 1]} : vector<2x512xf32> to vector<2x128xf32>
    %77 = arith.negf %76 : vector<2x128xf32>
    %78 = math.exp %77 : vector<2x128xf32>
    %cst_30 = arith.constant 1.000000e+00 : f32
    %79 = vector.broadcast %cst_30 : f32 to vector<2x128xf32>
    %80 = arith.addf %79, %78 : vector<2x128xf32>
    %81 = arith.divf %79, %80 : vector<2x128xf32>
    %82 = arith.mulf %73, %11 : vector<2x128xf32>
    %83 = arith.mulf %67, %75 : vector<2x128xf32>
    %84 = arith.addf %82, %83 : vector<2x128xf32>
    %85 = math.tanh %84 : vector<2x128xf32>
    %86 = arith.mulf %81, %85 : vector<2x128xf32>
    %c7_i32_31 = arith.constant 7 : i32
    %87 = arith.subi %c7_i32_31, %c0_i32 : i32
    %88 = arith.index_cast %87 : i32 to index
    %c0_32 = arith.constant 0 : index
    %c0_33 = arith.constant 0 : index
    %89 = vector.load %arg8[%88, %c0_32, %c0_33] : memref<8x2x128xf32, #tpu.memory_space<vmem>>, vector<1x2x128xf32>
    %90 = vector.shape_cast %89 : vector<1x2x128xf32> to vector<2x128xf32>
    %c0_34 = arith.constant 0 : index
    %c0_35 = arith.constant 0 : index
    %91 = vector.load %arg6[%c0_34, %c0_35] : memref<128x128xf32, #tpu.memory_space<vmem>>, vector<128x128xf32>
    %cst_36 = arith.constant dense<0.000000e+00> : vector<2x128xf32>
    %92 = tpu.matmul %86, %91, %cst_36 {dimension_numbers = #tpu.dot_dimension_numbers<[1], [0], [0], [1], [0, 0, 1, 1], [], []>} : vector<2x128xf32>, vector<128x128xf32>, vector<2x128xf32> -> vector<2x128xf32>
    %93 = arith.addf %90, %92 : vector<2x128xf32>
    %c7_i32_37 = arith.constant 7 : i32
    %94 = arith.subi %c7_i32_37, %c0_i32 : i32
    %95 = arith.index_cast %94 : i32 to index
    %c0_38 = arith.constant 0 : index
    %c0_39 = arith.constant 0 : index
    %96 = vector.load %arg8[%95, %c0_38, %c0_39] : memref<8x2x128xf32, #tpu.memory_space<vmem>>, vector<1x2x128xf32>
    %97 = vector.shape_cast %96 : vector<1x2x128xf32> to vector<2x128xf32>
    %98 = vector.shape_cast %93 : vector<2x128xf32> to vector<1x2x128xf32>
    tpu.vector_store %arg8[%95, %c0_38, %c0_39], %98 {strides = array<i32>} : memref<8x2x128xf32, #tpu.memory_space<vmem>>, vector<1x2x128xf32>,
    %c1_i32 = arith.constant 1 : i32
    %99 = arith.index_cast %c1_i32 : i32 to index
    %c0_40 = arith.constant 0 : index
    %c0_41 = arith.constant 0 : index
    %100 = vector.load %arg0[%99, %c0_40, %c0_41] : memref<8x2x128xf32, #tpu.memory_space<vmem>>, vector<1x2x128xf32>
    %101 = vector.shape_cast %100 : vector<1x2x128xf32> to vector<2x128xf32>
    %102 = tpu.concatenate %101, %43 in 1 : vector<2x128xf32>, vector<2x128xf32> -> vector<2x256xf32>
    %c0_42 = arith.constant 0 : index
    %c0_43 = arith.constant 0 : index
    %103 = vector.load %arg1[%c0_42, %c0_43] : memref<256x512xf32, #tpu.memory_space<vmem>>, vector<256x512xf32>
    %cst_44 = arith.constant dense<0.000000e+00> : vector<2x512xf32>
    %104 = tpu.matmul %102, %103, %cst_44 {dimension_numbers = #tpu.dot_dimension_numbers<[1], [0], [0], [1], [0, 0, 1, 1], [], []>} : vector<2x256xf32>, vector<256x512xf32>, vector<2x512xf32> -> vector<2x512xf32>
    %105 = arith.addf %104, %2 : vector<2x512xf32>
    %106 = vector.extract_strided_slice %105 {offsets = [0, 0], sizes = [2, 128], strides = [1, 1]} : vector<2x512xf32> to vector<2x128xf32>
    %107 = arith.negf %106 : vector<2x128xf32>
    %108 = math.exp %107 : vector<2x128xf32>
    %cst_45 = arith.constant 1.000000e+00 : f32
    %109 = vector.broadcast %cst_45 : f32 to vector<2x128xf32>
    %110 = arith.addf %109, %108 : vector<2x128xf32>
    %111 = arith.divf %109, %110 : vector<2x128xf32>
    %112 = vector.extract_strided_slice %105 {offsets = [0, 128], sizes = [2, 128], strides = [1, 1]} : vector<2x512xf32> to vector<2x128xf32>
    %113 = arith.negf %112 : vector<2x128xf32>
    %114 = math.exp %113 : vector<2x128xf32>
    %cst_46 = arith.constant 1.000000e+00 : f32
    %115 = vector.broadcast %cst_46 : f32 to vector<2x128xf32>
    %116 = arith.addf %115, %114 : vector<2x128xf32>
    %117 = arith.divf %115, %116 : vector<2x128xf32>
    %118 = vector.extract_strided_slice %105 {offsets = [0, 256], sizes = [2, 128], strides = [1, 1]} : vector<2x512xf32> to vector<2x128xf32>
    %119 = math.tanh %118 : vector<2x128xf32>
    %120 = vector.extract_strided_slice %105 {offsets = [0, 384], sizes = [2, 128], strides = [1, 1]} : vector<2x512xf32> to vector<2x128xf32>
    %121 = arith.negf %120 : vector<2x128xf32>
    %122 = math.exp %121 : vector<2x128xf32>
    %cst_47 = arith.constant 1.000000e+00 : f32
    %123 = vector.broadcast %cst_47 : f32 to vector<2x128xf32>
    %124 = arith.addf %123, %122 : vector<2x128xf32>
    %125 = arith.divf %123, %124 : vector<2x128xf32>
    %126 = arith.mulf %117, %41 : vector<2x128xf32>
    %127 = arith.mulf %111, %119 : vector<2x128xf32>
    %128 = arith.addf %126, %127 : vector<2x128xf32>
    %129 = math.tanh %128 : vector<2x128xf32>
    %130 = arith.mulf %125, %129 : vector<2x128xf32>
    %131 = arith.index_cast %c1_i32 : i32 to index
    %c0_48 = arith.constant 0 : index
    %c0_49 = arith.constant 0 : index
    %132 = vector.load %arg8[%131, %c0_48, %c0_49] : memref<8x2x128xf32, #tpu.memory_space<vmem>>, vector<1x2x128xf32>
    %133 = vector.shape_cast %132 : vector<1x2x128xf32> to vector<2x128xf32>
    %c0_50 = arith.constant 0 : index
    %c0_51 = arith.constant 0 : index
    %134 = vector.load %arg5[%c0_50, %c0_51] : memref<128x128xf32, #tpu.memory_space<vmem>>, vector<128x128xf32>
    %cst_52 = arith.constant dense<0.000000e+00> : vector<2x128xf32>
    %135 = tpu.matmul %130, %134, %cst_52 {dimension_numbers = #tpu.dot_dimension_numbers<[1], [0], [0], [1], [0, 0, 1, 1], [], []>} : vector<2x128xf32>, vector<128x128xf32>, vector<2x128xf32> -> vector<2x128xf32>
    %136 = arith.addf %133, %135 : vector<2x128xf32>
    %137 = arith.index_cast %c1_i32 : i32 to index
    %c0_53 = arith.constant 0 : index
    %c0_54 = arith.constant 0 : index
    %138 = vector.load %arg8[%137, %c0_53, %c0_54] : memref<8x2x128xf32, #tpu.memory_space<vmem>>, vector<1x2x128xf32>
    %139 = vector.shape_cast %138 : vector<1x2x128xf32> to vector<2x128xf32>
    %140 = vector.shape_cast %136 : vector<2x128xf32> to vector<1x2x128xf32>
    tpu.vector_store %arg8[%137, %c0_53, %c0_54], %140 {strides = array<i32>} : memref<8x2x128xf32, #tpu.memory_space<vmem>>, vector<1x2x128xf32>,
    %c7_i32_55 = arith.constant 7 : i32
    %141 = arith.subi %c7_i32_55, %c1_i32 : i32
    %142 = arith.index_cast %141 : i32 to index
    %c0_56 = arith.constant 0 : index
    %c0_57 = arith.constant 0 : index
    %143 = vector.load %arg0[%142, %c0_56, %c0_57] : memref<8x2x128xf32, #tpu.memory_space<vmem>>, vector<1x2x128xf32>
    %144 = vector.shape_cast %143 : vector<1x2x128xf32> to vector<2x128xf32>
    %145 = tpu.concatenate %144, %86 in 1 : vector<2x128xf32>, vector<2x128xf32> -> vector<2x256xf32>
    %c0_58 = arith.constant 0 : index
    %c0_59 = arith.constant 0 : index
    %146 = vector.load %arg3[%c0_58, %c0_59] : memref<256x512xf32, #tpu.memory_space<vmem>>, vector<256x512xf32>
    %cst_60 = arith.constant dense<0.000000e+00> : vector<2x512xf32>
    %147 = tpu.matmul %145, %146, %cst_60 {dimension_numbers = #tpu.dot_dimension_numbers<[1], [0], [0], [1], [0, 0, 1, 1], [], []>} : vector<2x256xf32>, vector<256x512xf32>, vector<2x512xf32> -> vector<2x512xf32>
    %148 = arith.addf %147, %5 : vector<2x512xf32>
    %149 = vector.extract_strided_slice %148 {offsets = [0, 0], sizes = [2, 128], strides = [1, 1]} : vector<2x512xf32> to vector<2x128xf32>
    %150 = arith.negf %149 : vector<2x128xf32>
    %151 = math.exp %150 : vector<2x128xf32>
    %cst_61 = arith.constant 1.000000e+00 : f32
    %152 = vector.broadcast %cst_61 : f32 to vector<2x128xf32>
    %153 = arith.addf %152, %151 : vector<2x128xf32>
    %154 = arith.divf %152, %153 : vector<2x128xf32>
    %155 = vector.extract_strided_slice %148 {offsets = [0, 128], sizes = [2, 128], strides = [1, 1]} : vector<2x512xf32> to vector<2x128xf32>
    %156 = arith.negf %155 : vector<2x128xf32>
    %157 = math.exp %156 : vector<2x128xf32>
    %cst_62 = arith.constant 1.000000e+00 : f32
    %158 = vector.broadcast %cst_62 : f32 to vector<2x128xf32>
    %159 = arith.addf %158, %157 : vector<2x128xf32>
    %160 = arith.divf %158, %159 : vector<2x128xf32>
    %161 = vector.extract_strided_slice %148 {offsets = [0, 256], sizes = [2, 128], strides = [1, 1]} : vector<2x512xf32> to vector<2x128xf32>
    %162 = math.tanh %161 : vector<2x128xf32>
    %163 = vector.extract_strided_slice %148 {offsets = [0, 384], sizes = [2, 128], strides = [1, 1]} : vector<2x512xf32> to vector<2x128xf32>
    %164 = arith.negf %163 : vector<2x128xf32>
    %165 = math.exp %164 : vector<2x128xf32>
    %cst_63 = arith.constant 1.000000e+00 : f32
    %166 = vector.broadcast %cst_63 : f32 to vector<2x128xf32>
    %167 = arith.addf %166, %165 : vector<2x128xf32>
    %168 = arith.divf %166, %167 : vector<2x128xf32>
    %169 = arith.mulf %160, %84 : vector<2x128xf32>
    %170 = arith.mulf %154, %162 : vector<2x128xf32>
    %171 = arith.addf %169, %170 : vector<2x128xf32>
    %172 = math.tanh %171 : vector<2x128xf32>
    %173 = arith.mulf %168, %172 : vector<2x128xf32>
    %c7_i32_64 = arith.constant 7 : i32
    %174 = arith.subi %c7_i32_64, %c1_i32 : i32
    %175 = arith.index_cast %174 : i32 to index
    %c0_65 = arith.constant 0 : index
    %c0_66 = arith.constant 0 : index
    %176 = vector.load %arg8[%175, %c0_65, %c0_66] : memref<8x2x128xf32, #tpu.memory_space<vmem>>, vector<1x2x128xf32>
    %177 = vector.shape_cast %176 : vector<1x2x128xf32> to vector<2x128xf32>
    %c0_67 = arith.constant 0 : index
    %c0_68 = arith.constant 0 : index
    %178 = vector.load %arg6[%c0_67, %c0_68] : memref<128x128xf32, #tpu.memory_space<vmem>>, vector<128x128xf32>
    %cst_69 = arith.constant dense<0.000000e+00> : vector<2x128xf32>
    %179 = tpu.matmul %173, %178, %cst_69 {dimension_numbers = #tpu.dot_dimension_numbers<[1], [0], [0], [1], [0, 0, 1, 1], [], []>} : vector<2x128xf32>, vector<128x128xf32>, vector<2x128xf32> -> vector<2x128xf32>
    %180 = arith.addf %177, %179 : vector<2x128xf32>
    %c7_i32_70 = arith.constant 7 : i32
    %181 = arith.subi %c7_i32_70, %c1_i32 : i32
    %182 = arith.index_cast %181 : i32 to index
    %c0_71 = arith.constant 0 : index
    %c0_72 = arith.constant 0 : index
    %183 = vector.load %arg8[%182, %c0_71, %c0_72] : memref<8x2x128xf32, #tpu.memory_space<vmem>>, vector<1x2x128xf32>
    %184 = vector.shape_cast %183 : vector<1x2x128xf32> to vector<2x128xf32>
    %185 = vector.shape_cast %180 : vector<2x128xf32> to vector<1x2x128xf32>
    tpu.vector_store %arg8[%182, %c0_71, %c0_72], %185 {strides = array<i32>} : memref<8x2x128xf32, #tpu.memory_space<vmem>>, vector<1x2x128xf32>,
    %c2_i32 = arith.constant 2 : i32
    %186 = arith.index_cast %c2_i32 : i32 to index
    %c0_73 = arith.constant 0 : index
    %c0_74 = arith.constant 0 : index
    %187 = vector.load %arg0[%186, %c0_73, %c0_74] : memref<8x2x128xf32, #tpu.memory_space<vmem>>, vector<1x2x128xf32>
    %188 = vector.shape_cast %187 : vector<1x2x128xf32> to vector<2x128xf32>
    %189 = tpu.concatenate %188, %130 in 1 : vector<2x128xf32>, vector<2x128xf32> -> vector<2x256xf32>
    %c0_75 = arith.constant 0 : index
    %c0_76 = arith.constant 0 : index
    %190 = vector.load %arg1[%c0_75, %c0_76] : memref<256x512xf32, #tpu.memory_space<vmem>>, vector<256x512xf32>
    %cst_77 = arith.constant dense<0.000000e+00> : vector<2x512xf32>
    %191 = tpu.matmul %189, %190, %cst_77 {dimension_numbers = #tpu.dot_dimension_numbers<[1], [0], [0], [1], [0, 0, 1, 1], [], []>} : vector<2x256xf32>, vector<256x512xf32>, vector<2x512xf32> -> vector<2x512xf32>
    %192 = arith.addf %191, %2 : vector<2x512xf32>
    %193 = vector.extract_strided_slice %192 {offsets = [0, 0], sizes = [2, 128], strides = [1, 1]} : vector<2x512xf32> to vector<2x128xf32>
    %194 = arith.negf %193 : vector<2x128xf32>
    %195 = math.exp %194 : vector<2x128xf32>
    %cst_78 = arith.constant 1.000000e+00 : f32
    %196 = vector.broadcast %cst_78 : f32 to vector<2x128xf32>
    %197 = arith.addf %196, %195 : vector<2x128xf32>
    %198 = arith.divf %196, %197 : vector<2x128xf32>
    %199 = vector.extract_strided_slice %192 {offsets = [0, 128], sizes = [2, 128], strides = [1, 1]} : vector<2x512xf32> to vector<2x128xf32>
    %200 = arith.negf %199 : vector<2x128xf32>
    %201 = math.exp %200 : vector<2x128xf32>
    %cst_79 = arith.constant 1.000000e+00 : f32
    %202 = vector.broadcast %cst_79 : f32 to vector<2x128xf32>
    %203 = arith.addf %202, %201 : vector<2x128xf32>
    %204 = arith.divf %202, %203 : vector<2x128xf32>
    %205 = vector.extract_strided_slice %192 {offsets = [0, 256], sizes = [2, 128], strides = [1, 1]} : vector<2x512xf32> to vector<2x128xf32>
    %206 = math.tanh %205 : vector<2x128xf32>
    %207 = vector.extract_strided_slice %192 {offsets = [0, 384], sizes = [2, 128], strides = [1, 1]} : vector<2x512xf32> to vector<2x128xf32>
    %208 = arith.negf %207 : vector<2x128xf32>
    %209 = math.exp %208 : vector<2x128xf32>
    %cst_80 = arith.constant 1.000000e+00 : f32
    %210 = vector.broadcast %cst_80 : f32 to vector<2x128xf32>
    %211 = arith.addf %210, %209 : vector<2x128xf32>
    %212 = arith.divf %210, %211 : vector<2x128xf32>
    %213 = arith.mulf %204, %128 : vector<2x128xf32>
    %214 = arith.mulf %198, %206 : vector<2x128xf32>
    %215 = arith.addf %213, %214 : vector<2x128xf32>
    %216 = math.tanh %215 : vector<2x128xf32>
    %217 = arith.mulf %212, %216 : vector<2x128xf32>
    %218 = arith.index_cast %c2_i32 : i32 to index
    %c0_81 = arith.constant 0 : index
    %c0_82 = arith.constant 0 : index
    %219 = vector.load %arg8[%218, %c0_81, %c0_82] : memref<8x2x128xf32, #tpu.memory_space<vmem>>, vector<1x2x128xf32>
    %220 = vector.shape_cast %219 : vector<1x2x128xf32> to vector<2x128xf32>
    %c0_83 = arith.constant 0 : index
    %c0_84 = arith.constant 0 : index
    %221 = vector.load %arg5[%c0_83, %c0_84] : memref<128x128xf32, #tpu.memory_space<vmem>>, vector<128x128xf32>
    %cst_85 = arith.constant dense<0.000000e+00> : vector<2x128xf32>
    %222 = tpu.matmul %217, %221, %cst_85 {dimension_numbers = #tpu.dot_dimension_numbers<[1], [0], [0], [1], [0, 0, 1, 1], [], []>} : vector<2x128xf32>, vector<128x128xf32>, vector<2x128xf32> -> vector<2x128xf32>
    %223 = arith.addf %220, %222 : vector<2x128xf32>
    %224 = arith.index_cast %c2_i32 : i32 to index
    %c0_86 = arith.constant 0 : index
    %c0_87 = arith.constant 0 : index
    %225 = vector.load %arg8[%224, %c0_86, %c0_87] : memref<8x2x128xf32, #tpu.memory_space<vmem>>, vector<1x2x128xf32>
    %226 = vector.shape_cast %225 : vector<1x2x128xf32> to vector<2x128xf32>
    %227 = vector.shape_cast %223 : vector<2x128xf32> to vector<1x2x128xf32>
    tpu.vector_store %arg8[%224, %c0_86, %c0_87], %227 {strides = array<i32>} : memref<8x2x128xf32, #tpu.memory_space<vmem>>, vector<1x2x128xf32>,
    %c7_i32_88 = arith.constant 7 : i32
    %228 = arith.subi %c7_i32_88, %c2_i32 : i32
    %229 = arith.index_cast %228 : i32 to index
    %c0_89 = arith.constant 0 : index
    %c0_90 = arith.constant 0 : index
    %230 = vector.load %arg0[%229, %c0_89, %c0_90] : memref<8x2x128xf32, #tpu.memory_space<vmem>>, vector<1x2x128xf32>
    %231 = vector.shape_cast %230 : vector<1x2x128xf32> to vector<2x128xf32>
    %232 = tpu.concatenate %231, %173 in 1 : vector<2x128xf32>, vector<2x128xf32> -> vector<2x256xf32>
    %c0_91 = arith.constant 0 : index
    %c0_92 = arith.constant 0 : index
    %233 = vector.load %arg3[%c0_91, %c0_92] : memref<256x512xf32, #tpu.memory_space<vmem>>, vector<256x512xf32>
    %cst_93 = arith.constant dense<0.000000e+00> : vector<2x512xf32>
    %234 = tpu.matmul %232, %233, %cst_93 {dimension_numbers = #tpu.dot_dimension_numbers<[1], [0], [0], [1], [0, 0, 1, 1], [], []>} : vector<2x256xf32>, vector<256x512xf32>, vector<2x512xf32> -> vector<2x512xf32>
    %235 = arith.addf %234, %5 : vector<2x512xf32>
    %236 = vector.extract_strided_slice %235 {offsets = [0, 0], sizes = [2, 128], strides = [1, 1]} : vector<2x512xf32> to vector<2x128xf32>
    %237 = arith.negf %236 : vector<2x128xf32>
    %238 = math.exp %237 : vector<2x128xf32>
    %cst_94 = arith.constant 1.000000e+00 : f32
    %239 = vector.broadcast %cst_94 : f32 to vector<2x128xf32>
    %240 = arith.addf %239, %238 : vector<2x128xf32>
    %241 = arith.divf %239, %240 : vector<2x128xf32>
    %242 = vector.extract_strided_slice %235 {offsets = [0, 128], sizes = [2, 128], strides = [1, 1]} : vector<2x512xf32> to vector<2x128xf32>
    %243 = arith.negf %242 : vector<2x128xf32>
    %244 = math.exp %243 : vector<2x128xf32>
    %cst_95 = arith.constant 1.000000e+00 : f32
    %245 = vector.broadcast %cst_95 : f32 to vector<2x128xf32>
    %246 = arith.addf %245, %244 : vector<2x128xf32>
    %247 = arith.divf %245, %246 : vector<2x128xf32>
    %248 = vector.extract_strided_slice %235 {offsets = [0, 256], sizes = [2, 128], strides = [1, 1]} : vector<2x512xf32> to vector<2x128xf32>
    %249 = math.tanh %248 : vector<2x128xf32>
    %250 = vector.extract_strided_slice %235 {offsets = [0, 384], sizes = [2, 128], strides = [1, 1]} : vector<2x512xf32> to vector<2x128xf32>
    %251 = arith.negf %250 : vector<2x128xf32>
    %252 = math.exp %251 : vector<2x128xf32>
    %cst_96 = arith.constant 1.000000e+00 : f32
    %253 = vector.broadcast %cst_96 : f32 to vector<2x128xf32>
    %254 = arith.addf %253, %252 : vector<2x128xf32>
    %255 = arith.divf %253, %254 : vector<2x128xf32>
    %256 = arith.mulf %247, %171 : vector<2x128xf32>
    %257 = arith.mulf %241, %249 : vector<2x128xf32>
    %258 = arith.addf %256, %257 : vector<2x128xf32>
    %259 = math.tanh %258 : vector<2x128xf32>
    %260 = arith.mulf %255, %259 : vector<2x128xf32>
    %c7_i32_97 = arith.constant 7 : i32
    %261 = arith.subi %c7_i32_97, %c2_i32 : i32
    %262 = arith.index_cast %261 : i32 to index
    %c0_98 = arith.constant 0 : index
    %c0_99 = arith.constant 0 : index
    %263 = vector.load %arg8[%262, %c0_98, %c0_99] : memref<8x2x128xf32, #tpu.memory_space<vmem>>, vector<1x2x128xf32>
    %264 = vector.shape_cast %263 : vector<1x2x128xf32> to vector<2x128xf32>
    %c0_100 = arith.constant 0 : index
    %c0_101 = arith.constant 0 : index
    %265 = vector.load %arg6[%c0_100, %c0_101] : memref<128x128xf32, #tpu.memory_space<vmem>>, vector<128x128xf32>
    %cst_102 = arith.constant dense<0.000000e+00> : vector<2x128xf32>
    %266 = tpu.matmul %260, %265, %cst_102 {dimension_numbers = #tpu.dot_dimension_numbers<[1], [0], [0], [1], [0, 0, 1, 1], [], []>} : vector<2x128xf32>, vector<128x128xf32>, vector<2x128xf32> -> vector<2x128xf32>
    %267 = arith.addf %264, %266 : vector<2x128xf32>
    %c7_i32_103 = arith.constant 7 : i32
    %268 = arith.subi %c7_i32_103, %c2_i32 : i32
    %269 = arith.index_cast %268 : i32 to index
    %c0_104 = arith.constant 0 : index
    %c0_105 = arith.constant 0 : index
    %270 = vector.load %arg8[%269, %c0_104, %c0_105] : memref<8x2x128xf32, #tpu.memory_space<vmem>>, vector<1x2x128xf32>
    %271 = vector.shape_cast %270 : vector<1x2x128xf32> to vector<2x128xf32>
    %272 = vector.shape_cast %267 : vector<2x128xf32> to vector<1x2x128xf32>
    tpu.vector_store %arg8[%269, %c0_104, %c0_105], %272 {strides = array<i32>} : memref<8x2x128xf32, #tpu.memory_space<vmem>>, vector<1x2x128xf32>,
    %c3_i32 = arith.constant 3 : i32
    %273 = arith.index_cast %c3_i32 : i32 to index
    %c0_106 = arith.constant 0 : index
    %c0_107 = arith.constant 0 : index
    %274 = vector.load %arg0[%273, %c0_106, %c0_107] : memref<8x2x128xf32, #tpu.memory_space<vmem>>, vector<1x2x128xf32>
    %275 = vector.shape_cast %274 : vector<1x2x128xf32> to vector<2x128xf32>
    %276 = tpu.concatenate %275, %217 in 1 : vector<2x128xf32>, vector<2x128xf32> -> vector<2x256xf32>
    %c0_108 = arith.constant 0 : index
    %c0_109 = arith.constant 0 : index
    %277 = vector.load %arg1[%c0_108, %c0_109] : memref<256x512xf32, #tpu.memory_space<vmem>>, vector<256x512xf32>
    %cst_110 = arith.constant dense<0.000000e+00> : vector<2x512xf32>
    %278 = tpu.matmul %276, %277, %cst_110 {dimension_numbers = #tpu.dot_dimension_numbers<[1], [0], [0], [1], [0, 0, 1, 1], [], []>} : vector<2x256xf32>, vector<256x512xf32>, vector<2x512xf32> -> vector<2x512xf32>
    %279 = arith.addf %278, %2 : vector<2x512xf32>
    %280 = vector.extract_strided_slice %279 {offsets = [0, 0], sizes = [2, 128], strides = [1, 1]} : vector<2x512xf32> to vector<2x128xf32>
    %281 = arith.negf %280 : vector<2x128xf32>
    %282 = math.exp %281 : vector<2x128xf32>
    %cst_111 = arith.constant 1.000000e+00 : f32
    %283 = vector.broadcast %cst_111 : f32 to vector<2x128xf32>
    %284 = arith.addf %283, %282 : vector<2x128xf32>
    %285 = arith.divf %283, %284 : vector<2x128xf32>
    %286 = vector.extract_strided_slice %279 {offsets = [0, 128], sizes = [2, 128], strides = [1, 1]} : vector<2x512xf32> to vector<2x128xf32>
    %287 = arith.negf %286 : vector<2x128xf32>
    %288 = math.exp %287 : vector<2x128xf32>
    %cst_112 = arith.constant 1.000000e+00 : f32
    %289 = vector.broadcast %cst_112 : f32 to vector<2x128xf32>
    %290 = arith.addf %289, %288 : vector<2x128xf32>
    %291 = arith.divf %289, %290 : vector<2x128xf32>
    %292 = vector.extract_strided_slice %279 {offsets = [0, 256], sizes = [2, 128], strides = [1, 1]} : vector<2x512xf32> to vector<2x128xf32>
    %293 = math.tanh %292 : vector<2x128xf32>
    %294 = vector.extract_strided_slice %279 {offsets = [0, 384], sizes = [2, 128], strides = [1, 1]} : vector<2x512xf32> to vector<2x128xf32>
    %295 = arith.negf %294 : vector<2x128xf32>
    %296 = math.exp %295 : vector<2x128xf32>
    %cst_113 = arith.constant 1.000000e+00 : f32
    %297 = vector.broadcast %cst_113 : f32 to vector<2x128xf32>
    %298 = arith.addf %297, %296 : vector<2x128xf32>
    %299 = arith.divf %297, %298 : vector<2x128xf32>
    %300 = arith.mulf %291, %215 : vector<2x128xf32>
    %301 = arith.mulf %285, %293 : vector<2x128xf32>
    %302 = arith.addf %300, %301 : vector<2x128xf32>
    %303 = math.tanh %302 : vector<2x128xf32>
    %304 = arith.mulf %299, %303 : vector<2x128xf32>
    %305 = arith.index_cast %c3_i32 : i32 to index
    %c0_114 = arith.constant 0 : index
    %c0_115 = arith.constant 0 : index
    %306 = vector.load %arg8[%305, %c0_114, %c0_115] : memref<8x2x128xf32, #tpu.memory_space<vmem>>, vector<1x2x128xf32>
    %307 = vector.shape_cast %306 : vector<1x2x128xf32> to vector<2x128xf32>
    %c0_116 = arith.constant 0 : index
    %c0_117 = arith.constant 0 : index
    %308 = vector.load %arg5[%c0_116, %c0_117] : memref<128x128xf32, #tpu.memory_space<vmem>>, vector<128x128xf32>
    %cst_118 = arith.constant dense<0.000000e+00> : vector<2x128xf32>
    %309 = tpu.matmul %304, %308, %cst_118 {dimension_numbers = #tpu.dot_dimension_numbers<[1], [0], [0], [1], [0, 0, 1, 1], [], []>} : vector<2x128xf32>, vector<128x128xf32>, vector<2x128xf32> -> vector<2x128xf32>
    %310 = arith.addf %307, %309 : vector<2x128xf32>
    %311 = arith.index_cast %c3_i32 : i32 to index
    %c0_119 = arith.constant 0 : index
    %c0_120 = arith.constant 0 : index
    %312 = vector.load %arg8[%311, %c0_119, %c0_120] : memref<8x2x128xf32, #tpu.memory_space<vmem>>, vector<1x2x128xf32>
    %313 = vector.shape_cast %312 : vector<1x2x128xf32> to vector<2x128xf32>
    %314 = vector.shape_cast %310 : vector<2x128xf32> to vector<1x2x128xf32>
    tpu.vector_store %arg8[%311, %c0_119, %c0_120], %314 {strides = array<i32>} : memref<8x2x128xf32, #tpu.memory_space<vmem>>, vector<1x2x128xf32>,
    %c7_i32_121 = arith.constant 7 : i32
    %315 = arith.subi %c7_i32_121, %c3_i32 : i32
    %316 = arith.index_cast %315 : i32 to index
    %c0_122 = arith.constant 0 : index
    %c0_123 = arith.constant 0 : index
    %317 = vector.load %arg0[%316, %c0_122, %c0_123] : memref<8x2x128xf32, #tpu.memory_space<vmem>>, vector<1x2x128xf32>
    %318 = vector.shape_cast %317 : vector<1x2x128xf32> to vector<2x128xf32>
    %319 = tpu.concatenate %318, %260 in 1 : vector<2x128xf32>, vector<2x128xf32> -> vector<2x256xf32>
    %c0_124 = arith.constant 0 : index
    %c0_125 = arith.constant 0 : index
    %320 = vector.load %arg3[%c0_124, %c0_125] : memref<256x512xf32, #tpu.memory_space<vmem>>, vector<256x512xf32>
    %cst_126 = arith.constant dense<0.000000e+00> : vector<2x512xf32>
    %321 = tpu.matmul %319, %320, %cst_126 {dimension_numbers = #tpu.dot_dimension_numbers<[1], [0], [0], [1], [0, 0, 1, 1], [], []>} : vector<2x256xf32>, vector<256x512xf32>, vector<2x512xf32> -> vector<2x512xf32>
    %322 = arith.addf %321, %5 : vector<2x512xf32>
    %323 = vector.extract_strided_slice %322 {offsets = [0, 0], sizes = [2, 128], strides = [1, 1]} : vector<2x512xf32> to vector<2x128xf32>
    %324 = arith.negf %323 : vector<2x128xf32>
    %325 = math.exp %324 : vector<2x128xf32>
    %cst_127 = arith.constant 1.000000e+00 : f32
    %326 = vector.broadcast %cst_127 : f32 to vector<2x128xf32>
    %327 = arith.addf %326, %325 : vector<2x128xf32>
    %328 = arith.divf %326, %327 : vector<2x128xf32>
    %329 = vector.extract_strided_slice %322 {offsets = [0, 128], sizes = [2, 128], strides = [1, 1]} : vector<2x512xf32> to vector<2x128xf32>
    %330 = arith.negf %329 : vector<2x128xf32>
    %331 = math.exp %330 : vector<2x128xf32>
    %cst_128 = arith.constant 1.000000e+00 : f32
    %332 = vector.broadcast %cst_128 : f32 to vector<2x128xf32>
    %333 = arith.addf %332, %331 : vector<2x128xf32>
    %334 = arith.divf %332, %333 : vector<2x128xf32>
    %335 = vector.extract_strided_slice %322 {offsets = [0, 256], sizes = [2, 128], strides = [1, 1]} : vector<2x512xf32> to vector<2x128xf32>
    %336 = math.tanh %335 : vector<2x128xf32>
    %337 = vector.extract_strided_slice %322 {offsets = [0, 384], sizes = [2, 128], strides = [1, 1]} : vector<2x512xf32> to vector<2x128xf32>
    %338 = arith.negf %337 : vector<2x128xf32>
    %339 = math.exp %338 : vector<2x128xf32>
    %cst_129 = arith.constant 1.000000e+00 : f32
    %340 = vector.broadcast %cst_129 : f32 to vector<2x128xf32>
    %341 = arith.addf %340, %339 : vector<2x128xf32>
    %342 = arith.divf %340, %341 : vector<2x128xf32>
    %343 = arith.mulf %334, %258 : vector<2x128xf32>
    %344 = arith.mulf %328, %336 : vector<2x128xf32>
    %345 = arith.addf %343, %344 : vector<2x128xf32>
    %346 = math.tanh %345 : vector<2x128xf32>
    %347 = arith.mulf %342, %346 : vector<2x128xf32>
    %c7_i32_130 = arith.constant 7 : i32
    %348 = arith.subi %c7_i32_130, %c3_i32 : i32
    %349 = arith.index_cast %348 : i32 to index
    %c0_131 = arith.constant 0 : index
    %c0_132 = arith.constant 0 : index
    %350 = vector.load %arg8[%349, %c0_131, %c0_132] : memref<8x2x128xf32, #tpu.memory_space<vmem>>, vector<1x2x128xf32>
    %351 = vector.shape_cast %350 : vector<1x2x128xf32> to vector<2x128xf32>
    %c0_133 = arith.constant 0 : index
    %c0_134 = arith.constant 0 : index
    %352 = vector.load %arg6[%c0_133, %c0_134] : memref<128x128xf32, #tpu.memory_space<vmem>>, vector<128x128xf32>
    %cst_135 = arith.constant dense<0.000000e+00> : vector<2x128xf32>
    %353 = tpu.matmul %347, %352, %cst_135 {dimension_numbers = #tpu.dot_dimension_numbers<[1], [0], [0], [1], [0, 0, 1, 1], [], []>} : vector<2x128xf32>, vector<128x128xf32>, vector<2x128xf32> -> vector<2x128xf32>
    %354 = arith.addf %351, %353 : vector<2x128xf32>
    %c7_i32_136 = arith.constant 7 : i32
    %355 = arith.subi %c7_i32_136, %c3_i32 : i32
    %356 = arith.index_cast %355 : i32 to index
    %c0_137 = arith.constant 0 : index
    %c0_138 = arith.constant 0 : index
    %357 = vector.load %arg8[%356, %c0_137, %c0_138] : memref<8x2x128xf32, #tpu.memory_space<vmem>>, vector<1x2x128xf32>
    %358 = vector.shape_cast %357 : vector<1x2x128xf32> to vector<2x128xf32>
    %359 = vector.shape_cast %354 : vector<2x128xf32> to vector<1x2x128xf32>
    tpu.vector_store %arg8[%356, %c0_137, %c0_138], %359 {strides = array<i32>} : memref<8x2x128xf32, #tpu.memory_space<vmem>>, vector<1x2x128xf32>,
    %c4_i32 = arith.constant 4 : i32
    %360 = arith.index_cast %c4_i32 : i32 to index
    %c0_139 = arith.constant 0 : index
    %c0_140 = arith.constant 0 : index
    %361 = vector.load %arg0[%360, %c0_139, %c0_140] : memref<8x2x128xf32, #tpu.memory_space<vmem>>, vector<1x2x128xf32>
    %362 = vector.shape_cast %361 : vector<1x2x128xf32> to vector<2x128xf32>
    %363 = tpu.concatenate %362, %304 in 1 : vector<2x128xf32>, vector<2x128xf32> -> vector<2x256xf32>
    %c0_141 = arith.constant 0 : index
    %c0_142 = arith.constant 0 : index
    %364 = vector.load %arg1[%c0_141, %c0_142] : memref<256x512xf32, #tpu.memory_space<vmem>>, vector<256x512xf32>
    %cst_143 = arith.constant dense<0.000000e+00> : vector<2x512xf32>
    %365 = tpu.matmul %363, %364, %cst_143 {dimension_numbers = #tpu.dot_dimension_numbers<[1], [0], [0], [1], [0, 0, 1, 1], [], []>} : vector<2x256xf32>, vector<256x512xf32>, vector<2x512xf32> -> vector<2x512xf32>
    %366 = arith.addf %365, %2 : vector<2x512xf32>
    %367 = vector.extract_strided_slice %366 {offsets = [0, 0], sizes = [2, 128], strides = [1, 1]} : vector<2x512xf32> to vector<2x128xf32>
    %368 = arith.negf %367 : vector<2x128xf32>
    %369 = math.exp %368 : vector<2x128xf32>
    %cst_144 = arith.constant 1.000000e+00 : f32
    %370 = vector.broadcast %cst_144 : f32 to vector<2x128xf32>
    %371 = arith.addf %370, %369 : vector<2x128xf32>
    %372 = arith.divf %370, %371 : vector<2x128xf32>
    %373 = vector.extract_strided_slice %366 {offsets = [0, 128], sizes = [2, 128], strides = [1, 1]} : vector<2x512xf32> to vector<2x128xf32>
    %374 = arith.negf %373 : vector<2x128xf32>
    %375 = math.exp %374 : vector<2x128xf32>
    %cst_145 = arith.constant 1.000000e+00 : f32
    %376 = vector.broadcast %cst_145 : f32 to vector<2x128xf32>
    %377 = arith.addf %376, %375 : vector<2x128xf32>
    %378 = arith.divf %376, %377 : vector<2x128xf32>
    %379 = vector.extract_strided_slice %366 {offsets = [0, 256], sizes = [2, 128], strides = [1, 1]} : vector<2x512xf32> to vector<2x128xf32>
    %380 = math.tanh %379 : vector<2x128xf32>
    %381 = vector.extract_strided_slice %366 {offsets = [0, 384], sizes = [2, 128], strides = [1, 1]} : vector<2x512xf32> to vector<2x128xf32>
    %382 = arith.negf %381 : vector<2x128xf32>
    %383 = math.exp %382 : vector<2x128xf32>
    %cst_146 = arith.constant 1.000000e+00 : f32
    %384 = vector.broadcast %cst_146 : f32 to vector<2x128xf32>
    %385 = arith.addf %384, %383 : vector<2x128xf32>
    %386 = arith.divf %384, %385 : vector<2x128xf32>
    %387 = arith.mulf %378, %302 : vector<2x128xf32>
    %388 = arith.mulf %372, %380 : vector<2x128xf32>
    %389 = arith.addf %387, %388 : vector<2x128xf32>
    %390 = math.tanh %389 : vector<2x128xf32>
    %391 = arith.mulf %386, %390 : vector<2x128xf32>
    %392 = arith.index_cast %c4_i32 : i32 to index
    %c0_147 = arith.constant 0 : index
    %c0_148 = arith.constant 0 : index
    %393 = vector.load %arg8[%392, %c0_147, %c0_148] : memref<8x2x128xf32, #tpu.memory_space<vmem>>, vector<1x2x128xf32>
    %394 = vector.shape_cast %393 : vector<1x2x128xf32> to vector<2x128xf32>
    %c0_149 = arith.constant 0 : index
    %c0_150 = arith.constant 0 : index
    %395 = vector.load %arg5[%c0_149, %c0_150] : memref<128x128xf32, #tpu.memory_space<vmem>>, vector<128x128xf32>
    %cst_151 = arith.constant dense<0.000000e+00> : vector<2x128xf32>
    %396 = tpu.matmul %391, %395, %cst_151 {dimension_numbers = #tpu.dot_dimension_numbers<[1], [0], [0], [1], [0, 0, 1, 1], [], []>} : vector<2x128xf32>, vector<128x128xf32>, vector<2x128xf32> -> vector<2x128xf32>
    %397 = arith.addf %394, %396 : vector<2x128xf32>
    %398 = arith.index_cast %c4_i32 : i32 to index
    %c0_152 = arith.constant 0 : index
    %c0_153 = arith.constant 0 : index
    %399 = vector.load %arg8[%398, %c0_152, %c0_153] : memref<8x2x128xf32, #tpu.memory_space<vmem>>, vector<1x2x128xf32>
    %400 = vector.shape_cast %399 : vector<1x2x128xf32> to vector<2x128xf32>
    %401 = vector.shape_cast %397 : vector<2x128xf32> to vector<1x2x128xf32>
    tpu.vector_store %arg8[%398, %c0_152, %c0_153], %401 {strides = array<i32>} : memref<8x2x128xf32, #tpu.memory_space<vmem>>, vector<1x2x128xf32>,
    %c7_i32_154 = arith.constant 7 : i32
    %402 = arith.subi %c7_i32_154, %c4_i32 : i32
    %403 = arith.index_cast %402 : i32 to index
    %c0_155 = arith.constant 0 : index
    %c0_156 = arith.constant 0 : index
    %404 = vector.load %arg0[%403, %c0_155, %c0_156] : memref<8x2x128xf32, #tpu.memory_space<vmem>>, vector<1x2x128xf32>
    %405 = vector.shape_cast %404 : vector<1x2x128xf32> to vector<2x128xf32>
    %406 = tpu.concatenate %405, %347 in 1 : vector<2x128xf32>, vector<2x128xf32> -> vector<2x256xf32>
    %c0_157 = arith.constant 0 : index
    %c0_158 = arith.constant 0 : index
    %407 = vector.load %arg3[%c0_157, %c0_158] : memref<256x512xf32, #tpu.memory_space<vmem>>, vector<256x512xf32>
    %cst_159 = arith.constant dense<0.000000e+00> : vector<2x512xf32>
    %408 = tpu.matmul %406, %407, %cst_159 {dimension_numbers = #tpu.dot_dimension_numbers<[1], [0], [0], [1], [0, 0, 1, 1], [], []>} : vector<2x256xf32>, vector<256x512xf32>, vector<2x512xf32> -> vector<2x512xf32>
    %409 = arith.addf %408, %5 : vector<2x512xf32>
    %410 = vector.extract_strided_slice %409 {offsets = [0, 0], sizes = [2, 128], strides = [1, 1]} : vector<2x512xf32> to vector<2x128xf32>
    %411 = arith.negf %410 : vector<2x128xf32>
    %412 = math.exp %411 : vector<2x128xf32>
    %cst_160 = arith.constant 1.000000e+00 : f32
    %413 = vector.broadcast %cst_160 : f32 to vector<2x128xf32>
    %414 = arith.addf %413, %412 : vector<2x128xf32>
    %415 = arith.divf %413, %414 : vector<2x128xf32>
    %416 = vector.extract_strided_slice %409 {offsets = [0, 128], sizes = [2, 128], strides = [1, 1]} : vector<2x512xf32> to vector<2x128xf32>
    %417 = arith.negf %416 : vector<2x128xf32>
    %418 = math.exp %417 : vector<2x128xf32>
    %cst_161 = arith.constant 1.000000e+00 : f32
    %419 = vector.broadcast %cst_161 : f32 to vector<2x128xf32>
    %420 = arith.addf %419, %418 : vector<2x128xf32>
    %421 = arith.divf %419, %420 : vector<2x128xf32>
    %422 = vector.extract_strided_slice %409 {offsets = [0, 256], sizes = [2, 128], strides = [1, 1]} : vector<2x512xf32> to vector<2x128xf32>
    %423 = math.tanh %422 : vector<2x128xf32>
    %424 = vector.extract_strided_slice %409 {offsets = [0, 384], sizes = [2, 128], strides = [1, 1]} : vector<2x512xf32> to vector<2x128xf32>
    %425 = arith.negf %424 : vector<2x128xf32>
    %426 = math.exp %425 : vector<2x128xf32>
    %cst_162 = arith.constant 1.000000e+00 : f32
    %427 = vector.broadcast %cst_162 : f32 to vector<2x128xf32>
    %428 = arith.addf %427, %426 : vector<2x128xf32>
    %429 = arith.divf %427, %428 : vector<2x128xf32>
    %430 = arith.mulf %421, %345 : vector<2x128xf32>
    %431 = arith.mulf %415, %423 : vector<2x128xf32>
    %432 = arith.addf %430, %431 : vector<2x128xf32>
    %433 = math.tanh %432 : vector<2x128xf32>
    %434 = arith.mulf %429, %433 : vector<2x128xf32>
    %c7_i32_163 = arith.constant 7 : i32
    %435 = arith.subi %c7_i32_163, %c4_i32 : i32
    %436 = arith.index_cast %435 : i32 to index
    %c0_164 = arith.constant 0 : index
    %c0_165 = arith.constant 0 : index
    %437 = vector.load %arg8[%436, %c0_164, %c0_165] : memref<8x2x128xf32, #tpu.memory_space<vmem>>, vector<1x2x128xf32>
    %438 = vector.shape_cast %437 : vector<1x2x128xf32> to vector<2x128xf32>
    %c0_166 = arith.constant 0 : index
    %c0_167 = arith.constant 0 : index
    %439 = vector.load %arg6[%c0_166, %c0_167] : memref<128x128xf32, #tpu.memory_space<vmem>>, vector<128x128xf32>
    %cst_168 = arith.constant dense<0.000000e+00> : vector<2x128xf32>
    %440 = tpu.matmul %434, %439, %cst_168 {dimension_numbers = #tpu.dot_dimension_numbers<[1], [0], [0], [1], [0, 0, 1, 1], [], []>} : vector<2x128xf32>, vector<128x128xf32>, vector<2x128xf32> -> vector<2x128xf32>
    %441 = arith.addf %438, %440 : vector<2x128xf32>
    %c7_i32_169 = arith.constant 7 : i32
    %442 = arith.subi %c7_i32_169, %c4_i32 : i32
    %443 = arith.index_cast %442 : i32 to index
    %c0_170 = arith.constant 0 : index
    %c0_171 = arith.constant 0 : index
    %444 = vector.load %arg8[%443, %c0_170, %c0_171] : memref<8x2x128xf32, #tpu.memory_space<vmem>>, vector<1x2x128xf32>
    %445 = vector.shape_cast %444 : vector<1x2x128xf32> to vector<2x128xf32>
    %446 = vector.shape_cast %441 : vector<2x128xf32> to vector<1x2x128xf32>
    tpu.vector_store %arg8[%443, %c0_170, %c0_171], %446 {strides = array<i32>} : memref<8x2x128xf32, #tpu.memory_space<vmem>>, vector<1x2x128xf32>,
    %c5_i32 = arith.constant 5 : i32
    %447 = arith.index_cast %c5_i32 : i32 to index
    %c0_172 = arith.constant 0 : index
    %c0_173 = arith.constant 0 : index
    %448 = vector.load %arg0[%447, %c0_172, %c0_173] : memref<8x2x128xf32, #tpu.memory_space<vmem>>, vector<1x2x128xf32>
    %449 = vector.shape_cast %448 : vector<1x2x128xf32> to vector<2x128xf32>
    %450 = tpu.concatenate %449, %391 in 1 : vector<2x128xf32>, vector<2x128xf32> -> vector<2x256xf32>
    %c0_174 = arith.constant 0 : index
    %c0_175 = arith.constant 0 : index
    %451 = vector.load %arg1[%c0_174, %c0_175] : memref<256x512xf32, #tpu.memory_space<vmem>>, vector<256x512xf32>
    %cst_176 = arith.constant dense<0.000000e+00> : vector<2x512xf32>
    %452 = tpu.matmul %450, %451, %cst_176 {dimension_numbers = #tpu.dot_dimension_numbers<[1], [0], [0], [1], [0, 0, 1, 1], [], []>} : vector<2x256xf32>, vector<256x512xf32>, vector<2x512xf32> -> vector<2x512xf32>
    %453 = arith.addf %452, %2 : vector<2x512xf32>
    %454 = vector.extract_strided_slice %453 {offsets = [0, 0], sizes = [2, 128], strides = [1, 1]} : vector<2x512xf32> to vector<2x128xf32>
    %455 = arith.negf %454 : vector<2x128xf32>
    %456 = math.exp %455 : vector<2x128xf32>
    %cst_177 = arith.constant 1.000000e+00 : f32
    %457 = vector.broadcast %cst_177 : f32 to vector<2x128xf32>
    %458 = arith.addf %457, %456 : vector<2x128xf32>
    %459 = arith.divf %457, %458 : vector<2x128xf32>
    %460 = vector.extract_strided_slice %453 {offsets = [0, 128], sizes = [2, 128], strides = [1, 1]} : vector<2x512xf32> to vector<2x128xf32>
    %461 = arith.negf %460 : vector<2x128xf32>
    %462 = math.exp %461 : vector<2x128xf32>
    %cst_178 = arith.constant 1.000000e+00 : f32
    %463 = vector.broadcast %cst_178 : f32 to vector<2x128xf32>
    %464 = arith.addf %463, %462 : vector<2x128xf32>
    %465 = arith.divf %463, %464 : vector<2x128xf32>
    %466 = vector.extract_strided_slice %453 {offsets = [0, 256], sizes = [2, 128], strides = [1, 1]} : vector<2x512xf32> to vector<2x128xf32>
    %467 = math.tanh %466 : vector<2x128xf32>
    %468 = vector.extract_strided_slice %453 {offsets = [0, 384], sizes = [2, 128], strides = [1, 1]} : vector<2x512xf32> to vector<2x128xf32>
    %469 = arith.negf %468 : vector<2x128xf32>
    %470 = math.exp %469 : vector<2x128xf32>
    %cst_179 = arith.constant 1.000000e+00 : f32
    %471 = vector.broadcast %cst_179 : f32 to vector<2x128xf32>
    %472 = arith.addf %471, %470 : vector<2x128xf32>
    %473 = arith.divf %471, %472 : vector<2x128xf32>
    %474 = arith.mulf %465, %389 : vector<2x128xf32>
    %475 = arith.mulf %459, %467 : vector<2x128xf32>
    %476 = arith.addf %474, %475 : vector<2x128xf32>
    %477 = math.tanh %476 : vector<2x128xf32>
    %478 = arith.mulf %473, %477 : vector<2x128xf32>
    %479 = arith.index_cast %c5_i32 : i32 to index
    %c0_180 = arith.constant 0 : index
    %c0_181 = arith.constant 0 : index
    %480 = vector.load %arg8[%479, %c0_180, %c0_181] : memref<8x2x128xf32, #tpu.memory_space<vmem>>, vector<1x2x128xf32>
    %481 = vector.shape_cast %480 : vector<1x2x128xf32> to vector<2x128xf32>
    %c0_182 = arith.constant 0 : index
    %c0_183 = arith.constant 0 : index
    %482 = vector.load %arg5[%c0_182, %c0_183] : memref<128x128xf32, #tpu.memory_space<vmem>>, vector<128x128xf32>
    %cst_184 = arith.constant dense<0.000000e+00> : vector<2x128xf32>
    %483 = tpu.matmul %478, %482, %cst_184 {dimension_numbers = #tpu.dot_dimension_numbers<[1], [0], [0], [1], [0, 0, 1, 1], [], []>} : vector<2x128xf32>, vector<128x128xf32>, vector<2x128xf32> -> vector<2x128xf32>
    %484 = arith.addf %481, %483 : vector<2x128xf32>
    %485 = arith.index_cast %c5_i32 : i32 to index
    %c0_185 = arith.constant 0 : index
    %c0_186 = arith.constant 0 : index
    %486 = vector.load %arg8[%485, %c0_185, %c0_186] : memref<8x2x128xf32, #tpu.memory_space<vmem>>, vector<1x2x128xf32>
    %487 = vector.shape_cast %486 : vector<1x2x128xf32> to vector<2x128xf32>
    %488 = vector.shape_cast %484 : vector<2x128xf32> to vector<1x2x128xf32>
    tpu.vector_store %arg8[%485, %c0_185, %c0_186], %488 {strides = array<i32>} : memref<8x2x128xf32, #tpu.memory_space<vmem>>, vector<1x2x128xf32>,
    %c7_i32_187 = arith.constant 7 : i32
    %489 = arith.subi %c7_i32_187, %c5_i32 : i32
    %490 = arith.index_cast %489 : i32 to index
    %c0_188 = arith.constant 0 : index
    %c0_189 = arith.constant 0 : index
    %491 = vector.load %arg0[%490, %c0_188, %c0_189] : memref<8x2x128xf32, #tpu.memory_space<vmem>>, vector<1x2x128xf32>
    %492 = vector.shape_cast %491 : vector<1x2x128xf32> to vector<2x128xf32>
    %493 = tpu.concatenate %492, %434 in 1 : vector<2x128xf32>, vector<2x128xf32> -> vector<2x256xf32>
    %c0_190 = arith.constant 0 : index
    %c0_191 = arith.constant 0 : index
    %494 = vector.load %arg3[%c0_190, %c0_191] : memref<256x512xf32, #tpu.memory_space<vmem>>, vector<256x512xf32>
    %cst_192 = arith.constant dense<0.000000e+00> : vector<2x512xf32>
    %495 = tpu.matmul %493, %494, %cst_192 {dimension_numbers = #tpu.dot_dimension_numbers<[1], [0], [0], [1], [0, 0, 1, 1], [], []>} : vector<2x256xf32>, vector<256x512xf32>, vector<2x512xf32> -> vector<2x512xf32>
    %496 = arith.addf %495, %5 : vector<2x512xf32>
    %497 = vector.extract_strided_slice %496 {offsets = [0, 0], sizes = [2, 128], strides = [1, 1]} : vector<2x512xf32> to vector<2x128xf32>
    %498 = arith.negf %497 : vector<2x128xf32>
    %499 = math.exp %498 : vector<2x128xf32>
    %cst_193 = arith.constant 1.000000e+00 : f32
    %500 = vector.broadcast %cst_193 : f32 to vector<2x128xf32>
    %501 = arith.addf %500, %499 : vector<2x128xf32>
    %502 = arith.divf %500, %501 : vector<2x128xf32>
    %503 = vector.extract_strided_slice %496 {offsets = [0, 128], sizes = [2, 128], strides = [1, 1]} : vector<2x512xf32> to vector<2x128xf32>
    %504 = arith.negf %503 : vector<2x128xf32>
    %505 = math.exp %504 : vector<2x128xf32>
    %cst_194 = arith.constant 1.000000e+00 : f32
    %506 = vector.broadcast %cst_194 : f32 to vector<2x128xf32>
    %507 = arith.addf %506, %505 : vector<2x128xf32>
    %508 = arith.divf %506, %507 : vector<2x128xf32>
    %509 = vector.extract_strided_slice %496 {offsets = [0, 256], sizes = [2, 128], strides = [1, 1]} : vector<2x512xf32> to vector<2x128xf32>
    %510 = math.tanh %509 : vector<2x128xf32>
    %511 = vector.extract_strided_slice %496 {offsets = [0, 384], sizes = [2, 128], strides = [1, 1]} : vector<2x512xf32> to vector<2x128xf32>
    %512 = arith.negf %511 : vector<2x128xf32>
    %513 = math.exp %512 : vector<2x128xf32>
    %cst_195 = arith.constant 1.000000e+00 : f32
    %514 = vector.broadcast %cst_195 : f32 to vector<2x128xf32>
    %515 = arith.addf %514, %513 : vector<2x128xf32>
    %516 = arith.divf %514, %515 : vector<2x128xf32>
    %517 = arith.mulf %508, %432 : vector<2x128xf32>
    %518 = arith.mulf %502, %510 : vector<2x128xf32>
    %519 = arith.addf %517, %518 : vector<2x128xf32>
    %520 = math.tanh %519 : vector<2x128xf32>
    %521 = arith.mulf %516, %520 : vector<2x128xf32>
    %c7_i32_196 = arith.constant 7 : i32
    %522 = arith.subi %c7_i32_196, %c5_i32 : i32
    %523 = arith.index_cast %522 : i32 to index
    %c0_197 = arith.constant 0 : index
    %c0_198 = arith.constant 0 : index
    %524 = vector.load %arg8[%523, %c0_197, %c0_198] : memref<8x2x128xf32, #tpu.memory_space<vmem>>, vector<1x2x128xf32>
    %525 = vector.shape_cast %524 : vector<1x2x128xf32> to vector<2x128xf32>
    %c0_199 = arith.constant 0 : index
    %c0_200 = arith.constant 0 : index
    %526 = vector.load %arg6[%c0_199, %c0_200] : memref<128x128xf32, #tpu.memory_space<vmem>>, vector<128x128xf32>
    %cst_201 = arith.constant dense<0.000000e+00> : vector<2x128xf32>
    %527 = tpu.matmul %521, %526, %cst_201 {dimension_numbers = #tpu.dot_dimension_numbers<[1], [0], [0], [1], [0, 0, 1, 1], [], []>} : vector<2x128xf32>, vector<128x128xf32>, vector<2x128xf32> -> vector<2x128xf32>
    %528 = arith.addf %525, %527 : vector<2x128xf32>
    %c7_i32_202 = arith.constant 7 : i32
    %529 = arith.subi %c7_i32_202, %c5_i32 : i32
    %530 = arith.index_cast %529 : i32 to index
    %c0_203 = arith.constant 0 : index
    %c0_204 = arith.constant 0 : index
    %531 = vector.load %arg8[%530, %c0_203, %c0_204] : memref<8x2x128xf32, #tpu.memory_space<vmem>>, vector<1x2x128xf32>
    %532 = vector.shape_cast %531 : vector<1x2x128xf32> to vector<2x128xf32>
    %533 = vector.shape_cast %528 : vector<2x128xf32> to vector<1x2x128xf32>
    tpu.vector_store %arg8[%530, %c0_203, %c0_204], %533 {strides = array<i32>} : memref<8x2x128xf32, #tpu.memory_space<vmem>>, vector<1x2x128xf32>,
    %c6_i32 = arith.constant 6 : i32
    %534 = arith.index_cast %c6_i32 : i32 to index
    %c0_205 = arith.constant 0 : index
    %c0_206 = arith.constant 0 : index
    %535 = vector.load %arg0[%534, %c0_205, %c0_206] : memref<8x2x128xf32, #tpu.memory_space<vmem>>, vector<1x2x128xf32>
    %536 = vector.shape_cast %535 : vector<1x2x128xf32> to vector<2x128xf32>
    %537 = tpu.concatenate %536, %478 in 1 : vector<2x128xf32>, vector<2x128xf32> -> vector<2x256xf32>
    %c0_207 = arith.constant 0 : index
    %c0_208 = arith.constant 0 : index
    %538 = vector.load %arg1[%c0_207, %c0_208] : memref<256x512xf32, #tpu.memory_space<vmem>>, vector<256x512xf32>
    %cst_209 = arith.constant dense<0.000000e+00> : vector<2x512xf32>
    %539 = tpu.matmul %537, %538, %cst_209 {dimension_numbers = #tpu.dot_dimension_numbers<[1], [0], [0], [1], [0, 0, 1, 1], [], []>} : vector<2x256xf32>, vector<256x512xf32>, vector<2x512xf32> -> vector<2x512xf32>
    %540 = arith.addf %539, %2 : vector<2x512xf32>
    %541 = vector.extract_strided_slice %540 {offsets = [0, 0], sizes = [2, 128], strides = [1, 1]} : vector<2x512xf32> to vector<2x128xf32>
    %542 = arith.negf %541 : vector<2x128xf32>
    %543 = math.exp %542 : vector<2x128xf32>
    %cst_210 = arith.constant 1.000000e+00 : f32
    %544 = vector.broadcast %cst_210 : f32 to vector<2x128xf32>
    %545 = arith.addf %544, %543 : vector<2x128xf32>
    %546 = arith.divf %544, %545 : vector<2x128xf32>
    %547 = vector.extract_strided_slice %540 {offsets = [0, 128], sizes = [2, 128], strides = [1, 1]} : vector<2x512xf32> to vector<2x128xf32>
    %548 = arith.negf %547 : vector<2x128xf32>
    %549 = math.exp %548 : vector<2x128xf32>
    %cst_211 = arith.constant 1.000000e+00 : f32
    %550 = vector.broadcast %cst_211 : f32 to vector<2x128xf32>
    %551 = arith.addf %550, %549 : vector<2x128xf32>
    %552 = arith.divf %550, %551 : vector<2x128xf32>
    %553 = vector.extract_strided_slice %540 {offsets = [0, 256], sizes = [2, 128], strides = [1, 1]} : vector<2x512xf32> to vector<2x128xf32>
    %554 = math.tanh %553 : vector<2x128xf32>
    %555 = vector.extract_strided_slice %540 {offsets = [0, 384], sizes = [2, 128], strides = [1, 1]} : vector<2x512xf32> to vector<2x128xf32>
    %556 = arith.negf %555 : vector<2x128xf32>
    %557 = math.exp %556 : vector<2x128xf32>
    %cst_212 = arith.constant 1.000000e+00 : f32
    %558 = vector.broadcast %cst_212 : f32 to vector<2x128xf32>
    %559 = arith.addf %558, %557 : vector<2x128xf32>
    %560 = arith.divf %558, %559 : vector<2x128xf32>
    %561 = arith.mulf %552, %476 : vector<2x128xf32>
    %562 = arith.mulf %546, %554 : vector<2x128xf32>
    %563 = arith.addf %561, %562 : vector<2x128xf32>
    %564 = math.tanh %563 : vector<2x128xf32>
    %565 = arith.mulf %560, %564 : vector<2x128xf32>
    %566 = arith.index_cast %c6_i32 : i32 to index
    %c0_213 = arith.constant 0 : index
    %c0_214 = arith.constant 0 : index
    %567 = vector.load %arg8[%566, %c0_213, %c0_214] : memref<8x2x128xf32, #tpu.memory_space<vmem>>, vector<1x2x128xf32>
    %568 = vector.shape_cast %567 : vector<1x2x128xf32> to vector<2x128xf32>
    %c0_215 = arith.constant 0 : index
    %c0_216 = arith.constant 0 : index
    %569 = vector.load %arg5[%c0_215, %c0_216] : memref<128x128xf32, #tpu.memory_space<vmem>>, vector<128x128xf32>
    %cst_217 = arith.constant dense<0.000000e+00> : vector<2x128xf32>
    %570 = tpu.matmul %565, %569, %cst_217 {dimension_numbers = #tpu.dot_dimension_numbers<[1], [0], [0], [1], [0, 0, 1, 1], [], []>} : vector<2x128xf32>, vector<128x128xf32>, vector<2x128xf32> -> vector<2x128xf32>
    %571 = arith.addf %568, %570 : vector<2x128xf32>
    %572 = arith.index_cast %c6_i32 : i32 to index
    %c0_218 = arith.constant 0 : index
    %c0_219 = arith.constant 0 : index
    %573 = vector.load %arg8[%572, %c0_218, %c0_219] : memref<8x2x128xf32, #tpu.memory_space<vmem>>, vector<1x2x128xf32>
    %574 = vector.shape_cast %573 : vector<1x2x128xf32> to vector<2x128xf32>
    %575 = vector.shape_cast %571 : vector<2x128xf32> to vector<1x2x128xf32>
    tpu.vector_store %arg8[%572, %c0_218, %c0_219], %575 {strides = array<i32>} : memref<8x2x128xf32, #tpu.memory_space<vmem>>, vector<1x2x128xf32>,
    %c7_i32_220 = arith.constant 7 : i32
    %576 = arith.subi %c7_i32_220, %c6_i32 : i32
    %577 = arith.index_cast %576 : i32 to index
    %c0_221 = arith.constant 0 : index
    %c0_222 = arith.constant 0 : index
    %578 = vector.load %arg0[%577, %c0_221, %c0_222] : memref<8x2x128xf32, #tpu.memory_space<vmem>>, vector<1x2x128xf32>
    %579 = vector.shape_cast %578 : vector<1x2x128xf32> to vector<2x128xf32>
    %580 = tpu.concatenate %579, %521 in 1 : vector<2x128xf32>, vector<2x128xf32> -> vector<2x256xf32>
    %c0_223 = arith.constant 0 : index
    %c0_224 = arith.constant 0 : index
    %581 = vector.load %arg3[%c0_223, %c0_224] : memref<256x512xf32, #tpu.memory_space<vmem>>, vector<256x512xf32>
    %cst_225 = arith.constant dense<0.000000e+00> : vector<2x512xf32>
    %582 = tpu.matmul %580, %581, %cst_225 {dimension_numbers = #tpu.dot_dimension_numbers<[1], [0], [0], [1], [0, 0, 1, 1], [], []>} : vector<2x256xf32>, vector<256x512xf32>, vector<2x512xf32> -> vector<2x512xf32>
    %583 = arith.addf %582, %5 : vector<2x512xf32>
    %584 = vector.extract_strided_slice %583 {offsets = [0, 0], sizes = [2, 128], strides = [1, 1]} : vector<2x512xf32> to vector<2x128xf32>
    %585 = arith.negf %584 : vector<2x128xf32>
    %586 = math.exp %585 : vector<2x128xf32>
    %cst_226 = arith.constant 1.000000e+00 : f32
    %587 = vector.broadcast %cst_226 : f32 to vector<2x128xf32>
    %588 = arith.addf %587, %586 : vector<2x128xf32>
    %589 = arith.divf %587, %588 : vector<2x128xf32>
    %590 = vector.extract_strided_slice %583 {offsets = [0, 128], sizes = [2, 128], strides = [1, 1]} : vector<2x512xf32> to vector<2x128xf32>
    %591 = arith.negf %590 : vector<2x128xf32>
    %592 = math.exp %591 : vector<2x128xf32>
    %cst_227 = arith.constant 1.000000e+00 : f32
    %593 = vector.broadcast %cst_227 : f32 to vector<2x128xf32>
    %594 = arith.addf %593, %592 : vector<2x128xf32>
    %595 = arith.divf %593, %594 : vector<2x128xf32>
    %596 = vector.extract_strided_slice %583 {offsets = [0, 256], sizes = [2, 128], strides = [1, 1]} : vector<2x512xf32> to vector<2x128xf32>
    %597 = math.tanh %596 : vector<2x128xf32>
    %598 = vector.extract_strided_slice %583 {offsets = [0, 384], sizes = [2, 128], strides = [1, 1]} : vector<2x512xf32> to vector<2x128xf32>
    %599 = arith.negf %598 : vector<2x128xf32>
    %600 = math.exp %599 : vector<2x128xf32>
    %cst_228 = arith.constant 1.000000e+00 : f32
    %601 = vector.broadcast %cst_228 : f32 to vector<2x128xf32>
    %602 = arith.addf %601, %600 : vector<2x128xf32>
    %603 = arith.divf %601, %602 : vector<2x128xf32>
    %604 = arith.mulf %595, %519 : vector<2x128xf32>
    %605 = arith.mulf %589, %597 : vector<2x128xf32>
    %606 = arith.addf %604, %605 : vector<2x128xf32>
    %607 = math.tanh %606 : vector<2x128xf32>
    %608 = arith.mulf %603, %607 : vector<2x128xf32>
    %c7_i32_229 = arith.constant 7 : i32
    %609 = arith.subi %c7_i32_229, %c6_i32 : i32
    %610 = arith.index_cast %609 : i32 to index
    %c0_230 = arith.constant 0 : index
    %c0_231 = arith.constant 0 : index
    %611 = vector.load %arg8[%610, %c0_230, %c0_231] : memref<8x2x128xf32, #tpu.memory_space<vmem>>, vector<1x2x128xf32>
    %612 = vector.shape_cast %611 : vector<1x2x128xf32> to vector<2x128xf32>
    %c0_232 = arith.constant 0 : index
    %c0_233 = arith.constant 0 : index
    %613 = vector.load %arg6[%c0_232, %c0_233] : memref<128x128xf32, #tpu.memory_space<vmem>>, vector<128x128xf32>
    %cst_234 = arith.constant dense<0.000000e+00> : vector<2x128xf32>
    %614 = tpu.matmul %608, %613, %cst_234 {dimension_numbers = #tpu.dot_dimension_numbers<[1], [0], [0], [1], [0, 0, 1, 1], [], []>} : vector<2x128xf32>, vector<128x128xf32>, vector<2x128xf32> -> vector<2x128xf32>
    %615 = arith.addf %612, %614 : vector<2x128xf32>
    %c7_i32_235 = arith.constant 7 : i32
    %616 = arith.subi %c7_i32_235, %c6_i32 : i32
    %617 = arith.index_cast %616 : i32 to index
    %c0_236 = arith.constant 0 : index
    %c0_237 = arith.constant 0 : index
    %618 = vector.load %arg8[%617, %c0_236, %c0_237] : memref<8x2x128xf32, #tpu.memory_space<vmem>>, vector<1x2x128xf32>
    %619 = vector.shape_cast %618 : vector<1x2x128xf32> to vector<2x128xf32>
    %620 = vector.shape_cast %615 : vector<2x128xf32> to vector<1x2x128xf32>
    tpu.vector_store %arg8[%617, %c0_236, %c0_237], %620 {strides = array<i32>} : memref<8x2x128xf32, #tpu.memory_space<vmem>>, vector<1x2x128xf32>,
    %c7_i32_238 = arith.constant 7 : i32
    %621 = arith.index_cast %c7_i32_238 : i32 to index
    %c0_239 = arith.constant 0 : index
    %c0_240 = arith.constant 0 : index
    %622 = vector.load %arg0[%621, %c0_239, %c0_240] : memref<8x2x128xf32, #tpu.memory_space<vmem>>, vector<1x2x128xf32>
    %623 = vector.shape_cast %622 : vector<1x2x128xf32> to vector<2x128xf32>
    %624 = tpu.concatenate %623, %565 in 1 : vector<2x128xf32>, vector<2x128xf32> -> vector<2x256xf32>
    %c0_241 = arith.constant 0 : index
    %c0_242 = arith.constant 0 : index
    %625 = vector.load %arg1[%c0_241, %c0_242] : memref<256x512xf32, #tpu.memory_space<vmem>>, vector<256x512xf32>
    %cst_243 = arith.constant dense<0.000000e+00> : vector<2x512xf32>
    %626 = tpu.matmul %624, %625, %cst_243 {dimension_numbers = #tpu.dot_dimension_numbers<[1], [0], [0], [1], [0, 0, 1, 1], [], []>} : vector<2x256xf32>, vector<256x512xf32>, vector<2x512xf32> -> vector<2x512xf32>
    %627 = arith.addf %626, %2 : vector<2x512xf32>
    %628 = vector.extract_strided_slice %627 {offsets = [0, 0], sizes = [2, 128], strides = [1, 1]} : vector<2x512xf32> to vector<2x128xf32>
    %629 = arith.negf %628 : vector<2x128xf32>
    %630 = math.exp %629 : vector<2x128xf32>
    %cst_244 = arith.constant 1.000000e+00 : f32
    %631 = vector.broadcast %cst_244 : f32 to vector<2x128xf32>
    %632 = arith.addf %631, %630 : vector<2x128xf32>
    %633 = arith.divf %631, %632 : vector<2x128xf32>
    %634 = vector.extract_strided_slice %627 {offsets = [0, 128], sizes = [2, 128], strides = [1, 1]} : vector<2x512xf32> to vector<2x128xf32>
    %635 = arith.negf %634 : vector<2x128xf32>
    %636 = math.exp %635 : vector<2x128xf32>
    %cst_245 = arith.constant 1.000000e+00 : f32
    %637 = vector.broadcast %cst_245 : f32 to vector<2x128xf32>
    %638 = arith.addf %637, %636 : vector<2x128xf32>
    %639 = arith.divf %637, %638 : vector<2x128xf32>
    %640 = vector.extract_strided_slice %627 {offsets = [0, 256], sizes = [2, 128], strides = [1, 1]} : vector<2x512xf32> to vector<2x128xf32>
    %641 = math.tanh %640 : vector<2x128xf32>
    %642 = vector.extract_strided_slice %627 {offsets = [0, 384], sizes = [2, 128], strides = [1, 1]} : vector<2x512xf32> to vector<2x128xf32>
    %643 = arith.negf %642 : vector<2x128xf32>
    %644 = math.exp %643 : vector<2x128xf32>
    %cst_246 = arith.constant 1.000000e+00 : f32
    %645 = vector.broadcast %cst_246 : f32 to vector<2x128xf32>
    %646 = arith.addf %645, %644 : vector<2x128xf32>
    %647 = arith.divf %645, %646 : vector<2x128xf32>
    %648 = arith.mulf %639, %563 : vector<2x128xf32>
    %649 = arith.mulf %633, %641 : vector<2x128xf32>
    %650 = arith.addf %648, %649 : vector<2x128xf32>
    %651 = math.tanh %650 : vector<2x128xf32>
    %652 = arith.mulf %647, %651 : vector<2x128xf32>
    %653 = arith.index_cast %c7_i32_238 : i32 to index
    %c0_247 = arith.constant 0 : index
    %c0_248 = arith.constant 0 : index
    %654 = vector.load %arg8[%653, %c0_247, %c0_248] : memref<8x2x128xf32, #tpu.memory_space<vmem>>, vector<1x2x128xf32>
    %655 = vector.shape_cast %654 : vector<1x2x128xf32> to vector<2x128xf32>
    %c0_249 = arith.constant 0 : index
    %c0_250 = arith.constant 0 : index
    %656 = vector.load %arg5[%c0_249, %c0_250] : memref<128x128xf32, #tpu.memory_space<vmem>>, vector<128x128xf32>
    %cst_251 = arith.constant dense<0.000000e+00> : vector<2x128xf32>
    %657 = tpu.matmul %652, %656, %cst_251 {dimension_numbers = #tpu.dot_dimension_numbers<[1], [0], [0], [1], [0, 0, 1, 1], [], []>} : vector<2x128xf32>, vector<128x128xf32>, vector<2x128xf32> -> vector<2x128xf32>
    %658 = arith.addf %655, %657 : vector<2x128xf32>
    %659 = arith.index_cast %c7_i32_238 : i32 to index
    %c0_252 = arith.constant 0 : index
    %c0_253 = arith.constant 0 : index
    %660 = vector.load %arg8[%659, %c0_252, %c0_253] : memref<8x2x128xf32, #tpu.memory_space<vmem>>, vector<1x2x128xf32>
    %661 = vector.shape_cast %660 : vector<1x2x128xf32> to vector<2x128xf32>
    %662 = vector.shape_cast %658 : vector<2x128xf32> to vector<1x2x128xf32>
    tpu.vector_store %arg8[%659, %c0_252, %c0_253], %662 {strides = array<i32>} : memref<8x2x128xf32, #tpu.memory_space<vmem>>, vector<1x2x128xf32>,
    %c7_i32_254 = arith.constant 7 : i32
    %663 = arith.subi %c7_i32_254, %c7_i32_238 : i32
    %664 = arith.index_cast %663 : i32 to index
    %c0_255 = arith.constant 0 : index
    %c0_256 = arith.constant 0 : index
    %665 = vector.load %arg0[%664, %c0_255, %c0_256] : memref<8x2x128xf32, #tpu.memory_space<vmem>>, vector<1x2x128xf32>
    %666 = vector.shape_cast %665 : vector<1x2x128xf32> to vector<2x128xf32>
    %667 = tpu.concatenate %666, %608 in 1 : vector<2x128xf32>, vector<2x128xf32> -> vector<2x256xf32>
    %c0_257 = arith.constant 0 : index
    %c0_258 = arith.constant 0 : index
    %668 = vector.load %arg3[%c0_257, %c0_258] : memref<256x512xf32, #tpu.memory_space<vmem>>, vector<256x512xf32>
    %cst_259 = arith.constant dense<0.000000e+00> : vector<2x512xf32>
    %669 = tpu.matmul %667, %668, %cst_259 {dimension_numbers = #tpu.dot_dimension_numbers<[1], [0], [0], [1], [0, 0, 1, 1], [], []>} : vector<2x256xf32>, vector<256x512xf32>, vector<2x512xf32> -> vector<2x512xf32>
    %670 = arith.addf %669, %5 : vector<2x512xf32>
    %671 = vector.extract_strided_slice %670 {offsets = [0, 0], sizes = [2, 128], strides = [1, 1]} : vector<2x512xf32> to vector<2x128xf32>
    %672 = arith.negf %671 : vector<2x128xf32>
    %673 = math.exp %672 : vector<2x128xf32>
    %cst_260 = arith.constant 1.000000e+00 : f32
    %674 = vector.broadcast %cst_260 : f32 to vector<2x128xf32>
    %675 = arith.addf %674, %673 : vector<2x128xf32>
    %676 = arith.divf %674, %675 : vector<2x128xf32>
    %677 = vector.extract_strided_slice %670 {offsets = [0, 128], sizes = [2, 128], strides = [1, 1]} : vector<2x512xf32> to vector<2x128xf32>
    %678 = arith.negf %677 : vector<2x128xf32>
    %679 = math.exp %678 : vector<2x128xf32>
    %cst_261 = arith.constant 1.000000e+00 : f32
    %680 = vector.broadcast %cst_261 : f32 to vector<2x128xf32>
    %681 = arith.addf %680, %679 : vector<2x128xf32>
    %682 = arith.divf %680, %681 : vector<2x128xf32>
    %683 = vector.extract_strided_slice %670 {offsets = [0, 256], sizes = [2, 128], strides = [1, 1]} : vector<2x512xf32> to vector<2x128xf32>
    %684 = math.tanh %683 : vector<2x128xf32>
    %685 = vector.extract_strided_slice %670 {offsets = [0, 384], sizes = [2, 128], strides = [1, 1]} : vector<2x512xf32> to vector<2x128xf32>
    %686 = arith.negf %685 : vector<2x128xf32>
    %687 = math.exp %686 : vector<2x128xf32>
    %cst_262 = arith.constant 1.000000e+00 : f32
    %688 = vector.broadcast %cst_262 : f32 to vector<2x128xf32>
    %689 = arith.addf %688, %687 : vector<2x128xf32>
    %690 = arith.divf %688, %689 : vector<2x128xf32>
    %691 = arith.mulf %682, %606 : vector<2x128xf32>
    %692 = arith.mulf %676, %684 : vector<2x128xf32>
    %693 = arith.addf %691, %692 : vector<2x128xf32>
    %694 = math.tanh %693 : vector<2x128xf32>
    %695 = arith.mulf %690, %694 : vector<2x128xf32>
    %c7_i32_263 = arith.constant 7 : i32
    %696 = arith.subi %c7_i32_263, %c7_i32_238 : i32
    %697 = arith.index_cast %696 : i32 to index
    %c0_264 = arith.constant 0 : index
    %c0_265 = arith.constant 0 : index
    %698 = vector.load %arg8[%697, %c0_264, %c0_265] : memref<8x2x128xf32, #tpu.memory_space<vmem>>, vector<1x2x128xf32>
    %699 = vector.shape_cast %698 : vector<1x2x128xf32> to vector<2x128xf32>
    %c0_266 = arith.constant 0 : index
    %c0_267 = arith.constant 0 : index
    %700 = vector.load %arg6[%c0_266, %c0_267] : memref<128x128xf32, #tpu.memory_space<vmem>>, vector<128x128xf32>
    %cst_268 = arith.constant dense<0.000000e+00> : vector<2x128xf32>
    %701 = tpu.matmul %695, %700, %cst_268 {dimension_numbers = #tpu.dot_dimension_numbers<[1], [0], [0], [1], [0, 0, 1, 1], [], []>} : vector<2x128xf32>, vector<128x128xf32>, vector<2x128xf32> -> vector<2x128xf32>
    %702 = arith.addf %699, %701 : vector<2x128xf32>
    %c7_i32_269 = arith.constant 7 : i32
    %703 = arith.subi %c7_i32_269, %c7_i32_238 : i32
    %704 = arith.index_cast %703 : i32 to index
    %c0_270 = arith.constant 0 : index
    %c0_271 = arith.constant 0 : index
    %705 = vector.load %arg8[%704, %c0_270, %c0_271] : memref<8x2x128xf32, #tpu.memory_space<vmem>>, vector<1x2x128xf32>
    %706 = vector.shape_cast %705 : vector<1x2x128xf32> to vector<2x128xf32>
    %707 = vector.shape_cast %702 : vector<2x128xf32> to vector<1x2x128xf32>
    tpu.vector_store %arg8[%704, %c0_270, %c0_271], %707 {strides = array<i32>} : memref<8x2x128xf32, #tpu.memory_space<vmem>>, vector<1x2x128xf32>,
    %c8_i32 = arith.constant 8 : i32
    return
  }
}

</mosaic_0001>

<llo_original>
// kernel: tpu_custom_call.1
$region0: #{tpu_custom_call.1}
  #allocation0 [shape = 'u32[]', space=smem, size = 0x4, offset = 0x4, fixed_abs, tag = 'smem constant byte address 0x4 - core index']
  #allocation1 [shape = 'u32[144,128]{1,0:T(1,128)}', space=vmem, size = 0x12000, scoped, tag = 'internal scratch']
  %s0 = inlined_call_operand.hbm [shape: f32[8,2,128], index: 0, kind: input, shape index: {}]
  %s1 = inlined_call_operand.hbm [shape: f32[256,512], index: 1, kind: input, shape index: {}]
  %s2 = inlined_call_operand.hbm [shape: f32[1,512], index: 2, kind: input, shape index: {}]
  %s3 = inlined_call_operand.hbm [shape: f32[256,512], index: 3, kind: input, shape index: {}]
  %s4 = inlined_call_operand.vmem [shape: f32[1,512], index: 4, kind: input, shape index: {}]
  %s5 = inlined_call_operand.hbm [shape: f32[128,128], index: 5, kind: input, shape index: {}]
  %s6 = inlined_call_operand.hbm [shape: f32[128,128], index: 6, kind: input, shape index: {}]
  %s7 = inlined_call_operand.vmem [shape: f32[1,128], index: 7, kind: input, shape index: {}]
  %s8 = inlined_call_operand.hbm [shape: f32[8,2,128], index: 8, kind: output, shape index: {}]
  %s9 = sld [smem:[#allocation0]]
  $region66: #{tpu_custom_call.1} parent=0
    _
  %s11 = ssub.s32 1, %s9
  %s12 = scalar_select 0, %s11, %s9
  $region1: #{tpu_custom_call.1} parent=0
    #allocation2 [shape = 'u8[8192]{0}', space=vmem, size = 0x2000, scoped, tag = 'input window, operand 0, single buffered']
    #allocation3 [shape = 's32[1]{0}', space=sflag, size = 0x4, scoped, tag = 'scoped memory for tpu_custom_call.1']
    #allocation4 [shape = 's32[1]{0}', space=sflag, size = 0x4, scoped, tag = 'scoped memory for tpu_custom_call.1']
    #allocation5 [shape = 'u8[524288]{0}', space=vmem, size = 0x80000, scoped, tag = 'input window, operand 1, single buffered']
    #allocation6 [shape = 's32[1]{0}', space=sflag, size = 0x4, scoped, tag = 'scoped memory for tpu_custom_call.1']
    #allocation7 [shape = 'u8[2048]{0}', space=vmem, size = 0x800, scoped, tag = 'input window, operand 2, single buffered']
    #allocation8 [shape = 'u8[524288]{0}', space=vmem, size = 0x80000, scoped, tag = 'input window, operand 3, single buffered']
    #allocation9 [shape = 's32[1]{0}', space=sflag, size = 0x4, scoped, tag = 'scoped memory for tpu_custom_call.1']
    #allocation10 [shape = 'u8[65536]{0}', space=vmem, size = 0x10000, scoped, tag = 'input window, operand 5, single buffered']
    #allocation11 [shape = 'u8[65536]{0}', space=vmem, size = 0x10000, scoped, tag = 'input window, operand 6, single buffered']
    #allocation12 [shape = 's32[1]{0}', space=sflag, size = 0x4, scoped, tag = 'scoped memory for tpu_custom_call.1']
    #allocation13 [shape = 'u8[8192]{0}', space=vmem, size = 0x2000, scoped, tag = 'output window, operand 0, single buffered']
    %13 = vsyncpa [#allocation3], 0
    %14 = vsyncpa [#allocation6], 0
    %15 = vsyncpa [#allocation9], 0
    %16 = vsyncpa [#allocation12], 0
    %17 = vsyncpa [#allocation4], 0
    // Predicated region
    $region2: #{tpu_custom_call.1} parent=1 // pred_check
      _
    $region3: #{tpu_custom_call.1} parent=1 // pred_check_branch
      %19 = sbr.rel (0) target = $region5
    $region4: #{tpu_custom_call.1} parent=1 // pred_region
      %s21 = ssub.s32 256, 256
      %22 = vsyncadd [#allocation3], %s21
      %s23 = sshll.u32 [#allocation2], 4
      %s24 = int_to_ptr.vmem [resolvable:$true] %s23
      %29 = dma.hbm_to_vmem [thread:$0]  %s0, 256, %s24, [#allocation3], 32, 32, 2
    $region5: #{tpu_custom_call.1} parent=1 // pred_fallthru
      _
    // Predicated region
    $region6: #{tpu_custom_call.1} parent=1 // pred_check
      _
    $region7: #{tpu_custom_call.1} parent=1 // pred_check_branch
      %31 = sbr.rel (0) target = $region9
    $region8: #{tpu_custom_call.1} parent=1 // pred_region
      %s33 = ssub.s32 16384, 16384
      %34 = vsyncadd [#allocation6], %s33
      %s35 = sshll.u32 [#allocation5], 4
      %s36 = int_to_ptr.vmem [resolvable:$true] %s35
      %41 = dma.hbm_to_vmem [thread:$0]  %s1, 16384, %s36, [#allocation6], 512, 512, 32
    $region9: #{tpu_custom_call.1} parent=1 // pred_fallthru
      _
    // Predicated region
    $region10: #{tpu_custom_call.1} parent=1 // pred_check
      _
    $region11: #{tpu_custom_call.1} parent=1 // pred_check_branch
      %43 = sbr.rel (0) target = $region13
    $region12: #{tpu_custom_call.1} parent=1 // pred_region
      %s45 = ssub.s32 64, 64
      %46 = vsyncadd [#allocation6], %s45
      %s48 = sshll.u32 [#allocation7], 4
      %s49 = int_to_ptr.vmem [resolvable:$true] %s48
      %51 = dma.hbm_to_vmem [thread:$0]  %s2, 64, %s49, [#allocation6]
    $region13: #{tpu_custom_call.1} parent=1 // pred_fallthru
      _
    // Predicated region
    $region14: #{tpu_custom_call.1} parent=1 // pred_check
      _
    $region15: #{tpu_custom_call.1} parent=1 // pred_check_branch
      %53 = sbr.rel (0) target = $region17
    $region16: #{tpu_custom_call.1} parent=1 // pred_region
      %s55 = ssub.s32 16384, 16384
      %56 = vsyncadd [#allocation9], %s55
      %s57 = sshll.u32 [#allocation8], 4
      %s58 = int_to_ptr.vmem [resolvable:$true] %s57
      %63 = dma.hbm_to_vmem [thread:$0]  %s3, 16384, %s58, [#allocation9], 512, 512, 32
    $region17: #{tpu_custom_call.1} parent=1 // pred_fallthru
      _
    // Predicated region
    $region18: #{tpu_custom_call.1} parent=1 // pred_check
      _
    $region19: #{tpu_custom_call.1} parent=1 // pred_check_branch
      %65 = sbr.rel (0) target = $region21
    $region20: #{tpu_custom_call.1} parent=1 // pred_region
      _
    $region21: #{tpu_custom_call.1} parent=1 // pred_fallthru
      _
    // Predicated region
    $region22: #{tpu_custom_call.1} parent=1 // pred_check
      _
    $region23: #{tpu_custom_call.1} parent=1 // pred_check_branch
      %67 = sbr.rel (0) target = $region25
    $region24: #{tpu_custom_call.1} parent=1 // pred_region
      %s69 = ssub.s32 2048, 2048
      %70 = vsyncadd [#allocation9], %s69
      %s71 = sshll.u32 [#allocation10], 4
      %s72 = int_to_ptr.vmem [resolvable:$true] %s71
      %77 = dma.hbm_to_vmem [thread:$0]  %s5, 2048, %s72, [#allocation9], 128, 128, 8
    $region25: #{tpu_custom_call.1} parent=1 // pred_fallthru
      _
    // Predicated region
    $region26: #{tpu_custom_call.1} parent=1 // pred_check
      _
    $region27: #{tpu_custom_call.1} parent=1 // pred_check_branch
      %79 = sbr.rel (0) target = $region29
    $region28: #{tpu_custom_call.1} parent=1 // pred_region
      %s81 = ssub.s32 2048, 2048
      %82 = vsyncadd [#allocation12], %s81
      %s83 = sshll.u32 [#allocation11], 4
      %s84 = int_to_ptr.vmem [resolvable:$true] %s83
      %89 = dma.hbm_to_vmem [thread:$0]  %s6, 2048, %s84, [#allocation12], 128, 128, 8
    $region29: #{tpu_custom_call.1} parent=1 // pred_fallthru
      _
    // Predicated region
    $region30: #{tpu_custom_call.1} parent=1 // pred_check
      _
    $region31: #{tpu_custom_call.1} parent=1 // pred_check_branch
      %91 = sbr.rel (0) target = $region33
    $region32: #{tpu_custom_call.1} parent=1 // pred_region
      _
    $region33: #{tpu_custom_call.1} parent=1 // pred_fallthru
      _
    // Predicated region
    $region34: #{tpu_custom_call.1} parent=1 // pred_check
      _
    $region35: #{tpu_custom_call.1} parent=1 // pred_check_branch
      %93 = sbr.rel (0) target = $region37
    $region36: #{tpu_custom_call.1} parent=1 // pred_region
      %94 = dma.done [#allocation3], 256
    $region37: #{tpu_custom_call.1} parent=1 // pred_fallthru
      _
    // Predicated region
    $region38: #{tpu_custom_call.1} parent=1 // pred_check
      _
    $region39: #{tpu_custom_call.1} parent=1 // pred_check_branch
      %96 = sbr.rel (0) target = $region41
    $region40: #{tpu_custom_call.1} parent=1 // pred_region
      %97 = dma.done [#allocation6], 16384
    $region41: #{tpu_custom_call.1} parent=1 // pred_fallthru
      _
    // Predicated region
    $region42: #{tpu_custom_call.1} parent=1 // pred_check
      _
    $region43: #{tpu_custom_call.1} parent=1 // pred_check_branch
      %99 = sbr.rel (0) target = $region45
    $region44: #{tpu_custom_call.1} parent=1 // pred_region
      %100 = dma.done [#allocation6], 64
    $region45: #{tpu_custom_call.1} parent=1 // pred_fallthru
      _
    // Predicated region
    $region46: #{tpu_custom_call.1} parent=1 // pred_check
      _
    $region47: #{tpu_custom_call.1} parent=1 // pred_check_branch
      %102 = sbr.rel (0) target = $region49
    $region48: #{tpu_custom_call.1} parent=1 // pred_region
      %103 = dma.done [#allocation9], 16384
    $region49: #{tpu_custom_call.1} parent=1 // pred_fallthru
      _
    // Predicated region
    $region50: #{tpu_custom_call.1} parent=1 // pred_check
      _
    $region51: #{tpu_custom_call.1} parent=1 // pred_check_branch
      %105 = sbr.rel (0) target = $region53
    $region52: #{tpu_custom_call.1} parent=1 // pred_region
      %106 = dma.done [#allocation9], 2048
    $region53: #{tpu_custom_call.1} parent=1 // pred_fallthru
      _
    // Predicated region
    $region54: #{tpu_custom_call.1} parent=1 // pred_check
      _
    $region55: #{tpu_custom_call.1} parent=1 // pred_check_branch
      %108 = sbr.rel (0) target = $region57
    $region56: #{tpu_custom_call.1} parent=1 // pred_region
      %109 = dma.done [#allocation12], 2048
    $region57: #{tpu_custom_call.1} parent=1 // pred_fallthru
      _
    %v110 = vld [vmem:[#allocation7] sm:$0xf]
    %v112 = vlaneseq
    %v113 = vshrl.u32 %v112, 7
    %v114 = vsub.s32 0, %v113
    %v115 = vrot.slane %v110, %v114
    %v116 = vlaneseq
    %v117 = vshrl.u32 %v116, 7
    %v118 = vsub.s32 1, %v117
    %v119 = vrot.slane %v110, %v118
    %v120 = vlaneseq
    %v121 = vshrl.u32 %v120, 7
    %v122 = vsub.s32 2, %v121
    %v123 = vrot.slane %v110, %v122
    %v124 = vlaneseq
    %v125 = vshrl.u32 %v124, 7
    %v126 = vsub.s32 3, %v125
    %v127 = vrot.slane %v110, %v126
    %v132 = vld [vmem:[%s4] sm:$0xf]
    %v134 = vlaneseq
    %v135 = vshrl.u32 %v134, 7
    %v136 = vsub.s32 0, %v135
    %v137 = vrot.slane %v132, %v136
    %v138 = vlaneseq
    %v139 = vshrl.u32 %v138, 7
    %v140 = vsub.s32 1, %v139
    %v141 = vrot.slane %v132, %v140
    %v142 = vlaneseq
    %v143 = vshrl.u32 %v142, 7
    %v144 = vsub.s32 2, %v143
    %v145 = vrot.slane %v132, %v144
    %v146 = vlaneseq
    %v147 = vshrl.u32 %v146, 7
    %v148 = vsub.s32 3, %v147
    %v149 = vrot.slane %v132, %v148
    %v154 = vld [vmem:[%s7] sm:$0x1]
    %v156 = vlaneseq
    %v157 = vshrl.u32 %v156, 7
    %v158 = vsub.s32 0, %v157
    %v159 = vrot.slane %v154, %v158
    %161 = vst [vmem:[#allocation13] sm:$0x3] %v159
    %162 = vst [vmem:[#allocation13 + $0x2] sm:$0x3] %v159
    %163 = vst [vmem:[#allocation13 + $0x4] sm:$0x3] %v159
    %164 = vst [vmem:[#allocation13 + $0x6] sm:$0x3] %v159
    %165 = vst [vmem:[#allocation13 + $0x8] sm:$0x3] %v159
    %166 = vst [vmem:[#allocation13 + $0xa] sm:$0x3] %v159
    %167 = vst [vmem:[#allocation13 + $0xc] sm:$0x3] %v159
    %168 = vst [vmem:[#allocation13 + $0xe] sm:$0x3] %v159
    %v169 = vld [vmem:[#allocation2] sm:$0x3]
    %v170 = vld [vmem:[#allocation5] sm:$0xff]
    %v171 = vld [vmem:[#allocation5 + $0x8] sm:$0xff]
    %v172 = vld [vmem:[#allocation5 + $0x10] sm:$0xff]
    %v173 = vld [vmem:[#allocation5 + $0x18] sm:$0xff]
    %v174 = vld [vmem:[#allocation5 + $0x20] sm:$0xff]
    %v175 = vld [vmem:[#allocation5 + $0x28] sm:$0xff]
    %v176 = vld [vmem:[#allocation5 + $0x30] sm:$0xff]
    %v177 = vld [vmem:[#allocation5 + $0x38] sm:$0xff]
    %v178 = vld [vmem:[#allocation5 + $0x40] sm:$0xff]
    %v179 = vld [vmem:[#allocation5 + $0x48] sm:$0xff]
    %v180 = vld [vmem:[#allocation5 + $0x50] sm:$0xff]
    %v181 = vld [vmem:[#allocation5 + $0x58] sm:$0xff]
    %v182 = vld [vmem:[#allocation5 + $0x60] sm:$0xff]
    %v183 = vld [vmem:[#allocation5 + $0x68] sm:$0xff]
    %v184 = vld [vmem:[#allocation5 + $0x70] sm:$0xff]
    %v185 = vld [vmem:[#allocation5 + $0x78] sm:$0xff]
    %v186 = vld [vmem:[#allocation5 + $0x80] sm:$0xff]
    %v187 = vld [vmem:[#allocation5 + $0x88] sm:$0xff]
    %v188 = vld [vmem:[#allocation5 + $0x90] sm:$0xff]
    %v189 = vld [vmem:[#allocation5 + $0x98] sm:$0xff]
    %v190 = vld [vmem:[#allocation5 + $0xa0] sm:$0xff]
    %v191 = vld [vmem:[#allocation5 + $0xa8] sm:$0xff]
    %v192 = vld [vmem:[#allocation5 + $0xb0] sm:$0xff]
    %v193 = vld [vmem:[#allocation5 + $0xb8] sm:$0xff]
    %v194 = vld [vmem:[#allocation5 + $0xc0] sm:$0xff]
    %v195 = vld [vmem:[#allocation5 + $0xc8] sm:$0xff]
    %v196 = vld [vmem:[#allocation5 + $0xd0] sm:$0xff]
    %v197 = vld [vmem:[#allocation5 + $0xd8] sm:$0xff]
    %v198 = vld [vmem:[#allocation5 + $0xe0] sm:$0xff]
    %v199 = vld [vmem:[#allocation5 + $0xe8] sm:$0xff]
    %v200 = vld [vmem:[#allocation5 + $0xf0] sm:$0xff]
    %v201 = vld [vmem:[#allocation5 + $0xf8] sm:$0xff]
    %v202 = vld [vmem:[#allocation5 + $0x100] sm:$0xff]
    %v203 = vld [vmem:[#allocation5 + $0x108] sm:$0xff]
    %v204 = vld [vmem:[#allocation5 + $0x110] sm:$0xff]
    %v205 = vld [vmem:[#allocation5 + $0x118] sm:$0xff]
    %v206 = vld [vmem:[#allocation5 + $0x120] sm:$0xff]
    %v207 = vld [vmem:[#allocation5 + $0x128] sm:$0xff]
    %v208 = vld [vmem:[#allocation5 + $0x130] sm:$0xff]
    %v209 = vld [vmem:[#allocation5 + $0x138] sm:$0xff]
    %v210 = vld [vmem:[#allocation5 + $0x140] sm:$0xff]
    %v211 = vld [vmem:[#allocation5 + $0x148] sm:$0xff]
    %v212 = vld [vmem:[#allocation5 + $0x150] sm:$0xff]
    %v213 = vld [vmem:[#allocation5 + $0x158] sm:$0xff]
    %v214 = vld [vmem:[#allocation5 + $0x160] sm:$0xff]
    %v215 = vld [vmem:[#allocation5 + $0x168] sm:$0xff]
    %v216 = vld [vmem:[#allocation5 + $0x170] sm:$0xff]
    %v217 = vld [vmem:[#allocation5 + $0x178] sm:$0xff]
    %v218 = vld [vmem:[#allocation5 + $0x180] sm:$0xff]
    %v219 = vld [vmem:[#allocation5 + $0x188] sm:$0xff]
    %v220 = vld [vmem:[#allocation5 + $0x190] sm:$0xff]
    %v221 = vld [vmem:[#allocation5 + $0x198] sm:$0xff]
    %v222 = vld [vmem:[#allocation5 + $0x1a0] sm:$0xff]
    %v223 = vld [vmem:[#allocation5 + $0x1a8] sm:$0xff]
    %v224 = vld [vmem:[#allocation5 + $0x1b0] sm:$0xff]
    %v225 = vld [vmem:[#allocation5 + $0x1b8] sm:$0xff]
    %v226 = vld [vmem:[#allocation5 + $0x1c0] sm:$0xff]
    %v227 = vld [vmem:[#allocation5 + $0x1c8] sm:$0xff]
    %v228 = vld [vmem:[#allocation5 + $0x1d0] sm:$0xff]
    %v229 = vld [vmem:[#allocation5 + $0x1d8] sm:$0xff]
    %v230 = vld [vmem:[#allocation5 + $0x1e0] sm:$0xff]
    %v231 = vld [vmem:[#allocation5 + $0x1e8] sm:$0xff]
    %v232 = vld [vmem:[#allocation5 + $0x1f0] sm:$0xff]
    %v233 = vld [vmem:[#allocation5 + $0x1f8] sm:$0xff]
    %v234 = vld [vmem:[#allocation5 + $0x200] sm:$0xff]
    %v235 = vld [vmem:[#allocation5 + $0x208] sm:$0xff]
    %v236 = vld [vmem:[#allocation5 + $0x210] sm:$0xff]
    %v237 = vld [vmem:[#allocation5 + $0x218] sm:$0xff]
    %v238 = vld [vmem:[#allocation5 + $0x220] sm:$0xff]
    %v239 = vld [vmem:[#allocation5 + $0x228] sm:$0xff]
    %v240 = vld [vmem:[#allocation5 + $0x230] sm:$0xff]
    %v241 = vld [vmem:[#allocation5 + $0x238] sm:$0xff]
    %v242 = vld [vmem:[#allocation5 + $0x240] sm:$0xff]
    %v243 = vld [vmem:[#allocation5 + $0x248] sm:$0xff]
    %v244 = vld [vmem:[#allocation5 + $0x250] sm:$0xff]
    %v245 = vld [vmem:[#allocation5 + $0x258] sm:$0xff]
    %v246 = vld [vmem:[#allocation5 + $0x260] sm:$0xff]
    %v247 = vld [vmem:[#allocation5 + $0x268] sm:$0xff]
    %v248 = vld [vmem:[#allocation5 + $0x270] sm:$0xff]
    %v249 = vld [vmem:[#allocation5 + $0x278] sm:$0xff]
    %v250 = vld [vmem:[#allocation5 + $0x280] sm:$0xff]
    %v251 = vld [vmem:[#allocation5 + $0x288] sm:$0xff]
    %v252 = vld [vmem:[#allocation5 + $0x290] sm:$0xff]
    %v253 = vld [vmem:[#allocation5 + $0x298] sm:$0xff]
    %v254 = vld [vmem:[#allocation5 + $0x2a0] sm:$0xff]
    %v255 = vld [vmem:[#allocation5 + $0x2a8] sm:$0xff]
    %v256 = vld [vmem:[#allocation5 + $0x2b0] sm:$0xff]
    %v257 = vld [vmem:[#allocation5 + $0x2b8] sm:$0xff]
    %v258 = vld [vmem:[#allocation5 + $0x2c0] sm:$0xff]
    %v259 = vld [vmem:[#allocation5 + $0x2c8] sm:$0xff]
    %v260 = vld [vmem:[#allocation5 + $0x2d0] sm:$0xff]
    %v261 = vld [vmem:[#allocation5 + $0x2d8] sm:$0xff]
    %v262 = vld [vmem:[#allocation5 + $0x2e0] sm:$0xff]
    %v263 = vld [vmem:[#allocation5 + $0x2e8] sm:$0xff]
    %v264 = vld [vmem:[#allocation5 + $0x2f0] sm:$0xff]
    %v265 = vld [vmem:[#allocation5 + $0x2f8] sm:$0xff]
    %v266 = vld [vmem:[#allocation5 + $0x300] sm:$0xff]
    %v267 = vld [vmem:[#allocation5 + $0x308] sm:$0xff]
    %v268 = vld [vmem:[#allocation5 + $0x310] sm:$0xff]
    %v269 = vld [vmem:[#allocation5 + $0x318] sm:$0xff]
    %v270 = vld [vmem:[#allocation5 + $0x320] sm:$0xff]
    %v271 = vld [vmem:[#allocation5 + $0x328] sm:$0xff]
    %v272 = vld [vmem:[#allocation5 + $0x330] sm:$0xff]
    %v273 = vld [vmem:[#allocation5 + $0x338] sm:$0xff]
    %v274 = vld [vmem:[#allocation5 + $0x340] sm:$0xff]
    %v275 = vld [vmem:[#allocation5 + $0x348] sm:$0xff]
    %v276 = vld [vmem:[#allocation5 + $0x350] sm:$0xff]
    %v277 = vld [vmem:[#allocation5 + $0x358] sm:$0xff]
    %v278 = vld [vmem:[#allocation5 + $0x360] sm:$0xff]
    %v279 = vld [vmem:[#allocation5 + $0x368] sm:$0xff]
    %v280 = vld [vmem:[#allocation5 + $0x370] sm:$0xff]
    %v281 = vld [vmem:[#allocation5 + $0x378] sm:$0xff]
    %v282 = vld [vmem:[#allocation5 + $0x380] sm:$0xff]
    %v283 = vld [vmem:[#allocation5 + $0x388] sm:$0xff]
    %v284 = vld [vmem:[#allocation5 + $0x390] sm:$0xff]
    %v285 = vld [vmem:[#allocation5 + $0x398] sm:$0xff]
    %v286 = vld [vmem:[#allocation5 + $0x3a0] sm:$0xff]
    %v287 = vld [vmem:[#allocation5 + $0x3a8] sm:$0xff]
    %v288 = vld [vmem:[#allocation5 + $0x3b0] sm:$0xff]
    %v289 = vld [vmem:[#allocation5 + $0x3b8] sm:$0xff]
    %v290 = vld [vmem:[#allocation5 + $0x3c0] sm:$0xff]
    %v291 = vld [vmem:[#allocation5 + $0x3c8] sm:$0xff]
    %v292 = vld [vmem:[#allocation5 + $0x3d0] sm:$0xff]
    %v293 = vld [vmem:[#allocation5 + $0x3d8] sm:$0xff]
    %v294 = vld [vmem:[#allocation5 + $0x3e0] sm:$0xff]
    %v295 = vld [vmem:[#allocation5 + $0x3e8] sm:$0xff]
    %v296 = vld [vmem:[#allocation5 + $0x3f0] sm:$0xff]
    %v297 = vld [vmem:[#allocation5 + $0x3f8] sm:$0xff]
    %298 = vmatprep.subr.mxu0 %v231
    %299 = vmatpush1.msra.mxu0 %v230
    %300 = vmatprep.subr.mxu0 %v227
    %301 = vmatpush1.msra.mxu0 %v226
    %302 = vmatprep.subr.mxu0 %v223
    %303 = vmatpush1.msra.mxu0 %v222
    %304 = vmatprep.subr.mxu0 %v219
    %305 = vmatpush1.msra.mxu0 %v218
    %306 = vmatprep.subr.mxu0 %v215
    %307 = vmatpush1.msra.mxu0 %v214
    %308 = vmatprep.subr.mxu0 %v211
    %309 = vmatpush1.msra.mxu0 %v210
    %310 = vmatprep.subr.mxu0 %v207
    %311 = vmatpush1.msra.mxu0 %v206
    %312 = vmatprep.subr.mxu0 %v203
    %313 = vmatpush1.msra.mxu0 %v202
    %314 = vmatprep.subr.mxu0 %v199
    %315 = vmatpush1.msra.mxu0 %v198
    %316 = vmatprep.subr.mxu0 %v195
    %317 = vmatpush1.msra.mxu0 %v194
    %318 = vmatprep.subr.mxu0 %v191
    %319 = vmatpush1.msra.mxu0 %v190
    %320 = vmatprep.subr.mxu0 %v187
    %321 = vmatpush1.msra.mxu0 %v186
    %322 = vmatprep.subr.mxu0 %v183
    %323 = vmatpush1.msra.mxu0 %v182
    %324 = vmatprep.subr.mxu0 %v179
    %325 = vmatpush1.msra.mxu0 %v178
    %326 = vmatprep.subr.mxu0 %v175
    %327 = vmatpush1.msra.mxu0 %v174
    %328 = vmatprep.subr.mxu0 %v171
    %329 = vmatpush1.msra.mxu0 %v170
    %330 = vmatprep.subr.mxu0 %v295
    %331 = vmatpush2.msra.mxu0 %v294
    %332 = vmatprep.subr.mxu0 %v291
    %333 = vmatpush2.msra.mxu0 %v290
    %334 = vmatprep.subr.mxu0 %v287
    %335 = vmatpush2.msra.mxu0 %v286
    %336 = vmatprep.subr.mxu0 %v283
    %337 = vmatpush2.msra.mxu0 %v282
    %338 = vmatprep.subr.mxu0 %v279
    %339 = vmatpush2.msra.mxu0 %v278
    %340 = vmatprep.subr.mxu0 %v275
    %341 = vmatpush2.msra.mxu0 %v274
    %342 = vmatprep.subr.mxu0 %v271
    %343 = vmatpush2.msra.mxu0 %v270
    %344 = vmatprep.subr.mxu0 %v267
    %345 = vmatpush2.msra.mxu0 %v266
    %346 = vmatprep.subr.mxu0 %v263
    %347 = vmatpush2.msra.mxu0 %v262
    %348 = vmatprep.subr.mxu0 %v259
    %349 = vmatpush2.msra.mxu0 %v258
    %350 = vmatprep.subr.mxu0 %v255
    %351 = vmatpush2.msra.mxu0 %v254
    %352 = vmatprep.subr.mxu0 %v251
    %353 = vmatpush2.msra.mxu0 %v250
    %354 = vmatprep.subr.mxu0 %v247
    %355 = vmatpush2.msra.mxu0 %v246
    %356 = vmatprep.subr.mxu0 %v243
    %357 = vmatpush2.msra.mxu0 %v242
    %358 = vmatprep.subr.mxu0 %v239
    %359 = vmatpush2.msra.mxu0 %v238
    %360 = vmatprep.subr.mxu0 %v235
    %361 = vmatpush2.msra.mxu0 %v234
    %362 = vmatprep.mubr.f32.mxu0 0.0
    %363 = vmatmul.mubr.f32.gmra.mxu0 %v169
    %v364 = vpop.f32.mrf.mxu0
    %v365 = vadd.f32 %v115, %v364
    %v366 = vpop.f32.mrf.mxu0
    %v367 = vadd.f32 %v119, %v366
    %368 = vdwg.mxu0
    %369 = vmatprep.subr.mxu0 %v233
    %370 = vmatpush1.msra.mxu0 %v232
    %371 = vmatprep.subr.mxu0 %v229
    %372 = vmatpush1.msra.mxu0 %v228
    %373 = vmatprep.subr.mxu0 %v225
    %374 = vmatpush1.msra.mxu0 %v224
    %375 = vmatprep.subr.mxu0 %v221
    %376 = vmatpush1.msra.mxu0 %v220
    %377 = vmatprep.subr.mxu0 %v217
    %378 = vmatpush1.msra.mxu0 %v216
    %379 = vmatprep.subr.mxu0 %v213
    %380 = vmatpush1.msra.mxu0 %v212
    %381 = vmatprep.subr.mxu0 %v209
    %382 = vmatpush1.msra.mxu0 %v208
    %383 = vmatprep.subr.mxu0 %v205
    %384 = vmatpush1.msra.mxu0 %v204
    %385 = vmatprep.subr.mxu0 %v201
    %386 = vmatpush1.msra.mxu0 %v200
    %387 = vmatprep.subr.mxu0 %v197
    %388 = vmatpush1.msra.mxu0 %v196
    %389 = vmatprep.subr.mxu0 %v193
    %390 = vmatpush1.msra.mxu0 %v192
    %391 = vmatprep.subr.mxu0 %v189
    %392 = vmatpush1.msra.mxu0 %v188
    %393 = vmatprep.subr.mxu0 %v185
    %394 = vmatpush1.msra.mxu0 %v184
    %395 = vmatprep.subr.mxu0 %v181
    %396 = vmatpush1.msra.mxu0 %v180
    %397 = vmatprep.subr.mxu0 %v177
    %398 = vmatpush1.msra.mxu0 %v176
    %399 = vmatprep.subr.mxu0 %v173
    %400 = vmatpush1.msra.mxu0 %v172
    %401 = vmatprep.subr.mxu0 %v297
    %402 = vmatpush2.msra.mxu0 %v296
    %403 = vmatprep.subr.mxu0 %v293
    %404 = vmatpush2.msra.mxu0 %v292
    %405 = vmatprep.subr.mxu0 %v289
    %406 = vmatpush2.msra.mxu0 %v288
    %407 = vmatprep.subr.mxu0 %v285
    %408 = vmatpush2.msra.mxu0 %v284
    %409 = vmatprep.subr.mxu0 %v281
    %410 = vmatpush2.msra.mxu0 %v280
    %411 = vmatprep.subr.mxu0 %v277
    %412 = vmatpush2.msra.mxu0 %v276
    %413 = vmatprep.subr.mxu0 %v273
    %414 = vmatpush2.msra.mxu0 %v272
    %415 = vmatprep.subr.mxu0 %v269
    %416 = vmatpush2.msra.mxu0 %v268
    %417 = vmatprep.subr.mxu0 %v265
    %418 = vmatpush2.msra.mxu0 %v264
    %419 = vmatprep.subr.mxu0 %v261
    %420 = vmatpush2.msra.mxu0 %v260
    %421 = vmatprep.subr.mxu0 %v257
    %422 = vmatpush2.msra.mxu0 %v256
    %423 = vmatprep.subr.mxu0 %v253
    %424 = vmatpush2.msra.mxu0 %v252
    %425 = vmatprep.subr.mxu0 %v249
    %426 = vmatpush2.msra.mxu0 %v248
    %427 = vmatprep.subr.mxu0 %v245
    %428 = vmatpush2.msra.mxu0 %v244
    %429 = vmatprep.subr.mxu0 %v241
    %430 = vmatpush2.msra.mxu0 %v240
    %431 = vmatprep.subr.mxu0 %v237
    %432 = vmatpush2.msra.mxu0 %v236
    %433 = vmatprep.mubr.f32.mxu0 0.0
    %434 = vmatmul.mubr.f32.gmra.mxu0 %v169
    %v435 = vpop.f32.mrf.mxu0
    %v436 = vadd.f32 %v123, %v435
    %v437 = vpop.f32.mrf.mxu0
    %v438 = vadd.f32 %v127, %v437
    %439 = vdwg.mxu0
    %v440 = vxor.u32 %v365, 2147483648
    %v441 = vmul.f32 %v440, 1.442695
    %v442 = vpow.pop %v441
    %v443 = vadd.f32 %v442, 1.0
    %v444 = vrcp.pop %v443
    %v445 = vmul.f32 1.0, %v444
    %v446 = vxor.u32 %v367, 2147483648
    %v447 = vmul.f32 %v446, 1.442695
    %v448 = vpow.pop %v447
    %v449 = vadd.f32 %v448, 1.0
    %v450 = vrcp.pop %v449
    %v451 = vmul.f32 1.0, %v450
    %v452 = vtanh.pop %v436
    %v453 = vxor.u32 %v438, 2147483648
    %v454 = vmul.f32 %v453, 1.442695
    %v455 = vpow.pop %v454
    %v456 = vadd.f32 %v455, 1.0
    %v457 = vrcp.pop %v456
    %v458 = vmul.f32 1.0, %v457
    %v459 = vmul.f32 %v451, 0.0
    %v460 = vmul.f32 %v445, %v452
    %v461 = vadd.f32 %v459, %v460
    %v462 = vtanh.pop %v461
    %v463 = vmul.f32 %v458, %v462
    %v464 = vld [vmem:[#allocation13] sm:$0x3]
    %v465 = vld [vmem:[#allocation10] sm:$0xff]
    %v466 = vld [vmem:[#allocation10 + $0x8] sm:$0xff]
    %v467 = vld [vmem:[#allocation10 + $0x10] sm:$0xff]
    %v468 = vld [vmem:[#allocation10 + $0x18] sm:$0xff]
    %v469 = vld [vmem:[#allocation10 + $0x20] sm:$0xff]
    %v470 = vld [vmem:[#allocation10 + $0x28] sm:$0xff]
    %v471 = vld [vmem:[#allocation10 + $0x30] sm:$0xff]
    %v472 = vld [vmem:[#allocation10 + $0x38] sm:$0xff]
    %v473 = vld [vmem:[#allocation10 + $0x40] sm:$0xff]
    %v474 = vld [vmem:[#allocation10 + $0x48] sm:$0xff]
    %v475 = vld [vmem:[#allocation10 + $0x50] sm:$0xff]
    %v476 = vld [vmem:[#allocation10 + $0x58] sm:$0xff]
    %v477 = vld [vmem:[#allocation10 + $0x60] sm:$0xff]
    %v478 = vld [vmem:[#allocation10 + $0x68] sm:$0xff]
    %v479 = vld [vmem:[#allocation10 + $0x70] sm:$0xff]
    %v480 = vld [vmem:[#allocation10 + $0x78] sm:$0xff]
    %481 = vmatprep.subr.mxu0 0.0
    %482 = vmatpush1.msra.mxu0 %v480
    %483 = vmatprep.subr.mxu0 0.0
    %484 = vmatpush1.msra.mxu0 %v479
    %485 = vmatprep.subr.mxu0 0.0
    %486 = vmatpush1.msra.mxu0 %v478
    %487 = vmatprep.subr.mxu0 0.0
    %488 = vmatpush1.msra.mxu0 %v477
    %489 = vmatprep.subr.mxu0 0.0
    %490 = vmatpush1.msra.mxu0 %v476
    %491 = vmatprep.subr.mxu0 0.0
    %492 = vmatpush1.msra.mxu0 %v475
    %493 = vmatprep.subr.mxu0 0.0
    %494 = vmatpush1.msra.mxu0 %v474
    %495 = vmatprep.subr.mxu0 0.0
    %496 = vmatpush1.msra.mxu0 %v473
    %497 = vmatprep.subr.mxu0 0.0
    %498 = vmatpush1.msra.mxu0 %v472
    %499 = vmatprep.subr.mxu0 0.0
    %500 = vmatpush1.msra.mxu0 %v471
    %501 = vmatprep.subr.mxu0 0.0
    %502 = vmatpush1.msra.mxu0 %v470
    %503 = vmatprep.subr.mxu0 0.0
    %504 = vmatpush1.msra.mxu0 %v469
    %505 = vmatprep.subr.mxu0 0.0
    %506 = vmatpush1.msra.mxu0 %v468
    %507 = vmatprep.subr.mxu0 0.0
    %508 = vmatpush1.msra.mxu0 %v467
    %509 = vmatprep.subr.mxu0 0.0
    %510 = vmatpush1.msra.mxu0 %v466
    %511 = vmatprep.subr.mxu0 0.0
    %512 = vmatpush1.msra.mxu0 %v465
    %513 = vmatprep.subr.mxu0 0.0
    %514 = vmatpush2.msra.mxu0 0.0
    %515 = vmatprep.subr.mxu0 0.0
    %516 = vmatpush2.msra.mxu0 0.0
    %517 = vmatprep.subr.mxu0 0.0
    %518 = vmatpush2.msra.mxu0 0.0
    %519 = vmatprep.subr.mxu0 0.0
    %520 = vmatpush2.msra.mxu0 0.0
    %521 = vmatprep.subr.mxu0 0.0
    %522 = vmatpush2.msra.mxu0 0.0
    %523 = vmatprep.subr.mxu0 0.0
    %524 = vmatpush2.msra.mxu0 0.0
    %525 = vmatprep.subr.mxu0 0.0
    %526 = vmatpush2.msra.mxu0 0.0
    %527 = vmatprep.subr.mxu0 0.0
    %528 = vmatpush2.msra.mxu0 0.0
    %529 = vmatprep.subr.mxu0 0.0
    %530 = vmatpush2.msra.mxu0 0.0
    %531 = vmatprep.subr.mxu0 0.0
    %532 = vmatpush2.msra.mxu0 0.0
    %533 = vmatprep.subr.mxu0 0.0
    %534 = vmatpush2.msra.mxu0 0.0
    %535 = vmatprep.subr.mxu0 0.0
    %536 = vmatpush2.msra.mxu0 0.0
    %537 = vmatprep.subr.mxu0 0.0
    %538 = vmatpush2.msra.mxu0 0.0
    %539 = vmatprep.subr.mxu0 0.0
    %540 = vmatpush2.msra.mxu0 0.0
    %541 = vmatprep.subr.mxu0 0.0
    %542 = vmatpush2.msra.mxu0 0.0
    %543 = vmatprep.subr.mxu0 0.0
    %544 = vmatpush2.msra.mxu0 0.0
    %545 = vmatprep.mubr.f32.mxu0 0.0
    %546 = vmatmul.mubr.f32.gmra.mxu0 %v463
    %v547 = vpop.f32.mrf.mxu0
    %v548 = vadd.f32 0.0, %v547
    %v549 = vpop.f32.mrf.mxu0
    %550 = vdwg.mxu0
    %v551 = vadd.f32 %v464, %v548
    %552 = vst [vmem:[#allocation13] sm:$0x3] %v551
    %s553 = scalar_lea.vmem [#allocation2], 14
    %v554 = vld [vmem:[%s553] sm:$0x3]
    %v555 = vld [vmem:[#allocation8] sm:$0xff]
    %v556 = vld [vmem:[#allocation8 + $0x8] sm:$0xff]
    %v557 = vld [vmem:[#allocation8 + $0x10] sm:$0xff]
    %v558 = vld [vmem:[#allocation8 + $0x18] sm:$0xff]
    %v559 = vld [vmem:[#allocation8 + $0x20] sm:$0xff]
    %v560 = vld [vmem:[#allocation8 + $0x28] sm:$0xff]
    %v561 = vld [vmem:[#allocation8 + $0x30] sm:$0xff]
    %v562 = vld [vmem:[#allocation8 + $0x38] sm:$0xff]
    %v563 = vld [vmem:[#allocation8 + $0x40] sm:$0xff]
    %v564 = vld [vmem:[#allocation8 + $0x48] sm:$0xff]
    %v565 = vld [vmem:[#allocation8 + $0x50] sm:$0xff]
    %v566 = vld [vmem:[#allocation8 + $0x58] sm:$0xff]
    %v567 = vld [vmem:[#allocation8 + $0x60] sm:$0xff]
    %v568 = vld [vmem:[#allocation8 + $0x68] sm:$0xff]
    %v569 = vld [vmem:[#allocation8 + $0x70] sm:$0xff]
    %v570 = vld [vmem:[#allocation8 + $0x78] sm:$0xff]
    %v571 = vld [vmem:[#allocation8 + $0x80] sm:$0xff]
    %v572 = vld [vmem:[#allocation8 + $0x88] sm:$0xff]
    %v573 = vld [vmem:[#allocation8 + $0x90] sm:$0xff]
    %v574 = vld [vmem:[#allocation8 + $0x98] sm:$0xff]
    %v575 = vld [vmem:[#allocation8 + $0xa0] sm:$0xff]
    %v576 = vld [vmem:[#allocation8 + $0xa8] sm:$0xff]
    %v577 = vld [vmem:[#allocation8 + $0xb0] sm:$0xff]
    %v578 = vld [vmem:[#allocation8 + $0xb8] sm:$0xff]
    %v579 = vld [vmem:[#allocation8 + $0xc0] sm:$0xff]
    %v580 = vld [vmem:[#allocation8 + $0xc8] sm:$0xff]
    %v581 = vld [vmem:[#allocation8 + $0xd0] sm:$0xff]
    %v582 = vld [vmem:[#allocation8 + $0xd8] sm:$0xff]
    %v583 = vld [vmem:[#allocation8 + $0xe0] sm:$0xff]
    %v584 = vld [vmem:[#allocation8 + $0xe8] sm:$0xff]
    %v585 = vld [vmem:[#allocation8 + $0xf0] sm:$0xff]
    %v586 = vld [vmem:[#allocation8 + $0xf8] sm:$0xff]
    %v587 = vld [vmem:[#allocation8 + $0x100] sm:$0xff]
    %v588 = vld [vmem:[#allocation8 + $0x108] sm:$0xff]
    %v589 = vld [vmem:[#allocation8 + $0x110] sm:$0xff]
    %v590 = vld [vmem:[#allocation8 + $0x118] sm:$0xff]
    %v591 = vld [vmem:[#allocation8 + $0x120] sm:$0xff]
    %v592 = vld [vmem:[#allocation8 + $0x128] sm:$0xff]
    %v593 = vld [vmem:[#allocation8 + $0x130] sm:$0xff]
    %v594 = vld [vmem:[#allocation8 + $0x138] sm:$0xff]
    %v595 = vld [vmem:[#allocation8 + $0x140] sm:$0xff]
    %v596 = vld [vmem:[#allocation8 + $0x148] sm:$0xff]
    %v597 = vld [vmem:[#allocation8 + $0x150] sm:$0xff]
    %v598 = vld [vmem:[#allocation8 + $0x158] sm:$0xff]
    %v599 = vld [vmem:[#allocation8 + $0x160] sm:$0xff]
    %v600 = vld [vmem:[#allocation8 + $0x168] sm:$0xff]
    %v601 = vld [vmem:[#allocation8 + $0x170] sm:$0xff]
    %v602 = vld [vmem:[#allocation8 + $0x178] sm:$0xff]
    %v603 = vld [vmem:[#allocation8 + $0x180] sm:$0xff]
    %v604 = vld [vmem:[#allocation8 + $0x188] sm:$0xff]
    %v605 = vld [vmem:[#allocation8 + $0x190] sm:$0xff]
    %v606 = vld [vmem:[#allocation8 + $0x198] sm:$0xff]
    %v607 = vld [vmem:[#allocation8 + $0x1a0] sm:$0xff]
    %v608 = vld [vmem:[#allocation8 + $0x1a8] sm:$0xff]
    %v609 = vld [vmem:[#allocation8 + $0x1b0] sm:$0xff]
    %v610 = vld [vmem:[#allocation8 + $0x1b8] sm:$0xff]
    %v611 = vld [vmem:[#allocation8 + $0x1c0] sm:$0xff]
    %v612 = vld [vmem:[#allocation8 + $0x1c8] sm:$0xff]
    %v613 = vld [vmem:[#allocation8 + $0x1d0] sm:$0xff]
    %v614 = vld [vmem:[#allocation8 + $0x1d8] sm:$0xff]
    %v615 = vld [vmem:[#allocation8 + $0x1e0] sm:$0xff]
    %v616 = vld [vmem:[#allocation8 + $0x1e8] sm:$0xff]
    %v617 = vld [vmem:[#allocation8 + $0x1f0] sm:$0xff]
    %v618 = vld [vmem:[#allocation8 + $0x1f8] sm:$0xff]
    %v619 = vld [vmem:[#allocation8 + $0x200] sm:$0xff]
    %v620 = vld [vmem:[#allocation8 + $0x208] sm:$0xff]
    %v621 = vld [vmem:[#allocation8 + $0x210] sm:$0xff]
    %v622 = vld [vmem:[#allocation8 + $0x218] sm:$0xff]
    %v623 = vld [vmem:[#allocation8 + $0x220] sm:$0xff]
    %v624 = vld [vmem:[#allocation8 + $0x228] sm:$0xff]
    %v625 = vld [vmem:[#allocation8 + $0x230] sm:$0xff]
    %v626 = vld [vmem:[#allocation8 + $0x238] sm:$0xff]
    %v627 = vld [vmem:[#allocation8 + $0x240] sm:$0xff]
    %v628 = vld [vmem:[#allocation8 + $0x248] sm:$0xff]
    %v629 = vld [vmem:[#allocation8 + $0x250] sm:$0xff]
    %v630 = vld [vmem:[#allocation8 + $0x258] sm:$0xff]
    %v631 = vld [vmem:[#allocation8 + $0x260] sm:$0xff]
    %v632 = vld [vmem:[#allocation8 + $0x268] sm:$0xff]
    %v633 = vld [vmem:[#allocation8 + $0x270] sm:$0xff]
    %v634 = vld [vmem:[#allocation8 + $0x278] sm:$0xff]
    %v635 = vld [vmem:[#allocation8 + $0x280] sm:$0xff]
    %v636 = vld [vmem:[#allocation8 + $0x288] sm:$0xff]
    %v637 = vld [vmem:[#allocation8 + $0x290] sm:$0xff]
    %v638 = vld [vmem:[#allocation8 + $0x298] sm:$0xff]
    %v639 = vld [vmem:[#allocation8 + $0x2a0] sm:$0xff]
    %v640 = vld [vmem:[#allocation8 + $0x2a8] sm:$0xff]
    %v641 = vld [vmem:[#allocation8 + $0x2b0] sm:$0xff]
    %v642 = vld [vmem:[#allocation8 + $0x2b8] sm:$0xff]
    %v643 = vld [vmem:[#allocation8 + $0x2c0] sm:$0xff]
    %v644 = vld [vmem:[#allocation8 + $0x2c8] sm:$0xff]
    %v645 = vld [vmem:[#allocation8 + $0x2d0] sm:$0xff]
    %v646 = vld [vmem:[#allocation8 + $0x2d8] sm:$0xff]
    %v647 = vld [vmem:[#allocation8 + $0x2e0] sm:$0xff]
    %v648 = vld [vmem:[#allocation8 + $0x2e8] sm:$0xff]
    %v649 = vld [vmem:[#allocation8 + $0x2f0] sm:$0xff]
    %v650 = vld [vmem:[#allocation8 + $0x2f8] sm:$0xff]
    %v651 = vld [vmem:[#allocation8 + $0x300] sm:$0xff]
    %v652 = vld [vmem:[#allocation8 + $0x308] sm:$0xff]
    %v653 = vld [vmem:[#allocation8 + $0x310] sm:$0xff]
    %v654 = vld [vmem:[#allocation8 + $0x318] sm:$0xff]
    %v655 = vld [vmem:[#allocation8 + $0x320] sm:$0xff]
    %v656 = vld [vmem:[#allocation8 + $0x328] sm:$0xff]
    %v657 = vld [vmem:[#allocation8 + $0x330] sm:$0xff]
    %v658 = vld [vmem:[#allocation8 + $0x338] sm:$0xff]
    %v659 = vld [vmem:[#allocation8 + $0x340] sm:$0xff]
    %v660 = vld [vmem:[#allocation8 + $0x348] sm:$0xff]
    %v661 = vld [vmem:[#allocation8 + $0x350] sm:$0xff]
    %v662 = vld [vmem:[#allocation8 + $0x358] sm:$0xff]
    %v663 = vld [vmem:[#allocation8 + $0x360] sm:$0xff]
    %v664 = vld [vmem:[#allocation8 + $0x368] sm:$0xff]
    %v665 = vld [vmem:[#allocation8 + $0x370] sm:$0xff]
    %v666 = vld [vmem:[#allocation8 + $0x378] sm:$0xff]
    %v667 = vld [vmem:[#allocation8 + $0x380] sm:$0xff]
    %v668 = vld [vmem:[#allocation8 + $0x388] sm:$0xff]
    %v669 = vld [vmem:[#allocation8 + $0x390] sm:$0xff]
    %v670 = vld [vmem:[#allocation8 + $0x398] sm:$0xff]
    %v671 = vld [vmem:[#allocation8 + $0x3a0] sm:$0xff]
    %v672 = vld [vmem:[#allocation8 + $0x3a8] sm:$0xff]
    %v673 = vld [vmem:[#allocation8 + $0x3b0] sm:$0xff]
    %v674 = vld [vmem:[#allocation8 + $0x3b8] sm:$0xff]
    %v675 = vld [vmem:[#allocation8 + $0x3c0] sm:$0xff]
    %v676 = vld [vmem:[#allocation8 + $0x3c8] sm:$0xff]
    %v677 = vld [vmem:[#allocation8 + $0x3d0] sm:$0xff]
    %v678 = vld [vmem:[#allocation8 + $0x3d8] sm:$0xff]
    %v679 = vld [vmem:[#allocation8 + $0x3e0] sm:$0xff]
    %v680 = vld [vmem:[#allocation8 + $0x3e8] sm:$0xff]
    %v681 = vld [vmem:[#allocation8 + $0x3f0] sm:$0xff]
    %v682 = vld [vmem:[#allocation8 + $0x3f8] sm:$0xff]
    %683 = vmatprep.subr.mxu0 %v616
    %684 = vmatpush1.msra.mxu0 %v615
    %685 = vmatprep.subr.mxu0 %v612
    %686 = vmatpush1.msra.mxu0 %v611
    %687 = vmatprep.subr.mxu0 %v608
    %688 = vmatpush1.msra.mxu0 %v607
    %689 = vmatprep.subr.mxu0 %v604
    %690 = vmatpush1.msra.mxu0 %v603
    %691 = vmatprep.subr.mxu0 %v600
    %692 = vmatpush1.msra.mxu0 %v599
    %693 = vmatprep.subr.mxu0 %v596
    %694 = vmatpush1.msra.mxu0 %v595
    %695 = vmatprep.subr.mxu0 %v592
    %696 = vmatpush1.msra.mxu0 %v591
    %697 = vmatprep.subr.mxu0 %v588
    %698 = vmatpush1.msra.mxu0 %v587
    %699 = vmatprep.subr.mxu0 %v584
    %700 = vmatpush1.msra.mxu0 %v583
    %701 = vmatprep.subr.mxu0 %v580
    %702 = vmatpush1.msra.mxu0 %v579
    %703 = vmatprep.subr.mxu0 %v576
    %704 = vmatpush1.msra.mxu0 %v575
    %705 = vmatprep.subr.mxu0 %v572
    %706 = vmatpush1.msra.mxu0 %v571
    %707 = vmatprep.subr.mxu0 %v568
    %708 = vmatpush1.msra.mxu0 %v567
    %709 = vmatprep.subr.mxu0 %v564
    %710 = vmatpush1.msra.mxu0 %v563
    %711 = vmatprep.subr.mxu0 %v560
    %712 = vmatpush1.msra.mxu0 %v559
    %713 = vmatprep.subr.mxu0 %v556
    %714 = vmatpush1.msra.mxu0 %v555
    %715 = vmatprep.subr.mxu0 %v680
    %716 = vmatpush2.msra.mxu0 %v679
    %717 = vmatprep.subr.mxu0 %v676
    %718 = vmatpush2.msra.mxu0 %v675
    %719 = vmatprep.subr.mxu0 %v672
    %720 = vmatpush2.msra.mxu0 %v671
    %721 = vmatprep.subr.mxu0 %v668
    %722 = vmatpush2.msra.mxu0 %v667
    %723 = vmatprep.subr.mxu0 %v664
    %724 = vmatpush2.msra.mxu0 %v663
    %725 = vmatprep.subr.mxu0 %v660
    %726 = vmatpush2.msra.mxu0 %v659
    %727 = vmatprep.subr.mxu0 %v656
    %728 = vmatpush2.msra.mxu0 %v655
    %729 = vmatprep.subr.mxu0 %v652
    %730 = vmatpush2.msra.mxu0 %v651
    %731 = vmatprep.subr.mxu0 %v648
    %732 = vmatpush2.msra.mxu0 %v647
    %733 = vmatprep.subr.mxu0 %v644
    %734 = vmatpush2.msra.mxu0 %v643
    %735 = vmatprep.subr.mxu0 %v640
    %736 = vmatpush2.msra.mxu0 %v639
    %737 = vmatprep.subr.mxu0 %v636
    %738 = vmatpush2.msra.mxu0 %v635
    %739 = vmatprep.subr.mxu0 %v632
    %740 = vmatpush2.msra.mxu0 %v631
    %741 = vmatprep.subr.mxu0 %v628
    %742 = vmatpush2.msra.mxu0 %v627
    %743 = vmatprep.subr.mxu0 %v624
    %744 = vmatpush2.msra.mxu0 %v623
    %745 = vmatprep.subr.mxu0 %v620
    %746 = vmatpush2.msra.mxu0 %v619
    %747 = vmatprep.mubr.f32.mxu0 0.0
    %748 = vmatmul.mubr.f32.gmra.mxu0 %v554
    %v749 = vpop.f32.mrf.mxu0
    %v750 = vadd.f32 %v137, %v749
    %v751 = vpop.f32.mrf.mxu0
    %v752 = vadd.f32 %v141, %v751
    %753 = vdwg.mxu0
    %754 = vmatprep.subr.mxu0 %v618
    %755 = vmatpush1.msra.mxu0 %v617
    %756 = vmatprep.subr.mxu0 %v614
    %757 = vmatpush1.msra.mxu0 %v613
    %758 = vmatprep.subr.mxu0 %v610
    %759 = vmatpush1.msra.mxu0 %v609
    %760 = vmatprep.subr.mxu0 %v606
    %761 = vmatpush1.msra.mxu0 %v605
    %762 = vmatprep.subr.mxu0 %v602
    %763 = vmatpush1.msra.mxu0 %v601
    %764 = vmatprep.subr.mxu0 %v598
    %765 = vmatpush1.msra.mxu0 %v597
    %766 = vmatprep.subr.mxu0 %v594
    %767 = vmatpush1.msra.mxu0 %v593
    %768 = vmatprep.subr.mxu0 %v590
    %769 = vmatpush1.msra.mxu0 %v589
    %770 = vmatprep.subr.mxu0 %v586
    %771 = vmatpush1.msra.mxu0 %v585
    %772 = vmatprep.subr.mxu0 %v582
    %773 = vmatpush1.msra.mxu0 %v581
    %774 = vmatprep.subr.mxu0 %v578
    %775 = vmatpush1.msra.mxu0 %v577
    %776 = vmatprep.subr.mxu0 %v574
    %777 = vmatpush1.msra.mxu0 %v573
    %778 = vmatprep.subr.mxu0 %v570
    %779 = vmatpush1.msra.mxu0 %v569
    %780 = vmatprep.subr.mxu0 %v566
    %781 = vmatpush1.msra.mxu0 %v565
    %782 = vmatprep.subr.mxu0 %v562
    %783 = vmatpush1.msra.mxu0 %v561
    %784 = vmatprep.subr.mxu0 %v558
    %785 = vmatpush1.msra.mxu0 %v557
    %786 = vmatprep.subr.mxu0 %v682
    %787 = vmatpush2.msra.mxu0 %v681
    %788 = vmatprep.subr.mxu0 %v678
    %789 = vmatpush2.msra.mxu0 %v677
    %790 = vmatprep.subr.mxu0 %v674
    %791 = vmatpush2.msra.mxu0 %v673
    %792 = vmatprep.subr.mxu0 %v670
    %793 = vmatpush2.msra.mxu0 %v669
    %794 = vmatprep.subr.mxu0 %v666
    %795 = vmatpush2.msra.mxu0 %v665
    %796 = vmatprep.subr.mxu0 %v662
    %797 = vmatpush2.msra.mxu0 %v661
    %798 = vmatprep.subr.mxu0 %v658
    %799 = vmatpush2.msra.mxu0 %v657
    %800 = vmatprep.subr.mxu0 %v654
    %801 = vmatpush2.msra.mxu0 %v653
    %802 = vmatprep.subr.mxu0 %v650
    %803 = vmatpush2.msra.mxu0 %v649
    %804 = vmatprep.subr.mxu0 %v646
    %805 = vmatpush2.msra.mxu0 %v645
    %806 = vmatprep.subr.mxu0 %v642
    %807 = vmatpush2.msra.mxu0 %v641
    %808 = vmatprep.subr.mxu0 %v638
    %809 = vmatpush2.msra.mxu0 %v637
    %810 = vmatprep.subr.mxu0 %v634
    %811 = vmatpush2.msra.mxu0 %v633
    %812 = vmatprep.subr.mxu0 %v630
    %813 = vmatpush2.msra.mxu0 %v629
    %814 = vmatprep.subr.mxu0 %v626
    %815 = vmatpush2.msra.mxu0 %v625
    %816 = vmatprep.subr.mxu0 %v622
    %817 = vmatpush2.msra.mxu0 %v621
    %818 = vmatprep.mubr.f32.mxu0 0.0
    %819 = vmatmul.mubr.f32.gmra.mxu0 %v554
    %v820 = vpop.f32.mrf.mxu0
    %v821 = vadd.f32 %v145, %v820
    %v822 = vpop.f32.mrf.mxu0
    %v823 = vadd.f32 %v149, %v822
    %824 = vdwg.mxu0
    %v825 = vxor.u32 %v750, 2147483648
    %v826 = vmul.f32 %v825, 1.442695
    %v827 = vpow.pop %v826
    %v828 = vadd.f32 %v827, 1.0
    %v829 = vrcp.pop %v828
    %v830 = vmul.f32 1.0, %v829
    %v831 = vxor.u32 %v752, 2147483648
    %v832 = vmul.f32 %v831, 1.442695
    %v833 = vpow.pop %v832
    %v834 = vadd.f32 %v833, 1.0
    %v835 = vrcp.pop %v834
    %v836 = vmul.f32 1.0, %v835
    %v837 = vtanh.pop %v821
    %v838 = vxor.u32 %v823, 2147483648
    %v839 = vmul.f32 %v838, 1.442695
    %v840 = vpow.pop %v839
    %v841 = vadd.f32 %v840, 1.0
    %v842 = vrcp.pop %v841
    %v843 = vmul.f32 1.0, %v842
    %v844 = vmul.f32 %v836, 0.0
    %v845 = vmul.f32 %v830, %v837
    %v846 = vadd.f32 %v844, %v845
    %v847 = vtanh.pop %v846
    %v848 = vmul.f32 %v843, %v847
    %s849 = scalar_lea.vmem [#allocation13], 14
    %v850 = vld [vmem:[%s849] sm:$0x3]
    %v851 = vld [vmem:[#allocation11] sm:$0xff]
    %v852 = vld [vmem:[#allocation11 + $0x8] sm:$0xff]
    %v853 = vld [vmem:[#allocation11 + $0x10] sm:$0xff]
    %v854 = vld [vmem:[#allocation11 + $0x18] sm:$0xff]
    %v855 = vld [vmem:[#allocation11 + $0x20] sm:$0xff]
    %v856 = vld [vmem:[#allocation11 + $0x28] sm:$0xff]
    %v857 = vld [vmem:[#allocation11 + $0x30] sm:$0xff]
    %v858 = vld [vmem:[#allocation11 + $0x38] sm:$0xff]
    %v859 = vld [vmem:[#allocation11 + $0x40] sm:$0xff]
    %v860 = vld [vmem:[#allocation11 + $0x48] sm:$0xff]
    %v861 = vld [vmem:[#allocation11 + $0x50] sm:$0xff]
    %v862 = vld [vmem:[#allocation11 + $0x58] sm:$0xff]
    %v863 = vld [vmem:[#allocation11 + $0x60] sm:$0xff]
    %v864 = vld [vmem:[#allocation11 + $0x68] sm:$0xff]
    %v865 = vld [vmem:[#allocation11 + $0x70] sm:$0xff]
    %v866 = vld [vmem:[#allocation11 + $0x78] sm:$0xff]
    %867 = vmatprep.subr.mxu0 0.0
    %868 = vmatpush1.msra.mxu0 %v866
    %869 = vmatprep.subr.mxu0 0.0
    %870 = vmatpush1.msra.mxu0 %v865
    %871 = vmatprep.subr.mxu0 0.0
    %872 = vmatpush1.msra.mxu0 %v864
    %873 = vmatprep.subr.mxu0 0.0
    %874 = vmatpush1.msra.mxu0 %v863
    %875 = vmatprep.subr.mxu0 0.0
    %876 = vmatpush1.msra.mxu0 %v862
    %877 = vmatprep.subr.mxu0 0.0
    %878 = vmatpush1.msra.mxu0 %v861
    %879 = vmatprep.subr.mxu0 0.0
    %880 = vmatpush1.msra.mxu0 %v860
    %881 = vmatprep.subr.mxu0 0.0
    %882 = vmatpush1.msra.mxu0 %v859
    %883 = vmatprep.subr.mxu0 0.0
    %884 = vmatpush1.msra.mxu0 %v858
    %885 = vmatprep.subr.mxu0 0.0
    %886 = vmatpush1.msra.mxu0 %v857
    %887 = vmatprep.subr.mxu0 0.0
    %888 = vmatpush1.msra.mxu0 %v856
    %889 = vmatprep.subr.mxu0 0.0
    %890 = vmatpush1.msra.mxu0 %v855
    %891 = vmatprep.subr.mxu0 0.0
    %892 = vmatpush1.msra.mxu0 %v854
    %893 = vmatprep.subr.mxu0 0.0
    %894 = vmatpush1.msra.mxu0 %v853
    %895 = vmatprep.subr.mxu0 0.0
    %896 = vmatpush1.msra.mxu0 %v852
    %897 = vmatprep.subr.mxu0 0.0
    %898 = vmatpush1.msra.mxu0 %v851
    %899 = vmatprep.subr.mxu0 0.0
    %900 = vmatpush2.msra.mxu0 0.0
    %901 = vmatprep.subr.mxu0 0.0
    %902 = vmatpush2.msra.mxu0 0.0
    %903 = vmatprep.subr.mxu0 0.0
    %904 = vmatpush2.msra.mxu0 0.0
    %905 = vmatprep.subr.mxu0 0.0
    %906 = vmatpush2.msra.mxu0 0.0
    %907 = vmatprep.subr.mxu0 0.0
    %908 = vmatpush2.msra.mxu0 0.0
    %909 = vmatprep.subr.mxu0 0.0
    %910 = vmatpush2.msra.mxu0 0.0
    %911 = vmatprep.subr.mxu0 0.0
    %912 = vmatpush2.msra.mxu0 0.0
    %913 = vmatprep.subr.mxu0 0.0
    %914 = vmatpush2.msra.mxu0 0.0
    %915 = vmatprep.subr.mxu0 0.0
    %916 = vmatpush2.msra.mxu0 0.0
    %917 = vmatprep.subr.mxu0 0.0
    %918 = vmatpush2.msra.mxu0 0.0
    %919 = vmatprep.subr.mxu0 0.0
    %920 = vmatpush2.msra.mxu0 0.0
    %921 = vmatprep.subr.mxu0 0.0
    %922 = vmatpush2.msra.mxu0 0.0
    %923 = vmatprep.subr.mxu0 0.0
    %924 = vmatpush2.msra.mxu0 0.0
    %925 = vmatprep.subr.mxu0 0.0
    %926 = vmatpush2.msra.mxu0 0.0
    %927 = vmatprep.subr.mxu0 0.0
    %928 = vmatpush2.msra.mxu0 0.0
    %929 = vmatprep.subr.mxu0 0.0
    %930 = vmatpush2.msra.mxu0 0.0
    %931 = vmatprep.mubr.f32.mxu0 0.0
    %932 = vmatmul.mubr.f32.gmra.mxu0 %v848
    %v933 = vpop.f32.mrf.mxu0
    %v934 = vadd.f32 0.0, %v933
    %v935 = vpop.f32.mrf.mxu0
    %936 = vdwg.mxu0
    %v937 = vadd.f32 %v850, %v934
    %938 = vst [vmem:[%s849] sm:$0x3] %v937
    %s939 = scalar_lea.vmem [#allocation2], 2
    %v940 = vld [vmem:[%s939] sm:$0x3]
    %v941 = vld [vmem:[#allocation5] sm:$0xff]
    %v942 = vld [vmem:[#allocation5 + $0x8] sm:$0xff]
    %v943 = vld [vmem:[#allocation5 + $0x10] sm:$0xff]
    %v944 = vld [vmem:[#allocation5 + $0x18] sm:$0xff]
    %v945 = vld [vmem:[#allocation5 + $0x20] sm:$0xff]
    %v946 = vld [vmem:[#allocation5 + $0x28] sm:$0xff]
    %v947 = vld [vmem:[#allocation5 + $0x30] sm:$0xff]
    %v948 = vld [vmem:[#allocation5 + $0x38] sm:$0xff]
    %v949 = vld [vmem:[#allocation5 + $0x40] sm:$0xff]
    %v950 = vld [vmem:[#allocation5 + $0x48] sm:$0xff]
    %v951 = vld [vmem:[#allocation5 + $0x50] sm:$0xff]
    %v952 = vld [vmem:[#allocation5 + $0x58] sm:$0xff]
    %v953 = vld [vmem:[#allocation5 + $0x60] sm:$0xff]
    %v954 = vld [vmem:[#allocation5 + $0x68] sm:$0xff]
    %v955 = vld [vmem:[#allocation5 + $0x70] sm:$0xff]
    %v956 = vld [vmem:[#allocation5 + $0x78] sm:$0xff]
    %v957 = vld [vmem:[#allocation5 + $0x80] sm:$0xff]
    %v958 = vld [vmem:[#allocation5 + $0x88] sm:$0xff]
    %v959 = vld [vmem:[#allocation5 + $0x90] sm:$0xff]
    %v960 = vld [vmem:[#allocation5 + $0x98] sm:$0xff]
    %v961 = vld [vmem:[#allocation5 + $0xa0] sm:$0xff]
    %v962 = vld [vmem:[#allocation5 + $0xa8] sm:$0xff]
    %v963 = vld [vmem:[#allocation5 + $0xb0] sm:$0xff]
    %v964 = vld [vmem:[#allocation5 + $0xb8] sm:$0xff]
    %v965 = vld [vmem:[#allocation5 + $0xc0] sm:$0xff]
    %v966 = vld [vmem:[#allocation5 + $0xc8] sm:$0xff]
    %v967 = vld [vmem:[#allocation5 + $0xd0] sm:$0xff]
    %v968 = vld [vmem:[#allocation5 + $0xd8] sm:$0xff]
    %v969 = vld [vmem:[#allocation5 + $0xe0] sm:$0xff]
    %v970 = vld [vmem:[#allocation5 + $0xe8] sm:$0xff]
    %v971 = vld [vmem:[#allocation5 + $0xf0] sm:$0xff]
    %v972 = vld [vmem:[#allocation5 + $0xf8] sm:$0xff]
    %v973 = vld [vmem:[#allocation5 + $0x100] sm:$0xff]
    %v974 = vld [vmem:[#allocation5 + $0x108] sm:$0xff]
    %v975 = vld [vmem:[#allocation5 + $0x110] sm:$0xff]
    %v976 = vld [vmem:[#allocation5 + $0x118] sm:$0xff]
    %v977 = vld [vmem:[#allocation5 + $0x120] sm:$0xff]
    %v978 = vld [vmem:[#allocation5 + $0x128] sm:$0xff]
    %v979 = vld [vmem:[#allocation5 + $0x130] sm:$0xff]
    %v980 = vld [vmem:[#allocation5 + $0x138] sm:$0xff]
    %v981 = vld [vmem:[#allocation5 + $0x140] sm:$0xff]
    %v982 = vld [vmem:[#allocation5 + $0x148] sm:$0xff]
    %v983 = vld [vmem:[#allocation5 + $0x150] sm:$0xff]
    %v984 = vld [vmem:[#allocation5 + $0x158] sm:$0xff]
    %v985 = vld [vmem:[#allocation5 + $0x160] sm:$0xff]
    %v986 = vld [vmem:[#allocation5 + $0x168] sm:$0xff]
    %v987 = vld [vmem:[#allocation5 + $0x170] sm:$0xff]
    %v988 = vld [vmem:[#allocation5 + $0x178] sm:$0xff]
    %v989 = vld [vmem:[#allocation5 + $0x180] sm:$0xff]
    %v990 = vld [vmem:[#allocation5 + $0x188] sm:$0xff]
    %v991 = vld [vmem:[#allocation5 + $0x190] sm:$0xff]
    %v992 = vld [vmem:[#allocation5 + $0x198] sm:$0xff]
    %v993 = vld [vmem:[#allocation5 + $0x1a0] sm:$0xff]
    %v994 = vld [vmem:[#allocation5 + $0x1a8] sm:$0xff]
    %v995 = vld [vmem:[#allocation5 + $0x1b0] sm:$0xff]
    %v996 = vld [vmem:[#allocation5 + $0x1b8] sm:$0xff]
    %v997 = vld [vmem:[#allocation5 + $0x1c0] sm:$0xff]
    %v998 = vld [vmem:[#allocation5 + $0x1c8] sm:$0xff]
    %v999 = vld [vmem:[#allocation5 + $0x1d0] sm:$0xff]
    %v1000 = vld [vmem:[#allocation5 + $0x1d8] sm:$0xff]
    %v1001 = vld [vmem:[#allocation5 + $0x1e0] sm:$0xff]
    %v1002 = vld [vmem:[#allocation5 + $0x1e8] sm:$0xff]
    %v1003 = vld [vmem:[#allocation5 + $0x1f0] sm:$0xff]
    %v1004 = vld [vmem:[#allocation5 + $0x1f8] sm:$0xff]
    %v1005 = vld [vmem:[#allocation5 + $0x200] sm:$0xff]
    %v1006 = vld [vmem:[#allocation5 + $0x208] sm:$0xff]
    %v1007 = vld [vmem:[#allocation5 + $0x210] sm:$0xff]
    %v1008 = vld [vmem:[#allocation5 + $0x218] sm:$0xff]
    %v1009 = vld [vmem:[#allocation5 + $0x220] sm:$0xff]
    %v1010 = vld [vmem:[#allocation5 + $0x228] sm:$0xff]
    %v1011 = vld [vmem:[#allocation5 + $0x230] sm:$0xff]
    %v1012 = vld [vmem:[#allocation5 + $0x238] sm:$0xff]
    %v1013 = vld [vmem:[#allocation5 + $0x240] sm:$0xff]
    %v1014 = vld [vmem:[#allocation5 + $0x248] sm:$0xff]
    %v1015 = vld [vmem:[#allocation5 + $0x250] sm:$0xff]
    %v1016 = vld [vmem:[#allocation5 + $0x258] sm:$0xff]
    %v1017 = vld [vmem:[#allocation5 + $0x260] sm:$0xff]
    %v1018 = vld [vmem:[#allocation5 + $0x268] sm:$0xff]
    %v1019 = vld [vmem:[#allocation5 + $0x270] sm:$0xff]
    %v1020 = vld [vmem:[#allocation5 + $0x278] sm:$0xff]
    %v1021 = vld [vmem:[#allocation5 + $0x280] sm:$0xff]
    %v1022 = vld [vmem:[#allocation5 + $0x288] sm:$0xff]
    %v1023 = vld [vmem:[#allocation5 + $0x290] sm:$0xff]
    %v1024 = vld [vmem:[#allocation5 + $0x298] sm:$0xff]
    %v1025 = vld [vmem:[#allocation5 + $0x2a0] sm:$0xff]
    %v1026 = vld [vmem:[#allocation5 + $0x2a8] sm:$0xff]
    %v1027 = vld [vmem:[#allocation5 + $0x2b0] sm:$0xff]
    %v1028 = vld [vmem:[#allocation5 + $0x2b8] sm:$0xff]
    %v1029 = vld [vmem:[#allocation5 + $0x2c0] sm:$0xff]
    %v1030 = vld [vmem:[#allocation5 + $0x2c8] sm:$0xff]
    %v1031 = vld [vmem:[#allocation5 + $0x2d0] sm:$0xff]
    %v1032 = vld [vmem:[#allocation5 + $0x2d8] sm:$0xff]
    %v1033 = vld [vmem:[#allocation5 + $0x2e0] sm:$0xff]
    %v1034 = vld [vmem:[#allocation5 + $0x2e8] sm:$0xff]
    %v1035 = vld [vmem:[#allocation5 + $0x2f0] sm:$0xff]
    %v1036 = vld [vmem:[#allocation5 + $0x2f8] sm:$0xff]
    %v1037 = vld [vmem:[#allocation5 + $0x300] sm:$0xff]
    %v1038 = vld [vmem:[#allocation5 + $0x308] sm:$0xff]
    %v1039 = vld [vmem:[#allocation5 + $0x310] sm:$0xff]
    %v1040 = vld [vmem:[#allocation5 + $0x318] sm:$0xff]
    %v1041 = vld [vmem:[#allocation5 + $0x320] sm:$0xff]
    %v1042 = vld [vmem:[#allocation5 + $0x328] sm:$0xff]
    %v1043 = vld [vmem:[#allocation5 + $0x330] sm:$0xff]
    %v1044 = vld [vmem:[#allocation5 + $0x338] sm:$0xff]
    %v1045 = vld [vmem:[#allocation5 + $0x340] sm:$0xff]
    %v1046 = vld [vmem:[#allocation5 + $0x348] sm:$0xff]
    %v1047 = vld [vmem:[#allocation5 + $0x350] sm:$0xff]
    %v1048 = vld [vmem:[#allocation5 + $0x358] sm:$0xff]
    %v1049 = vld [vmem:[#allocation5 + $0x360] sm:$0xff]
    %v1050 = vld [vmem:[#allocation5 + $0x368] sm:$0xff]
    %v1051 = vld [vmem:[#allocation5 + $0x370] sm:$0xff]
    %v1052 = vld [vmem:[#allocation5 + $0x378] sm:$0xff]
    %v1053 = vld [vmem:[#allocation5 + $0x380] sm:$0xff]
    %v1054 = vld [vmem:[#allocation5 + $0x388] sm:$0xff]
    %v1055 = vld [vmem:[#allocation5 + $0x390] sm:$0xff]
    %v1056 = vld [vmem:[#allocation5 + $0x398] sm:$0xff]
    %v1057 = vld [vmem:[#allocation5 + $0x3a0] sm:$0xff]
    %v1058 = vld [vmem:[#allocation5 + $0x3a8] sm:$0xff]
    %v1059 = vld [vmem:[#allocation5 + $0x3b0] sm:$0xff]
    %v1060 = vld [vmem:[#allocation5 + $0x3b8] sm:$0xff]
    %v1061 = vld [vmem:[#allocation5 + $0x3c0] sm:$0xff]
    %v1062 = vld [vmem:[#allocation5 + $0x3c8] sm:$0xff]
    %v1063 = vld [vmem:[#allocation5 + $0x3d0] sm:$0xff]
    %v1064 = vld [vmem:[#allocation5 + $0x3d8] sm:$0xff]
    %v1065 = vld [vmem:[#allocation5 + $0x3e0] sm:$0xff]
    %v1066 = vld [vmem:[#allocation5 + $0x3e8] sm:$0xff]
    %v1067 = vld [vmem:[#allocation5 + $0x3f0] sm:$0xff]
    %v1068 = vld [vmem:[#allocation5 + $0x3f8] sm:$0xff]
    %1069 = vmatprep.subr.mxu0 %v1002
    %1070 = vmatpush1.msra.mxu0 %v1001
    %1071 = vmatprep.subr.mxu0 %v998
    %1072 = vmatpush1.msra.mxu0 %v997
    %1073 = vmatprep.subr.mxu0 %v994
    %1074 = vmatpush1.msra.mxu0 %v993
    %1075 = vmatprep.subr.mxu0 %v990
    %1076 = vmatpush1.msra.mxu0 %v989
    %1077 = vmatprep.subr.mxu0 %v986
    %1078 = vmatpush1.msra.mxu0 %v985
    %1079 = vmatprep.subr.mxu0 %v982
    %1080 = vmatpush1.msra.mxu0 %v981
    %1081 = vmatprep.subr.mxu0 %v978
    %1082 = vmatpush1.msra.mxu0 %v977
    %1083 = vmatprep.subr.mxu0 %v974
    %1084 = vmatpush1.msra.mxu0 %v973
    %1085 = vmatprep.subr.mxu0 %v970
    %1086 = vmatpush1.msra.mxu0 %v969
    %1087 = vmatprep.subr.mxu0 %v966
    %1088 = vmatpush1.msra.mxu0 %v965
    %1089 = vmatprep.subr.mxu0 %v962
    %1090 = vmatpush1.msra.mxu0 %v961
    %1091 = vmatprep.subr.mxu0 %v958
    %1092 = vmatpush1.msra.mxu0 %v957
    %1093 = vmatprep.subr.mxu0 %v954
    %1094 = vmatpush1.msra.mxu0 %v953
    %1095 = vmatprep.subr.mxu0 %v950
    %1096 = vmatpush1.msra.mxu0 %v949
    %1097 = vmatprep.subr.mxu0 %v946
    %1098 = vmatpush1.msra.mxu0 %v945
    %1099 = vmatprep.subr.mxu0 %v942
    %1100 = vmatpush1.msra.mxu0 %v941
    %1101 = vmatprep.subr.mxu0 %v1066
    %1102 = vmatpush2.msra.mxu0 %v1065
    %1103 = vmatprep.subr.mxu0 %v1062
    %1104 = vmatpush2.msra.mxu0 %v1061
    %1105 = vmatprep.subr.mxu0 %v1058
    %1106 = vmatpush2.msra.mxu0 %v1057
    %1107 = vmatprep.subr.mxu0 %v1054
    %1108 = vmatpush2.msra.mxu0 %v1053
    %1109 = vmatprep.subr.mxu0 %v1050
    %1110 = vmatpush2.msra.mxu0 %v1049
    %1111 = vmatprep.subr.mxu0 %v1046
    %1112 = vmatpush2.msra.mxu0 %v1045
    %1113 = vmatprep.subr.mxu0 %v1042
    %1114 = vmatpush2.msra.mxu0 %v1041
    %1115 = vmatprep.subr.mxu0 %v1038
    %1116 = vmatpush2.msra.mxu0 %v1037
    %1117 = vmatprep.subr.mxu0 %v1034
    %1118 = vmatpush2.msra.mxu0 %v1033
    %1119 = vmatprep.subr.mxu0 %v1030
    %1120 = vmatpush2.msra.mxu0 %v1029
    %1121 = vmatprep.subr.mxu0 %v1026
    %1122 = vmatpush2.msra.mxu0 %v1025
    %1123 = vmatprep.subr.mxu0 %v1022
    %1124 = vmatpush2.msra.mxu0 %v1021
    %1125 = vmatprep.subr.mxu0 %v1018
    %1126 = vmatpush2.msra.mxu0 %v1017
    %1127 = vmatprep.subr.mxu0 %v1014
    %1128 = vmatpush2.msra.mxu0 %v1013
    %1129 = vmatprep.subr.mxu0 %v1010
    %1130 = vmatpush2.msra.mxu0 %v1009
    %1131 = vmatprep.subr.mxu0 %v1006
    %1132 = vmatpush2.msra.mxu0 %v1005
    %1133 = vmatprep.mubr.f32.mxu0 %v463
    %1134 = vmatmul.mubr.f32.gmra.mxu0 %v940
    %v1135 = vpop.f32.mrf.mxu0
    %v1136 = vadd.f32 %v115, %v1135
    %v1137 = vpop.f32.mrf.mxu0
    %v1138 = vadd.f32 %v119, %v1137
    %1139 = vdwg.mxu0
    %1140 = vmatprep.subr.mxu0 %v1004
    %1141 = vmatpush1.msra.mxu0 %v1003
    %1142 = vmatprep.subr.mxu0 %v1000
    %1143 = vmatpush1.msra.mxu0 %v999
    %1144 = vmatprep.subr.mxu0 %v996
    %1145 = vmatpush1.msra.mxu0 %v995
    %1146 = vmatprep.subr.mxu0 %v992
    %1147 = vmatpush1.msra.mxu0 %v991
    %1148 = vmatprep.subr.mxu0 %v988
    %1149 = vmatpush1.msra.mxu0 %v987
    %1150 = vmatprep.subr.mxu0 %v984
    %1151 = vmatpush1.msra.mxu0 %v983
    %1152 = vmatprep.subr.mxu0 %v980
    %1153 = vmatpush1.msra.mxu0 %v979
    %1154 = vmatprep.subr.mxu0 %v976
    %1155 = vmatpush1.msra.mxu0 %v975
    %1156 = vmatprep.subr.mxu0 %v972
    %1157 = vmatpush1.msra.mxu0 %v971
    %1158 = vmatprep.subr.mxu0 %v968
    %1159 = vmatpush1.msra.mxu0 %v967
    %1160 = vmatprep.subr.mxu0 %v964
    %1161 = vmatpush1.msra.mxu0 %v963
    %1162 = vmatprep.subr.mxu0 %v960
    %1163 = vmatpush1.msra.mxu0 %v959
    %1164 = vmatprep.subr.mxu0 %v956
    %1165 = vmatpush1.msra.mxu0 %v955
    %1166 = vmatprep.subr.mxu0 %v952
    %1167 = vmatpush1.msra.mxu0 %v951
    %1168 = vmatprep.subr.mxu0 %v948
    %1169 = vmatpush1.msra.mxu0 %v947
    %1170 = vmatprep.subr.mxu0 %v944
    %1171 = vmatpush1.msra.mxu0 %v943
    %1172 = vmatprep.subr.mxu0 %v1068
    %1173 = vmatpush2.msra.mxu0 %v1067
    %1174 = vmatprep.subr.mxu0 %v1064
    %1175 = vmatpush2.msra.mxu0 %v1063
    %1176 = vmatprep.subr.mxu0 %v1060
    %1177 = vmatpush2.msra.mxu0 %v1059
    %1178 = vmatprep.subr.mxu0 %v1056
    %1179 = vmatpush2.msra.mxu0 %v1055
    %1180 = vmatprep.subr.mxu0 %v1052
    %1181 = vmatpush2.msra.mxu0 %v1051
    %1182 = vmatprep.subr.mxu0 %v1048
    %1183 = vmatpush2.msra.mxu0 %v1047
    %1184 = vmatprep.subr.mxu0 %v1044
    %1185 = vmatpush2.msra.mxu0 %v1043
    %1186 = vmatprep.subr.mxu0 %v1040
    %1187 = vmatpush2.msra.mxu0 %v1039
    %1188 = vmatprep.subr.mxu0 %v1036
    %1189 = vmatpush2.msra.mxu0 %v1035
    %1190 = vmatprep.subr.mxu0 %v1032
    %1191 = vmatpush2.msra.mxu0 %v1031
    %1192 = vmatprep.subr.mxu0 %v1028
    %1193 = vmatpush2.msra.mxu0 %v1027
    %1194 = vmatprep.subr.mxu0 %v1024
    %1195 = vmatpush2.msra.mxu0 %v1023
    %1196 = vmatprep.subr.mxu0 %v1020
    %1197 = vmatpush2.msra.mxu0 %v1019
    %1198 = vmatprep.subr.mxu0 %v1016
    %1199 = vmatpush2.msra.mxu0 %v1015
    %1200 = vmatprep.subr.mxu0 %v1012
    %1201 = vmatpush2.msra.mxu0 %v1011
    %1202 = vmatprep.subr.mxu0 %v1008
    %1203 = vmatpush2.msra.mxu0 %v1007
    %1204 = vmatprep.mubr.f32.mxu0 %v463
    %1205 = vmatmul.mubr.f32.gmra.mxu0 %v940
    %v1206 = vpop.f32.mrf.mxu0
    %v1207 = vadd.f32 %v123, %v1206
    %v1208 = vpop.f32.mrf.mxu0
    %v1209 = vadd.f32 %v127, %v1208
    %1210 = vdwg.mxu0
    %v1211 = vxor.u32 %v1136, 2147483648
    %v1212 = vmul.f32 %v1211, 1.442695
    %v1213 = vpow.pop %v1212
    %v1214 = vadd.f32 %v1213, 1.0
    %v1215 = vrcp.pop %v1214
    %v1216 = vmul.f32 1.0, %v1215
    %v1217 = vxor.u32 %v1138, 2147483648
    %v1218 = vmul.f32 %v1217, 1.442695
    %v1219 = vpow.pop %v1218
    %v1220 = vadd.f32 %v1219, 1.0
    %v1221 = vrcp.pop %v1220
    %v1222 = vmul.f32 1.0, %v1221
    %v1223 = vtanh.pop %v1207
    %v1224 = vxor.u32 %v1209, 2147483648
    %v1225 = vmul.f32 %v1224, 1.442695
    %v1226 = vpow.pop %v1225
    %v1227 = vadd.f32 %v1226, 1.0
    %v1228 = vrcp.pop %v1227
    %v1229 = vmul.f32 1.0, %v1228
    %v1230 = vmul.f32 %v1222, %v461
    %v1231 = vmul.f32 %v1216, %v1223
    %v1232 = vadd.f32 %v1230, %v1231
    %v1233 = vtanh.pop %v1232
    %v1234 = vmul.f32 %v1229, %v1233
    %s1235 = scalar_lea.vmem [#allocation13], 2
    %v1236 = vld [vmem:[%s1235] sm:$0x3]
    %v1237 = vld [vmem:[#allocation10] sm:$0xff]
    %v1238 = vld [vmem:[#allocation10 + $0x8] sm:$0xff]
    %v1239 = vld [vmem:[#allocation10 + $0x10] sm:$0xff]
    %v1240 = vld [vmem:[#allocation10 + $0x18] sm:$0xff]
    %v1241 = vld [vmem:[#allocation10 + $0x20] sm:$0xff]
    %v1242 = vld [vmem:[#allocation10 + $0x28] sm:$0xff]
    %v1243 = vld [vmem:[#allocation10 + $0x30] sm:$0xff]
    %v1244 = vld [vmem:[#allocation10 + $0x38] sm:$0xff]
    %v1245 = vld [vmem:[#allocation10 + $0x40] sm:$0xff]
    %v1246 = vld [vmem:[#allocation10 + $0x48] sm:$0xff]
    %v1247 = vld [vmem:[#allocation10 + $0x50] sm:$0xff]
    %v1248 = vld [vmem:[#allocation10 + $0x58] sm:$0xff]
    %v1249 = vld [vmem:[#allocation10 + $0x60] sm:$0xff]
    %v1250 = vld [vmem:[#allocation10 + $0x68] sm:$0xff]
    %v1251 = vld [vmem:[#allocation10 + $0x70] sm:$0xff]
    %v1252 = vld [vmem:[#allocation10 + $0x78] sm:$0xff]
    %1253 = vmatprep.subr.mxu0 0.0
    %1254 = vmatpush1.msra.mxu0 %v1252
    %1255 = vmatprep.subr.mxu0 0.0
    %1256 = vmatpush1.msra.mxu0 %v1251
    %1257 = vmatprep.subr.mxu0 0.0
    %1258 = vmatpush1.msra.mxu0 %v1250
    %1259 = vmatprep.subr.mxu0 0.0
    %1260 = vmatpush1.msra.mxu0 %v1249
    %1261 = vmatprep.subr.mxu0 0.0
    %1262 = vmatpush1.msra.mxu0 %v1248
    %1263 = vmatprep.subr.mxu0 0.0
    %1264 = vmatpush1.msra.mxu0 %v1247
    %1265 = vmatprep.subr.mxu0 0.0
    %1266 = vmatpush1.msra.mxu0 %v1246
    %1267 = vmatprep.subr.mxu0 0.0
    %1268 = vmatpush1.msra.mxu0 %v1245
    %1269 = vmatprep.subr.mxu0 0.0
    %1270 = vmatpush1.msra.mxu0 %v1244
    %1271 = vmatprep.subr.mxu0 0.0
    %1272 = vmatpush1.msra.mxu0 %v1243
    %1273 = vmatprep.subr.mxu0 0.0
    %1274 = vmatpush1.msra.mxu0 %v1242
    %1275 = vmatprep.subr.mxu0 0.0
    %1276 = vmatpush1.msra.mxu0 %v1241
    %1277 = vmatprep.subr.mxu0 0.0
    %1278 = vmatpush1.msra.mxu0 %v1240
    %1279 = vmatprep.subr.mxu0 0.0
    %1280 = vmatpush1.msra.mxu0 %v1239
    %1281 = vmatprep.subr.mxu0 0.0
    %1282 = vmatpush1.msra.mxu0 %v1238
    %1283 = vmatprep.subr.mxu0 0.0
    %1284 = vmatpush1.msra.mxu0 %v1237
    %1285 = vmatprep.subr.mxu0 0.0
    %1286 = vmatpush2.msra.mxu0 0.0
    %1287 = vmatprep.subr.mxu0 0.0
    %1288 = vmatpush2.msra.mxu0 0.0
    %1289 = vmatprep.subr.mxu0 0.0
    %1290 = vmatpush2.msra.mxu0 0.0
    %1291 = vmatprep.subr.mxu0 0.0
    %1292 = vmatpush2.msra.mxu0 0.0
    %1293 = vmatprep.subr.mxu0 0.0
    %1294 = vmatpush2.msra.mxu0 0.0
    %1295 = vmatprep.subr.mxu0 0.0
    %1296 = vmatpush2.msra.mxu0 0.0
    %1297 = vmatprep.subr.mxu0 0.0
    %1298 = vmatpush2.msra.mxu0 0.0
    %1299 = vmatprep.subr.mxu0 0.0
    %1300 = vmatpush2.msra.mxu0 0.0
    %1301 = vmatprep.subr.mxu0 0.0
    %1302 = vmatpush2.msra.mxu0 0.0
    %1303 = vmatprep.subr.mxu0 0.0
    %1304 = vmatpush2.msra.mxu0 0.0
    %1305 = vmatprep.subr.mxu0 0.0
    %1306 = vmatpush2.msra.mxu0 0.0
    %1307 = vmatprep.subr.mxu0 0.0
    %1308 = vmatpush2.msra.mxu0 0.0
    %1309 = vmatprep.subr.mxu0 0.0
    %1310 = vmatpush2.msra.mxu0 0.0
    %1311 = vmatprep.subr.mxu0 0.0
    %1312 = vmatpush2.msra.mxu0 0.0
    %1313 = vmatprep.subr.mxu0 0.0
    %1314 = vmatpush2.msra.mxu0 0.0
    %1315 = vmatprep.subr.mxu0 0.0
    %1316 = vmatpush2.msra.mxu0 0.0
    %1317 = vmatprep.mubr.f32.mxu0 0.0
    %1318 = vmatmul.mubr.f32.gmra.mxu0 %v1234
    %v1319 = vpop.f32.mrf.mxu0
    %v1320 = vadd.f32 0.0, %v1319
    %v1321 = vpop.f32.mrf.mxu0
    %1322 = vdwg.mxu0
    %v1323 = vadd.f32 %v1236, %v1320
    %1324 = vst [vmem:[%s1235] sm:$0x3] %v1323
    %s1325 = scalar_lea.vmem [#allocation2], 12
    %v1326 = vld [vmem:[%s1325] sm:$0x3]
    %v1327 = vld [vmem:[#allocation8] sm:$0xff]
    %v1328 = vld [vmem:[#allocation8 + $0x8] sm:$0xff]
    %v1329 = vld [vmem:[#allocation8 + $0x10] sm:$0xff]
    %v1330 = vld [vmem:[#allocation8 + $0x18] sm:$0xff]
    %v1331 = vld [vmem:[#allocation8 + $0x20] sm:$0xff]
    %v1332 = vld [vmem:[#allocation8 + $0x28] sm:$0xff]
    %v1333 = vld [vmem:[#allocation8 + $0x30] sm:$0xff]
    %v1334 = vld [vmem:[#allocation8 + $0x38] sm:$0xff]
    %v1335 = vld [vmem:[#allocation8 + $0x40] sm:$0xff]
    %v1336 = vld [vmem:[#allocation8 + $0x48] sm:$0xff]
    %v1337 = vld [vmem:[#allocation8 + $0x50] sm:$0xff]
    %v1338 = vld [vmem:[#allocation8 + $0x58] sm:$0xff]
    %v1339 = vld [vmem:[#allocation8 + $0x60] sm:$0xff]
    %v1340 = vld [vmem:[#allocation8 + $0x68] sm:$0xff]
    %v1341 = vld [vmem:[#allocation8 + $0x70] sm:$0xff]
    %v1342 = vld [vmem:[#allocation8 + $0x78] sm:$0xff]
    %v1343 = vld [vmem:[#allocation8 + $0x80] sm:$0xff]
    %v1344 = vld [vmem:[#allocation8 + $0x88] sm:$0xff]
    %v1345 = vld [vmem:[#allocation8 + $0x90] sm:$0xff]
    %v1346 = vld [vmem:[#allocation8 + $0x98] sm:$0xff]
    %v1347 = vld [vmem:[#allocation8 + $0xa0] sm:$0xff]
    %v1348 = vld [vmem:[#allocation8 + $0xa8] sm:$0xff]
    %v1349 = vld [vmem:[#allocation8 + $0xb0] sm:$0xff]
    %v1350 = vld [vmem:[#allocation8 + $0xb8] sm:$0xff]
    %v1351 = vld [vmem:[#allocation8 + $0xc0] sm:$0xff]
    %v1352 = vld [vmem:[#allocation8 + $0xc8] sm:$0xff]
    %v1353 = vld [vmem:[#allocation8 + $0xd0] sm:$0xff]
    %v1354 = vld [vmem:[#allocation8 + $0xd8] sm:$0xff]
    %v1355 = vld [vmem:[#allocation8 + $0xe0] sm:$0xff]
    %v1356 = vld [vmem:[#allocation8 + $0xe8] sm:$0xff]
    %v1357 = vld [vmem:[#allocation8 + $0xf0] sm:$0xff]
    %v1358 = vld [vmem:[#allocation8 + $0xf8] sm:$0xff]
    %v1359 = vld [vmem:[#allocation8 + $0x100] sm:$0xff]
    %v1360 = vld [vmem:[#allocation8 + $0x108] sm:$0xff]
    %v1361 = vld [vmem:[#allocation8 + $0x110] sm:$0xff]
    %v1362 = vld [vmem:[#allocation8 + $0x118] sm:$0xff]
    %v1363 = vld [vmem:[#allocation8 + $0x120] sm:$0xff]
    %v1364 = vld [vmem:[#allocation8 + $0x128] sm:$0xff]
    %v1365 = vld [vmem:[#allocation8 + $0x130] sm:$0xff]
    %v1366 = vld [vmem:[#allocation8 + $0x138] sm:$0xff]
    %v1367 = vld [vmem:[#allocation8 + $0x140] sm:$0xff]
    %v1368 = vld [vmem:[#allocation8 + $0x148] sm:$0xff]
    %v1369 = vld [vmem:[#allocation8 + $0x150] sm:$0xff]
    %v1370 = vld [vmem:[#allocation8 + $0x158] sm:$0xff]
    %v1371 = vld [vmem:[#allocation8 + $0x160] sm:$0xff]
    %v1372 = vld [vmem:[#allocation8 + $0x168] sm:$0xff]
    %v1373 = vld [vmem:[#allocation8 + $0x170] sm:$0xff]
    %v1374 = vld [vmem:[#allocation8 + $0x178] sm:$0xff]
    %v1375 = vld [vmem:[#allocation8 + $0x180] sm:$0xff]
    %v1376 = vld [vmem:[#allocation8 + $0x188] sm:$0xff]
    %v1377 = vld [vmem:[#allocation8 + $0x190] sm:$0xff]
    %v1378 = vld [vmem:[#allocation8 + $0x198] sm:$0xff]
    %v1379 = vld [vmem:[#allocation8 + $0x1a0] sm:$0xff]
    %v1380 = vld [vmem:[#allocation8 + $0x1a8] sm:$0xff]
    %v1381 = vld [vmem:[#allocation8 + $0x1b0] sm:$0xff]
    %v1382 = vld [vmem:[#allocation8 + $0x1b8] sm:$0xff]
    %v1383 = vld [vmem:[#allocation8 + $0x1c0] sm:$0xff]
    %v1384 = vld [vmem:[#allocation8 + $0x1c8] sm:$0xff]
    %v1385 = vld [vmem:[#allocation8 + $0x1d0] sm:$0xff]
    %v1386 = vld [vmem:[#allocation8 + $0x1d8] sm:$0xff]
    %v1387 = vld [vmem:[#allocation8 + $0x1e0] sm:$0xff]
    %v1388 = vld [vmem:[#allocation8 + $0x1e8] sm:$0xff]
    %v1389 = vld [vmem:[#allocation8 + $0x1f0] sm:$0xff]
    %v1390 = vld [vmem:[#allocation8 + $0x1f8] sm:$0xff]
    %v1391 = vld [vmem:[#allocation8 + $0x200] sm:$0xff]
    %v1392 = vld [vmem:[#allocation8 + $0x208] sm:$0xff]
    %v1393 = vld [vmem:[#allocation8 + $0x210] sm:$0xff]
    %v1394 = vld [vmem:[#allocation8 + $0x218] sm:$0xff]
    %v1395 = vld [vmem:[#allocation8 + $0x220] sm:$0xff]
    %v1396 = vld [vmem:[#allocation8 + $0x228] sm:$0xff]
    %v1397 = vld [vmem:[#allocation8 + $0x230] sm:$0xff]
    %v1398 = vld [vmem:[#allocation8 + $0x238] sm:$0xff]
    %v1399 = vld [vmem:[#allocation8 + $0x240] sm:$0xff]
    %v1400 = vld [vmem:[#allocation8 + $0x248] sm:$0xff]
    %v1401 = vld [vmem:[#allocation8 + $0x250] sm:$0xff]
    %v1402 = vld [vmem:[#allocation8 + $0x258] sm:$0xff]
    %v1403 = vld [vmem:[#allocation8 + $0x260] sm:$0xff]
    %v1404 = vld [vmem:[#allocation8 + $0x268] sm:$0xff]
    %v1405 = vld [vmem:[#allocation8 + $0x270] sm:$0xff]
    %v1406 = vld [vmem:[#allocation8 + $0x278] sm:$0xff]
    %v1407 = vld [vmem:[#allocation8 + $0x280] sm:$0xff]
    %v1408 = vld [vmem:[#allocation8 + $0x288] sm:$0xff]
    %v1409 = vld [vmem:[#allocation8 + $0x290] sm:$0xff]
    %v1410 = vld [vmem:[#allocation8 + $0x298] sm:$0xff]
    %v1411 = vld [vmem:[#allocation8 + $0x2a0] sm:$0xff]
    %v1412 = vld [vmem:[#allocation8 + $0x2a8] sm:$0xff]
    %v1413 = vld [vmem:[#allocation8 + $0x2b0] sm:$0xff]
    %v1414 = vld [vmem:[#allocation8 + $0x2b8] sm:$0xff]
    %v1415 = vld [vmem:[#allocation8 + $0x2c0] sm:$0xff]
    %v1416 = vld [vmem:[#allocation8 + $0x2c8] sm:$0xff]
    %v1417 = vld [vmem:[#allocation8 + $0x2d0] sm:$0xff]
    %v1418 = vld [vmem:[#allocation8 + $0x2d8] sm:$0xff]
    %v1419 = vld [vmem:[#allocation8 + $0x2e0] sm:$0xff]
    %v1420 = vld [vmem:[#allocation8 + $0x2e8] sm:$0xff]
    %v1421 = vld [vmem:[#allocation8 + $0x2f0] sm:$0xff]
    %v1422 = vld [vmem:[#allocation8 + $0x2f8] sm:$0xff]
    %v1423 = vld [vmem:[#allocation8 + $0x300] sm:$0xff]
    %v1424 = vld [vmem:[#allocation8 + $0x308] sm:$0xff]
    %v1425 = vld [vmem:[#allocation8 + $0x310] sm:$0xff]
    %v1426 = vld [vmem:[#allocation8 + $0x318] sm:$0xff]
    %v1427 = vld [vmem:[#allocation8 + $0x320] sm:$0xff]
    %v1428 = vld [vmem:[#allocation8 + $0x328] sm:$0xff]
    %v1429 = vld [vmem:[#allocation8 + $0x330] sm:$0xff]
    %v1430 = vld [vmem:[#allocation8 + $0x338] sm:$0xff]
    %v1431 = vld [vmem:[#allocation8 + $0x340] sm:$0xff]
    %v1432 = vld [vmem:[#allocation8 + $0x348] sm:$0xff]
    %v1433 = vld [vmem:[#allocation8 + $0x350] sm:$0xff]
    %v1434 = vld [vmem:[#allocation8 + $0x358] sm:$0xff]
    %v1435 = vld [vmem:[#allocation8 + $0x360] sm:$0xff]
    %v1436 = vld [vmem:[#allocation8 + $0x368] sm:$0xff]
    %v1437 = vld [vmem:[#allocation8 + $0x370] sm:$0xff]
    %v1438 = vld [vmem:[#allocation8 + $0x378] sm:$0xff]
    %v1439 = vld [vmem:[#allocation8 + $0x380] sm:$0xff]
    %v1440 = vld [vmem:[#allocation8 + $0x388] sm:$0xff]
    %v1441 = vld [vmem:[#allocation8 + $0x390] sm:$0xff]
    %v1442 = vld [vmem:[#allocation8 + $0x398] sm:$0xff]
    %v1443 = vld [vmem:[#allocation8 + $0x3a0] sm:$0xff]
    %v1444 = vld [vmem:[#allocation8 + $0x3a8] sm:$0xff]
    %v1445 = vld [vmem:[#allocation8 + $0x3b0] sm:$0xff]
    %v1446 = vld [vmem:[#allocation8 + $0x3b8] sm:$0xff]
    %v1447 = vld [vmem:[#allocation8 + $0x3c0] sm:$0xff]
    %v1448 = vld [vmem:[#allocation8 + $0x3c8] sm:$0xff]
    %v1449 = vld [vmem:[#allocation8 + $0x3d0] sm:$0xff]
    %v1450 = vld [vmem:[#allocation8 + $0x3d8] sm:$0xff]
    %v1451 = vld [vmem:[#allocation8 + $0x3e0] sm:$0xff]
    %v1452 = vld [vmem:[#allocation8 + $0x3e8] sm:$0xff]
    %v1453 = vld [vmem:[#allocation8 + $0x3f0] sm:$0xff]
    %v1454 = vld [vmem:[#allocation8 + $0x3f8] sm:$0xff]
    %1455 = vmatprep.subr.mxu0 %v1388
    %1456 = vmatpush1.msra.mxu0 %v1387
    %1457 = vmatprep.subr.mxu0 %v1384
    %1458 = vmatpush1.msra.mxu0 %v1383
    %1459 = vmatprep.subr.mxu0 %v1380
    %1460 = vmatpush1.msra.mxu0 %v1379
    %1461 = vmatprep.subr.mxu0 %v1376
    %1462 = vmatpush1.msra.mxu0 %v1375
    %1463 = vmatprep.subr.mxu0 %v1372
    %1464 = vmatpush1.msra.mxu0 %v1371
    %1465 = vmatprep.subr.mxu0 %v1368
    %1466 = vmatpush1.msra.mxu0 %v1367
    %1467 = vmatprep.subr.mxu0 %v1364
    %1468 = vmatpush1.msra.mxu0 %v1363
    %1469 = vmatprep.subr.mxu0 %v1360
    %1470 = vmatpush1.msra.mxu0 %v1359
    %1471 = vmatprep.subr.mxu0 %v1356
    %1472 = vmatpush1.msra.mxu0 %v1355
    %1473 = vmatprep.subr.mxu0 %v1352
    %1474 = vmatpush1.msra.mxu0 %v1351
    %1475 = vmatprep.subr.mxu0 %v1348
    %1476 = vmatpush1.msra.mxu0 %v1347
    %1477 = vmatprep.subr.mxu0 %v1344
    %1478 = vmatpush1.msra.mxu0 %v1343
    %1479 = vmatprep.subr.mxu0 %v1340
    %1480 = vmatpush1.msra.mxu0 %v1339
    %1481 = vmatprep.subr.mxu0 %v1336
    %1482 = vmatpush1.msra.mxu0 %v1335
    %1483 = vmatprep.subr.mxu0 %v1332
    %1484 = vmatpush1.msra.mxu0 %v1331
    %1485 = vmatprep.subr.mxu0 %v1328
    %1486 = vmatpush1.msra.mxu0 %v1327
    %1487 = vmatprep.subr.mxu0 %v1452
    %1488 = vmatpush2.msra.mxu0 %v1451
    %1489 = vmatprep.subr.mxu0 %v1448
    %1490 = vmatpush2.msra.mxu0 %v1447
    %1491 = vmatprep.subr.mxu0 %v1444
    %1492 = vmatpush2.msra.mxu0 %v1443
    %1493 = vmatprep.subr.mxu0 %v1440
    %1494 = vmatpush2.msra.mxu0 %v1439
    %1495 = vmatprep.subr.mxu0 %v1436
    %1496 = vmatpush2.msra.mxu0 %v1435
    %1497 = vmatprep.subr.mxu0 %v1432
    %1498 = vmatpush2.msra.mxu0 %v1431
    %1499 = vmatprep.subr.mxu0 %v1428
    %1500 = vmatpush2.msra.mxu0 %v1427
    %1501 = vmatprep.subr.mxu0 %v1424
    %1502 = vmatpush2.msra.mxu0 %v1423
    %1503 = vmatprep.subr.mxu0 %v1420
    %1504 = vmatpush2.msra.mxu0 %v1419
    %1505 = vmatprep.subr.mxu0 %v1416
    %1506 = vmatpush2.msra.mxu0 %v1415
    %1507 = vmatprep.subr.mxu0 %v1412
    %1508 = vmatpush2.msra.mxu0 %v1411
    %1509 = vmatprep.subr.mxu0 %v1408
    %1510 = vmatpush2.msra.mxu0 %v1407
    %1511 = vmatprep.subr.mxu0 %v1404
    %1512 = vmatpush2.msra.mxu0 %v1403
    %1513 = vmatprep.subr.mxu0 %v1400
    %1514 = vmatpush2.msra.mxu0 %v1399
    %1515 = vmatprep.subr.mxu0 %v1396
    %1516 = vmatpush2.msra.mxu0 %v1395
    %1517 = vmatprep.subr.mxu0 %v1392
    %1518 = vmatpush2.msra.mxu0 %v1391
    %1519 = vmatprep.mubr.f32.mxu0 %v848
    %1520 = vmatmul.mubr.f32.gmra.mxu0 %v1326
    %v1521 = vpop.f32.mrf.mxu0
    %v1522 = vadd.f32 %v137, %v1521
    %v1523 = vpop.f32.mrf.mxu0
    %v1524 = vadd.f32 %v141, %v1523
    %1525 = vdwg.mxu0
    %1526 = vmatprep.subr.mxu0 %v1390
    %1527 = vmatpush1.msra.mxu0 %v1389
    %1528 = vmatprep.subr.mxu0 %v1386
    %1529 = vmatpush1.msra.mxu0 %v1385
    %1530 = vmatprep.subr.mxu0 %v1382
    %1531 = vmatpush1.msra.mxu0 %v1381
    %1532 = vmatprep.subr.mxu0 %v1378
    %1533 = vmatpush1.msra.mxu0 %v1377
    %1534 = vmatprep.subr.mxu0 %v1374
    %1535 = vmatpush1.msra.mxu0 %v1373
    %1536 = vmatprep.subr.mxu0 %v1370
    %1537 = vmatpush1.msra.mxu0 %v1369
    %1538 = vmatprep.subr.mxu0 %v1366
    %1539 = vmatpush1.msra.mxu0 %v1365
    %1540 = vmatprep.subr.mxu0 %v1362
    %1541 = vmatpush1.msra.mxu0 %v1361
    %1542 = vmatprep.subr.mxu0 %v1358
    %1543 = vmatpush1.msra.mxu0 %v1357
    %1544 = vmatprep.subr.mxu0 %v1354
    %1545 = vmatpush1.msra.mxu0 %v1353
    %1546 = vmatprep.subr.mxu0 %v1350
    %1547 = vmatpush1.msra.mxu0 %v1349
    %1548 = vmatprep.subr.mxu0 %v1346
    %1549 = vmatpush1.msra.mxu0 %v1345
    %1550 = vmatprep.subr.mxu0 %v1342
    %1551 = vmatpush1.msra.mxu0 %v1341
    %1552 = vmatprep.subr.mxu0 %v1338
    %1553 = vmatpush1.msra.mxu0 %v1337
    %1554 = vmatprep.subr.mxu0 %v1334
    %1555 = vmatpush1.msra.mxu0 %v1333
    %1556 = vmatprep.subr.mxu0 %v1330
    %1557 = vmatpush1.msra.mxu0 %v1329
    %1558 = vmatprep.subr.mxu0 %v1454
    %1559 = vmatpush2.msra.mxu0 %v1453
    %1560 = vmatprep.subr.mxu0 %v1450
    %1561 = vmatpush2.msra.mxu0 %v1449
    %1562 = vmatprep.subr.mxu0 %v1446
    %1563 = vmatpush2.msra.mxu0 %v1445
    %1564 = vmatprep.subr.mxu0 %v1442
    %1565 = vmatpush2.msra.mxu0 %v1441
    %1566 = vmatprep.subr.mxu0 %v1438
    %1567 = vmatpush2.msra.mxu0 %v1437
    %1568 = vmatprep.subr.mxu0 %v1434
    %1569 = vmatpush2.msra.mxu0 %v1433
    %1570 = vmatprep.subr.mxu0 %v1430
    %1571 = vmatpush2.msra.mxu0 %v1429
    %1572 = vmatprep.subr.mxu0 %v1426
    %1573 = vmatpush2.msra.mxu0 %v1425
    %1574 = vmatprep.subr.mxu0 %v1422
    %1575 = vmatpush2.msra.mxu0 %v1421
    %1576 = vmatprep.subr.mxu0 %v1418
    %1577 = vmatpush2.msra.mxu0 %v1417
    %1578 = vmatprep.subr.mxu0 %v1414
    %1579 = vmatpush2.msra.mxu0 %v1413
    %1580 = vmatprep.subr.mxu0 %v1410
    %1581 = vmatpush2.msra.mxu0 %v1409
    %1582 = vmatprep.subr.mxu0 %v1406
    %1583 = vmatpush2.msra.mxu0 %v1405
    %1584 = vmatprep.subr.mxu0 %v1402
    %1585 = vmatpush2.msra.mxu0 %v1401
    %1586 = vmatprep.subr.mxu0 %v1398
    %1587 = vmatpush2.msra.mxu0 %v1397
    %1588 = vmatprep.subr.mxu0 %v1394
    %1589 = vmatpush2.msra.mxu0 %v1393
    %1590 = vmatprep.mubr.f32.mxu0 %v848
    %1591 = vmatmul.mubr.f32.gmra.mxu0 %v1326
    %v1592 = vpop.f32.mrf.mxu0
    %v1593 = vadd.f32 %v145, %v1592
    %v1594 = vpop.f32.mrf.mxu0
    %v1595 = vadd.f32 %v149, %v1594
    %1596 = vdwg.mxu0
    %v1597 = vxor.u32 %v1522, 2147483648
    %v1598 = vmul.f32 %v1597, 1.442695
    %v1599 = vpow.pop %v1598
    %v1600 = vadd.f32 %v1599, 1.0
    %v1601 = vrcp.pop %v1600
    %v1602 = vmul.f32 1.0, %v1601
    %v1603 = vxor.u32 %v1524, 2147483648
    %v1604 = vmul.f32 %v1603, 1.442695
    %v1605 = vpow.pop %v1604
    %v1606 = vadd.f32 %v1605, 1.0
    %v1607 = vrcp.pop %v1606
    %v1608 = vmul.f32 1.0, %v1607
    %v1609 = vtanh.pop %v1593
    %v1610 = vxor.u32 %v1595, 2147483648
    %v1611 = vmul.f32 %v1610, 1.442695
    %v1612 = vpow.pop %v1611
    %v1613 = vadd.f32 %v1612, 1.0
    %v1614 = vrcp.pop %v1613
    %v1615 = vmul.f32 1.0, %v1614
    %v1616 = vmul.f32 %v1608, %v846
    %v1617 = vmul.f32 %v1602, %v1609
    %v1618 = vadd.f32 %v1616, %v1617
    %v1619 = vtanh.pop %v1618
    %v1620 = vmul.f32 %v1615, %v1619
    %s1621 = scalar_lea.vmem [#allocation13], 12
    %v1622 = vld [vmem:[%s1621] sm:$0x3]
    %v1623 = vld [vmem:[#allocation11] sm:$0xff]
    %v1624 = vld [vmem:[#allocation11 + $0x8] sm:$0xff]
    %v1625 = vld [vmem:[#allocation11 + $0x10] sm:$0xff]
    %v1626 = vld [vmem:[#allocation11 + $0x18] sm:$0xff]
    %v1627 = vld [vmem:[#allocation11 + $0x20] sm:$0xff]
    %v1628 = vld [vmem:[#allocation11 + $0x28] sm:$0xff]
    %v1629 = vld [vmem:[#allocation11 + $0x30] sm:$0xff]
    %v1630 = vld [vmem:[#allocation11 + $0x38] sm:$0xff]
    %v1631 = vld [vmem:[#allocation11 + $0x40] sm:$0xff]
    %v1632 = vld [vmem:[#allocation11 + $0x48] sm:$0xff]
    %v1633 = vld [vmem:[#allocation11 + $0x50] sm:$0xff]
    %v1634 = vld [vmem:[#allocation11 + $0x58] sm:$0xff]
    %v1635 = vld [vmem:[#allocation11 + $0x60] sm:$0xff]
    %v1636 = vld [vmem:[#allocation11 + $0x68] sm:$0xff]
    %v1637 = vld [vmem:[#allocation11 + $0x70] sm:$0xff]
    %v1638 = vld [vmem:[#allocation11 + $0x78] sm:$0xff]
    %1639 = vmatprep.subr.mxu0 0.0
    %1640 = vmatpush1.msra.mxu0 %v1638
    %1641 = vmatprep.subr.mxu0 0.0
    %1642 = vmatpush1.msra.mxu0 %v1637
    %1643 = vmatprep.subr.mxu0 0.0
    %1644 = vmatpush1.msra.mxu0 %v1636
    %1645 = vmatprep.subr.mxu0 0.0
    %1646 = vmatpush1.msra.mxu0 %v1635
    %1647 = vmatprep.subr.mxu0 0.0
    %1648 = vmatpush1.msra.mxu0 %v1634
    %1649 = vmatprep.subr.mxu0 0.0
    %1650 = vmatpush1.msra.mxu0 %v1633
    %1651 = vmatprep.subr.mxu0 0.0
    %1652 = vmatpush1.msra.mxu0 %v1632
    %1653 = vmatprep.subr.mxu0 0.0
    %1654 = vmatpush1.msra.mxu0 %v1631
    %1655 = vmatprep.subr.mxu0 0.0
    %1656 = vmatpush1.msra.mxu0 %v1630
    %1657 = vmatprep.subr.mxu0 0.0
    %1658 = vmatpush1.msra.mxu0 %v1629
    %1659 = vmatprep.subr.mxu0 0.0
    %1660 = vmatpush1.msra.mxu0 %v1628
    %1661 = vmatprep.subr.mxu0 0.0
    %1662 = vmatpush1.msra.mxu0 %v1627
    %1663 = vmatprep.subr.mxu0 0.0
    %1664 = vmatpush1.msra.mxu0 %v1626
    %1665 = vmatprep.subr.mxu0 0.0
    %1666 = vmatpush1.msra.mxu0 %v1625
    %1667 = vmatprep.subr.mxu0 0.0
    %1668 = vmatpush1.msra.mxu0 %v1624
    %1669 = vmatprep.subr.mxu0 0.0
    %1670 = vmatpush1.msra.mxu0 %v1623
    %1671 = vmatprep.subr.mxu0 0.0
    %1672 = vmatpush2.msra.mxu0 0.0
    %1673 = vmatprep.subr.mxu0 0.0
    %1674 = vmatpush2.msra.mxu0 0.0
    %1675 = vmatprep.subr.mxu0 0.0
    %1676 = vmatpush2.msra.mxu0 0.0
    %1677 = vmatprep.subr.mxu0 0.0
    %1678 = vmatpush2.msra.mxu0 0.0
    %1679 = vmatprep.subr.mxu0 0.0
    %1680 = vmatpush2.msra.mxu0 0.0
    %1681 = vmatprep.subr.mxu0 0.0
    %1682 = vmatpush2.msra.mxu0 0.0
    %1683 = vmatprep.subr.mxu0 0.0
    %1684 = vmatpush2.msra.mxu0 0.0
    %1685 = vmatprep.subr.mxu0 0.0
    %1686 = vmatpush2.msra.mxu0 0.0
    %1687 = vmatprep.subr.mxu0 0.0
    %1688 = vmatpush2.msra.mxu0 0.0
    %1689 = vmatprep.subr.mxu0 0.0
    %1690 = vmatpush2.msra.mxu0 0.0
    %1691 = vmatprep.subr.mxu0 0.0
    %1692 = vmatpush2.msra.mxu0 0.0
    %1693 = vmatprep.subr.mxu0 0.0
    %1694 = vmatpush2.msra.mxu0 0.0
    %1695 = vmatprep.subr.mxu0 0.0
    %1696 = vmatpush2.msra.mxu0 0.0
    %1697 = vmatprep.subr.mxu0 0.0
    %1698 = vmatpush2.msra.mxu0 0.0
    %1699 = vmatprep.subr.mxu0 0.0
    %1700 = vmatpush2.msra.mxu0 0.0
    %1701 = vmatprep.subr.mxu0 0.0
    %1702 = vmatpush2.msra.mxu0 0.0
    %1703 = vmatprep.mubr.f32.mxu0 0.0
    %1704 = vmatmul.mubr.f32.gmra.mxu0 %v1620
    %v1705 = vpop.f32.mrf.mxu0
    %v1706 = vadd.f32 0.0, %v1705
    %v1707 = vpop.f32.mrf.mxu0
    %1708 = vdwg.mxu0
    %v1709 = vadd.f32 %v1622, %v1706
    %1710 = vst [vmem:[%s1621] sm:$0x3] %v1709
    %s1711 = scalar_lea.vmem [#allocation2], 4
    %v1712 = vld [vmem:[%s1711] sm:$0x3]
    %v1713 = vld [vmem:[#allocation5] sm:$0xff]
    %v1714 = vld [vmem:[#allocation5 + $0x8] sm:$0xff]
    %v1715 = vld [vmem:[#allocation5 + $0x10] sm:$0xff]
    %v1716 = vld [vmem:[#allocation5 + $0x18] sm:$0xff]
    %v1717 = vld [vmem:[#allocation5 + $0x20] sm:$0xff]
    %v1718 = vld [vmem:[#allocation5 + $0x28] sm:$0xff]
    %v1719 = vld [vmem:[#allocation5 + $0x30] sm:$0xff]
    %v1720 = vld [vmem:[#allocation5 + $0x38] sm:$0xff]
    %v1721 = vld [vmem:[#allocation5 + $0x40] sm:$0xff]
    %v1722 = vld [vmem:[#allocation5 + $0x48] sm:$0xff]
    %v1723 = vld [vmem:[#allocation5 + $0x50] sm:$0xff]
    %v1724 = vld [vmem:[#allocation5 + $0x58] sm:$0xff]
    %v1725 = vld [vmem:[#allocation5 + $0x60] sm:$0xff]
    %v1726 = vld [vmem:[#allocation5 + $0x68] sm:$0xff]
    %v1727 = vld [vmem:[#allocation5 + $0x70] sm:$0xff]
    %v1728 = vld [vmem:[#allocation5 + $0x78] sm:$0xff]
    %v1729 = vld [vmem:[#allocation5 + $0x80] sm:$0xff]
    %v1730 = vld [vmem:[#allocation5 + $0x88] sm:$0xff]
    %v1731 = vld [vmem:[#allocation5 + $0x90] sm:$0xff]
    %v1732 = vld [vmem:[#allocation5 + $0x98] sm:$0xff]
    %v1733 = vld [vmem:[#allocation5 + $0xa0] sm:$0xff]
    %v1734 = vld [vmem:[#allocation5 + $0xa8] sm:$0xff]
    %v1735 = vld [vmem:[#allocation5 + $0xb0] sm:$0xff]
    %v1736 = vld [vmem:[#allocation5 + $0xb8] sm:$0xff]
    %v1737 = vld [vmem:[#allocation5 + $0xc0] sm:$0xff]
    %v1738 = vld [vmem:[#allocation5 + $0xc8] sm:$0xff]
    %v1739 = vld [vmem:[#allocation5 + $0xd0] sm:$0xff]
    %v1740 = vld [vmem:[#allocation5 + $0xd8] sm:$0xff]
    %v1741 = vld [vmem:[#allocation5 + $0xe0] sm:$0xff]
    %v1742 = vld [vmem:[#allocation5 + $0xe8] sm:$0xff]
    %v1743 = vld [vmem:[#allocation5 + $0xf0] sm:$0xff]
    %v1744 = vld [vmem:[#allocation5 + $0xf8] sm:$0xff]
    %v1745 = vld [vmem:[#allocation5 + $0x100] sm:$0xff]
    %v1746 = vld [vmem:[#allocation5 + $0x108] sm:$0xff]
    %v1747 = vld [vmem:[#allocation5 + $0x110] sm:$0xff]
    %v1748 = vld [vmem:[#allocation5 + $0x118] sm:$0xff]
    %v1749 = vld [vmem:[#allocation5 + $0x120] sm:$0xff]
    %v1750 = vld [vmem:[#allocation5 + $0x128] sm:$0xff]
    %v1751 = vld [vmem:[#allocation5 + $0x130] sm:$0xff]
    %v1752 = vld [vmem:[#allocation5 + $0x138] sm:$0xff]
    %v1753 = vld [vmem:[#allocation5 + $0x140] sm:$0xff]
    %v1754 = vld [vmem:[#allocation5 + $0x148] sm:$0xff]
    %v1755 = vld [vmem:[#allocation5 + $0x150] sm:$0xff]
    %v1756 = vld [vmem:[#allocation5 + $0x158] sm:$0xff]
    %v1757 = vld [vmem:[#allocation5 + $0x160] sm:$0xff]
    %v1758 = vld [vmem:[#allocation5 + $0x168] sm:$0xff]
    %v1759 = vld [vmem:[#allocation5 + $0x170] sm:$0xff]
    %v1760 = vld [vmem:[#allocation5 + $0x178] sm:$0xff]
    %v1761 = vld [vmem:[#allocation5 + $0x180] sm:$0xff]
    %v1762 = vld [vmem:[#allocation5 + $0x188] sm:$0xff]
    %v1763 = vld [vmem:[#allocation5 + $0x190] sm:$0xff]
    %v1764 = vld [vmem:[#allocation5 + $0x198] sm:$0xff]
    %v1765 = vld [vmem:[#allocation5 + $0x1a0] sm:$0xff]
    %v1766 = vld [vmem:[#allocation5 + $0x1a8] sm:$0xff]
    %v1767 = vld [vmem:[#allocation5 + $0x1b0] sm:$0xff]
    %v1768 = vld [vmem:[#allocation5 + $0x1b8] sm:$0xff]
    %v1769 = vld [vmem:[#allocation5 + $0x1c0] sm:$0xff]
    %v1770 = vld [vmem:[#allocation5 + $0x1c8] sm:$0xff]
    %v1771 = vld [vmem:[#allocation5 + $0x1d0] sm:$0xff]
    %v1772 = vld [vmem:[#allocation5 + $0x1d8] sm:$0xff]
    %v1773 = vld [vmem:[#allocation5 + $0x1e0] sm:$0xff]
    %v1774 = vld [vmem:[#allocation5 + $0x1e8] sm:$0xff]
    %v1775 = vld [vmem:[#allocation5 + $0x1f0] sm:$0xff]
    %v1776 = vld [vmem:[#allocation5 + $0x1f8] sm:$0xff]
    %v1777 = vld [vmem:[#allocation5 + $0x200] sm:$0xff]
    %v1778 = vld [vmem:[#allocation5 + $0x208] sm:$0xff]
    %v1779 = vld [vmem:[#allocation5 + $0x210] sm:$0xff]
    %v1780 = vld [vmem:[#allocation5 + $0x218] sm:$0xff]
    %v1781 = vld [vmem:[#allocation5 + $0x220] sm:$0xff]
    %v1782 = vld [vmem:[#allocation5 + $0x228] sm:$0xff]
    %v1783 = vld [vmem:[#allocation5 + $0x230] sm:$0xff]
    %v1784 = vld [vmem:[#allocation5 + $0x238] sm:$0xff]
    %v1785 = vld [vmem:[#allocation5 + $0x240] sm:$0xff]
    %v1786 = vld [vmem:[#allocation5 + $0x248] sm:$0xff]
    %v1787 = vld [vmem:[#allocation5 + $0x250] sm:$0xff]
    %v1788 = vld [vmem:[#allocation5 + $0x258] sm:$0xff]
    %v1789 = vld [vmem:[#allocation5 + $0x260] sm:$0xff]
    %v1790 = vld [vmem:[#allocation5 + $0x268] sm:$0xff]
    %v1791 = vld [vmem:[#allocation5 + $0x270] sm:$0xff]
    %v1792 = vld [vmem:[#allocation5 + $0x278] sm:$0xff]
    %v1793 = vld [vmem:[#allocation5 + $0x280] sm:$0xff]
    %v1794 = vld [vmem:[#allocation5 + $0x288] sm:$0xff]
    %v1795 = vld [vmem:[#allocation5 + $0x290] sm:$0xff]
    %v1796 = vld [vmem:[#allocation5 + $0x298] sm:$0xff]
    %v1797 = vld [vmem:[#allocation5 + $0x2a0] sm:$0xff]
    %v1798 = vld [vmem:[#allocation5 + $0x2a8] sm:$0xff]
    %v1799 = vld [vmem:[#allocation5 + $0x2b0] sm:$0xff]
    %v1800 = vld [vmem:[#allocation5 + $0x2b8] sm:$0xff]
    %v1801 = vld [vmem:[#allocation5 + $0x2c0] sm:$0xff]
    %v1802 = vld [vmem:[#allocation5 + $0x2c8] sm:$0xff]
    %v1803 = vld [vmem:[#allocation5 + $0x2d0] sm:$0xff]
    %v1804 = vld [vmem:[#allocation5 + $0x2d8] sm:$0xff]
    %v1805 = vld [vmem:[#allocation5 + $0x2e0] sm:$0xff]
    %v1806 = vld [vmem:[#allocation5 + $0x2e8] sm:$0xff]
    %v1807 = vld [vmem:[#allocation5 + $0x2f0] sm:$0xff]
    %v1808 = vld [vmem:[#allocation5 + $0x2f8] sm:$0xff]
    %v1809 = vld [vmem:[#allocation5 + $0x300] sm:$0xff]
    %v1810 = vld [vmem:[#allocation5 + $0x308] sm:$0xff]
    %v1811 = vld [vmem:[#allocation5 + $0x310] sm:$0xff]
    %v1812 = vld [vmem:[#allocation5 + $0x318] sm:$0xff]
    %v1813 = vld [vmem:[#allocation5 + $0x320] sm:$0xff]
    %v1814 = vld [vmem:[#allocation5 + $0x328] sm:$0xff]
    %v1815 = vld [vmem:[#allocation5 + $0x330] sm:$0xff]
    %v1816 = vld [vmem:[#allocation5 + $0x338] sm:$0xff]
    %v1817 = vld [vmem:[#allocation5 + $0x340] sm:$0xff]
    %v1818 = vld [vmem:[#allocation5 + $0x348] sm:$0xff]
    %v1819 = vld [vmem:[#allocation5 + $0x350] sm:$0xff]
    %v1820 = vld [vmem:[#allocation5 + $0x358] sm:$0xff]
    %v1821 = vld [vmem:[#allocation5 + $0x360] sm:$0xff]
    %v1822 = vld [vmem:[#allocation5 + $0x368] sm:$0xff]
    %v1823 = vld [vmem:[#allocation5 + $0x370] sm:$0xff]
    %v1824 = vld [vmem:[#allocation5 + $0x378] sm:$0xff]
    %v1825 = vld [vmem:[#allocation5 + $0x380] sm:$0xff]
    %v1826 = vld [vmem:[#allocation5 + $0x388] sm:$0xff]
    %v1827 = vld [vmem:[#allocation5 + $0x390] sm:$0xff]
    %v1828 = vld [vmem:[#allocation5 + $0x398] sm:$0xff]
    %v1829 = vld [vmem:[#allocation5 + $0x3a0] sm:$0xff]
    %v1830 = vld [vmem:[#allocation5 + $0x3a8] sm:$0xff]
    %v1831 = vld [vmem:[#allocation5 + $0x3b0] sm:$0xff]
    %v1832 = vld [vmem:[#allocation5 + $0x3b8] sm:$0xff]
    %v1833 = vld [vmem:[#allocation5 + $0x3c0] sm:$0xff]
    %v1834 = vld [vmem:[#allocation5 + $0x3c8] sm:$0xff]
    %v1835 = vld [vmem:[#allocation5 + $0x3d0] sm:$0xff]
    %v1836 = vld [vmem:[#allocation5 + $0x3d8] sm:$0xff]
    %v1837 = vld [vmem:[#allocation5 + $0x3e0] sm:$0xff]
    %v1838 = vld [vmem:[#allocation5 + $0x3e8] sm:$0xff]
    %v1839 = vld [vmem:[#allocation5 + $0x3f0] sm:$0xff]
    %v1840 = vld [vmem:[#allocation5 + $0x3f8] sm:$0xff]
    %1841 = vmatprep.subr.mxu0 %v1774
    %1842 = vmatpush1.msra.mxu0 %v1773
    %1843 = vmatprep.subr.mxu0 %v1770
    %1844 = vmatpush1.msra.mxu0 %v1769
    %1845 = vmatprep.subr.mxu0 %v1766
    %1846 = vmatpush1.msra.mxu0 %v1765
    %1847 = vmatprep.subr.mxu0 %v1762
    %1848 = vmatpush1.msra.mxu0 %v1761
    %1849 = vmatprep.subr.mxu0 %v1758
    %1850 = vmatpush1.msra.mxu0 %v1757
    %1851 = vmatprep.subr.mxu0 %v1754
    %1852 = vmatpush1.msra.mxu0 %v1753
    %1853 = vmatprep.subr.mxu0 %v1750
    %1854 = vmatpush1.msra.mxu0 %v1749
    %1855 = vmatprep.subr.mxu0 %v1746
    %1856 = vmatpush1.msra.mxu0 %v1745
    %1857 = vmatprep.subr.mxu0 %v1742
    %1858 = vmatpush1.msra.mxu0 %v1741
    %1859 = vmatprep.subr.mxu0 %v1738
    %1860 = vmatpush1.msra.mxu0 %v1737
    %1861 = vmatprep.subr.mxu0 %v1734
    %1862 = vmatpush1.msra.mxu0 %v1733
    %1863 = vmatprep.subr.mxu0 %v1730
    %1864 = vmatpush1.msra.mxu0 %v1729
    %1865 = vmatprep.subr.mxu0 %v1726
    %1866 = vmatpush1.msra.mxu0 %v1725
    %1867 = vmatprep.subr.mxu0 %v1722
    %1868 = vmatpush1.msra.mxu0 %v1721
    %1869 = vmatprep.subr.mxu0 %v1718
    %1870 = vmatpush1.msra.mxu0 %v1717
    %1871 = vmatprep.subr.mxu0 %v1714
    %1872 = vmatpush1.msra.mxu0 %v1713
    %1873 = vmatprep.subr.mxu0 %v1838
    %1874 = vmatpush2.msra.mxu0 %v1837
    %1875 = vmatprep.subr.mxu0 %v1834
    %1876 = vmatpush2.msra.mxu0 %v1833
    %1877 = vmatprep.subr.mxu0 %v1830
    %1878 = vmatpush2.msra.mxu0 %v1829
    %1879 = vmatprep.subr.mxu0 %v1826
    %1880 = vmatpush2.msra.mxu0 %v1825
    %1881 = vmatprep.subr.mxu0 %v1822
    %1882 = vmatpush2.msra.mxu0 %v1821
    %1883 = vmatprep.subr.mxu0 %v1818
    %1884 = vmatpush2.msra.mxu0 %v1817
    %1885 = vmatprep.subr.mxu0 %v1814
    %1886 = vmatpush2.msra.mxu0 %v1813
    %1887 = vmatprep.subr.mxu0 %v1810
    %1888 = vmatpush2.msra.mxu0 %v1809
    %1889 = vmatprep.subr.mxu0 %v1806
    %1890 = vmatpush2.msra.mxu0 %v1805
    %1891 = vmatprep.subr.mxu0 %v1802
    %1892 = vmatpush2.msra.mxu0 %v1801
    %1893 = vmatprep.subr.mxu0 %v1798
    %1894 = vmatpush2.msra.mxu0 %v1797
    %1895 = vmatprep.subr.mxu0 %v1794
    %1896 = vmatpush2.msra.mxu0 %v1793
    %1897 = vmatprep.subr.mxu0 %v1790
    %1898 = vmatpush2.msra.mxu0 %v1789
    %1899 = vmatprep.subr.mxu0 %v1786
    %1900 = vmatpush2.msra.mxu0 %v1785
    %1901 = vmatprep.subr.mxu0 %v1782
    %1902 = vmatpush2.msra.mxu0 %v1781
    %1903 = vmatprep.subr.mxu0 %v1778
    %1904 = vmatpush2.msra.mxu0 %v1777
    %1905 = vmatprep.mubr.f32.mxu0 %v1234
    %1906 = vmatmul.mubr.f32.gmra.mxu0 %v1712
    %v1907 = vpop.f32.mrf.mxu0
    %v1908 = vadd.f32 %v115, %v1907
    %v1909 = vpop.f32.mrf.mxu0
    %v1910 = vadd.f32 %v119, %v1909
    %1911 = vdwg.mxu0
    %1912 = vmatprep.subr.mxu0 %v1776
    %1913 = vmatpush1.msra.mxu0 %v1775
    %1914 = vmatprep.subr.mxu0 %v1772
    %1915 = vmatpush1.msra.mxu0 %v1771
    %1916 = vmatprep.subr.mxu0 %v1768
    %1917 = vmatpush1.msra.mxu0 %v1767
    %1918 = vmatprep.subr.mxu0 %v1764
    %1919 = vmatpush1.msra.mxu0 %v1763
    %1920 = vmatprep.subr.mxu0 %v1760
    %1921 = vmatpush1.msra.mxu0 %v1759
    %1922 = vmatprep.subr.mxu0 %v1756
    %1923 = vmatpush1.msra.mxu0 %v1755
    %1924 = vmatprep.subr.mxu0 %v1752
    %1925 = vmatpush1.msra.mxu0 %v1751
    %1926 = vmatprep.subr.mxu0 %v1748
    %1927 = vmatpush1.msra.mxu0 %v1747
    %1928 = vmatprep.subr.mxu0 %v1744
    %1929 = vmatpush1.msra.mxu0 %v1743
    %1930 = vmatprep.subr.mxu0 %v1740
    %1931 = vmatpush1.msra.mxu0 %v1739
    %1932 = vmatprep.subr.mxu0 %v1736
    %1933 = vmatpush1.msra.mxu0 %v1735
    %1934 = vmatprep.subr.mxu0 %v1732
    %1935 = vmatpush1.msra.mxu0 %v1731
    %1936 = vmatprep.subr.mxu0 %v1728
    %1937 = vmatpush1.msra.mxu0 %v1727
    %1938 = vmatprep.subr.mxu0 %v1724
    %1939 = vmatpush1.msra.mxu0 %v1723
    %1940 = vmatprep.subr.mxu0 %v1720
    %1941 = vmatpush1.msra.mxu0 %v1719
    %1942 = vmatprep.subr.mxu0 %v1716
    %1943 = vmatpush1.msra.mxu0 %v1715
    %1944 = vmatprep.subr.mxu0 %v1840
    %1945 = vmatpush2.msra.mxu0 %v1839
    %1946 = vmatprep.subr.mxu0 %v1836
    %1947 = vmatpush2.msra.mxu0 %v1835
    %1948 = vmatprep.subr.mxu0 %v1832
    %1949 = vmatpush2.msra.mxu0 %v1831
    %1950 = vmatprep.subr.mxu0 %v1828
    %1951 = vmatpush2.msra.mxu0 %v1827
    %1952 = vmatprep.subr.mxu0 %v1824
    %1953 = vmatpush2.msra.mxu0 %v1823
    %1954 = vmatprep.subr.mxu0 %v1820
    %1955 = vmatpush2.msra.mxu0 %v1819
    %1956 = vmatprep.subr.mxu0 %v1816
    %1957 = vmatpush2.msra.mxu0 %v1815
    %1958 = vmatprep.subr.mxu0 %v1812
    %1959 = vmatpush2.msra.mxu0 %v1811
    %1960 = vmatprep.subr.mxu0 %v1808
    %1961 = vmatpush2.msra.mxu0 %v1807
    %1962 = vmatprep.subr.mxu0 %v1804
    %1963 = vmatpush2.msra.mxu0 %v1803
    %1964 = vmatprep.subr.mxu0 %v1800
    %1965 = vmatpush2.msra.mxu0 %v1799
    %1966 = vmatprep.subr.mxu0 %v1796
    %1967 = vmatpush2.msra.mxu0 %v1795
    %1968 = vmatprep.subr.mxu0 %v1792
    %1969 = vmatpush2.msra.mxu0 %v1791
    %1970 = vmatprep.subr.mxu0 %v1788
    %1971 = vmatpush2.msra.mxu0 %v1787
    %1972 = vmatprep.subr.mxu0 %v1784
    %1973 = vmatpush2.msra.mxu0 %v1783
    %1974 = vmatprep.subr.mxu0 %v1780
    %1975 = vmatpush2.msra.mxu0 %v1779
    %1976 = vmatprep.mubr.f32.mxu0 %v1234
    %1977 = vmatmul.mubr.f32.gmra.mxu0 %v1712
    %v1978 = vpop.f32.mrf.mxu0
    %v1979 = vadd.f32 %v123, %v1978
    %v1980 = vpop.f32.mrf.mxu0
    %v1981 = vadd.f32 %v127, %v1980
    %1982 = vdwg.mxu0
    %v1983 = vxor.u32 %v1908, 2147483648
    %v1984 = vmul.f32 %v1983, 1.442695
    %v1985 = vpow.pop %v1984
    %v1986 = vadd.f32 %v1985, 1.0
    %v1987 = vrcp.pop %v1986
    %v1988 = vmul.f32 1.0, %v1987
    %v1989 = vxor.u32 %v1910, 2147483648
    %v1990 = vmul.f32 %v1989, 1.442695
    %v1991 = vpow.pop %v1990
    %v1992 = vadd.f32 %v1991, 1.0
    %v1993 = vrcp.pop %v1992
    %v1994 = vmul.f32 1.0, %v1993
    %v1995 = vtanh.pop %v1979
    %v1996 = vxor.u32 %v1981, 2147483648
    %v1997 = vmul.f32 %v1996, 1.442695
    %v1998 = vpow.pop %v1997
    %v1999 = vadd.f32 %v1998, 1.0
    %v2000 = vrcp.pop %v1999
    %v2001 = vmul.f32 1.0, %v2000
    %v2002 = vmul.f32 %v1994, %v1232
    %v2003 = vmul.f32 %v1988, %v1995
    %v2004 = vadd.f32 %v2002, %v2003
    %v2005 = vtanh.pop %v2004
    %v2006 = vmul.f32 %v2001, %v2005
    %s2007 = scalar_lea.vmem [#allocation13], 4
    %v2008 = vld [vmem:[%s2007] sm:$0x3]
    %v2009 = vld [vmem:[#allocation10] sm:$0xff]
    %v2010 = vld [vmem:[#allocation10 + $0x8] sm:$0xff]
    %v2011 = vld [vmem:[#allocation10 + $0x10] sm:$0xff]
    %v2012 = vld [vmem:[#allocation10 + $0x18] sm:$0xff]
    %v2013 = vld [vmem:[#allocation10 + $0x20] sm:$0xff]
    %v2014 = vld [vmem:[#allocation10 + $0x28] sm:$0xff]
    %v2015 = vld [vmem:[#allocation10 + $0x30] sm:$0xff]
    %v2016 = vld [vmem:[#allocation10 + $0x38] sm:$0xff]
    %v2017 = vld [vmem:[#allocation10 + $0x40] sm:$0xff]
    %v2018 = vld [vmem:[#allocation10 + $0x48] sm:$0xff]
    %v2019 = vld [vmem:[#allocation10 + $0x50] sm:$0xff]
    %v2020 = vld [vmem:[#allocation10 + $0x58] sm:$0xff]
    %v2021 = vld [vmem:[#allocation10 + $0x60] sm:$0xff]
    %v2022 = vld [vmem:[#allocation10 + $0x68] sm:$0xff]
    %v2023 = vld [vmem:[#allocation10 + $0x70] sm:$0xff]
    %v2024 = vld [vmem:[#allocation10 + $0x78] sm:$0xff]
    %2025 = vmatprep.subr.mxu0 0.0
    %2026 = vmatpush1.msra.mxu0 %v2024
    %2027 = vmatprep.subr.mxu0 0.0
    %2028 = vmatpush1.msra.mxu0 %v2023
    %2029 = vmatprep.subr.mxu0 0.0
    %2030 = vmatpush1.msra.mxu0 %v2022
    %2031 = vmatprep.subr.mxu0 0.0
    %2032 = vmatpush1.msra.mxu0 %v2021
    %2033 = vmatprep.subr.mxu0 0.0
    %2034 = vmatpush1.msra.mxu0 %v2020
    %2035 = vmatprep.subr.mxu0 0.0
    %2036 = vmatpush1.msra.mxu0 %v2019
    %2037 = vmatprep.subr.mxu0 0.0
    %2038 = vmatpush1.msra.mxu0 %v2018
    %2039 = vmatprep.subr.mxu0 0.0
    %2040 = vmatpush1.msra.mxu0 %v2017
    %2041 = vmatprep.subr.mxu0 0.0
    %2042 = vmatpush1.msra.mxu0 %v2016
    %2043 = vmatprep.subr.mxu0 0.0
    %2044 = vmatpush1.msra.mxu0 %v2015
    %2045 = vmatprep.subr.mxu0 0.0
    %2046 = vmatpush1.msra.mxu0 %v2014
    %2047 = vmatprep.subr.mxu0 0.0
    %2048 = vmatpush1.msra.mxu0 %v2013
    %2049 = vmatprep.subr.mxu0 0.0
    %2050 = vmatpush1.msra.mxu0 %v2012
    %2051 = vmatprep.subr.mxu0 0.0
    %2052 = vmatpush1.msra.mxu0 %v2011
    %2053 = vmatprep.subr.mxu0 0.0
    %2054 = vmatpush1.msra.mxu0 %v2010
    %2055 = vmatprep.subr.mxu0 0.0
    %2056 = vmatpush1.msra.mxu0 %v2009
    %2057 = vmatprep.subr.mxu0 0.0
    %2058 = vmatpush2.msra.mxu0 0.0
    %2059 = vmatprep.subr.mxu0 0.0
    %2060 = vmatpush2.msra.mxu0 0.0
    %2061 = vmatprep.subr.mxu0 0.0
    %2062 = vmatpush2.msra.mxu0 0.0
    %2063 = vmatprep.subr.mxu0 0.0
    %2064 = vmatpush2.msra.mxu0 0.0
    %2065 = vmatprep.subr.mxu0 0.0
    %2066 = vmatpush2.msra.mxu0 0.0
    %2067 = vmatprep.subr.mxu0 0.0
    %2068 = vmatpush2.msra.mxu0 0.0
    %2069 = vmatprep.subr.mxu0 0.0
    %2070 = vmatpush2.msra.mxu0 0.0
    %2071 = vmatprep.subr.mxu0 0.0
    %2072 = vmatpush2.msra.mxu0 0.0
    %2073 = vmatprep.subr.mxu0 0.0
    %2074 = vmatpush2.msra.mxu0 0.0
    %2075 = vmatprep.subr.mxu0 0.0
    %2076 = vmatpush2.msra.mxu0 0.0
    %2077 = vmatprep.subr.mxu0 0.0
    %2078 = vmatpush2.msra.mxu0 0.0
    %2079 = vmatprep.subr.mxu0 0.0
    %2080 = vmatpush2.msra.mxu0 0.0
    %2081 = vmatprep.subr.mxu0 0.0
    %2082 = vmatpush2.msra.mxu0 0.0
    %2083 = vmatprep.subr.mxu0 0.0
    %2084 = vmatpush2.msra.mxu0 0.0
    %2085 = vmatprep.subr.mxu0 0.0
    %2086 = vmatpush2.msra.mxu0 0.0
    %2087 = vmatprep.subr.mxu0 0.0
    %2088 = vmatpush2.msra.mxu0 0.0
    %2089 = vmatprep.mubr.f32.mxu0 0.0
    %2090 = vmatmul.mubr.f32.gmra.mxu0 %v2006
    %v2091 = vpop.f32.mrf.mxu0
    %v2092 = vadd.f32 0.0, %v2091
    %v2093 = vpop.f32.mrf.mxu0
    %2094 = vdwg.mxu0
    %v2095 = vadd.f32 %v2008, %v2092
    %2096 = vst [vmem:[%s2007] sm:$0x3] %v2095
    %s2097 = scalar_lea.vmem [#allocation2], 10
    %v2098 = vld [vmem:[%s2097] sm:$0x3]
    %v2099 = vld [vmem:[#allocation8] sm:$0xff]
    %v2100 = vld [vmem:[#allocation8 + $0x8] sm:$0xff]
    %v2101 = vld [vmem:[#allocation8 + $0x10] sm:$0xff]
    %v2102 = vld [vmem:[#allocation8 + $0x18] sm:$0xff]
    %v2103 = vld [vmem:[#allocation8 + $0x20] sm:$0xff]
    %v2104 = vld [vmem:[#allocation8 + $0x28] sm:$0xff]
    %v2105 = vld [vmem:[#allocation8 + $0x30] sm:$0xff]
    %v2106 = vld [vmem:[#allocation8 + $0x38] sm:$0xff]
    %v2107 = vld [vmem:[#allocation8 + $0x40] sm:$0xff]
    %v2108 = vld [vmem:[#allocation8 + $0x48] sm:$0xff]
    %v2109 = vld [vmem:[#allocation8 + $0x50] sm:$0xff]
    %v2110 = vld [vmem:[#allocation8 + $0x58] sm:$0xff]
    %v2111 = vld [vmem:[#allocation8 + $0x60] sm:$0xff]
    %v2112 = vld [vmem:[#allocation8 + $0x68] sm:$0xff]
    %v2113 = vld [vmem:[#allocation8 + $0x70] sm:$0xff]
    %v2114 = vld [vmem:[#allocation8 + $0x78] sm:$0xff]
    %v2115 = vld [vmem:[#allocation8 + $0x80] sm:$0xff]
    %v2116 = vld [vmem:[#allocation8 + $0x88] sm:$0xff]
    %v2117 = vld [vmem:[#allocation8 + $0x90] sm:$0xff]
    %v2118 = vld [vmem:[#allocation8 + $0x98] sm:$0xff]
    %v2119 = vld [vmem:[#allocation8 + $0xa0] sm:$0xff]
    %v2120 = vld [vmem:[#allocation8 + $0xa8] sm:$0xff]
    %v2121 = vld [vmem:[#allocation8 + $0xb0] sm:$0xff]
    %v2122 = vld [vmem:[#allocation8 + $0xb8] sm:$0xff]
    %v2123 = vld [vmem:[#allocation8 + $0xc0] sm:$0xff]
    %v2124 = vld [vmem:[#allocation8 + $0xc8] sm:$0xff]
    %v2125 = vld [vmem:[#allocation8 + $0xd0] sm:$0xff]
    %v2126 = vld [vmem:[#allocation8 + $0xd8] sm:$0xff]
    %v2127 = vld [vmem:[#allocation8 + $0xe0] sm:$0xff]
    %v2128 = vld [vmem:[#allocation8 + $0xe8] sm:$0xff]
    %v2129 = vld [vmem:[#allocation8 + $0xf0] sm:$0xff]
    %v2130 = vld [vmem:[#allocation8 + $0xf8] sm:$0xff]
    %v2131 = vld [vmem:[#allocation8 + $0x100] sm:$0xff]
    %v2132 = vld [vmem:[#allocation8 + $0x108] sm:$0xff]
    %v2133 = vld [vmem:[#allocation8 + $0x110] sm:$0xff]
    %v2134 = vld [vmem:[#allocation8 + $0x118] sm:$0xff]
    %v2135 = vld [vmem:[#allocation8 + $0x120] sm:$0xff]
    %v2136 = vld [vmem:[#allocation8 + $0x128] sm:$0xff]
    %v2137 = vld [vmem:[#allocation8 + $0x130] sm:$0xff]
    %v2138 = vld [vmem:[#allocation8 + $0x138] sm:$0xff]
    %v2139 = vld [vmem:[#allocation8 + $0x140] sm:$0xff]
    %v2140 = vld [vmem:[#allocation8 + $0x148] sm:$0xff]
    %v2141 = vld [vmem:[#allocation8 + $0x150] sm:$0xff]
    %v2142 = vld [vmem:[#allocation8 + $0x158] sm:$0xff]
    %v2143 = vld [vmem:[#allocation8 + $0x160] sm:$0xff]
    %v2144 = vld [vmem:[#allocation8 + $0x168] sm:$0xff]
    %v2145 = vld [vmem:[#allocation8 + $0x170] sm:$0xff]
    %v2146 = vld [vmem:[#allocation8 + $0x178] sm:$0xff]
    %v2147 = vld [vmem:[#allocation8 + $0x180] sm:$0xff]
    %v2148 = vld [vmem:[#allocation8 + $0x188] sm:$0xff]
    %v2149 = vld [vmem:[#allocation8 + $0x190] sm:$0xff]
    %v2150 = vld [vmem:[#allocation8 + $0x198] sm:$0xff]
    %v2151 = vld [vmem:[#allocation8 + $0x1a0] sm:$0xff]
    %v2152 = vld [vmem:[#allocation8 + $0x1a8] sm:$0xff]
    %v2153 = vld [vmem:[#allocation8 + $0x1b0] sm:$0xff]
    %v2154 = vld [vmem:[#allocation8 + $0x1b8] sm:$0xff]
    %v2155 = vld [vmem:[#allocation8 + $0x1c0] sm:$0xff]
    %v2156 = vld [vmem:[#allocation8 + $0x1c8] sm:$0xff]
    %v2157 = vld [vmem:[#allocation8 + $0x1d0] sm:$0xff]
    %v2158 = vld [vmem:[#allocation8 + $0x1d8] sm:$0xff]
    %v2159 = vld [vmem:[#allocation8 + $0x1e0] sm:$0xff]
    %v2160 = vld [vmem:[#allocation8 + $0x1e8] sm:$0xff]
    %v2161 = vld [vmem:[#allocation8 + $0x1f0] sm:$0xff]
    %v2162 = vld [vmem:[#allocation8 + $0x1f8] sm:$0xff]
    %v2163 = vld [vmem:[#allocation8 + $0x200] sm:$0xff]
    %v2164 = vld [vmem:[#allocation8 + $0x208] sm:$0xff]
    %v2165 = vld [vmem:[#allocation8 + $0x210] sm:$0xff]
    %v2166 = vld [vmem:[#allocation8 + $0x218] sm:$0xff]
    %v2167 = vld [vmem:[#allocation8 + $0x220] sm:$0xff]
    %v2168 = vld [vmem:[#allocation8 + $0x228] sm:$0xff]
    %v2169 = vld [vmem:[#allocation8 + $0x230] sm:$0xff]
    %v2170 = vld [vmem:[#allocation8 + $0x238] sm:$0xff]
    %v2171 = vld [vmem:[#allocation8 + $0x240] sm:$0xff]
    %v2172 = vld [vmem:[#allocation8 + $0x248] sm:$0xff]
    %v2173 = vld [vmem:[#allocation8 + $0x250] sm:$0xff]
    %v2174 = vld [vmem:[#allocation8 + $0x258] sm:$0xff]
    %v2175 = vld [vmem:[#allocation8 + $0x260] sm:$0xff]
    %v2176 = vld [vmem:[#allocation8 + $0x268] sm:$0xff]
    %v2177 = vld [vmem:[#allocation8 + $0x270] sm:$0xff]
    %v2178 = vld [vmem:[#allocation8 + $0x278] sm:$0xff]
    %v2179 = vld [vmem:[#allocation8 + $0x280] sm:$0xff]
    %v2180 = vld [vmem:[#allocation8 + $0x288] sm:$0xff]
    %v2181 = vld [vmem:[#allocation8 + $0x290] sm:$0xff]
    %v2182 = vld [vmem:[#allocation8 + $0x298] sm:$0xff]
    %v2183 = vld [vmem:[#allocation8 + $0x2a0] sm:$0xff]
    %v2184 = vld [vmem:[#allocation8 + $0x2a8] sm:$0xff]
    %v2185 = vld [vmem:[#allocation8 + $0x2b0] sm:$0xff]
    %v2186 = vld [vmem:[#allocation8 + $0x2b8] sm:$0xff]
    %v2187 = vld [vmem:[#allocation8 + $0x2c0] sm:$0xff]
    %v2188 = vld [vmem:[#allocation8 + $0x2c8] sm:$0xff]
    %v2189 = vld [vmem:[#allocation8 + $0x2d0] sm:$0xff]
    %v2190 = vld [vmem:[#allocation8 + $0x2d8] sm:$0xff]
    %v2191 = vld [vmem:[#allocation8 + $0x2e0] sm:$0xff]
    %v2192 = vld [vmem:[#allocation8 + $0x2e8] sm:$0xff]
    %v2193 = vld [vmem:[#allocation8 + $0x2f0] sm:$0xff]
    %v2194 = vld [vmem:[#allocation8 + $0x2f8] sm:$0xff]
    %v2195 = vld [vmem:[#allocation8 + $0x300] sm:$0xff]
    %v2196 = vld [vmem:[#allocation8 + $0x308] sm:$0xff]
    %v2197 = vld [vmem:[#allocation8 + $0x310] sm:$0xff]
    %v2198 = vld [vmem:[#allocation8 + $0x318] sm:$0xff]
    %v2199 = vld [vmem:[#allocation8 + $0x320] sm:$0xff]
    %v2200 = vld [vmem:[#allocation8 + $0x328] sm:$0xff]
    %v2201 = vld [vmem:[#allocation8 + $0x330] sm:$0xff]
    %v2202 = vld [vmem:[#allocation8 + $0x338] sm:$0xff]
    %v2203 = vld [vmem:[#allocation8 + $0x340] sm:$0xff]
    %v2204 = vld [vmem:[#allocation8 + $0x348] sm:$0xff]
    %v2205 = vld [vmem:[#allocation8 + $0x350] sm:$0xff]
    %v2206 = vld [vmem:[#allocation8 + $0x358] sm:$0xff]
    %v2207 = vld [vmem:[#allocation8 + $0x360] sm:$0xff]
    %v2208 = vld [vmem:[#allocation8 + $0x368] sm:$0xff]
    %v2209 = vld [vmem:[#allocation8 + $0x370] sm:$0xff]
    %v2210 = vld [vmem:[#allocation8 + $0x378] sm:$0xff]
    %v2211 = vld [vmem:[#allocation8 + $0x380] sm:$0xff]
    %v2212 = vld [vmem:[#allocation8 + $0x388] sm:$0xff]
    %v2213 = vld [vmem:[#allocation8 + $0x390] sm:$0xff]
    %v2214 = vld [vmem:[#allocation8 + $0x398] sm:$0xff]
    %v2215 = vld [vmem:[#allocation8 + $0x3a0] sm:$0xff]
    %v2216 = vld [vmem:[#allocation8 + $0x3a8] sm:$0xff]
    %v2217 = vld [vmem:[#allocation8 + $0x3b0] sm:$0xff]
    %v2218 = vld [vmem:[#allocation8 + $0x3b8] sm:$0xff]
    %v2219 = vld [vmem:[#allocation8 + $0x3c0] sm:$0xff]
    %v2220 = vld [vmem:[#allocation8 + $0x3c8] sm:$0xff]
    %v2221 = vld [vmem:[#allocation8 + $0x3d0] sm:$0xff]
    %v2222 = vld [vmem:[#allocation8 + $0x3d8] sm:$0xff]
    %v2223 = vld [vmem:[#allocation8 + $0x3e0] sm:$0xff]
    %v2224 = vld [vmem:[#allocation8 + $0x3e8] sm:$0xff]
    %v2225 = vld [vmem:[#allocation8 + $0x3f0] sm:$0xff]
    %v2226 = vld [vmem:[#allocation8 + $0x3f8] sm:$0xff]
    %2227 = vmatprep.subr.mxu0 %v2160
    %2228 = vmatpush1.msra.mxu0 %v2159
    %2229 = vmatprep.subr.mxu0 %v2156
    %2230 = vmatpush1.msra.mxu0 %v2155
    %2231 = vmatprep.subr.mxu0 %v2152
    %2232 = vmatpush1.msra.mxu0 %v2151
    %2233 = vmatprep.subr.mxu0 %v2148
    %2234 = vmatpush1.msra.mxu0 %v2147
    %2235 = vmatprep.subr.mxu0 %v2144
    %2236 = vmatpush1.msra.mxu0 %v2143
    %2237 = vmatprep.subr.mxu0 %v2140
    %2238 = vmatpush1.msra.mxu0 %v2139
    %2239 = vmatprep.subr.mxu0 %v2136
    %2240 = vmatpush1.msra.mxu0 %v2135
    %2241 = vmatprep.subr.mxu0 %v2132
    %2242 = vmatpush1.msra.mxu0 %v2131
    %2243 = vmatprep.subr.mxu0 %v2128
    %2244 = vmatpush1.msra.mxu0 %v2127
    %2245 = vmatprep.subr.mxu0 %v2124
    %2246 = vmatpush1.msra.mxu0 %v2123
    %2247 = vmatprep.subr.mxu0 %v2120
    %2248 = vmatpush1.msra.mxu0 %v2119
    %2249 = vmatprep.subr.mxu0 %v2116
    %2250 = vmatpush1.msra.mxu0 %v2115
    %2251 = vmatprep.subr.mxu0 %v2112
    %2252 = vmatpush1.msra.mxu0 %v2111
    %2253 = vmatprep.subr.mxu0 %v2108
    %2254 = vmatpush1.msra.mxu0 %v2107
    %2255 = vmatprep.subr.mxu0 %v2104
    %2256 = vmatpush1.msra.mxu0 %v2103
    %2257 = vmatprep.subr.mxu0 %v2100
    %2258 = vmatpush1.msra.mxu0 %v2099
    %2259 = vmatprep.subr.mxu0 %v2224
    %2260 = vmatpush2.msra.mxu0 %v2223
    %2261 = vmatprep.subr.mxu0 %v2220
    %2262 = vmatpush2.msra.mxu0 %v2219
    %2263 = vmatprep.subr.mxu0 %v2216
    %2264 = vmatpush2.msra.mxu0 %v2215
    %2265 = vmatprep.subr.mxu0 %v2212
    %2266 = vmatpush2.msra.mxu0 %v2211
    %2267 = vmatprep.subr.mxu0 %v2208
    %2268 = vmatpush2.msra.mxu0 %v2207
    %2269 = vmatprep.subr.mxu0 %v2204
    %2270 = vmatpush2.msra.mxu0 %v2203
    %2271 = vmatprep.subr.mxu0 %v2200
    %2272 = vmatpush2.msra.mxu0 %v2199
    %2273 = vmatprep.subr.mxu0 %v2196
    %2274 = vmatpush2.msra.mxu0 %v2195
    %2275 = vmatprep.subr.mxu0 %v2192
    %2276 = vmatpush2.msra.mxu0 %v2191
    %2277 = vmatprep.subr.mxu0 %v2188
    %2278 = vmatpush2.msra.mxu0 %v2187
    %2279 = vmatprep.subr.mxu0 %v2184
    %2280 = vmatpush2.msra.mxu0 %v2183
    %2281 = vmatprep.subr.mxu0 %v2180
    %2282 = vmatpush2.msra.mxu0 %v2179
    %2283 = vmatprep.subr.mxu0 %v2176
    %2284 = vmatpush2.msra.mxu0 %v2175
    %2285 = vmatprep.subr.mxu0 %v2172
    %2286 = vmatpush2.msra.mxu0 %v2171
    %2287 = vmatprep.subr.mxu0 %v2168
    %2288 = vmatpush2.msra.mxu0 %v2167
    %2289 = vmatprep.subr.mxu0 %v2164
    %2290 = vmatpush2.msra.mxu0 %v2163
    %2291 = vmatprep.mubr.f32.mxu0 %v1620
    %2292 = vmatmul.mubr.f32.gmra.mxu0 %v2098
    %v2293 = vpop.f32.mrf.mxu0
    %v2294 = vadd.f32 %v137, %v2293
    %v2295 = vpop.f32.mrf.mxu0
    %v2296 = vadd.f32 %v141, %v2295
    %2297 = vdwg.mxu0
    %2298 = vmatprep.subr.mxu0 %v2162
    %2299 = vmatpush1.msra.mxu0 %v2161
    %2300 = vmatprep.subr.mxu0 %v2158
    %2301 = vmatpush1.msra.mxu0 %v2157
    %2302 = vmatprep.subr.mxu0 %v2154
    %2303 = vmatpush1.msra.mxu0 %v2153
    %2304 = vmatprep.subr.mxu0 %v2150
    %2305 = vmatpush1.msra.mxu0 %v2149
    %2306 = vmatprep.subr.mxu0 %v2146
    %2307 = vmatpush1.msra.mxu0 %v2145
    %2308 = vmatprep.subr.mxu0 %v2142
    %2309 = vmatpush1.msra.mxu0 %v2141
    %2310 = vmatprep.subr.mxu0 %v2138
    %2311 = vmatpush1.msra.mxu0 %v2137
    %2312 = vmatprep.subr.mxu0 %v2134
    %2313 = vmatpush1.msra.mxu0 %v2133
    %2314 = vmatprep.subr.mxu0 %v2130
    %2315 = vmatpush1.msra.mxu0 %v2129
    %2316 = vmatprep.subr.mxu0 %v2126
    %2317 = vmatpush1.msra.mxu0 %v2125
    %2318 = vmatprep.subr.mxu0 %v2122
    %2319 = vmatpush1.msra.mxu0 %v2121
    %2320 = vmatprep.subr.mxu0 %v2118
    %2321 = vmatpush1.msra.mxu0 %v2117
    %2322 = vmatprep.subr.mxu0 %v2114
    %2323 = vmatpush1.msra.mxu0 %v2113
    %2324 = vmatprep.subr.mxu0 %v2110
    %2325 = vmatpush1.msra.mxu0 %v2109
    %2326 = vmatprep.subr.mxu0 %v2106
    %2327 = vmatpush1.msra.mxu0 %v2105
    %2328 = vmatprep.subr.mxu0 %v2102
    %2329 = vmatpush1.msra.mxu0 %v2101
    %2330 = vmatprep.subr.mxu0 %v2226
    %2331 = vmatpush2.msra.mxu0 %v2225
    %2332 = vmatprep.subr.mxu0 %v2222
    %2333 = vmatpush2.msra.mxu0 %v2221
    %2334 = vmatprep.subr.mxu0 %v2218
    %2335 = vmatpush2.msra.mxu0 %v2217
    %2336 = vmatprep.subr.mxu0 %v2214
    %2337 = vmatpush2.msra.mxu0 %v2213
    %2338 = vmatprep.subr.mxu0 %v2210
    %2339 = vmatpush2.msra.mxu0 %v2209
    %2340 = vmatprep.subr.mxu0 %v2206
    %2341 = vmatpush2.msra.mxu0 %v2205
    %2342 = vmatprep.subr.mxu0 %v2202
    %2343 = vmatpush2.msra.mxu0 %v2201
    %2344 = vmatprep.subr.mxu0 %v2198
    %2345 = vmatpush2.msra.mxu0 %v2197
    %2346 = vmatprep.subr.mxu0 %v2194
    %2347 = vmatpush2.msra.mxu0 %v2193
    %2348 = vmatprep.subr.mxu0 %v2190
    %2349 = vmatpush2.msra.mxu0 %v2189
    %2350 = vmatprep.subr.mxu0 %v2186
    %2351 = vmatpush2.msra.mxu0 %v2185
    %2352 = vmatprep.subr.mxu0 %v2182
    %2353 = vmatpush2.msra.mxu0 %v2181
    %2354 = vmatprep.subr.mxu0 %v2178
    %2355 = vmatpush2.msra.mxu0 %v2177
    %2356 = vmatprep.subr.mxu0 %v2174
    %2357 = vmatpush2.msra.mxu0 %v2173
    %2358 = vmatprep.subr.mxu0 %v2170
    %2359 = vmatpush2.msra.mxu0 %v2169
    %2360 = vmatprep.subr.mxu0 %v2166
    %2361 = vmatpush2.msra.mxu0 %v2165
    %2362 = vmatprep.mubr.f32.mxu0 %v1620
    %2363 = vmatmul.mubr.f32.gmra.mxu0 %v2098
    %v2364 = vpop.f32.mrf.mxu0
    %v2365 = vadd.f32 %v145, %v2364
    %v2366 = vpop.f32.mrf.mxu0
    %v2367 = vadd.f32 %v149, %v2366
    %2368 = vdwg.mxu0
    %v2369 = vxor.u32 %v2294, 2147483648
    %v2370 = vmul.f32 %v2369, 1.442695
    %v2371 = vpow.pop %v2370
    %v2372 = vadd.f32 %v2371, 1.0
    %v2373 = vrcp.pop %v2372
    %v2374 = vmul.f32 1.0, %v2373
    %v2375 = vxor.u32 %v2296, 2147483648
    %v2376 = vmul.f32 %v2375, 1.442695
    %v2377 = vpow.pop %v2376
    %v2378 = vadd.f32 %v2377, 1.0
    %v2379 = vrcp.pop %v2378
    %v2380 = vmul.f32 1.0, %v2379
    %v2381 = vtanh.pop %v2365
    %v2382 = vxor.u32 %v2367, 2147483648
    %v2383 = vmul.f32 %v2382, 1.442695
    %v2384 = vpow.pop %v2383
    %v2385 = vadd.f32 %v2384, 1.0
    %v2386 = vrcp.pop %v2385
    %v2387 = vmul.f32 1.0, %v2386
    %v2388 = vmul.f32 %v2380, %v1618
    %v2389 = vmul.f32 %v2374, %v2381
    %v2390 = vadd.f32 %v2388, %v2389
    %v2391 = vtanh.pop %v2390
    %v2392 = vmul.f32 %v2387, %v2391
    %s2393 = scalar_lea.vmem [#allocation13], 10
    %v2394 = vld [vmem:[%s2393] sm:$0x3]
    %v2395 = vld [vmem:[#allocation11] sm:$0xff]
    %v2396 = vld [vmem:[#allocation11 + $0x8] sm:$0xff]
    %v2397 = vld [vmem:[#allocation11 + $0x10] sm:$0xff]
    %v2398 = vld [vmem:[#allocation11 + $0x18] sm:$0xff]
    %v2399 = vld [vmem:[#allocation11 + $0x20] sm:$0xff]
    %v2400 = vld [vmem:[#allocation11 + $0x28] sm:$0xff]
    %v2401 = vld [vmem:[#allocation11 + $0x30] sm:$0xff]
    %v2402 = vld [vmem:[#allocation11 + $0x38] sm:$0xff]
    %v2403 = vld [vmem:[#allocation11 + $0x40] sm:$0xff]
    %v2404 = vld [vmem:[#allocation11 + $0x48] sm:$0xff]
    %v2405 = vld [vmem:[#allocation11 + $0x50] sm:$0xff]
    %v2406 = vld [vmem:[#allocation11 + $0x58] sm:$0xff]
    %v2407 = vld [vmem:[#allocation11 + $0x60] sm:$0xff]
    %v2408 = vld [vmem:[#allocation11 + $0x68] sm:$0xff]
    %v2409 = vld [vmem:[#allocation11 + $0x70] sm:$0xff]
    %v2410 = vld [vmem:[#allocation11 + $0x78] sm:$0xff]
    %2411 = vmatprep.subr.mxu0 0.0
    %2412 = vmatpush1.msra.mxu0 %v2410
    %2413 = vmatprep.subr.mxu0 0.0
    %2414 = vmatpush1.msra.mxu0 %v2409
    %2415 = vmatprep.subr.mxu0 0.0
    %2416 = vmatpush1.msra.mxu0 %v2408
    %2417 = vmatprep.subr.mxu0 0.0
    %2418 = vmatpush1.msra.mxu0 %v2407
    %2419 = vmatprep.subr.mxu0 0.0
    %2420 = vmatpush1.msra.mxu0 %v2406
    %2421 = vmatprep.subr.mxu0 0.0
    %2422 = vmatpush1.msra.mxu0 %v2405
    %2423 = vmatprep.subr.mxu0 0.0
    %2424 = vmatpush1.msra.mxu0 %v2404
    %2425 = vmatprep.subr.mxu0 0.0
    %2426 = vmatpush1.msra.mxu0 %v2403
    %2427 = vmatprep.subr.mxu0 0.0
    %2428 = vmatpush1.msra.mxu0 %v2402
    %2429 = vmatprep.subr.mxu0 0.0
    %2430 = vmatpush1.msra.mxu0 %v2401
    %2431 = vmatprep.subr.mxu0 0.0
    %2432 = vmatpush1.msra.mxu0 %v2400
    %2433 = vmatprep.subr.mxu0 0.0
    %2434 = vmatpush1.msra.mxu0 %v2399
    %2435 = vmatprep.subr.mxu0 0.0
    %2436 = vmatpush1.msra.mxu0 %v2398
    %2437 = vmatprep.subr.mxu0 0.0
    %2438 = vmatpush1.msra.mxu0 %v2397
    %2439 = vmatprep.subr.mxu0 0.0
    %2440 = vmatpush1.msra.mxu0 %v2396
    %2441 = vmatprep.subr.mxu0 0.0
    %2442 = vmatpush1.msra.mxu0 %v2395
    %2443 = vmatprep.subr.mxu0 0.0
    %2444 = vmatpush2.msra.mxu0 0.0
    %2445 = vmatprep.subr.mxu0 0.0
    %2446 = vmatpush2.msra.mxu0 0.0
    %2447 = vmatprep.subr.mxu0 0.0
    %2448 = vmatpush2.msra.mxu0 0.0
    %2449 = vmatprep.subr.mxu0 0.0
    %2450 = vmatpush2.msra.mxu0 0.0
    %2451 = vmatprep.subr.mxu0 0.0
    %2452 = vmatpush2.msra.mxu0 0.0
    %2453 = vmatprep.subr.mxu0 0.0
    %2454 = vmatpush2.msra.mxu0 0.0
    %2455 = vmatprep.subr.mxu0 0.0
    %2456 = vmatpush2.msra.mxu0 0.0
    %2457 = vmatprep.subr.mxu0 0.0
    %2458 = vmatpush2.msra.mxu0 0.0
    %2459 = vmatprep.subr.mxu0 0.0
    %2460 = vmatpush2.msra.mxu0 0.0
    %2461 = vmatprep.subr.mxu0 0.0
    %2462 = vmatpush2.msra.mxu0 0.0
    %2463 = vmatprep.subr.mxu0 0.0
    %2464 = vmatpush2.msra.mxu0 0.0
    %2465 = vmatprep.subr.mxu0 0.0
    %2466 = vmatpush2.msra.mxu0 0.0
    %2467 = vmatprep.subr.mxu0 0.0
    %2468 = vmatpush2.msra.mxu0 0.0
    %2469 = vmatprep.subr.mxu0 0.0
    %2470 = vmatpush2.msra.mxu0 0.0
    %2471 = vmatprep.subr.mxu0 0.0
    %2472 = vmatpush2.msra.mxu0 0.0
    %2473 = vmatprep.subr.mxu0 0.0
    %2474 = vmatpush2.msra.mxu0 0.0
    %2475 = vmatprep.mubr.f32.mxu0 0.0
    %2476 = vmatmul.mubr.f32.gmra.mxu0 %v2392
    %v2477 = vpop.f32.mrf.mxu0
    %v2478 = vadd.f32 0.0, %v2477
    %v2479 = vpop.f32.mrf.mxu0
    %2480 = vdwg.mxu0
    %v2481 = vadd.f32 %v2394, %v2478
    %2482 = vst [vmem:[%s2393] sm:$0x3] %v2481
    %s2483 = scalar_lea.vmem [#allocation2], 6
    %v2484 = vld [vmem:[%s2483] sm:$0x3]
    %v2485 = vld [vmem:[#allocation5] sm:$0xff]
    %v2486 = vld [vmem:[#allocation5 + $0x8] sm:$0xff]
    %v2487 = vld [vmem:[#allocation5 + $0x10] sm:$0xff]
    %v2488 = vld [vmem:[#allocation5 + $0x18] sm:$0xff]
    %v2489 = vld [vmem:[#allocation5 + $0x20] sm:$0xff]
    %v2490 = vld [vmem:[#allocation5 + $0x28] sm:$0xff]
    %v2491 = vld [vmem:[#allocation5 + $0x30] sm:$0xff]
    %v2492 = vld [vmem:[#allocation5 + $0x38] sm:$0xff]
    %v2493 = vld [vmem:[#allocation5 + $0x40] sm:$0xff]
    %v2494 = vld [vmem:[#allocation5 + $0x48] sm:$0xff]
    %v2495 = vld [vmem:[#allocation5 + $0x50] sm:$0xff]
    %v2496 = vld [vmem:[#allocation5 + $0x58] sm:$0xff]
    %v2497 = vld [vmem:[#allocation5 + $0x60] sm:$0xff]
    %v2498 = vld [vmem:[#allocation5 + $0x68] sm:$0xff]
    %v2499 = vld [vmem:[#allocation5 + $0x70] sm:$0xff]
    %v2500 = vld [vmem:[#allocation5 + $0x78] sm:$0xff]
    %v2501 = vld [vmem:[#allocation5 + $0x80] sm:$0xff]
    %v2502 = vld [vmem:[#allocation5 + $0x88] sm:$0xff]
    %v2503 = vld [vmem:[#allocation5 + $0x90] sm:$0xff]
    %v2504 = vld [vmem:[#allocation5 + $0x98] sm:$0xff]
    %v2505 = vld [vmem:[#allocation5 + $0xa0] sm:$0xff]
    %v2506 = vld [vmem:[#allocation5 + $0xa8] sm:$0xff]
    %v2507 = vld [vmem:[#allocation5 + $0xb0] sm:$0xff]
    %v2508 = vld [vmem:[#allocation5 + $0xb8] sm:$0xff]
    %v2509 = vld [vmem:[#allocation5 + $0xc0] sm:$0xff]
    %v2510 = vld [vmem:[#allocation5 + $0xc8] sm:$0xff]
    %v2511 = vld [vmem:[#allocation5 + $0xd0] sm:$0xff]
    %v2512 = vld [vmem:[#allocation5 + $0xd8] sm:$0xff]
    %v2513 = vld [vmem:[#allocation5 + $0xe0] sm:$0xff]
    %v2514 = vld [vmem:[#allocation5 + $0xe8] sm:$0xff]
    %v2515 = vld [vmem:[#allocation5 + $0xf0] sm:$0xff]
    %v2516 = vld [vmem:[#allocation5 + $0xf8] sm:$0xff]
    %v2517 = vld [vmem:[#allocation5 + $0x100] sm:$0xff]
    %v2518 = vld [vmem:[#allocation5 + $0x108] sm:$0xff]
    %v2519 = vld [vmem:[#allocation5 + $0x110] sm:$0xff]
    %v2520 = vld [vmem:[#allocation5 + $0x118] sm:$0xff]
    %v2521 = vld [vmem:[#allocation5 + $0x120] sm:$0xff]
    %v2522 = vld [vmem:[#allocation5 + $0x128] sm:$0xff]
    %v2523 = vld [vmem:[#allocation5 + $0x130] sm:$0xff]
    %v2524 = vld [vmem:[#allocation5 + $0x138] sm:$0xff]
    %v2525 = vld [vmem:[#allocation5 + $0x140] sm:$0xff]
    %v2526 = vld [vmem:[#allocation5 + $0x148] sm:$0xff]
    %v2527 = vld [vmem:[#allocation5 + $0x150] sm:$0xff]
    %v2528 = vld [vmem:[#allocation5 + $0x158] sm:$0xff]
    %v2529 = vld [vmem:[#allocation5 + $0x160] sm:$0xff]
    %v2530 = vld [vmem:[#allocation5 + $0x168] sm:$0xff]
    %v2531 = vld [vmem:[#allocation5 + $0x170] sm:$0xff]
    %v2532 = vld [vmem:[#allocation5 + $0x178] sm:$0xff]
    %v2533 = vld [vmem:[#allocation5 + $0x180] sm:$0xff]
    %v2534 = vld [vmem:[#allocation5 + $0x188] sm:$0xff]
    %v2535 = vld [vmem:[#allocation5 + $0x190] sm:$0xff]
    %v2536 = vld [vmem:[#allocation5 + $0x198] sm:$0xff]
    %v2537 = vld [vmem:[#allocation5 + $0x1a0] sm:$0xff]
    %v2538 = vld [vmem:[#allocation5 + $0x1a8] sm:$0xff]
    %v2539 = vld [vmem:[#allocation5 + $0x1b0] sm:$0xff]
    %v2540 = vld [vmem:[#allocation5 + $0x1b8] sm:$0xff]
    %v2541 = vld [vmem:[#allocation5 + $0x1c0] sm:$0xff]
    %v2542 = vld [vmem:[#allocation5 + $0x1c8] sm:$0xff]
    %v2543 = vld [vmem:[#allocation5 + $0x1d0] sm:$0xff]
    %v2544 = vld [vmem:[#allocation5 + $0x1d8] sm:$0xff]
    %v2545 = vld [vmem:[#allocation5 + $0x1e0] sm:$0xff]
    %v2546 = vld [vmem:[#allocation5 + $0x1e8] sm:$0xff]
    %v2547 = vld [vmem:[#allocation5 + $0x1f0] sm:$0xff]
    %v2548 = vld [vmem:[#allocation5 + $0x1f8] sm:$0xff]
    %v2549 = vld [vmem:[#allocation5 + $0x200] sm:$0xff]
    %v2550 = vld [vmem:[#allocation5 + $0x208] sm:$0xff]
    %v2551 = vld [vmem:[#allocation5 + $0x210] sm:$0xff]
    %v2552 = vld [vmem:[#allocation5 + $0x218] sm:$0xff]
    %v2553 = vld [vmem:[#allocation5 + $0x220] sm:$0xff]
    %v2554 = vld [vmem:[#allocation5 + $0x228] sm:$0xff]
    %v2555 = vld [vmem:[#allocation5 + $0x230] sm:$0xff]
    %v2556 = vld [vmem:[#allocation5 + $0x238] sm:$0xff]
    %v2557 = vld [vmem:[#allocation5 + $0x240] sm:$0xff]
    %v2558 = vld [vmem:[#allocation5 + $0x248] sm:$0xff]
    %v2559 = vld [vmem:[#allocation5 + $0x250] sm:$0xff]
    %v2560 = vld [vmem:[#allocation5 + $0x258] sm:$0xff]
    %v2561 = vld [vmem:[#allocation5 + $0x260] sm:$0xff]
    %v2562 = vld [vmem:[#allocation5 + $0x268] sm:$0xff]
    %v2563 = vld [vmem:[#allocation5 + $0x270] sm:$0xff]
    %v2564 = vld [vmem:[#allocation5 + $0x278] sm:$0xff]
    %v2565 = vld [vmem:[#allocation5 + $0x280] sm:$0xff]
    %v2566 = vld [vmem:[#allocation5 + $0x288] sm:$0xff]
    %v2567 = vld [vmem:[#allocation5 + $0x290] sm:$0xff]
    %v2568 = vld [vmem:[#allocation5 + $0x298] sm:$0xff]
    %v2569 = vld [vmem:[#allocation5 + $0x2a0] sm:$0xff]
    %v2570 = vld [vmem:[#allocation5 + $0x2a8] sm:$0xff]
    %v2571 = vld [vmem:[#allocation5 + $0x2b0] sm:$0xff]
    %v2572 = vld [vmem:[#allocation5 + $0x2b8] sm:$0xff]
    %v2573 = vld [vmem:[#allocation5 + $0x2c0] sm:$0xff]
    %v2574 = vld [vmem:[#allocation5 + $0x2c8] sm:$0xff]
    %v2575 = vld [vmem:[#allocation5 + $0x2d0] sm:$0xff]
    %v2576 = vld [vmem:[#allocation5 + $0x2d8] sm:$0xff]
    %v2577 = vld [vmem:[#allocation5 + $0x2e0] sm:$0xff]
    %v2578 = vld [vmem:[#allocation5 + $0x2e8] sm:$0xff]
    %v2579 = vld [vmem:[#allocation5 + $0x2f0] sm:$0xff]
    %v2580 = vld [vmem:[#allocation5 + $0x2f8] sm:$0xff]
    %v2581 = vld [vmem:[#allocation5 + $0x300] sm:$0xff]
    %v2582 = vld [vmem:[#allocation5 + $0x308] sm:$0xff]
    %v2583 = vld [vmem:[#allocation5 + $0x310] sm:$0xff]
    %v2584 = vld [vmem:[#allocation5 + $0x318] sm:$0xff]
    %v2585 = vld [vmem:[#allocation5 + $0x320] sm:$0xff]
    %v2586 = vld [vmem:[#allocation5 + $0x328] sm:$0xff]
    %v2587 = vld [vmem:[#allocation5 + $0x330] sm:$0xff]
    %v2588 = vld [vmem:[#allocation5 + $0x338] sm:$0xff]
    %v2589 = vld [vmem:[#allocation5 + $0x340] sm:$0xff]
    %v2590 = vld [vmem:[#allocation5 + $0x348] sm:$0xff]
    %v2591 = vld [vmem:[#allocation5 + $0x350] sm:$0xff]
    %v2592 = vld [vmem:[#allocation5 + $0x358] sm:$0xff]
    %v2593 = vld [vmem:[#allocation5 + $0x360] sm:$0xff]
    %v2594 = vld [vmem:[#allocation5 + $0x368] sm:$0xff]
    %v2595 = vld [vmem:[#allocation5 + $0x370] sm:$0xff]
    %v2596 = vld [vmem:[#allocation5 + $0x378] sm:$0xff]
    %v2597 = vld [vmem:[#allocation5 + $0x380] sm:$0xff]
    %v2598 = vld [vmem:[#allocation5 + $0x388] sm:$0xff]
    %v2599 = vld [vmem:[#allocation5 + $0x390] sm:$0xff]
    %v2600 = vld [vmem:[#allocation5 + $0x398] sm:$0xff]
    %v2601 = vld [vmem:[#allocation5 + $0x3a0] sm:$0xff]
    %v2602 = vld [vmem:[#allocation5 + $0x3a8] sm:$0xff]
    %v2603 = vld [vmem:[#allocation5 + $0x3b0] sm:$0xff]
    %v2604 = vld [vmem:[#allocation5 + $0x3b8] sm:$0xff]
    %v2605 = vld [vmem:[#allocation5 + $0x3c0] sm:$0xff]
    %v2606 = vld [vmem:[#allocation5 + $0x3c8] sm:$0xff]
    %v2607 = vld [vmem:[#allocation5 + $0x3d0] sm:$0xff]
    %v2608 = vld [vmem:[#allocation5 + $0x3d8] sm:$0xff]
    %v2609 = vld [vmem:[#allocation5 + $0x3e0] sm:$0xff]
    %v2610 = vld [vmem:[#allocation5 + $0x3e8] sm:$0xff]
    %v2611 = vld [vmem:[#allocation5 + $0x3f0] sm:$0xff]
    %v2612 = vld [vmem:[#allocation5 + $0x3f8] sm:$0xff]
    %2613 = vmatprep.subr.mxu0 %v2546
    %2614 = vmatpush1.msra.mxu0 %v2545
    %2615 = vmatprep.subr.mxu0 %v2542
    %2616 = vmatpush1.msra.mxu0 %v2541
    %2617 = vmatprep.subr.mxu0 %v2538
    %2618 = vmatpush1.msra.mxu0 %v2537
    %2619 = vmatprep.subr.mxu0 %v2534
    %2620 = vmatpush1.msra.mxu0 %v2533
    %2621 = vmatprep.subr.mxu0 %v2530
    %2622 = vmatpush1.msra.mxu0 %v2529
    %2623 = vmatprep.subr.mxu0 %v2526
    %2624 = vmatpush1.msra.mxu0 %v2525
    %2625 = vmatprep.subr.mxu0 %v2522
    %2626 = vmatpush1.msra.mxu0 %v2521
    %2627 = vmatprep.subr.mxu0 %v2518
    %2628 = vmatpush1.msra.mxu0 %v2517
    %2629 = vmatprep.subr.mxu0 %v2514
    %2630 = vmatpush1.msra.mxu0 %v2513
    %2631 = vmatprep.subr.mxu0 %v2510
    %2632 = vmatpush1.msra.mxu0 %v2509
    %2633 = vmatprep.subr.mxu0 %v2506
    %2634 = vmatpush1.msra.mxu0 %v2505
    %2635 = vmatprep.subr.mxu0 %v2502
    %2636 = vmatpush1.msra.mxu0 %v2501
    %2637 = vmatprep.subr.mxu0 %v2498
    %2638 = vmatpush1.msra.mxu0 %v2497
    %2639 = vmatprep.subr.mxu0 %v2494
    %2640 = vmatpush1.msra.mxu0 %v2493
    %2641 = vmatprep.subr.mxu0 %v2490
    %2642 = vmatpush1.msra.mxu0 %v2489
    %2643 = vmatprep.subr.mxu0 %v2486
    %2644 = vmatpush1.msra.mxu0 %v2485
    %2645 = vmatprep.subr.mxu0 %v2610
    %2646 = vmatpush2.msra.mxu0 %v2609
    %2647 = vmatprep.subr.mxu0 %v2606
    %2648 = vmatpush2.msra.mxu0 %v2605
    %2649 = vmatprep.subr.mxu0 %v2602
    %2650 = vmatpush2.msra.mxu0 %v2601
    %2651 = vmatprep.subr.mxu0 %v2598
    %2652 = vmatpush2.msra.mxu0 %v2597
    %2653 = vmatprep.subr.mxu0 %v2594
    %2654 = vmatpush2.msra.mxu0 %v2593
    %2655 = vmatprep.subr.mxu0 %v2590
    %2656 = vmatpush2.msra.mxu0 %v2589
    %2657 = vmatprep.subr.mxu0 %v2586
    %2658 = vmatpush2.msra.mxu0 %v2585
    %2659 = vmatprep.subr.mxu0 %v2582
    %2660 = vmatpush2.msra.mxu0 %v2581
    %2661 = vmatprep.subr.mxu0 %v2578
    %2662 = vmatpush2.msra.mxu0 %v2577
    %2663 = vmatprep.subr.mxu0 %v2574
    %2664 = vmatpush2.msra.mxu0 %v2573
    %2665 = vmatprep.subr.mxu0 %v2570
    %2666 = vmatpush2.msra.mxu0 %v2569
    %2667 = vmatprep.subr.mxu0 %v2566
    %2668 = vmatpush2.msra.mxu0 %v2565
    %2669 = vmatprep.subr.mxu0 %v2562
    %2670 = vmatpush2.msra.mxu0 %v2561
    %2671 = vmatprep.subr.mxu0 %v2558
    %2672 = vmatpush2.msra.mxu0 %v2557
    %2673 = vmatprep.subr.mxu0 %v2554
    %2674 = vmatpush2.msra.mxu0 %v2553
    %2675 = vmatprep.subr.mxu0 %v2550
    %2676 = vmatpush2.msra.mxu0 %v2549
    %2677 = vmatprep.mubr.f32.mxu0 %v2006
    %2678 = vmatmul.mubr.f32.gmra.mxu0 %v2484
    %v2679 = vpop.f32.mrf.mxu0
    %v2680 = vadd.f32 %v115, %v2679
    %v2681 = vpop.f32.mrf.mxu0
    %v2682 = vadd.f32 %v119, %v2681
    %2683 = vdwg.mxu0
    %2684 = vmatprep.subr.mxu0 %v2548
    %2685 = vmatpush1.msra.mxu0 %v2547
    %2686 = vmatprep.subr.mxu0 %v2544
    %2687 = vmatpush1.msra.mxu0 %v2543
    %2688 = vmatprep.subr.mxu0 %v2540
    %2689 = vmatpush1.msra.mxu0 %v2539
    %2690 = vmatprep.subr.mxu0 %v2536
    %2691 = vmatpush1.msra.mxu0 %v2535
    %2692 = vmatprep.subr.mxu0 %v2532
    %2693 = vmatpush1.msra.mxu0 %v2531
    %2694 = vmatprep.subr.mxu0 %v2528
    %2695 = vmatpush1.msra.mxu0 %v2527
    %2696 = vmatprep.subr.mxu0 %v2524
    %2697 = vmatpush1.msra.mxu0 %v2523
    %2698 = vmatprep.subr.mxu0 %v2520
    %2699 = vmatpush1.msra.mxu0 %v2519
    %2700 = vmatprep.subr.mxu0 %v2516
    %2701 = vmatpush1.msra.mxu0 %v2515
    %2702 = vmatprep.subr.mxu0 %v2512
    %2703 = vmatpush1.msra.mxu0 %v2511
    %2704 = vmatprep.subr.mxu0 %v2508
    %2705 = vmatpush1.msra.mxu0 %v2507
    %2706 = vmatprep.subr.mxu0 %v2504
    %2707 = vmatpush1.msra.mxu0 %v2503
    %2708 = vmatprep.subr.mxu0 %v2500
    %2709 = vmatpush1.msra.mxu0 %v2499
    %2710 = vmatprep.subr.mxu0 %v2496
    %2711 = vmatpush1.msra.mxu0 %v2495
    %2712 = vmatprep.subr.mxu0 %v2492
    %2713 = vmatpush1.msra.mxu0 %v2491
    %2714 = vmatprep.subr.mxu0 %v2488
    %2715 = vmatpush1.msra.mxu0 %v2487
    %2716 = vmatprep.subr.mxu0 %v2612
    %2717 = vmatpush2.msra.mxu0 %v2611
    %2718 = vmatprep.subr.mxu0 %v2608
    %2719 = vmatpush2.msra.mxu0 %v2607
    %2720 = vmatprep.subr.mxu0 %v2604
    %2721 = vmatpush2.msra.mxu0 %v2603
    %2722 = vmatprep.subr.mxu0 %v2600
    %2723 = vmatpush2.msra.mxu0 %v2599
    %2724 = vmatprep.subr.mxu0 %v2596
    %2725 = vmatpush2.msra.mxu0 %v2595
    %2726 = vmatprep.subr.mxu0 %v2592
    %2727 = vmatpush2.msra.mxu0 %v2591
    %2728 = vmatprep.subr.mxu0 %v2588
    %2729 = vmatpush2.msra.mxu0 %v2587
    %2730 = vmatprep.subr.mxu0 %v2584
    %2731 = vmatpush2.msra.mxu0 %v2583
    %2732 = vmatprep.subr.mxu0 %v2580
    %2733 = vmatpush2.msra.mxu0 %v2579
    %2734 = vmatprep.subr.mxu0 %v2576
    %2735 = vmatpush2.msra.mxu0 %v2575
    %2736 = vmatprep.subr.mxu0 %v2572
    %2737 = vmatpush2.msra.mxu0 %v2571
    %2738 = vmatprep.subr.mxu0 %v2568
    %2739 = vmatpush2.msra.mxu0 %v2567
    %2740 = vmatprep.subr.mxu0 %v2564
    %2741 = vmatpush2.msra.mxu0 %v2563
    %2742 = vmatprep.subr.mxu0 %v2560
    %2743 = vmatpush2.msra.mxu0 %v2559
    %2744 = vmatprep.subr.mxu0 %v2556
    %2745 = vmatpush2.msra.mxu0 %v2555
    %2746 = vmatprep.subr.mxu0 %v2552
    %2747 = vmatpush2.msra.mxu0 %v2551
    %2748 = vmatprep.mubr.f32.mxu0 %v2006
    %2749 = vmatmul.mubr.f32.gmra.mxu0 %v2484
    %v2750 = vpop.f32.mrf.mxu0
    %v2751 = vadd.f32 %v123, %v2750
    %v2752 = vpop.f32.mrf.mxu0
    %v2753 = vadd.f32 %v127, %v2752
    %2754 = vdwg.mxu0
    %v2755 = vxor.u32 %v2680, 2147483648
    %v2756 = vmul.f32 %v2755, 1.442695
    %v2757 = vpow.pop %v2756
    %v2758 = vadd.f32 %v2757, 1.0
    %v2759 = vrcp.pop %v2758
    %v2760 = vmul.f32 1.0, %v2759
    %v2761 = vxor.u32 %v2682, 2147483648
    %v2762 = vmul.f32 %v2761, 1.442695
    %v2763 = vpow.pop %v2762
    %v2764 = vadd.f32 %v2763, 1.0
    %v2765 = vrcp.pop %v2764
    %v2766 = vmul.f32 1.0, %v2765
    %v2767 = vtanh.pop %v2751
    %v2768 = vxor.u32 %v2753, 2147483648
    %v2769 = vmul.f32 %v2768, 1.442695
    %v2770 = vpow.pop %v2769
    %v2771 = vadd.f32 %v2770, 1.0
    %v2772 = vrcp.pop %v2771
    %v2773 = vmul.f32 1.0, %v2772
    %v2774 = vmul.f32 %v2766, %v2004
    %v2775 = vmul.f32 %v2760, %v2767
    %v2776 = vadd.f32 %v2774, %v2775
    %v2777 = vtanh.pop %v2776
    %v2778 = vmul.f32 %v2773, %v2777
    %s2779 = scalar_lea.vmem [#allocation13], 6
    %v2780 = vld [vmem:[%s2779] sm:$0x3]
    %v2781 = vld [vmem:[#allocation10] sm:$0xff]
    %v2782 = vld [vmem:[#allocation10 + $0x8] sm:$0xff]
    %v2783 = vld [vmem:[#allocation10 + $0x10] sm:$0xff]
    %v2784 = vld [vmem:[#allocation10 + $0x18] sm:$0xff]
    %v2785 = vld [vmem:[#allocation10 + $0x20] sm:$0xff]
    %v2786 = vld [vmem:[#allocation10 + $0x28] sm:$0xff]
    %v2787 = vld [vmem:[#allocation10 + $0x30] sm:$0xff]
    %v2788 = vld [vmem:[#allocation10 + $0x38] sm:$0xff]
    %v2789 = vld [vmem:[#allocation10 + $0x40] sm:$0xff]
    %v2790 = vld [vmem:[#allocation10 + $0x48] sm:$0xff]
    %v2791 = vld [vmem:[#allocation10 + $0x50] sm:$0xff]
    %v2792 = vld [vmem:[#allocation10 + $0x58] sm:$0xff]
    %v2793 = vld [vmem:[#allocation10 + $0x60] sm:$0xff]
    %v2794 = vld [vmem:[#allocation10 + $0x68] sm:$0xff]
    %v2795 = vld [vmem:[#allocation10 + $0x70] sm:$0xff]
    %v2796 = vld [vmem:[#allocation10 + $0x78] sm:$0xff]
    %2797 = vmatprep.subr.mxu0 0.0
    %2798 = vmatpush1.msra.mxu0 %v2796
    %2799 = vmatprep.subr.mxu0 0.0
    %2800 = vmatpush1.msra.mxu0 %v2795
    %2801 = vmatprep.subr.mxu0 0.0
    %2802 = vmatpush1.msra.mxu0 %v2794
    %2803 = vmatprep.subr.mxu0 0.0
    %2804 = vmatpush1.msra.mxu0 %v2793
    %2805 = vmatprep.subr.mxu0 0.0
    %2806 = vmatpush1.msra.mxu0 %v2792
    %2807 = vmatprep.subr.mxu0 0.0
    %2808 = vmatpush1.msra.mxu0 %v2791
    %2809 = vmatprep.subr.mxu0 0.0
    %2810 = vmatpush1.msra.mxu0 %v2790
    %2811 = vmatprep.subr.mxu0 0.0
    %2812 = vmatpush1.msra.mxu0 %v2789
    %2813 = vmatprep.subr.mxu0 0.0
    %2814 = vmatpush1.msra.mxu0 %v2788
    %2815 = vmatprep.subr.mxu0 0.0
    %2816 = vmatpush1.msra.mxu0 %v2787
    %2817 = vmatprep.subr.mxu0 0.0
    %2818 = vmatpush1.msra.mxu0 %v2786
    %2819 = vmatprep.subr.mxu0 0.0
    %2820 = vmatpush1.msra.mxu0 %v2785
    %2821 = vmatprep.subr.mxu0 0.0
    %2822 = vmatpush1.msra.mxu0 %v2784
    %2823 = vmatprep.subr.mxu0 0.0
    %2824 = vmatpush1.msra.mxu0 %v2783
    %2825 = vmatprep.subr.mxu0 0.0
    %2826 = vmatpush1.msra.mxu0 %v2782
    %2827 = vmatprep.subr.mxu0 0.0
    %2828 = vmatpush1.msra.mxu0 %v2781
    %2829 = vmatprep.subr.mxu0 0.0
    %2830 = vmatpush2.msra.mxu0 0.0
    %2831 = vmatprep.subr.mxu0 0.0
    %2832 = vmatpush2.msra.mxu0 0.0
    %2833 = vmatprep.subr.mxu0 0.0
    %2834 = vmatpush2.msra.mxu0 0.0
    %2835 = vmatprep.subr.mxu0 0.0
    %2836 = vmatpush2.msra.mxu0 0.0
    %2837 = vmatprep.subr.mxu0 0.0
    %2838 = vmatpush2.msra.mxu0 0.0
    %2839 = vmatprep.subr.mxu0 0.0
    %2840 = vmatpush2.msra.mxu0 0.0
    %2841 = vmatprep.subr.mxu0 0.0
    %2842 = vmatpush2.msra.mxu0 0.0
    %2843 = vmatprep.subr.mxu0 0.0
    %2844 = vmatpush2.msra.mxu0 0.0
    %2845 = vmatprep.subr.mxu0 0.0
    %2846 = vmatpush2.msra.mxu0 0.0
    %2847 = vmatprep.subr.mxu0 0.0
    %2848 = vmatpush2.msra.mxu0 0.0
    %2849 = vmatprep.subr.mxu0 0.0
    %2850 = vmatpush2.msra.mxu0 0.0
    %2851 = vmatprep.subr.mxu0 0.0
    %2852 = vmatpush2.msra.mxu0 0.0
    %2853 = vmatprep.subr.mxu0 0.0
    %2854 = vmatpush2.msra.mxu0 0.0
    %2855 = vmatprep.subr.mxu0 0.0
    %2856 = vmatpush2.msra.mxu0 0.0
    %2857 = vmatprep.subr.mxu0 0.0
    %2858 = vmatpush2.msra.mxu0 0.0
    %2859 = vmatprep.subr.mxu0 0.0
    %2860 = vmatpush2.msra.mxu0 0.0
    %2861 = vmatprep.mubr.f32.mxu0 0.0
    %2862 = vmatmul.mubr.f32.gmra.mxu0 %v2778
    %v2863 = vpop.f32.mrf.mxu0
    %v2864 = vadd.f32 0.0, %v2863
    %v2865 = vpop.f32.mrf.mxu0
    %2866 = vdwg.mxu0
    %v2867 = vadd.f32 %v2780, %v2864
    %2868 = vst [vmem:[%s2779] sm:$0x3] %v2867
    %s2869 = scalar_lea.vmem [#allocation2], 8
    %v2870 = vld [vmem:[%s2869] sm:$0x3]
    %v2871 = vld [vmem:[#allocation8] sm:$0xff]
    %v2872 = vld [vmem:[#allocation8 + $0x8] sm:$0xff]
    %v2873 = vld [vmem:[#allocation8 + $0x10] sm:$0xff]
    %v2874 = vld [vmem:[#allocation8 + $0x18] sm:$0xff]
    %v2875 = vld [vmem:[#allocation8 + $0x20] sm:$0xff]
    %v2876 = vld [vmem:[#allocation8 + $0x28] sm:$0xff]
    %v2877 = vld [vmem:[#allocation8 + $0x30] sm:$0xff]
    %v2878 = vld [vmem:[#allocation8 + $0x38] sm:$0xff]
    %v2879 = vld [vmem:[#allocation8 + $0x40] sm:$0xff]
    %v2880 = vld [vmem:[#allocation8 + $0x48] sm:$0xff]
    %v2881 = vld [vmem:[#allocation8 + $0x50] sm:$0xff]
    %v2882 = vld [vmem:[#allocation8 + $0x58] sm:$0xff]
    %v2883 = vld [vmem:[#allocation8 + $0x60] sm:$0xff]
    %v2884 = vld [vmem:[#allocation8 + $0x68] sm:$0xff]
    %v2885 = vld [vmem:[#allocation8 + $0x70] sm:$0xff]
    %v2886 = vld [vmem:[#allocation8 + $0x78] sm:$0xff]
    %v2887 = vld [vmem:[#allocation8 + $0x80] sm:$0xff]
    %v2888 = vld [vmem:[#allocation8 + $0x88] sm:$0xff]
    %v2889 = vld [vmem:[#allocation8 + $0x90] sm:$0xff]
    %v2890 = vld [vmem:[#allocation8 + $0x98] sm:$0xff]
    %v2891 = vld [vmem:[#allocation8 + $0xa0] sm:$0xff]
    %v2892 = vld [vmem:[#allocation8 + $0xa8] sm:$0xff]
    %v2893 = vld [vmem:[#allocation8 + $0xb0] sm:$0xff]
    %v2894 = vld [vmem:[#allocation8 + $0xb8] sm:$0xff]
    %v2895 = vld [vmem:[#allocation8 + $0xc0] sm:$0xff]
    %v2896 = vld [vmem:[#allocation8 + $0xc8] sm:$0xff]
    %v2897 = vld [vmem:[#allocation8 + $0xd0] sm:$0xff]
    %v2898 = vld [vmem:[#allocation8 + $0xd8] sm:$0xff]
    %v2899 = vld [vmem:[#allocation8 + $0xe0] sm:$0xff]
    %v2900 = vld [vmem:[#allocation8 + $0xe8] sm:$0xff]
    %v2901 = vld [vmem:[#allocation8 + $0xf0] sm:$0xff]
    %v2902 = vld [vmem:[#allocation8 + $0xf8] sm:$0xff]
    %v2903 = vld [vmem:[#allocation8 + $0x100] sm:$0xff]
    %v2904 = vld [vmem:[#allocation8 + $0x108] sm:$0xff]
    %v2905 = vld [vmem:[#allocation8 + $0x110] sm:$0xff]
    %v2906 = vld [vmem:[#allocation8 + $0x118] sm:$0xff]
    %v2907 = vld [vmem:[#allocation8 + $0x120] sm:$0xff]
    %v2908 = vld [vmem:[#allocation8 + $0x128] sm:$0xff]
    %v2909 = vld [vmem:[#allocation8 + $0x130] sm:$0xff]
    %v2910 = vld [vmem:[#allocation8 + $0x138] sm:$0xff]
    %v2911 = vld [vmem:[#allocation8 + $0x140] sm:$0xff]
    %v2912 = vld [vmem:[#allocation8 + $0x148] sm:$0xff]
    %v2913 = vld [vmem:[#allocation8 + $0x150] sm:$0xff]
    %v2914 = vld [vmem:[#allocation8 + $0x158] sm:$0xff]
    %v2915 = vld [vmem:[#allocation8 + $0x160] sm:$0xff]
    %v2916 = vld [vmem:[#allocation8 + $0x168] sm:$0xff]
    %v2917 = vld [vmem:[#allocation8 + $0x170] sm:$0xff]
    %v2918 = vld [vmem:[#allocation8 + $0x178] sm:$0xff]
    %v2919 = vld [vmem:[#allocation8 + $0x180] sm:$0xff]
    %v2920 = vld [vmem:[#allocation8 + $0x188] sm:$0xff]
    %v2921 = vld [vmem:[#allocation8 + $0x190] sm:$0xff]
    %v2922 = vld [vmem:[#allocation8 + $0x198] sm:$0xff]
    %v2923 = vld [vmem:[#allocation8 + $0x1a0] sm:$0xff]
    %v2924 = vld [vmem:[#allocation8 + $0x1a8] sm:$0xff]
    %v2925 = vld [vmem:[#allocation8 + $0x1b0] sm:$0xff]
    %v2926 = vld [vmem:[#allocation8 + $0x1b8] sm:$0xff]
    %v2927 = vld [vmem:[#allocation8 + $0x1c0] sm:$0xff]
    %v2928 = vld [vmem:[#allocation8 + $0x1c8] sm:$0xff]
    %v2929 = vld [vmem:[#allocation8 + $0x1d0] sm:$0xff]
    %v2930 = vld [vmem:[#allocation8 + $0x1d8] sm:$0xff]
    %v2931 = vld [vmem:[#allocation8 + $0x1e0] sm:$0xff]
    %v2932 = vld [vmem:[#allocation8 + $0x1e8] sm:$0xff]
    %v2933 = vld [vmem:[#allocation8 + $0x1f0] sm:$0xff]
    %v2934 = vld [vmem:[#allocation8 + $0x1f8] sm:$0xff]
    %v2935 = vld [vmem:[#allocation8 + $0x200] sm:$0xff]
    %v2936 = vld [vmem:[#allocation8 + $0x208] sm:$0xff]
    %v2937 = vld [vmem:[#allocation8 + $0x210] sm:$0xff]
    %v2938 = vld [vmem:[#allocation8 + $0x218] sm:$0xff]
    %v2939 = vld [vmem:[#allocation8 + $0x220] sm:$0xff]
    %v2940 = vld [vmem:[#allocation8 + $0x228] sm:$0xff]
    %v2941 = vld [vmem:[#allocation8 + $0x230] sm:$0xff]
    %v2942 = vld [vmem:[#allocation8 + $0x238] sm:$0xff]
    %v2943 = vld [vmem:[#allocation8 + $0x240] sm:$0xff]
    %v2944 = vld [vmem:[#allocation8 + $0x248] sm:$0xff]
    %v2945 = vld [vmem:[#allocation8 + $0x250] sm:$0xff]
    %v2946 = vld [vmem:[#allocation8 + $0x258] sm:$0xff]
    %v2947 = vld [vmem:[#allocation8 + $0x260] sm:$0xff]
    %v2948 = vld [vmem:[#allocation8 + $0x268] sm:$0xff]
    %v2949 = vld [vmem:[#allocation8 + $0x270] sm:$0xff]
    %v2950 = vld [vmem:[#allocation8 + $0x278] sm:$0xff]
    %v2951 = vld [vmem:[#allocation8 + $0x280] sm:$0xff]
    %v2952 = vld [vmem:[#allocation8 + $0x288] sm:$0xff]
    %v2953 = vld [vmem:[#allocation8 + $0x290] sm:$0xff]
    %v2954 = vld [vmem:[#allocation8 + $0x298] sm:$0xff]
    %v2955 = vld [vmem:[#allocation8 + $0x2a0] sm:$0xff]
    %v2956 = vld [vmem:[#allocation8 + $0x2a8] sm:$0xff]
    %v2957 = vld [vmem:[#allocation8 + $0x2b0] sm:$0xff]
    %v2958 = vld [vmem:[#allocation8 + $0x2b8] sm:$0xff]
    %v2959 = vld [vmem:[#allocation8 + $0x2c0] sm:$0xff]
    %v2960 = vld [vmem:[#allocation8 + $0x2c8] sm:$0xff]
    %v2961 = vld [vmem:[#allocation8 + $0x2d0] sm:$0xff]
    %v2962 = vld [vmem:[#allocation8 + $0x2d8] sm:$0xff]
    %v2963 = vld [vmem:[#allocation8 + $0x2e0] sm:$0xff]
    %v2964 = vld [vmem:[#allocation8 + $0x2e8] sm:$0xff]
    %v2965 = vld [vmem:[#allocation8 + $0x2f0] sm:$0xff]
    %v2966 = vld [vmem:[#allocation8 + $0x2f8] sm:$0xff]
    %v2967 = vld [vmem:[#allocation8 + $0x300] sm:$0xff]
    %v2968 = vld [vmem:[#allocation8 + $0x308] sm:$0xff]
    %v2969 = vld [vmem:[#allocation8 + $0x310] sm:$0xff]
    %v2970 = vld [vmem:[#allocation8 + $0x318] sm:$0xff]
    %v2971 = vld [vmem:[#allocation8 + $0x320] sm:$0xff]
    %v2972 = vld [vmem:[#allocation8 + $0x328] sm:$0xff]
    %v2973 = vld [vmem:[#allocation8 + $0x330] sm:$0xff]
    %v2974 = vld [vmem:[#allocation8 + $0x338] sm:$0xff]
    %v2975 = vld [vmem:[#allocation8 + $0x340] sm:$0xff]
    %v2976 = vld [vmem:[#allocation8 + $0x348] sm:$0xff]
    %v2977 = vld [vmem:[#allocation8 + $0x350] sm:$0xff]
    %v2978 = vld [vmem:[#allocation8 + $0x358] sm:$0xff]
    %v2979 = vld [vmem:[#allocation8 + $0x360] sm:$0xff]
    %v2980 = vld [vmem:[#allocation8 + $0x368] sm:$0xff]
    %v2981 = vld [vmem:[#allocation8 + $0x370] sm:$0xff]
    %v2982 = vld [vmem:[#allocation8 + $0x378] sm:$0xff]
    %v2983 = vld [vmem:[#allocation8 + $0x380] sm:$0xff]
    %v2984 = vld [vmem:[#allocation8 + $0x388] sm:$0xff]
    %v2985 = vld [vmem:[#allocation8 + $0x390] sm:$0xff]
    %v2986 = vld [vmem:[#allocation8 + $0x398] sm:$0xff]
    %v2987 = vld [vmem:[#allocation8 + $0x3a0] sm:$0xff]
    %v2988 = vld [vmem:[#allocation8 + $0x3a8] sm:$0xff]
    %v2989 = vld [vmem:[#allocation8 + $0x3b0] sm:$0xff]
    %v2990 = vld [vmem:[#allocation8 + $0x3b8] sm:$0xff]
    %v2991 = vld [vmem:[#allocation8 + $0x3c0] sm:$0xff]
    %v2992 = vld [vmem:[#allocation8 + $0x3c8] sm:$0xff]
    %v2993 = vld [vmem:[#allocation8 + $0x3d0] sm:$0xff]
    %v2994 = vld [vmem:[#allocation8 + $0x3d8] sm:$0xff]
    %v2995 = vld [vmem:[#allocation8 + $0x3e0] sm:$0xff]
    %v2996 = vld [vmem:[#allocation8 + $0x3e8] sm:$0xff]
    %v2997 = vld [vmem:[#allocation8 + $0x3f0] sm:$0xff]
    %v2998 = vld [vmem:[#allocation8 + $0x3f8] sm:$0xff]
    %2999 = vmatprep.subr.mxu0 %v2932
    %3000 = vmatpush1.msra.mxu0 %v2931
    %3001 = vmatprep.subr.mxu0 %v2928
    %3002 = vmatpush1.msra.mxu0 %v2927
    %3003 = vmatprep.subr.mxu0 %v2924
    %3004 = vmatpush1.msra.mxu0 %v2923
    %3005 = vmatprep.subr.mxu0 %v2920
    %3006 = vmatpush1.msra.mxu0 %v2919
    %3007 = vmatprep.subr.mxu0 %v2916
    %3008 = vmatpush1.msra.mxu0 %v2915
    %3009 = vmatprep.subr.mxu0 %v2912
    %3010 = vmatpush1.msra.mxu0 %v2911
    %3011 = vmatprep.subr.mxu0 %v2908
    %3012 = vmatpush1.msra.mxu0 %v2907
    %3013 = vmatprep.subr.mxu0 %v2904
    %3014 = vmatpush1.msra.mxu0 %v2903
    %3015 = vmatprep.subr.mxu0 %v2900
    %3016 = vmatpush1.msra.mxu0 %v2899
    %3017 = vmatprep.subr.mxu0 %v2896
    %3018 = vmatpush1.msra.mxu0 %v2895
    %3019 = vmatprep.subr.mxu0 %v2892
    %3020 = vmatpush1.msra.mxu0 %v2891
    %3021 = vmatprep.subr.mxu0 %v2888
    %3022 = vmatpush1.msra.mxu0 %v2887
    %3023 = vmatprep.subr.mxu0 %v2884
    %3024 = vmatpush1.msra.mxu0 %v2883
    %3025 = vmatprep.subr.mxu0 %v2880
    %3026 = vmatpush1.msra.mxu0 %v2879
    %3027 = vmatprep.subr.mxu0 %v2876
    %3028 = vmatpush1.msra.mxu0 %v2875
    %3029 = vmatprep.subr.mxu0 %v2872
    %3030 = vmatpush1.msra.mxu0 %v2871
    %3031 = vmatprep.subr.mxu0 %v2996
    %3032 = vmatpush2.msra.mxu0 %v2995
    %3033 = vmatprep.subr.mxu0 %v2992
    %3034 = vmatpush2.msra.mxu0 %v2991
    %3035 = vmatprep.subr.mxu0 %v2988
    %3036 = vmatpush2.msra.mxu0 %v2987
    %3037 = vmatprep.subr.mxu0 %v2984
    %3038 = vmatpush2.msra.mxu0 %v2983
    %3039 = vmatprep.subr.mxu0 %v2980
    %3040 = vmatpush2.msra.mxu0 %v2979
    %3041 = vmatprep.subr.mxu0 %v2976
    %3042 = vmatpush2.msra.mxu0 %v2975
    %3043 = vmatprep.subr.mxu0 %v2972
    %3044 = vmatpush2.msra.mxu0 %v2971
    %3045 = vmatprep.subr.mxu0 %v2968
    %3046 = vmatpush2.msra.mxu0 %v2967
    %3047 = vmatprep.subr.mxu0 %v2964
    %3048 = vmatpush2.msra.mxu0 %v2963
    %3049 = vmatprep.subr.mxu0 %v2960
    %3050 = vmatpush2.msra.mxu0 %v2959
    %3051 = vmatprep.subr.mxu0 %v2956
    %3052 = vmatpush2.msra.mxu0 %v2955
    %3053 = vmatprep.subr.mxu0 %v2952
    %3054 = vmatpush2.msra.mxu0 %v2951
    %3055 = vmatprep.subr.mxu0 %v2948
    %3056 = vmatpush2.msra.mxu0 %v2947
    %3057 = vmatprep.subr.mxu0 %v2944
    %3058 = vmatpush2.msra.mxu0 %v2943
    %3059 = vmatprep.subr.mxu0 %v2940
    %3060 = vmatpush2.msra.mxu0 %v2939
    %3061 = vmatprep.subr.mxu0 %v2936
    %3062 = vmatpush2.msra.mxu0 %v2935
    %3063 = vmatprep.mubr.f32.mxu0 %v2392
    %3064 = vmatmul.mubr.f32.gmra.mxu0 %v2870
    %v3065 = vpop.f32.mrf.mxu0
    %v3066 = vadd.f32 %v137, %v3065
    %v3067 = vpop.f32.mrf.mxu0
    %v3068 = vadd.f32 %v141, %v3067
    %3069 = vdwg.mxu0
    %3070 = vmatprep.subr.mxu0 %v2934
    %3071 = vmatpush1.msra.mxu0 %v2933
    %3072 = vmatprep.subr.mxu0 %v2930
    %3073 = vmatpush1.msra.mxu0 %v2929
    %3074 = vmatprep.subr.mxu0 %v2926
    %3075 = vmatpush1.msra.mxu0 %v2925
    %3076 = vmatprep.subr.mxu0 %v2922
    %3077 = vmatpush1.msra.mxu0 %v2921
    %3078 = vmatprep.subr.mxu0 %v2918
    %3079 = vmatpush1.msra.mxu0 %v2917
    %3080 = vmatprep.subr.mxu0 %v2914
    %3081 = vmatpush1.msra.mxu0 %v2913
    %3082 = vmatprep.subr.mxu0 %v2910
    %3083 = vmatpush1.msra.mxu0 %v2909
    %3084 = vmatprep.subr.mxu0 %v2906
    %3085 = vmatpush1.msra.mxu0 %v2905
    %3086 = vmatprep.subr.mxu0 %v2902
    %3087 = vmatpush1.msra.mxu0 %v2901
    %3088 = vmatprep.subr.mxu0 %v2898
    %3089 = vmatpush1.msra.mxu0 %v2897
    %3090 = vmatprep.subr.mxu0 %v2894
    %3091 = vmatpush1.msra.mxu0 %v2893
    %3092 = vmatprep.subr.mxu0 %v2890
    %3093 = vmatpush1.msra.mxu0 %v2889
    %3094 = vmatprep.subr.mxu0 %v2886
    %3095 = vmatpush1.msra.mxu0 %v2885
    %3096 = vmatprep.subr.mxu0 %v2882
    %3097 = vmatpush1.msra.mxu0 %v2881
    %3098 = vmatprep.subr.mxu0 %v2878
    %3099 = vmatpush1.msra.mxu0 %v2877
    %3100 = vmatprep.subr.mxu0 %v2874
    %3101 = vmatpush1.msra.mxu0 %v2873
    %3102 = vmatprep.subr.mxu0 %v2998
    %3103 = vmatpush2.msra.mxu0 %v2997
    %3104 = vmatprep.subr.mxu0 %v2994
    %3105 = vmatpush2.msra.mxu0 %v2993
    %3106 = vmatprep.subr.mxu0 %v2990
    %3107 = vmatpush2.msra.mxu0 %v2989
    %3108 = vmatprep.subr.mxu0 %v2986
    %3109 = vmatpush2.msra.mxu0 %v2985
    %3110 = vmatprep.subr.mxu0 %v2982
    %3111 = vmatpush2.msra.mxu0 %v2981
    %3112 = vmatprep.subr.mxu0 %v2978
    %3113 = vmatpush2.msra.mxu0 %v2977
    %3114 = vmatprep.subr.mxu0 %v2974
    %3115 = vmatpush2.msra.mxu0 %v2973
    %3116 = vmatprep.subr.mxu0 %v2970
    %3117 = vmatpush2.msra.mxu0 %v2969
    %3118 = vmatprep.subr.mxu0 %v2966
    %3119 = vmatpush2.msra.mxu0 %v2965
    %3120 = vmatprep.subr.mxu0 %v2962
    %3121 = vmatpush2.msra.mxu0 %v2961
    %3122 = vmatprep.subr.mxu0 %v2958
    %3123 = vmatpush2.msra.mxu0 %v2957
    %3124 = vmatprep.subr.mxu0 %v2954
    %3125 = vmatpush2.msra.mxu0 %v2953
    %3126 = vmatprep.subr.mxu0 %v2950
    %3127 = vmatpush2.msra.mxu0 %v2949
    %3128 = vmatprep.subr.mxu0 %v2946
    %3129 = vmatpush2.msra.mxu0 %v2945
    %3130 = vmatprep.subr.mxu0 %v2942
    %3131 = vmatpush2.msra.mxu0 %v2941
    %3132 = vmatprep.subr.mxu0 %v2938
    %3133 = vmatpush2.msra.mxu0 %v2937
    %3134 = vmatprep.mubr.f32.mxu0 %v2392
    %3135 = vmatmul.mubr.f32.gmra.mxu0 %v2870
    %v3136 = vpop.f32.mrf.mxu0
    %v3137 = vadd.f32 %v145, %v3136
    %v3138 = vpop.f32.mrf.mxu0
    %v3139 = vadd.f32 %v149, %v3138
    %3140 = vdwg.mxu0
    %v3141 = vxor.u32 %v3066, 2147483648
    %v3142 = vmul.f32 %v3141, 1.442695
    %v3143 = vpow.pop %v3142
    %v3144 = vadd.f32 %v3143, 1.0
    %v3145 = vrcp.pop %v3144
    %v3146 = vmul.f32 1.0, %v3145
    %v3147 = vxor.u32 %v3068, 2147483648
    %v3148 = vmul.f32 %v3147, 1.442695
    %v3149 = vpow.pop %v3148
    %v3150 = vadd.f32 %v3149, 1.0
    %v3151 = vrcp.pop %v3150
    %v3152 = vmul.f32 1.0, %v3151
    %v3153 = vtanh.pop %v3137
    %v3154 = vxor.u32 %v3139, 2147483648
    %v3155 = vmul.f32 %v3154, 1.442695
    %v3156 = vpow.pop %v3155
    %v3157 = vadd.f32 %v3156, 1.0
    %v3158 = vrcp.pop %v3157
    %v3159 = vmul.f32 1.0, %v3158
    %v3160 = vmul.f32 %v3152, %v2390
    %v3161 = vmul.f32 %v3146, %v3153
    %v3162 = vadd.f32 %v3160, %v3161
    %v3163 = vtanh.pop %v3162
    %v3164 = vmul.f32 %v3159, %v3163
    %s3165 = scalar_lea.vmem [#allocation13], 8
    %v3166 = vld [vmem:[%s3165] sm:$0x3]
    %v3167 = vld [vmem:[#allocation11] sm:$0xff]
    %v3168 = vld [vmem:[#allocation11 + $0x8] sm:$0xff]
    %v3169 = vld [vmem:[#allocation11 + $0x10] sm:$0xff]
    %v3170 = vld [vmem:[#allocation11 + $0x18] sm:$0xff]
    %v3171 = vld [vmem:[#allocation11 + $0x20] sm:$0xff]
    %v3172 = vld [vmem:[#allocation11 + $0x28] sm:$0xff]
    %v3173 = vld [vmem:[#allocation11 + $0x30] sm:$0xff]
    %v3174 = vld [vmem:[#allocation11 + $0x38] sm:$0xff]
    %v3175 = vld [vmem:[#allocation11 + $0x40] sm:$0xff]
    %v3176 = vld [vmem:[#allocation11 + $0x48] sm:$0xff]
    %v3177 = vld [vmem:[#allocation11 + $0x50] sm:$0xff]
    %v3178 = vld [vmem:[#allocation11 + $0x58] sm:$0xff]
    %v3179 = vld [vmem:[#allocation11 + $0x60] sm:$0xff]
    %v3180 = vld [vmem:[#allocation11 + $0x68] sm:$0xff]
    %v3181 = vld [vmem:[#allocation11 + $0x70] sm:$0xff]
    %v3182 = vld [vmem:[#allocation11 + $0x78] sm:$0xff]
    %3183 = vmatprep.subr.mxu0 0.0
    %3184 = vmatpush1.msra.mxu0 %v3182
    %3185 = vmatprep.subr.mxu0 0.0
    %3186 = vmatpush1.msra.mxu0 %v3181
    %3187 = vmatprep.subr.mxu0 0.0
    %3188 = vmatpush1.msra.mxu0 %v3180
    %3189 = vmatprep.subr.mxu0 0.0
    %3190 = vmatpush1.msra.mxu0 %v3179
    %3191 = vmatprep.subr.mxu0 0.0
    %3192 = vmatpush1.msra.mxu0 %v3178
    %3193 = vmatprep.subr.mxu0 0.0
    %3194 = vmatpush1.msra.mxu0 %v3177
    %3195 = vmatprep.subr.mxu0 0.0
    %3196 = vmatpush1.msra.mxu0 %v3176
    %3197 = vmatprep.subr.mxu0 0.0
    %3198 = vmatpush1.msra.mxu0 %v3175
    %3199 = vmatprep.subr.mxu0 0.0
    %3200 = vmatpush1.msra.mxu0 %v3174
    %3201 = vmatprep.subr.mxu0 0.0
    %3202 = vmatpush1.msra.mxu0 %v3173
    %3203 = vmatprep.subr.mxu0 0.0
    %3204 = vmatpush1.msra.mxu0 %v3172
    %3205 = vmatprep.subr.mxu0 0.0
    %3206 = vmatpush1.msra.mxu0 %v3171
    %3207 = vmatprep.subr.mxu0 0.0
    %3208 = vmatpush1.msra.mxu0 %v3170
    %3209 = vmatprep.subr.mxu0 0.0
    %3210 = vmatpush1.msra.mxu0 %v3169
    %3211 = vmatprep.subr.mxu0 0.0
    %3212 = vmatpush1.msra.mxu0 %v3168
    %3213 = vmatprep.subr.mxu0 0.0
    %3214 = vmatpush1.msra.mxu0 %v3167
    %3215 = vmatprep.subr.mxu0 0.0
    %3216 = vmatpush2.msra.mxu0 0.0
    %3217 = vmatprep.subr.mxu0 0.0
    %3218 = vmatpush2.msra.mxu0 0.0
    %3219 = vmatprep.subr.mxu0 0.0
    %3220 = vmatpush2.msra.mxu0 0.0
    %3221 = vmatprep.subr.mxu0 0.0
    %3222 = vmatpush2.msra.mxu0 0.0
    %3223 = vmatprep.subr.mxu0 0.0
    %3224 = vmatpush2.msra.mxu0 0.0
    %3225 = vmatprep.subr.mxu0 0.0
    %3226 = vmatpush2.msra.mxu0 0.0
    %3227 = vmatprep.subr.mxu0 0.0
    %3228 = vmatpush2.msra.mxu0 0.0
    %3229 = vmatprep.subr.mxu0 0.0
    %3230 = vmatpush2.msra.mxu0 0.0
    %3231 = vmatprep.subr.mxu0 0.0
    %3232 = vmatpush2.msra.mxu0 0.0
    %3233 = vmatprep.subr.mxu0 0.0
    %3234 = vmatpush2.msra.mxu0 0.0
    %3235 = vmatprep.subr.mxu0 0.0
    %3236 = vmatpush2.msra.mxu0 0.0
    %3237 = vmatprep.subr.mxu0 0.0
    %3238 = vmatpush2.msra.mxu0 0.0
    %3239 = vmatprep.subr.mxu0 0.0
    %3240 = vmatpush2.msra.mxu0 0.0
    %3241 = vmatprep.subr.mxu0 0.0
    %3242 = vmatpush2.msra.mxu0 0.0
    %3243 = vmatprep.subr.mxu0 0.0
    %3244 = vmatpush2.msra.mxu0 0.0
    %3245 = vmatprep.subr.mxu0 0.0
    %3246 = vmatpush2.msra.mxu0 0.0
    %3247 = vmatprep.mubr.f32.mxu0 0.0
    %3248 = vmatmul.mubr.f32.gmra.mxu0 %v3164
    %v3249 = vpop.f32.mrf.mxu0
    %v3250 = vadd.f32 0.0, %v3249
    %v3251 = vpop.f32.mrf.mxu0
    %3252 = vdwg.mxu0
    %v3253 = vadd.f32 %v3166, %v3250
    %3254 = vst [vmem:[%s3165] sm:$0x3] %v3253
    %v3255 = vld [vmem:[%s2869] sm:$0x3]
    %v3256 = vld [vmem:[#allocation5] sm:$0xff]
    %v3257 = vld [vmem:[#allocation5 + $0x8] sm:$0xff]
    %v3258 = vld [vmem:[#allocation5 + $0x10] sm:$0xff]
    %v3259 = vld [vmem:[#allocation5 + $0x18] sm:$0xff]
    %v3260 = vld [vmem:[#allocation5 + $0x20] sm:$0xff]
    %v3261 = vld [vmem:[#allocation5 + $0x28] sm:$0xff]
    %v3262 = vld [vmem:[#allocation5 + $0x30] sm:$0xff]
    %v3263 = vld [vmem:[#allocation5 + $0x38] sm:$0xff]
    %v3264 = vld [vmem:[#allocation5 + $0x40] sm:$0xff]
    %v3265 = vld [vmem:[#allocation5 + $0x48] sm:$0xff]
    %v3266 = vld [vmem:[#allocation5 + $0x50] sm:$0xff]
    %v3267 = vld [vmem:[#allocation5 + $0x58] sm:$0xff]
    %v3268 = vld [vmem:[#allocation5 + $0x60] sm:$0xff]
    %v3269 = vld [vmem:[#allocation5 + $0x68] sm:$0xff]
    %v3270 = vld [vmem:[#allocation5 + $0x70] sm:$0xff]
    %v3271 = vld [vmem:[#allocation5 + $0x78] sm:$0xff]
    %v3272 = vld [vmem:[#allocation5 + $0x80] sm:$0xff]
    %v3273 = vld [vmem:[#allocation5 + $0x88] sm:$0xff]
    %v3274 = vld [vmem:[#allocation5 + $0x90] sm:$0xff]
    %v3275 = vld [vmem:[#allocation5 + $0x98] sm:$0xff]
    %v3276 = vld [vmem:[#allocation5 + $0xa0] sm:$0xff]
    %v3277 = vld [vmem:[#allocation5 + $0xa8] sm:$0xff]
    %v3278 = vld [vmem:[#allocation5 + $0xb0] sm:$0xff]
    %v3279 = vld [vmem:[#allocation5 + $0xb8] sm:$0xff]
    %v3280 = vld [vmem:[#allocation5 + $0xc0] sm:$0xff]
    %v3281 = vld [vmem:[#allocation5 + $0xc8] sm:$0xff]
    %v3282 = vld [vmem:[#allocation5 + $0xd0] sm:$0xff]
    %v3283 = vld [vmem:[#allocation5 + $0xd8] sm:$0xff]
    %v3284 = vld [vmem:[#allocation5 + $0xe0] sm:$0xff]
    %v3285 = vld [vmem:[#allocation5 + $0xe8] sm:$0xff]
    %v3286 = vld [vmem:[#allocation5 + $0xf0] sm:$0xff]
    %v3287 = vld [vmem:[#allocation5 + $0xf8] sm:$0xff]
    %v3288 = vld [vmem:[#allocation5 + $0x100] sm:$0xff]
    %v3289 = vld [vmem:[#allocation5 + $0x108] sm:$0xff]
    %v3290 = vld [vmem:[#allocation5 + $0x110] sm:$0xff]
    %v3291 = vld [vmem:[#allocation5 + $0x118] sm:$0xff]
    %v3292 = vld [vmem:[#allocation5 + $0x120] sm:$0xff]
    %v3293 = vld [vmem:[#allocation5 + $0x128] sm:$0xff]
    %v3294 = vld [vmem:[#allocation5 + $0x130] sm:$0xff]
    %v3295 = vld [vmem:[#allocation5 + $0x138] sm:$0xff]
    %v3296 = vld [vmem:[#allocation5 + $0x140] sm:$0xff]
    %v3297 = vld [vmem:[#allocation5 + $0x148] sm:$0xff]
    %v3298 = vld [vmem:[#allocation5 + $0x150] sm:$0xff]
    %v3299 = vld [vmem:[#allocation5 + $0x158] sm:$0xff]
    %v3300 = vld [vmem:[#allocation5 + $0x160] sm:$0xff]
    %v3301 = vld [vmem:[#allocation5 + $0x168] sm:$0xff]
    %v3302 = vld [vmem:[#allocation5 + $0x170] sm:$0xff]
    %v3303 = vld [vmem:[#allocation5 + $0x178] sm:$0xff]
    %v3304 = vld [vmem:[#allocation5 + $0x180] sm:$0xff]
    %v3305 = vld [vmem:[#allocation5 + $0x188] sm:$0xff]
    %v3306 = vld [vmem:[#allocation5 + $0x190] sm:$0xff]
    %v3307 = vld [vmem:[#allocation5 + $0x198] sm:$0xff]
    %v3308 = vld [vmem:[#allocation5 + $0x1a0] sm:$0xff]
    %v3309 = vld [vmem:[#allocation5 + $0x1a8] sm:$0xff]
    %v3310 = vld [vmem:[#allocation5 + $0x1b0] sm:$0xff]
    %v3311 = vld [vmem:[#allocation5 + $0x1b8] sm:$0xff]
    %v3312 = vld [vmem:[#allocation5 + $0x1c0] sm:$0xff]
    %v3313 = vld [vmem:[#allocation5 + $0x1c8] sm:$0xff]
    %v3314 = vld [vmem:[#allocation5 + $0x1d0] sm:$0xff]
    %v3315 = vld [vmem:[#allocation5 + $0x1d8] sm:$0xff]
    %v3316 = vld [vmem:[#allocation5 + $0x1e0] sm:$0xff]
    %v3317 = vld [vmem:[#allocation5 + $0x1e8] sm:$0xff]
    %v3318 = vld [vmem:[#allocation5 + $0x1f0] sm:$0xff]
    %v3319 = vld [vmem:[#allocation5 + $0x1f8] sm:$0xff]
    %v3320 = vld [vmem:[#allocation5 + $0x200] sm:$0xff]
    %v3321 = vld [vmem:[#allocation5 + $0x208] sm:$0xff]
    %v3322 = vld [vmem:[#allocation5 + $0x210] sm:$0xff]
    %v3323 = vld [vmem:[#allocation5 + $0x218] sm:$0xff]
    %v3324 = vld [vmem:[#allocation5 + $0x220] sm:$0xff]
    %v3325 = vld [vmem:[#allocation5 + $0x228] sm:$0xff]
    %v3326 = vld [vmem:[#allocation5 + $0x230] sm:$0xff]
    %v3327 = vld [vmem:[#allocation5 + $0x238] sm:$0xff]
    %v3328 = vld [vmem:[#allocation5 + $0x240] sm:$0xff]
    %v3329 = vld [vmem:[#allocation5 + $0x248] sm:$0xff]
    %v3330 = vld [vmem:[#allocation5 + $0x250] sm:$0xff]
    %v3331 = vld [vmem:[#allocation5 + $0x258] sm:$0xff]
    %v3332 = vld [vmem:[#allocation5 + $0x260] sm:$0xff]
    %v3333 = vld [vmem:[#allocation5 + $0x268] sm:$0xff]
    %v3334 = vld [vmem:[#allocation5 + $0x270] sm:$0xff]
    %v3335 = vld [vmem:[#allocation5 + $0x278] sm:$0xff]
    %v3336 = vld [vmem:[#allocation5 + $0x280] sm:$0xff]
    %v3337 = vld [vmem:[#allocation5 + $0x288] sm:$0xff]
    %v3338 = vld [vmem:[#allocation5 + $0x290] sm:$0xff]
    %v3339 = vld [vmem:[#allocation5 + $0x298] sm:$0xff]
    %v3340 = vld [vmem:[#allocation5 + $0x2a0] sm:$0xff]
    %v3341 = vld [vmem:[#allocation5 + $0x2a8] sm:$0xff]
    %v3342 = vld [vmem:[#allocation5 + $0x2b0] sm:$0xff]
    %v3343 = vld [vmem:[#allocation5 + $0x2b8] sm:$0xff]
    %v3344 = vld [vmem:[#allocation5 + $0x2c0] sm:$0xff]
    %v3345 = vld [vmem:[#allocation5 + $0x2c8] sm:$0xff]
    %v3346 = vld [vmem:[#allocation5 + $0x2d0] sm:$0xff]
    %v3347 = vld [vmem:[#allocation5 + $0x2d8] sm:$0xff]
    %v3348 = vld [vmem:[#allocation5 + $0x2e0] sm:$0xff]
    %v3349 = vld [vmem:[#allocation5 + $0x2e8] sm:$0xff]
    %v3350 = vld [vmem:[#allocation5 + $0x2f0] sm:$0xff]
    %v3351 = vld [vmem:[#allocation5 + $0x2f8] sm:$0xff]
    %v3352 = vld [vmem:[#allocation5 + $0x300] sm:$0xff]
    %v3353 = vld [vmem:[#allocation5 + $0x308] sm:$0xff]
    %v3354 = vld [vmem:[#allocation5 + $0x310] sm:$0xff]
    %v3355 = vld [vmem:[#allocation5 + $0x318] sm:$0xff]
    %v3356 = vld [vmem:[#allocation5 + $0x320] sm:$0xff]
    %v3357 = vld [vmem:[#allocation5 + $0x328] sm:$0xff]
    %v3358 = vld [vmem:[#allocation5 + $0x330] sm:$0xff]
    %v3359 = vld [vmem:[#allocation5 + $0x338] sm:$0xff]
    %v3360 = vld [vmem:[#allocation5 + $0x340] sm:$0xff]
    %v3361 = vld [vmem:[#allocation5 + $0x348] sm:$0xff]
    %v3362 = vld [vmem:[#allocation5 + $0x350] sm:$0xff]
    %v3363 = vld [vmem:[#allocation5 + $0x358] sm:$0xff]
    %v3364 = vld [vmem:[#allocation5 + $0x360] sm:$0xff]
    %v3365 = vld [vmem:[#allocation5 + $0x368] sm:$0xff]
    %v3366 = vld [vmem:[#allocation5 + $0x370] sm:$0xff]
    %v3367 = vld [vmem:[#allocation5 + $0x378] sm:$0xff]
    %v3368 = vld [vmem:[#allocation5 + $0x380] sm:$0xff]
    %v3369 = vld [vmem:[#allocation5 + $0x388] sm:$0xff]
    %v3370 = vld [vmem:[#allocation5 + $0x390] sm:$0xff]
    %v3371 = vld [vmem:[#allocation5 + $0x398] sm:$0xff]
    %v3372 = vld [vmem:[#allocation5 + $0x3a0] sm:$0xff]
    %v3373 = vld [vmem:[#allocation5 + $0x3a8] sm:$0xff]
    %v3374 = vld [vmem:[#allocation5 + $0x3b0] sm:$0xff]
    %v3375 = vld [vmem:[#allocation5 + $0x3b8] sm:$0xff]
    %v3376 = vld [vmem:[#allocation5 + $0x3c0] sm:$0xff]
    %v3377 = vld [vmem:[#allocation5 + $0x3c8] sm:$0xff]
    %v3378 = vld [vmem:[#allocation5 + $0x3d0] sm:$0xff]
    %v3379 = vld [vmem:[#allocation5 + $0x3d8] sm:$0xff]
    %v3380 = vld [vmem:[#allocation5 + $0x3e0] sm:$0xff]
    %v3381 = vld [vmem:[#allocation5 + $0x3e8] sm:$0xff]
    %v3382 = vld [vmem:[#allocation5 + $0x3f0] sm:$0xff]
    %v3383 = vld [vmem:[#allocation5 + $0x3f8] sm:$0xff]
    %3384 = vmatprep.subr.mxu0 %v3317
    %3385 = vmatpush1.msra.mxu0 %v3316
    %3386 = vmatprep.subr.mxu0 %v3313
    %3387 = vmatpush1.msra.mxu0 %v3312
    %3388 = vmatprep.subr.mxu0 %v3309
    %3389 = vmatpush1.msra.mxu0 %v3308
    %3390 = vmatprep.subr.mxu0 %v3305
    %3391 = vmatpush1.msra.mxu0 %v3304
    %3392 = vmatprep.subr.mxu0 %v3301
    %3393 = vmatpush1.msra.mxu0 %v3300
    %3394 = vmatprep.subr.mxu0 %v3297
    %3395 = vmatpush1.msra.mxu0 %v3296
    %3396 = vmatprep.subr.mxu0 %v3293
    %3397 = vmatpush1.msra.mxu0 %v3292
    %3398 = vmatprep.subr.mxu0 %v3289
    %3399 = vmatpush1.msra.mxu0 %v3288
    %3400 = vmatprep.subr.mxu0 %v3285
    %3401 = vmatpush1.msra.mxu0 %v3284
    %3402 = vmatprep.subr.mxu0 %v3281
    %3403 = vmatpush1.msra.mxu0 %v3280
    %3404 = vmatprep.subr.mxu0 %v3277
    %3405 = vmatpush1.msra.mxu0 %v3276
    %3406 = vmatprep.subr.mxu0 %v3273
    %3407 = vmatpush1.msra.mxu0 %v3272
    %3408 = vmatprep.subr.mxu0 %v3269
    %3409 = vmatpush1.msra.mxu0 %v3268
    %3410 = vmatprep.subr.mxu0 %v3265
    %3411 = vmatpush1.msra.mxu0 %v3264
    %3412 = vmatprep.subr.mxu0 %v3261
    %3413 = vmatpush1.msra.mxu0 %v3260
    %3414 = vmatprep.subr.mxu0 %v3257
    %3415 = vmatpush1.msra.mxu0 %v3256
    %3416 = vmatprep.subr.mxu0 %v3381
    %3417 = vmatpush2.msra.mxu0 %v3380
    %3418 = vmatprep.subr.mxu0 %v3377
    %3419 = vmatpush2.msra.mxu0 %v3376
    %3420 = vmatprep.subr.mxu0 %v3373
    %3421 = vmatpush2.msra.mxu0 %v3372
    %3422 = vmatprep.subr.mxu0 %v3369
    %3423 = vmatpush2.msra.mxu0 %v3368
    %3424 = vmatprep.subr.mxu0 %v3365
    %3425 = vmatpush2.msra.mxu0 %v3364
    %3426 = vmatprep.subr.mxu0 %v3361
    %3427 = vmatpush2.msra.mxu0 %v3360
    %3428 = vmatprep.subr.mxu0 %v3357
    %3429 = vmatpush2.msra.mxu0 %v3356
    %3430 = vmatprep.subr.mxu0 %v3353
    %3431 = vmatpush2.msra.mxu0 %v3352
    %3432 = vmatprep.subr.mxu0 %v3349
    %3433 = vmatpush2.msra.mxu0 %v3348
    %3434 = vmatprep.subr.mxu0 %v3345
    %3435 = vmatpush2.msra.mxu0 %v3344
    %3436 = vmatprep.subr.mxu0 %v3341
    %3437 = vmatpush2.msra.mxu0 %v3340
    %3438 = vmatprep.subr.mxu0 %v3337
    %3439 = vmatpush2.msra.mxu0 %v3336
    %3440 = vmatprep.subr.mxu0 %v3333
    %3441 = vmatpush2.msra.mxu0 %v3332
    %3442 = vmatprep.subr.mxu0 %v3329
    %3443 = vmatpush2.msra.mxu0 %v3328
    %3444 = vmatprep.subr.mxu0 %v3325
    %3445 = vmatpush2.msra.mxu0 %v3324
    %3446 = vmatprep.subr.mxu0 %v3321
    %3447 = vmatpush2.msra.mxu0 %v3320
    %3448 = vmatprep.mubr.f32.mxu0 %v2778
    %3449 = vmatmul.mubr.f32.gmra.mxu0 %v3255
    %v3450 = vpop.f32.mrf.mxu0
    %v3451 = vadd.f32 %v115, %v3450
    %v3452 = vpop.f32.mrf.mxu0
    %v3453 = vadd.f32 %v119, %v3452
    %3454 = vdwg.mxu0
    %3455 = vmatprep.subr.mxu0 %v3319
    %3456 = vmatpush1.msra.mxu0 %v3318
    %3457 = vmatprep.subr.mxu0 %v3315
    %3458 = vmatpush1.msra.mxu0 %v3314
    %3459 = vmatprep.subr.mxu0 %v3311
    %3460 = vmatpush1.msra.mxu0 %v3310
    %3461 = vmatprep.subr.mxu0 %v3307
    %3462 = vmatpush1.msra.mxu0 %v3306
    %3463 = vmatprep.subr.mxu0 %v3303
    %3464 = vmatpush1.msra.mxu0 %v3302
    %3465 = vmatprep.subr.mxu0 %v3299
    %3466 = vmatpush1.msra.mxu0 %v3298
    %3467 = vmatprep.subr.mxu0 %v3295
    %3468 = vmatpush1.msra.mxu0 %v3294
    %3469 = vmatprep.subr.mxu0 %v3291
    %3470 = vmatpush1.msra.mxu0 %v3290
    %3471 = vmatprep.subr.mxu0 %v3287
    %3472 = vmatpush1.msra.mxu0 %v3286
    %3473 = vmatprep.subr.mxu0 %v3283
    %3474 = vmatpush1.msra.mxu0 %v3282
    %3475 = vmatprep.subr.mxu0 %v3279
    %3476 = vmatpush1.msra.mxu0 %v3278
    %3477 = vmatprep.subr.mxu0 %v3275
    %3478 = vmatpush1.msra.mxu0 %v3274
    %3479 = vmatprep.subr.mxu0 %v3271
    %3480 = vmatpush1.msra.mxu0 %v3270
    %3481 = vmatprep.subr.mxu0 %v3267
    %3482 = vmatpush1.msra.mxu0 %v3266
    %3483 = vmatprep.subr.mxu0 %v3263
    %3484 = vmatpush1.msra.mxu0 %v3262
    %3485 = vmatprep.subr.mxu0 %v3259
    %3486 = vmatpush1.msra.mxu0 %v3258
    %3487 = vmatprep.subr.mxu0 %v3383
    %3488 = vmatpush2.msra.mxu0 %v3382
    %3489 = vmatprep.subr.mxu0 %v3379
    %3490 = vmatpush2.msra.mxu0 %v3378
    %3491 = vmatprep.subr.mxu0 %v3375
    %3492 = vmatpush2.msra.mxu0 %v3374
    %3493 = vmatprep.subr.mxu0 %v3371
    %3494 = vmatpush2.msra.mxu0 %v3370
    %3495 = vmatprep.subr.mxu0 %v3367
    %3496 = vmatpush2.msra.mxu0 %v3366
    %3497 = vmatprep.subr.mxu0 %v3363
    %3498 = vmatpush2.msra.mxu0 %v3362
    %3499 = vmatprep.subr.mxu0 %v3359
    %3500 = vmatpush2.msra.mxu0 %v3358
    %3501 = vmatprep.subr.mxu0 %v3355
    %3502 = vmatpush2.msra.mxu0 %v3354
    %3503 = vmatprep.subr.mxu0 %v3351
    %3504 = vmatpush2.msra.mxu0 %v3350
    %3505 = vmatprep.subr.mxu0 %v3347
    %3506 = vmatpush2.msra.mxu0 %v3346
    %3507 = vmatprep.subr.mxu0 %v3343
    %3508 = vmatpush2.msra.mxu0 %v3342
    %3509 = vmatprep.subr.mxu0 %v3339
    %3510 = vmatpush2.msra.mxu0 %v3338
    %3511 = vmatprep.subr.mxu0 %v3335
    %3512 = vmatpush2.msra.mxu0 %v3334
    %3513 = vmatprep.subr.mxu0 %v3331
    %3514 = vmatpush2.msra.mxu0 %v3330
    %3515 = vmatprep.subr.mxu0 %v3327
    %3516 = vmatpush2.msra.mxu0 %v3326
    %3517 = vmatprep.subr.mxu0 %v3323
    %3518 = vmatpush2.msra.mxu0 %v3322
    %3519 = vmatprep.mubr.f32.mxu0 %v2778
    %3520 = vmatmul.mubr.f32.gmra.mxu0 %v3255
    %v3521 = vpop.f32.mrf.mxu0
    %v3522 = vadd.f32 %v123, %v3521
    %v3523 = vpop.f32.mrf.mxu0
    %v3524 = vadd.f32 %v127, %v3523
    %3525 = vdwg.mxu0
    %v3526 = vxor.u32 %v3451, 2147483648
    %v3527 = vmul.f32 %v3526, 1.442695
    %v3528 = vpow.pop %v3527
    %v3529 = vadd.f32 %v3528, 1.0
    %v3530 = vrcp.pop %v3529
    %v3531 = vmul.f32 1.0, %v3530
    %v3532 = vxor.u32 %v3453, 2147483648
    %v3533 = vmul.f32 %v3532, 1.442695
    %v3534 = vpow.pop %v3533
    %v3535 = vadd.f32 %v3534, 1.0
    %v3536 = vrcp.pop %v3535
    %v3537 = vmul.f32 1.0, %v3536
    %v3538 = vtanh.pop %v3522
    %v3539 = vxor.u32 %v3524, 2147483648
    %v3540 = vmul.f32 %v3539, 1.442695
    %v3541 = vpow.pop %v3540
    %v3542 = vadd.f32 %v3541, 1.0
    %v3543 = vrcp.pop %v3542
    %v3544 = vmul.f32 1.0, %v3543
    %v3545 = vmul.f32 %v3537, %v2776
    %v3546 = vmul.f32 %v3531, %v3538
    %v3547 = vadd.f32 %v3545, %v3546
    %v3548 = vtanh.pop %v3547
    %v3549 = vmul.f32 %v3544, %v3548
    %v3550 = vld [vmem:[%s3165] sm:$0x3]
    %v3551 = vld [vmem:[#allocation10] sm:$0xff]
    %v3552 = vld [vmem:[#allocation10 + $0x8] sm:$0xff]
    %v3553 = vld [vmem:[#allocation10 + $0x10] sm:$0xff]
    %v3554 = vld [vmem:[#allocation10 + $0x18] sm:$0xff]
    %v3555 = vld [vmem:[#allocation10 + $0x20] sm:$0xff]
    %v3556 = vld [vmem:[#allocation10 + $0x28] sm:$0xff]
    %v3557 = vld [vmem:[#allocation10 + $0x30] sm:$0xff]
    %v3558 = vld [vmem:[#allocation10 + $0x38] sm:$0xff]
    %v3559 = vld [vmem:[#allocation10 + $0x40] sm:$0xff]
    %v3560 = vld [vmem:[#allocation10 + $0x48] sm:$0xff]
    %v3561 = vld [vmem:[#allocation10 + $0x50] sm:$0xff]
    %v3562 = vld [vmem:[#allocation10 + $0x58] sm:$0xff]
    %v3563 = vld [vmem:[#allocation10 + $0x60] sm:$0xff]
    %v3564 = vld [vmem:[#allocation10 + $0x68] sm:$0xff]
    %v3565 = vld [vmem:[#allocation10 + $0x70] sm:$0xff]
    %v3566 = vld [vmem:[#allocation10 + $0x78] sm:$0xff]
    %3567 = vmatprep.subr.mxu0 0.0
    %3568 = vmatpush1.msra.mxu0 %v3566
    %3569 = vmatprep.subr.mxu0 0.0
    %3570 = vmatpush1.msra.mxu0 %v3565
    %3571 = vmatprep.subr.mxu0 0.0
    %3572 = vmatpush1.msra.mxu0 %v3564
    %3573 = vmatprep.subr.mxu0 0.0
    %3574 = vmatpush1.msra.mxu0 %v3563
    %3575 = vmatprep.subr.mxu0 0.0
    %3576 = vmatpush1.msra.mxu0 %v3562
    %3577 = vmatprep.subr.mxu0 0.0
    %3578 = vmatpush1.msra.mxu0 %v3561
    %3579 = vmatprep.subr.mxu0 0.0
    %3580 = vmatpush1.msra.mxu0 %v3560
    %3581 = vmatprep.subr.mxu0 0.0
    %3582 = vmatpush1.msra.mxu0 %v3559
    %3583 = vmatprep.subr.mxu0 0.0
    %3584 = vmatpush1.msra.mxu0 %v3558
    %3585 = vmatprep.subr.mxu0 0.0
    %3586 = vmatpush1.msra.mxu0 %v3557
    %3587 = vmatprep.subr.mxu0 0.0
    %3588 = vmatpush1.msra.mxu0 %v3556
    %3589 = vmatprep.subr.mxu0 0.0
    %3590 = vmatpush1.msra.mxu0 %v3555
    %3591 = vmatprep.subr.mxu0 0.0
    %3592 = vmatpush1.msra.mxu0 %v3554
    %3593 = vmatprep.subr.mxu0 0.0
    %3594 = vmatpush1.msra.mxu0 %v3553
    %3595 = vmatprep.subr.mxu0 0.0
    %3596 = vmatpush1.msra.mxu0 %v3552
    %3597 = vmatprep.subr.mxu0 0.0
    %3598 = vmatpush1.msra.mxu0 %v3551
    %3599 = vmatprep.subr.mxu0 0.0
    %3600 = vmatpush2.msra.mxu0 0.0
    %3601 = vmatprep.subr.mxu0 0.0
    %3602 = vmatpush2.msra.mxu0 0.0
    %3603 = vmatprep.subr.mxu0 0.0
    %3604 = vmatpush2.msra.mxu0 0.0
    %3605 = vmatprep.subr.mxu0 0.0
    %3606 = vmatpush2.msra.mxu0 0.0
    %3607 = vmatprep.subr.mxu0 0.0
    %3608 = vmatpush2.msra.mxu0 0.0
    %3609 = vmatprep.subr.mxu0 0.0
    %3610 = vmatpush2.msra.mxu0 0.0
    %3611 = vmatprep.subr.mxu0 0.0
    %3612 = vmatpush2.msra.mxu0 0.0
    %3613 = vmatprep.subr.mxu0 0.0
    %3614 = vmatpush2.msra.mxu0 0.0
    %3615 = vmatprep.subr.mxu0 0.0
    %3616 = vmatpush2.msra.mxu0 0.0
    %3617 = vmatprep.subr.mxu0 0.0
    %3618 = vmatpush2.msra.mxu0 0.0
    %3619 = vmatprep.subr.mxu0 0.0
    %3620 = vmatpush2.msra.mxu0 0.0
    %3621 = vmatprep.subr.mxu0 0.0
    %3622 = vmatpush2.msra.mxu0 0.0
    %3623 = vmatprep.subr.mxu0 0.0
    %3624 = vmatpush2.msra.mxu0 0.0
    %3625 = vmatprep.subr.mxu0 0.0
    %3626 = vmatpush2.msra.mxu0 0.0
    %3627 = vmatprep.subr.mxu0 0.0
    %3628 = vmatpush2.msra.mxu0 0.0
    %3629 = vmatprep.subr.mxu0 0.0
    %3630 = vmatpush2.msra.mxu0 0.0
    %3631 = vmatprep.mubr.f32.mxu0 0.0
    %3632 = vmatmul.mubr.f32.gmra.mxu0 %v3549
    %v3633 = vpop.f32.mrf.mxu0
    %v3634 = vadd.f32 0.0, %v3633
    %v3635 = vpop.f32.mrf.mxu0
    %3636 = vdwg.mxu0
    %v3637 = vadd.f32 %v3550, %v3634
    %3638 = vst [vmem:[%s3165] sm:$0x3] %v3637
    %v3639 = vld [vmem:[%s2483] sm:$0x3]
    %v3640 = vld [vmem:[#allocation8] sm:$0xff]
    %v3641 = vld [vmem:[#allocation8 + $0x8] sm:$0xff]
    %v3642 = vld [vmem:[#allocation8 + $0x10] sm:$0xff]
    %v3643 = vld [vmem:[#allocation8 + $0x18] sm:$0xff]
    %v3644 = vld [vmem:[#allocation8 + $0x20] sm:$0xff]
    %v3645 = vld [vmem:[#allocation8 + $0x28] sm:$0xff]
    %v3646 = vld [vmem:[#allocation8 + $0x30] sm:$0xff]
    %v3647 = vld [vmem:[#allocation8 + $0x38] sm:$0xff]
    %v3648 = vld [vmem:[#allocation8 + $0x40] sm:$0xff]
    %v3649 = vld [vmem:[#allocation8 + $0x48] sm:$0xff]
    %v3650 = vld [vmem:[#allocation8 + $0x50] sm:$0xff]
    %v3651 = vld [vmem:[#allocation8 + $0x58] sm:$0xff]
    %v3652 = vld [vmem:[#allocation8 + $0x60] sm:$0xff]
    %v3653 = vld [vmem:[#allocation8 + $0x68] sm:$0xff]
    %v3654 = vld [vmem:[#allocation8 + $0x70] sm:$0xff]
    %v3655 = vld [vmem:[#allocation8 + $0x78] sm:$0xff]
    %v3656 = vld [vmem:[#allocation8 + $0x80] sm:$0xff]
    %v3657 = vld [vmem:[#allocation8 + $0x88] sm:$0xff]
    %v3658 = vld [vmem:[#allocation8 + $0x90] sm:$0xff]
    %v3659 = vld [vmem:[#allocation8 + $0x98] sm:$0xff]
    %v3660 = vld [vmem:[#allocation8 + $0xa0] sm:$0xff]
    %v3661 = vld [vmem:[#allocation8 + $0xa8] sm:$0xff]
    %v3662 = vld [vmem:[#allocation8 + $0xb0] sm:$0xff]
    %v3663 = vld [vmem:[#allocation8 + $0xb8] sm:$0xff]
    %v3664 = vld [vmem:[#allocation8 + $0xc0] sm:$0xff]
    %v3665 = vld [vmem:[#allocation8 + $0xc8] sm:$0xff]
    %v3666 = vld [vmem:[#allocation8 + $0xd0] sm:$0xff]
    %v3667 = vld [vmem:[#allocation8 + $0xd8] sm:$0xff]
    %v3668 = vld [vmem:[#allocation8 + $0xe0] sm:$0xff]
    %v3669 = vld [vmem:[#allocation8 + $0xe8] sm:$0xff]
    %v3670 = vld [vmem:[#allocation8 + $0xf0] sm:$0xff]
    %v3671 = vld [vmem:[#allocation8 + $0xf8] sm:$0xff]
    %v3672 = vld [vmem:[#allocation8 + $0x100] sm:$0xff]
    %v3673 = vld [vmem:[#allocation8 + $0x108] sm:$0xff]
    %v3674 = vld [vmem:[#allocation8 + $0x110] sm:$0xff]
    %v3675 = vld [vmem:[#allocation8 + $0x118] sm:$0xff]
    %v3676 = vld [vmem:[#allocation8 + $0x120] sm:$0xff]
    %v3677 = vld [vmem:[#allocation8 + $0x128] sm:$0xff]
    %v3678 = vld [vmem:[#allocation8 + $0x130] sm:$0xff]
    %v3679 = vld [vmem:[#allocation8 + $0x138] sm:$0xff]
    %v3680 = vld [vmem:[#allocation8 + $0x140] sm:$0xff]
    %v3681 = vld [vmem:[#allocation8 + $0x148] sm:$0xff]
    %v3682 = vld [vmem:[#allocation8 + $0x150] sm:$0xff]
    %v3683 = vld [vmem:[#allocation8 + $0x158] sm:$0xff]
    %v3684 = vld [vmem:[#allocation8 + $0x160] sm:$0xff]
    %v3685 = vld [vmem:[#allocation8 + $0x168] sm:$0xff]
    %v3686 = vld [vmem:[#allocation8 + $0x170] sm:$0xff]
    %v3687 = vld [vmem:[#allocation8 + $0x178] sm:$0xff]
    %v3688 = vld [vmem:[#allocation8 + $0x180] sm:$0xff]
    %v3689 = vld [vmem:[#allocation8 + $0x188] sm:$0xff]
    %v3690 = vld [vmem:[#allocation8 + $0x190] sm:$0xff]
    %v3691 = vld [vmem:[#allocation8 + $0x198] sm:$0xff]
    %v3692 = vld [vmem:[#allocation8 + $0x1a0] sm:$0xff]
    %v3693 = vld [vmem:[#allocation8 + $0x1a8] sm:$0xff]
    %v3694 = vld [vmem:[#allocation8 + $0x1b0] sm:$0xff]
    %v3695 = vld [vmem:[#allocation8 + $0x1b8] sm:$0xff]
    %v3696 = vld [vmem:[#allocation8 + $0x1c0] sm:$0xff]
    %v3697 = vld [vmem:[#allocation8 + $0x1c8] sm:$0xff]
    %v3698 = vld [vmem:[#allocation8 + $0x1d0] sm:$0xff]
    %v3699 = vld [vmem:[#allocation8 + $0x1d8] sm:$0xff]
    %v3700 = vld [vmem:[#allocation8 + $0x1e0] sm:$0xff]
    %v3701 = vld [vmem:[#allocation8 + $0x1e8] sm:$0xff]
    %v3702 = vld [vmem:[#allocation8 + $0x1f0] sm:$0xff]
    %v3703 = vld [vmem:[#allocation8 + $0x1f8] sm:$0xff]
    %v3704 = vld [vmem:[#allocation8 + $0x200] sm:$0xff]
    %v3705 = vld [vmem:[#allocation8 + $0x208] sm:$0xff]
    %v3706 = vld [vmem:[#allocation8 + $0x210] sm:$0xff]
    %v3707 = vld [vmem:[#allocation8 + $0x218] sm:$0xff]
    %v3708 = vld [vmem:[#allocation8 + $0x220] sm:$0xff]
    %v3709 = vld [vmem:[#allocation8 + $0x228] sm:$0xff]
    %v3710 = vld [vmem:[#allocation8 + $0x230] sm:$0xff]
    %v3711 = vld [vmem:[#allocation8 + $0x238] sm:$0xff]
    %v3712 = vld [vmem:[#allocation8 + $0x240] sm:$0xff]
    %v3713 = vld [vmem:[#allocation8 + $0x248] sm:$0xff]
    %v3714 = vld [vmem:[#allocation8 + $0x250] sm:$0xff]
    %v3715 = vld [vmem:[#allocation8 + $0x258] sm:$0xff]
    %v3716 = vld [vmem:[#allocation8 + $0x260] sm:$0xff]
    %v3717 = vld [vmem:[#allocation8 + $0x268] sm:$0xff]
    %v3718 = vld [vmem:[#allocation8 + $0x270] sm:$0xff]
    %v3719 = vld [vmem:[#allocation8 + $0x278] sm:$0xff]
    %v3720 = vld [vmem:[#allocation8 + $0x280] sm:$0xff]
    %v3721 = vld [vmem:[#allocation8 + $0x288] sm:$0xff]
    %v3722 = vld [vmem:[#allocation8 + $0x290] sm:$0xff]
    %v3723 = vld [vmem:[#allocation8 + $0x298] sm:$0xff]
    %v3724 = vld [vmem:[#allocation8 + $0x2a0] sm:$0xff]
    %v3725 = vld [vmem:[#allocation8 + $0x2a8] sm:$0xff]
    %v3726 = vld [vmem:[#allocation8 + $0x2b0] sm:$0xff]
    %v3727 = vld [vmem:[#allocation8 + $0x2b8] sm:$0xff]
    %v3728 = vld [vmem:[#allocation8 + $0x2c0] sm:$0xff]
    %v3729 = vld [vmem:[#allocation8 + $0x2c8] sm:$0xff]
    %v3730 = vld [vmem:[#allocation8 + $0x2d0] sm:$0xff]
    %v3731 = vld [vmem:[#allocation8 + $0x2d8] sm:$0xff]
    %v3732 = vld [vmem:[#allocation8 + $0x2e0] sm:$0xff]
    %v3733 = vld [vmem:[#allocation8 + $0x2e8] sm:$0xff]
    %v3734 = vld [vmem:[#allocation8 + $0x2f0] sm:$0xff]
    %v3735 = vld [vmem:[#allocation8 + $0x2f8] sm:$0xff]
    %v3736 = vld [vmem:[#allocation8 + $0x300] sm:$0xff]
    %v3737 = vld [vmem:[#allocation8 + $0x308] sm:$0xff]
    %v3738 = vld [vmem:[#allocation8 + $0x310] sm:$0xff]
    %v3739 = vld [vmem:[#allocation8 + $0x318] sm:$0xff]
    %v3740 = vld [vmem:[#allocation8 + $0x320] sm:$0xff]
    %v3741 = vld [vmem:[#allocation8 + $0x328] sm:$0xff]
    %v3742 = vld [vmem:[#allocation8 + $0x330] sm:$0xff]
    %v3743 = vld [vmem:[#allocation8 + $0x338] sm:$0xff]
    %v3744 = vld [vmem:[#allocation8 + $0x340] sm:$0xff]
    %v3745 = vld [vmem:[#allocation8 + $0x348] sm:$0xff]
    %v3746 = vld [vmem:[#allocation8 + $0x350] sm:$0xff]
    %v3747 = vld [vmem:[#allocation8 + $0x358] sm:$0xff]
    %v3748 = vld [vmem:[#allocation8 + $0x360] sm:$0xff]
    %v3749 = vld [vmem:[#allocation8 + $0x368] sm:$0xff]
    %v3750 = vld [vmem:[#allocation8 + $0x370] sm:$0xff]
    %v3751 = vld [vmem:[#allocation8 + $0x378] sm:$0xff]
    %v3752 = vld [vmem:[#allocation8 + $0x380] sm:$0xff]
    %v3753 = vld [vmem:[#allocation8 + $0x388] sm:$0xff]
    %v3754 = vld [vmem:[#allocation8 + $0x390] sm:$0xff]
    %v3755 = vld [vmem:[#allocation8 + $0x398] sm:$0xff]
    %v3756 = vld [vmem:[#allocation8 + $0x3a0] sm:$0xff]
    %v3757 = vld [vmem:[#allocation8 + $0x3a8] sm:$0xff]
    %v3758 = vld [vmem:[#allocation8 + $0x3b0] sm:$0xff]
    %v3759 = vld [vmem:[#allocation8 + $0x3b8] sm:$0xff]
    %v3760 = vld [vmem:[#allocation8 + $0x3c0] sm:$0xff]
    %v3761 = vld [vmem:[#allocation8 + $0x3c8] sm:$0xff]
    %v3762 = vld [vmem:[#allocation8 + $0x3d0] sm:$0xff]
    %v3763 = vld [vmem:[#allocation8 + $0x3d8] sm:$0xff]
    %v3764 = vld [vmem:[#allocation8 + $0x3e0] sm:$0xff]
    %v3765 = vld [vmem:[#allocation8 + $0x3e8] sm:$0xff]
    %v3766 = vld [vmem:[#allocation8 + $0x3f0] sm:$0xff]
    %v3767 = vld [vmem:[#allocation8 + $0x3f8] sm:$0xff]
    %3768 = vmatprep.subr.mxu0 %v3701
    %3769 = vmatpush1.msra.mxu0 %v3700
    %3770 = vmatprep.subr.mxu0 %v3697
    %3771 = vmatpush1.msra.mxu0 %v3696
    %3772 = vmatprep.subr.mxu0 %v3693
    %3773 = vmatpush1.msra.mxu0 %v3692
    %3774 = vmatprep.subr.mxu0 %v3689
    %3775 = vmatpush1.msra.mxu0 %v3688
    %3776 = vmatprep.subr.mxu0 %v3685
    %3777 = vmatpush1.msra.mxu0 %v3684
    %3778 = vmatprep.subr.mxu0 %v3681
    %3779 = vmatpush1.msra.mxu0 %v3680
    %3780 = vmatprep.subr.mxu0 %v3677
    %3781 = vmatpush1.msra.mxu0 %v3676
    %3782 = vmatprep.subr.mxu0 %v3673
    %3783 = vmatpush1.msra.mxu0 %v3672
    %3784 = vmatprep.subr.mxu0 %v3669
    %3785 = vmatpush1.msra.mxu0 %v3668
    %3786 = vmatprep.subr.mxu0 %v3665
    %3787 = vmatpush1.msra.mxu0 %v3664
    %3788 = vmatprep.subr.mxu0 %v3661
    %3789 = vmatpush1.msra.mxu0 %v3660
    %3790 = vmatprep.subr.mxu0 %v3657
    %3791 = vmatpush1.msra.mxu0 %v3656
    %3792 = vmatprep.subr.mxu0 %v3653
    %3793 = vmatpush1.msra.mxu0 %v3652
    %3794 = vmatprep.subr.mxu0 %v3649
    %3795 = vmatpush1.msra.mxu0 %v3648
    %3796 = vmatprep.subr.mxu0 %v3645
    %3797 = vmatpush1.msra.mxu0 %v3644
    %3798 = vmatprep.subr.mxu0 %v3641
    %3799 = vmatpush1.msra.mxu0 %v3640
    %3800 = vmatprep.subr.mxu0 %v3765
    %3801 = vmatpush2.msra.mxu0 %v3764
    %3802 = vmatprep.subr.mxu0 %v3761
    %3803 = vmatpush2.msra.mxu0 %v3760
    %3804 = vmatprep.subr.mxu0 %v3757
    %3805 = vmatpush2.msra.mxu0 %v3756
    %3806 = vmatprep.subr.mxu0 %v3753
    %3807 = vmatpush2.msra.mxu0 %v3752
    %3808 = vmatprep.subr.mxu0 %v3749
    %3809 = vmatpush2.msra.mxu0 %v3748
    %3810 = vmatprep.subr.mxu0 %v3745
    %3811 = vmatpush2.msra.mxu0 %v3744
    %3812 = vmatprep.subr.mxu0 %v3741
    %3813 = vmatpush2.msra.mxu0 %v3740
    %3814 = vmatprep.subr.mxu0 %v3737
    %3815 = vmatpush2.msra.mxu0 %v3736
    %3816 = vmatprep.subr.mxu0 %v3733
    %3817 = vmatpush2.msra.mxu0 %v3732
    %3818 = vmatprep.subr.mxu0 %v3729
    %3819 = vmatpush2.msra.mxu0 %v3728
    %3820 = vmatprep.subr.mxu0 %v3725
    %3821 = vmatpush2.msra.mxu0 %v3724
    %3822 = vmatprep.subr.mxu0 %v3721
    %3823 = vmatpush2.msra.mxu0 %v3720
    %3824 = vmatprep.subr.mxu0 %v3717
    %3825 = vmatpush2.msra.mxu0 %v3716
    %3826 = vmatprep.subr.mxu0 %v3713
    %3827 = vmatpush2.msra.mxu0 %v3712
    %3828 = vmatprep.subr.mxu0 %v3709
    %3829 = vmatpush2.msra.mxu0 %v3708
    %3830 = vmatprep.subr.mxu0 %v3705
    %3831 = vmatpush2.msra.mxu0 %v3704
    %3832 = vmatprep.mubr.f32.mxu0 %v3164
    %3833 = vmatmul.mubr.f32.gmra.mxu0 %v3639
    %v3834 = vpop.f32.mrf.mxu0
    %v3835 = vadd.f32 %v137, %v3834
    %v3836 = vpop.f32.mrf.mxu0
    %v3837 = vadd.f32 %v141, %v3836
    %3838 = vdwg.mxu0
    %3839 = vmatprep.subr.mxu0 %v3703
    %3840 = vmatpush1.msra.mxu0 %v3702
    %3841 = vmatprep.subr.mxu0 %v3699
    %3842 = vmatpush1.msra.mxu0 %v3698
    %3843 = vmatprep.subr.mxu0 %v3695
    %3844 = vmatpush1.msra.mxu0 %v3694
    %3845 = vmatprep.subr.mxu0 %v3691
    %3846 = vmatpush1.msra.mxu0 %v3690
    %3847 = vmatprep.subr.mxu0 %v3687
    %3848 = vmatpush1.msra.mxu0 %v3686
    %3849 = vmatprep.subr.mxu0 %v3683
    %3850 = vmatpush1.msra.mxu0 %v3682
    %3851 = vmatprep.subr.mxu0 %v3679
    %3852 = vmatpush1.msra.mxu0 %v3678
    %3853 = vmatprep.subr.mxu0 %v3675
    %3854 = vmatpush1.msra.mxu0 %v3674
    %3855 = vmatprep.subr.mxu0 %v3671
    %3856 = vmatpush1.msra.mxu0 %v3670
    %3857 = vmatprep.subr.mxu0 %v3667
    %3858 = vmatpush1.msra.mxu0 %v3666
    %3859 = vmatprep.subr.mxu0 %v3663
    %3860 = vmatpush1.msra.mxu0 %v3662
    %3861 = vmatprep.subr.mxu0 %v3659
    %3862 = vmatpush1.msra.mxu0 %v3658
    %3863 = vmatprep.subr.mxu0 %v3655
    %3864 = vmatpush1.msra.mxu0 %v3654
    %3865 = vmatprep.subr.mxu0 %v3651
    %3866 = vmatpush1.msra.mxu0 %v3650
    %3867 = vmatprep.subr.mxu0 %v3647
    %3868 = vmatpush1.msra.mxu0 %v3646
    %3869 = vmatprep.subr.mxu0 %v3643
    %3870 = vmatpush1.msra.mxu0 %v3642
    %3871 = vmatprep.subr.mxu0 %v3767
    %3872 = vmatpush2.msra.mxu0 %v3766
    %3873 = vmatprep.subr.mxu0 %v3763
    %3874 = vmatpush2.msra.mxu0 %v3762
    %3875 = vmatprep.subr.mxu0 %v3759
    %3876 = vmatpush2.msra.mxu0 %v3758
    %3877 = vmatprep.subr.mxu0 %v3755
    %3878 = vmatpush2.msra.mxu0 %v3754
    %3879 = vmatprep.subr.mxu0 %v3751
    %3880 = vmatpush2.msra.mxu0 %v3750
    %3881 = vmatprep.subr.mxu0 %v3747
    %3882 = vmatpush2.msra.mxu0 %v3746
    %3883 = vmatprep.subr.mxu0 %v3743
    %3884 = vmatpush2.msra.mxu0 %v3742
    %3885 = vmatprep.subr.mxu0 %v3739
    %3886 = vmatpush2.msra.mxu0 %v3738
    %3887 = vmatprep.subr.mxu0 %v3735
    %3888 = vmatpush2.msra.mxu0 %v3734
    %3889 = vmatprep.subr.mxu0 %v3731
    %3890 = vmatpush2.msra.mxu0 %v3730
    %3891 = vmatprep.subr.mxu0 %v3727
    %3892 = vmatpush2.msra.mxu0 %v3726
    %3893 = vmatprep.subr.mxu0 %v3723
    %3894 = vmatpush2.msra.mxu0 %v3722
    %3895 = vmatprep.subr.mxu0 %v3719
    %3896 = vmatpush2.msra.mxu0 %v3718
    %3897 = vmatprep.subr.mxu0 %v3715
    %3898 = vmatpush2.msra.mxu0 %v3714
    %3899 = vmatprep.subr.mxu0 %v3711
    %3900 = vmatpush2.msra.mxu0 %v3710
    %3901 = vmatprep.subr.mxu0 %v3707
    %3902 = vmatpush2.msra.mxu0 %v3706
    %3903 = vmatprep.mubr.f32.mxu0 %v3164
    %3904 = vmatmul.mubr.f32.gmra.mxu0 %v3639
    %v3905 = vpop.f32.mrf.mxu0
    %v3906 = vadd.f32 %v145, %v3905
    %v3907 = vpop.f32.mrf.mxu0
    %v3908 = vadd.f32 %v149, %v3907
    %3909 = vdwg.mxu0
    %v3910 = vxor.u32 %v3835, 2147483648
    %v3911 = vmul.f32 %v3910, 1.442695
    %v3912 = vpow.pop %v3911
    %v3913 = vadd.f32 %v3912, 1.0
    %v3914 = vrcp.pop %v3913
    %v3915 = vmul.f32 1.0, %v3914
    %v3916 = vxor.u32 %v3837, 2147483648
    %v3917 = vmul.f32 %v3916, 1.442695
    %v3918 = vpow.pop %v3917
    %v3919 = vadd.f32 %v3918, 1.0
    %v3920 = vrcp.pop %v3919
    %v3921 = vmul.f32 1.0, %v3920
    %v3922 = vtanh.pop %v3906
    %v3923 = vxor.u32 %v3908, 2147483648
    %v3924 = vmul.f32 %v3923, 1.442695
    %v3925 = vpow.pop %v3924
    %v3926 = vadd.f32 %v3925, 1.0
    %v3927 = vrcp.pop %v3926
    %v3928 = vmul.f32 1.0, %v3927
    %v3929 = vmul.f32 %v3921, %v3162
    %v3930 = vmul.f32 %v3915, %v3922
    %v3931 = vadd.f32 %v3929, %v3930
    %v3932 = vtanh.pop %v3931
    %v3933 = vmul.f32 %v3928, %v3932
    %v3934 = vld [vmem:[%s2779] sm:$0x3]
    %v3935 = vld [vmem:[#allocation11] sm:$0xff]
    %v3936 = vld [vmem:[#allocation11 + $0x8] sm:$0xff]
    %v3937 = vld [vmem:[#allocation11 + $0x10] sm:$0xff]
    %v3938 = vld [vmem:[#allocation11 + $0x18] sm:$0xff]
    %v3939 = vld [vmem:[#allocation11 + $0x20] sm:$0xff]
    %v3940 = vld [vmem:[#allocation11 + $0x28] sm:$0xff]
    %v3941 = vld [vmem:[#allocation11 + $0x30] sm:$0xff]
    %v3942 = vld [vmem:[#allocation11 + $0x38] sm:$0xff]
    %v3943 = vld [vmem:[#allocation11 + $0x40] sm:$0xff]
    %v3944 = vld [vmem:[#allocation11 + $0x48] sm:$0xff]
    %v3945 = vld [vmem:[#allocation11 + $0x50] sm:$0xff]
    %v3946 = vld [vmem:[#allocation11 + $0x58] sm:$0xff]
    %v3947 = vld [vmem:[#allocation11 + $0x60] sm:$0xff]
    %v3948 = vld [vmem:[#allocation11 + $0x68] sm:$0xff]
    %v3949 = vld [vmem:[#allocation11 + $0x70] sm:$0xff]
    %v3950 = vld [vmem:[#allocation11 + $0x78] sm:$0xff]
    %3951 = vmatprep.subr.mxu0 0.0
    %3952 = vmatpush1.msra.mxu0 %v3950
    %3953 = vmatprep.subr.mxu0 0.0
    %3954 = vmatpush1.msra.mxu0 %v3949
    %3955 = vmatprep.subr.mxu0 0.0
    %3956 = vmatpush1.msra.mxu0 %v3948
    %3957 = vmatprep.subr.mxu0 0.0
    %3958 = vmatpush1.msra.mxu0 %v3947
    %3959 = vmatprep.subr.mxu0 0.0
    %3960 = vmatpush1.msra.mxu0 %v3946
    %3961 = vmatprep.subr.mxu0 0.0
    %3962 = vmatpush1.msra.mxu0 %v3945
    %3963 = vmatprep.subr.mxu0 0.0
    %3964 = vmatpush1.msra.mxu0 %v3944
    %3965 = vmatprep.subr.mxu0 0.0
    %3966 = vmatpush1.msra.mxu0 %v3943
    %3967 = vmatprep.subr.mxu0 0.0
    %3968 = vmatpush1.msra.mxu0 %v3942
    %3969 = vmatprep.subr.mxu0 0.0
    %3970 = vmatpush1.msra.mxu0 %v3941
    %3971 = vmatprep.subr.mxu0 0.0
    %3972 = vmatpush1.msra.mxu0 %v3940
    %3973 = vmatprep.subr.mxu0 0.0
    %3974 = vmatpush1.msra.mxu0 %v3939
    %3975 = vmatprep.subr.mxu0 0.0
    %3976 = vmatpush1.msra.mxu0 %v3938
    %3977 = vmatprep.subr.mxu0 0.0
    %3978 = vmatpush1.msra.mxu0 %v3937
    %3979 = vmatprep.subr.mxu0 0.0
    %3980 = vmatpush1.msra.mxu0 %v3936
    %3981 = vmatprep.subr.mxu0 0.0
    %3982 = vmatpush1.msra.mxu0 %v3935
    %3983 = vmatprep.subr.mxu0 0.0
    %3984 = vmatpush2.msra.mxu0 0.0
    %3985 = vmatprep.subr.mxu0 0.0
    %3986 = vmatpush2.msra.mxu0 0.0
    %3987 = vmatprep.subr.mxu0 0.0
    %3988 = vmatpush2.msra.mxu0 0.0
    %3989 = vmatprep.subr.mxu0 0.0
    %3990 = vmatpush2.msra.mxu0 0.0
    %3991 = vmatprep.subr.mxu0 0.0
    %3992 = vmatpush2.msra.mxu0 0.0
    %3993 = vmatprep.subr.mxu0 0.0
    %3994 = vmatpush2.msra.mxu0 0.0
    %3995 = vmatprep.subr.mxu0 0.0
    %3996 = vmatpush2.msra.mxu0 0.0
    %3997 = vmatprep.subr.mxu0 0.0
    %3998 = vmatpush2.msra.mxu0 0.0
    %3999 = vmatprep.subr.mxu0 0.0
    %4000 = vmatpush2.msra.mxu0 0.0
    %4001 = vmatprep.subr.mxu0 0.0
    %4002 = vmatpush2.msra.mxu0 0.0
    %4003 = vmatprep.subr.mxu0 0.0
    %4004 = vmatpush2.msra.mxu0 0.0
    %4005 = vmatprep.subr.mxu0 0.0
    %4006 = vmatpush2.msra.mxu0 0.0
    %4007 = vmatprep.subr.mxu0 0.0
    %4008 = vmatpush2.msra.mxu0 0.0
    %4009 = vmatprep.subr.mxu0 0.0
    %4010 = vmatpush2.msra.mxu0 0.0
    %4011 = vmatprep.subr.mxu0 0.0
    %4012 = vmatpush2.msra.mxu0 0.0
    %4013 = vmatprep.subr.mxu0 0.0
    %4014 = vmatpush2.msra.mxu0 0.0
    %4015 = vmatprep.mubr.f32.mxu0 0.0
    %4016 = vmatmul.mubr.f32.gmra.mxu0 %v3933
    %v4017 = vpop.f32.mrf.mxu0
    %v4018 = vadd.f32 0.0, %v4017
    %v4019 = vpop.f32.mrf.mxu0
    %4020 = vdwg.mxu0
    %v4021 = vadd.f32 %v3934, %v4018
    %4022 = vst [vmem:[%s2779] sm:$0x3] %v4021
    %v4023 = vld [vmem:[%s2097] sm:$0x3]
    %v4024 = vld [vmem:[#allocation5] sm:$0xff]
    %v4025 = vld [vmem:[#allocation5 + $0x8] sm:$0xff]
    %v4026 = vld [vmem:[#allocation5 + $0x10] sm:$0xff]
    %v4027 = vld [vmem:[#allocation5 + $0x18] sm:$0xff]
    %v4028 = vld [vmem:[#allocation5 + $0x20] sm:$0xff]
    %v4029 = vld [vmem:[#allocation5 + $0x28] sm:$0xff]
    %v4030 = vld [vmem:[#allocation5 + $0x30] sm:$0xff]
    %v4031 = vld [vmem:[#allocation5 + $0x38] sm:$0xff]
    %v4032 = vld [vmem:[#allocation5 + $0x40] sm:$0xff]
    %v4033 = vld [vmem:[#allocation5 + $0x48] sm:$0xff]
    %v4034 = vld [vmem:[#allocation5 + $0x50] sm:$0xff]
    %v4035 = vld [vmem:[#allocation5 + $0x58] sm:$0xff]
    %v4036 = vld [vmem:[#allocation5 + $0x60] sm:$0xff]
    %v4037 = vld [vmem:[#allocation5 + $0x68] sm:$0xff]
    %v4038 = vld [vmem:[#allocation5 + $0x70] sm:$0xff]
    %v4039 = vld [vmem:[#allocation5 + $0x78] sm:$0xff]
    %v4040 = vld [vmem:[#allocation5 + $0x80] sm:$0xff]
    %v4041 = vld [vmem:[#allocation5 + $0x88] sm:$0xff]
    %v4042 = vld [vmem:[#allocation5 + $0x90] sm:$0xff]
    %v4043 = vld [vmem:[#allocation5 + $0x98] sm:$0xff]
    %v4044 = vld [vmem:[#allocation5 + $0xa0] sm:$0xff]
    %v4045 = vld [vmem:[#allocation5 + $0xa8] sm:$0xff]
    %v4046 = vld [vmem:[#allocation5 + $0xb0] sm:$0xff]
    %v4047 = vld [vmem:[#allocation5 + $0xb8] sm:$0xff]
    %v4048 = vld [vmem:[#allocation5 + $0xc0] sm:$0xff]
    %v4049 = vld [vmem:[#allocation5 + $0xc8] sm:$0xff]
    %v4050 = vld [vmem:[#allocation5 + $0xd0] sm:$0xff]
    %v4051 = vld [vmem:[#allocation5 + $0xd8] sm:$0xff]
    %v4052 = vld [vmem:[#allocation5 + $0xe0] sm:$0xff]
    %v4053 = vld [vmem:[#allocation5 + $0xe8] sm:$0xff]
    %v4054 = vld [vmem:[#allocation5 + $0xf0] sm:$0xff]
    %v4055 = vld [vmem:[#allocation5 + $0xf8] sm:$0xff]
    %v4056 = vld [vmem:[#allocation5 + $0x100] sm:$0xff]
    %v4057 = vld [vmem:[#allocation5 + $0x108] sm:$0xff]
    %v4058 = vld [vmem:[#allocation5 + $0x110] sm:$0xff]
    %v4059 = vld [vmem:[#allocation5 + $0x118] sm:$0xff]
    %v4060 = vld [vmem:[#allocation5 + $0x120] sm:$0xff]
    %v4061 = vld [vmem:[#allocation5 + $0x128] sm:$0xff]
    %v4062 = vld [vmem:[#allocation5 + $0x130] sm:$0xff]
    %v4063 = vld [vmem:[#allocation5 + $0x138] sm:$0xff]
    %v4064 = vld [vmem:[#allocation5 + $0x140] sm:$0xff]
    %v4065 = vld [vmem:[#allocation5 + $0x148] sm:$0xff]
    %v4066 = vld [vmem:[#allocation5 + $0x150] sm:$0xff]
    %v4067 = vld [vmem:[#allocation5 + $0x158] sm:$0xff]
    %v4068 = vld [vmem:[#allocation5 + $0x160] sm:$0xff]
    %v4069 = vld [vmem:[#allocation5 + $0x168] sm:$0xff]
    %v4070 = vld [vmem:[#allocation5 + $0x170] sm:$0xff]
    %v4071 = vld [vmem:[#allocation5 + $0x178] sm:$0xff]
    %v4072 = vld [vmem:[#allocation5 + $0x180] sm:$0xff]
    %v4073 = vld [vmem:[#allocation5 + $0x188] sm:$0xff]
    %v4074 = vld [vmem:[#allocation5 + $0x190] sm:$0xff]
    %v4075 = vld [vmem:[#allocation5 + $0x198] sm:$0xff]
    %v4076 = vld [vmem:[#allocation5 + $0x1a0] sm:$0xff]
    %v4077 = vld [vmem:[#allocation5 + $0x1a8] sm:$0xff]
    %v4078 = vld [vmem:[#allocation5 + $0x1b0] sm:$0xff]
    %v4079 = vld [vmem:[#allocation5 + $0x1b8] sm:$0xff]
    %v4080 = vld [vmem:[#allocation5 + $0x1c0] sm:$0xff]
    %v4081 = vld [vmem:[#allocation5 + $0x1c8] sm:$0xff]
    %v4082 = vld [vmem:[#allocation5 + $0x1d0] sm:$0xff]
    %v4083 = vld [vmem:[#allocation5 + $0x1d8] sm:$0xff]
    %v4084 = vld [vmem:[#allocation5 + $0x1e0] sm:$0xff]
    %v4085 = vld [vmem:[#allocation5 + $0x1e8] sm:$0xff]
    %v4086 = vld [vmem:[#allocation5 + $0x1f0] sm:$0xff]
    %v4087 = vld [vmem:[#allocation5 + $0x1f8] sm:$0xff]
    %v4088 = vld [vmem:[#allocation5 + $0x200] sm:$0xff]
    %v4089 = vld [vmem:[#allocation5 + $0x208] sm:$0xff]
    %v4090 = vld [vmem:[#allocation5 + $0x210] sm:$0xff]
    %v4091 = vld [vmem:[#allocation5 + $0x218] sm:$0xff]
    %v4092 = vld [vmem:[#allocation5 + $0x220] sm:$0xff]
    %v4093 = vld [vmem:[#allocation5 + $0x228] sm:$0xff]
    %v4094 = vld [vmem:[#allocation5 + $0x230] sm:$0xff]
    %v4095 = vld [vmem:[#allocation5 + $0x238] sm:$0xff]
    %v4096 = vld [vmem:[#allocation5 + $0x240] sm:$0xff]
    %v4097 = vld [vmem:[#allocation5 + $0x248] sm:$0xff]
    %v4098 = vld [vmem:[#allocation5 + $0x250] sm:$0xff]
    %v4099 = vld [vmem:[#allocation5 + $0x258] sm:$0xff]
    %v4100 = vld [vmem:[#allocation5 + $0x260] sm:$0xff]
    %v4101 = vld [vmem:[#allocation5 + $0x268] sm:$0xff]
    %v4102 = vld [vmem:[#allocation5 + $0x270] sm:$0xff]
    %v4103 = vld [vmem:[#allocation5 + $0x278] sm:$0xff]
    %v4104 = vld [vmem:[#allocation5 + $0x280] sm:$0xff]
    %v4105 = vld [vmem:[#allocation5 + $0x288] sm:$0xff]
    %v4106 = vld [vmem:[#allocation5 + $0x290] sm:$0xff]
    %v4107 = vld [vmem:[#allocation5 + $0x298] sm:$0xff]
    %v4108 = vld [vmem:[#allocation5 + $0x2a0] sm:$0xff]
    %v4109 = vld [vmem:[#allocation5 + $0x2a8] sm:$0xff]
    %v4110 = vld [vmem:[#allocation5 + $0x2b0] sm:$0xff]
    %v4111 = vld [vmem:[#allocation5 + $0x2b8] sm:$0xff]
    %v4112 = vld [vmem:[#allocation5 + $0x2c0] sm:$0xff]
    %v4113 = vld [vmem:[#allocation5 + $0x2c8] sm:$0xff]
    %v4114 = vld [vmem:[#allocation5 + $0x2d0] sm:$0xff]
    %v4115 = vld [vmem:[#allocation5 + $0x2d8] sm:$0xff]
    %v4116 = vld [vmem:[#allocation5 + $0x2e0] sm:$0xff]
    %v4117 = vld [vmem:[#allocation5 + $0x2e8] sm:$0xff]
    %v4118 = vld [vmem:[#allocation5 + $0x2f0] sm:$0xff]
    %v4119 = vld [vmem:[#allocation5 + $0x2f8] sm:$0xff]
    %v4120 = vld [vmem:[#allocation5 + $0x300] sm:$0xff]
    %v4121 = vld [vmem:[#allocation5 + $0x308] sm:$0xff]
    %v4122 = vld [vmem:[#allocation5 + $0x310] sm:$0xff]
    %v4123 = vld [vmem:[#allocation5 + $0x318] sm:$0xff]
    %v4124 = vld [vmem:[#allocation5 + $0x320] sm:$0xff]
    %v4125 = vld [vmem:[#allocation5 + $0x328] sm:$0xff]
    %v4126 = vld [vmem:[#allocation5 + $0x330] sm:$0xff]
    %v4127 = vld [vmem:[#allocation5 + $0x338] sm:$0xff]
    %v4128 = vld [vmem:[#allocation5 + $0x340] sm:$0xff]
    %v4129 = vld [vmem:[#allocation5 + $0x348] sm:$0xff]
    %v4130 = vld [vmem:[#allocation5 + $0x350] sm:$0xff]
    %v4131 = vld [vmem:[#allocation5 + $0x358] sm:$0xff]
    %v4132 = vld [vmem:[#allocation5 + $0x360] sm:$0xff]
    %v4133 = vld [vmem:[#allocation5 + $0x368] sm:$0xff]
    %v4134 = vld [vmem:[#allocation5 + $0x370] sm:$0xff]
    %v4135 = vld [vmem:[#allocation5 + $0x378] sm:$0xff]
    %v4136 = vld [vmem:[#allocation5 + $0x380] sm:$0xff]
    %v4137 = vld [vmem:[#allocation5 + $0x388] sm:$0xff]
    %v4138 = vld [vmem:[#allocation5 + $0x390] sm:$0xff]
    %v4139 = vld [vmem:[#allocation5 + $0x398] sm:$0xff]
    %v4140 = vld [vmem:[#allocation5 + $0x3a0] sm:$0xff]
    %v4141 = vld [vmem:[#allocation5 + $0x3a8] sm:$0xff]
    %v4142 = vld [vmem:[#allocation5 + $0x3b0] sm:$0xff]
    %v4143 = vld [vmem:[#allocation5 + $0x3b8] sm:$0xff]
    %v4144 = vld [vmem:[#allocation5 + $0x3c0] sm:$0xff]
    %v4145 = vld [vmem:[#allocation5 + $0x3c8] sm:$0xff]
    %v4146 = vld [vmem:[#allocation5 + $0x3d0] sm:$0xff]
    %v4147 = vld [vmem:[#allocation5 + $0x3d8] sm:$0xff]
    %v4148 = vld [vmem:[#allocation5 + $0x3e0] sm:$0xff]
    %v4149 = vld [vmem:[#allocation5 + $0x3e8] sm:$0xff]
    %v4150 = vld [vmem:[#allocation5 + $0x3f0] sm:$0xff]
    %v4151 = vld [vmem:[#allocation5 + $0x3f8] sm:$0xff]
    %4152 = vmatprep.subr.mxu0 %v4085
    %4153 = vmatpush1.msra.mxu0 %v4084
    %4154 = vmatprep.subr.mxu0 %v4081
    %4155 = vmatpush1.msra.mxu0 %v4080
    %4156 = vmatprep.subr.mxu0 %v4077
    %4157 = vmatpush1.msra.mxu0 %v4076
    %4158 = vmatprep.subr.mxu0 %v4073
    %4159 = vmatpush1.msra.mxu0 %v4072
    %4160 = vmatprep.subr.mxu0 %v4069
    %4161 = vmatpush1.msra.mxu0 %v4068
    %4162 = vmatprep.subr.mxu0 %v4065
    %4163 = vmatpush1.msra.mxu0 %v4064
    %4164 = vmatprep.subr.mxu0 %v4061
    %4165 = vmatpush1.msra.mxu0 %v4060
    %4166 = vmatprep.subr.mxu0 %v4057
    %4167 = vmatpush1.msra.mxu0 %v4056
    %4168 = vmatprep.subr.mxu0 %v4053
    %4169 = vmatpush1.msra.mxu0 %v4052
    %4170 = vmatprep.subr.mxu0 %v4049
    %4171 = vmatpush1.msra.mxu0 %v4048
    %4172 = vmatprep.subr.mxu0 %v4045
    %4173 = vmatpush1.msra.mxu0 %v4044
    %4174 = vmatprep.subr.mxu0 %v4041
    %4175 = vmatpush1.msra.mxu0 %v4040
    %4176 = vmatprep.subr.mxu0 %v4037
    %4177 = vmatpush1.msra.mxu0 %v4036
    %4178 = vmatprep.subr.mxu0 %v4033
    %4179 = vmatpush1.msra.mxu0 %v4032
    %4180 = vmatprep.subr.mxu0 %v4029
    %4181 = vmatpush1.msra.mxu0 %v4028
    %4182 = vmatprep.subr.mxu0 %v4025
    %4183 = vmatpush1.msra.mxu0 %v4024
    %4184 = vmatprep.subr.mxu0 %v4149
    %4185 = vmatpush2.msra.mxu0 %v4148
    %4186 = vmatprep.subr.mxu0 %v4145
    %4187 = vmatpush2.msra.mxu0 %v4144
    %4188 = vmatprep.subr.mxu0 %v4141
    %4189 = vmatpush2.msra.mxu0 %v4140
    %4190 = vmatprep.subr.mxu0 %v4137
    %4191 = vmatpush2.msra.mxu0 %v4136
    %4192 = vmatprep.subr.mxu0 %v4133
    %4193 = vmatpush2.msra.mxu0 %v4132
    %4194 = vmatprep.subr.mxu0 %v4129
    %4195 = vmatpush2.msra.mxu0 %v4128
    %4196 = vmatprep.subr.mxu0 %v4125
    %4197 = vmatpush2.msra.mxu0 %v4124
    %4198 = vmatprep.subr.mxu0 %v4121
    %4199 = vmatpush2.msra.mxu0 %v4120
    %4200 = vmatprep.subr.mxu0 %v4117
    %4201 = vmatpush2.msra.mxu0 %v4116
    %4202 = vmatprep.subr.mxu0 %v4113
    %4203 = vmatpush2.msra.mxu0 %v4112
    %4204 = vmatprep.subr.mxu0 %v4109
    %4205 = vmatpush2.msra.mxu0 %v4108
    %4206 = vmatprep.subr.mxu0 %v4105
    %4207 = vmatpush2.msra.mxu0 %v4104
    %4208 = vmatprep.subr.mxu0 %v4101
    %4209 = vmatpush2.msra.mxu0 %v4100
    %4210 = vmatprep.subr.mxu0 %v4097
    %4211 = vmatpush2.msra.mxu0 %v4096
    %4212 = vmatprep.subr.mxu0 %v4093
    %4213 = vmatpush2.msra.mxu0 %v4092
    %4214 = vmatprep.subr.mxu0 %v4089
    %4215 = vmatpush2.msra.mxu0 %v4088
    %4216 = vmatprep.mubr.f32.mxu0 %v3549
    %4217 = vmatmul.mubr.f32.gmra.mxu0 %v4023
    %v4218 = vpop.f32.mrf.mxu0
    %v4219 = vadd.f32 %v115, %v4218
    %v4220 = vpop.f32.mrf.mxu0
    %v4221 = vadd.f32 %v119, %v4220
    %4222 = vdwg.mxu0
    %4223 = vmatprep.subr.mxu0 %v4087
    %4224 = vmatpush1.msra.mxu0 %v4086
    %4225 = vmatprep.subr.mxu0 %v4083
    %4226 = vmatpush1.msra.mxu0 %v4082
    %4227 = vmatprep.subr.mxu0 %v4079
    %4228 = vmatpush1.msra.mxu0 %v4078
    %4229 = vmatprep.subr.mxu0 %v4075
    %4230 = vmatpush1.msra.mxu0 %v4074
    %4231 = vmatprep.subr.mxu0 %v4071
    %4232 = vmatpush1.msra.mxu0 %v4070
    %4233 = vmatprep.subr.mxu0 %v4067
    %4234 = vmatpush1.msra.mxu0 %v4066
    %4235 = vmatprep.subr.mxu0 %v4063
    %4236 = vmatpush1.msra.mxu0 %v4062
    %4237 = vmatprep.subr.mxu0 %v4059
    %4238 = vmatpush1.msra.mxu0 %v4058
    %4239 = vmatprep.subr.mxu0 %v4055
    %4240 = vmatpush1.msra.mxu0 %v4054
    %4241 = vmatprep.subr.mxu0 %v4051
    %4242 = vmatpush1.msra.mxu0 %v4050
    %4243 = vmatprep.subr.mxu0 %v4047
    %4244 = vmatpush1.msra.mxu0 %v4046
    %4245 = vmatprep.subr.mxu0 %v4043
    %4246 = vmatpush1.msra.mxu0 %v4042
    %4247 = vmatprep.subr.mxu0 %v4039
    %4248 = vmatpush1.msra.mxu0 %v4038
    %4249 = vmatprep.subr.mxu0 %v4035
    %4250 = vmatpush1.msra.mxu0 %v4034
    %4251 = vmatprep.subr.mxu0 %v4031
    %4252 = vmatpush1.msra.mxu0 %v4030
    %4253 = vmatprep.subr.mxu0 %v4027
    %4254 = vmatpush1.msra.mxu0 %v4026
    %4255 = vmatprep.subr.mxu0 %v4151
    %4256 = vmatpush2.msra.mxu0 %v4150
    %4257 = vmatprep.subr.mxu0 %v4147
    %4258 = vmatpush2.msra.mxu0 %v4146
    %4259 = vmatprep.subr.mxu0 %v4143
    %4260 = vmatpush2.msra.mxu0 %v4142
    %4261 = vmatprep.subr.mxu0 %v4139
    %4262 = vmatpush2.msra.mxu0 %v4138
    %4263 = vmatprep.subr.mxu0 %v4135
    %4264 = vmatpush2.msra.mxu0 %v4134
    %4265 = vmatprep.subr.mxu0 %v4131
    %4266 = vmatpush2.msra.mxu0 %v4130
    %4267 = vmatprep.subr.mxu0 %v4127
    %4268 = vmatpush2.msra.mxu0 %v4126
    %4269 = vmatprep.subr.mxu0 %v4123
    %4270 = vmatpush2.msra.mxu0 %v4122
    %4271 = vmatprep.subr.mxu0 %v4119
    %4272 = vmatpush2.msra.mxu0 %v4118
    %4273 = vmatprep.subr.mxu0 %v4115
    %4274 = vmatpush2.msra.mxu0 %v4114
    %4275 = vmatprep.subr.mxu0 %v4111
    %4276 = vmatpush2.msra.mxu0 %v4110
    %4277 = vmatprep.subr.mxu0 %v4107
    %4278 = vmatpush2.msra.mxu0 %v4106
    %4279 = vmatprep.subr.mxu0 %v4103
    %4280 = vmatpush2.msra.mxu0 %v4102
    %4281 = vmatprep.subr.mxu0 %v4099
    %4282 = vmatpush2.msra.mxu0 %v4098
    %4283 = vmatprep.subr.mxu0 %v4095
    %4284 = vmatpush2.msra.mxu0 %v4094
    %4285 = vmatprep.subr.mxu0 %v4091
    %4286 = vmatpush2.msra.mxu0 %v4090
    %4287 = vmatprep.mubr.f32.mxu0 %v3549
    %4288 = vmatmul.mubr.f32.gmra.mxu0 %v4023
    %v4289 = vpop.f32.mrf.mxu0
    %v4290 = vadd.f32 %v123, %v4289
    %v4291 = vpop.f32.mrf.mxu0
    %v4292 = vadd.f32 %v127, %v4291
    %4293 = vdwg.mxu0
    %v4294 = vxor.u32 %v4219, 2147483648
    %v4295 = vmul.f32 %v4294, 1.442695
    %v4296 = vpow.pop %v4295
    %v4297 = vadd.f32 %v4296, 1.0
    %v4298 = vrcp.pop %v4297
    %v4299 = vmul.f32 1.0, %v4298
    %v4300 = vxor.u32 %v4221, 2147483648
    %v4301 = vmul.f32 %v4300, 1.442695
    %v4302 = vpow.pop %v4301
    %v4303 = vadd.f32 %v4302, 1.0
    %v4304 = vrcp.pop %v4303
    %v4305 = vmul.f32 1.0, %v4304
    %v4306 = vtanh.pop %v4290
    %v4307 = vxor.u32 %v4292, 2147483648
    %v4308 = vmul.f32 %v4307, 1.442695
    %v4309 = vpow.pop %v4308
    %v4310 = vadd.f32 %v4309, 1.0
    %v4311 = vrcp.pop %v4310
    %v4312 = vmul.f32 1.0, %v4311
    %v4313 = vmul.f32 %v4305, %v3547
    %v4314 = vmul.f32 %v4299, %v4306
    %v4315 = vadd.f32 %v4313, %v4314
    %v4316 = vtanh.pop %v4315
    %v4317 = vmul.f32 %v4312, %v4316
    %v4318 = vld [vmem:[%s2393] sm:$0x3]
    %v4319 = vld [vmem:[#allocation10] sm:$0xff]
    %v4320 = vld [vmem:[#allocation10 + $0x8] sm:$0xff]
    %v4321 = vld [vmem:[#allocation10 + $0x10] sm:$0xff]
    %v4322 = vld [vmem:[#allocation10 + $0x18] sm:$0xff]
    %v4323 = vld [vmem:[#allocation10 + $0x20] sm:$0xff]
    %v4324 = vld [vmem:[#allocation10 + $0x28] sm:$0xff]
    %v4325 = vld [vmem:[#allocation10 + $0x30] sm:$0xff]
    %v4326 = vld [vmem:[#allocation10 + $0x38] sm:$0xff]
    %v4327 = vld [vmem:[#allocation10 + $0x40] sm:$0xff]
    %v4328 = vld [vmem:[#allocation10 + $0x48] sm:$0xff]
    %v4329 = vld [vmem:[#allocation10 + $0x50] sm:$0xff]
    %v4330 = vld [vmem:[#allocation10 + $0x58] sm:$0xff]
    %v4331 = vld [vmem:[#allocation10 + $0x60] sm:$0xff]
    %v4332 = vld [vmem:[#allocation10 + $0x68] sm:$0xff]
    %v4333 = vld [vmem:[#allocation10 + $0x70] sm:$0xff]
    %v4334 = vld [vmem:[#allocation10 + $0x78] sm:$0xff]
    %4335 = vmatprep.subr.mxu0 0.0
    %4336 = vmatpush1.msra.mxu0 %v4334
    %4337 = vmatprep.subr.mxu0 0.0
    %4338 = vmatpush1.msra.mxu0 %v4333
    %4339 = vmatprep.subr.mxu0 0.0
    %4340 = vmatpush1.msra.mxu0 %v4332
    %4341 = vmatprep.subr.mxu0 0.0
    %4342 = vmatpush1.msra.mxu0 %v4331
    %4343 = vmatprep.subr.mxu0 0.0
    %4344 = vmatpush1.msra.mxu0 %v4330
    %4345 = vmatprep.subr.mxu0 0.0
    %4346 = vmatpush1.msra.mxu0 %v4329
    %4347 = vmatprep.subr.mxu0 0.0
    %4348 = vmatpush1.msra.mxu0 %v4328
    %4349 = vmatprep.subr.mxu0 0.0
    %4350 = vmatpush1.msra.mxu0 %v4327
    %4351 = vmatprep.subr.mxu0 0.0
    %4352 = vmatpush1.msra.mxu0 %v4326
    %4353 = vmatprep.subr.mxu0 0.0
    %4354 = vmatpush1.msra.mxu0 %v4325
    %4355 = vmatprep.subr.mxu0 0.0
    %4356 = vmatpush1.msra.mxu0 %v4324
    %4357 = vmatprep.subr.mxu0 0.0
    %4358 = vmatpush1.msra.mxu0 %v4323
    %4359 = vmatprep.subr.mxu0 0.0
    %4360 = vmatpush1.msra.mxu0 %v4322
    %4361 = vmatprep.subr.mxu0 0.0
    %4362 = vmatpush1.msra.mxu0 %v4321
    %4363 = vmatprep.subr.mxu0 0.0
    %4364 = vmatpush1.msra.mxu0 %v4320
    %4365 = vmatprep.subr.mxu0 0.0
    %4366 = vmatpush1.msra.mxu0 %v4319
    %4367 = vmatprep.subr.mxu0 0.0
    %4368 = vmatpush2.msra.mxu0 0.0
    %4369 = vmatprep.subr.mxu0 0.0
    %4370 = vmatpush2.msra.mxu0 0.0
    %4371 = vmatprep.subr.mxu0 0.0
    %4372 = vmatpush2.msra.mxu0 0.0
    %4373 = vmatprep.subr.mxu0 0.0
    %4374 = vmatpush2.msra.mxu0 0.0
    %4375 = vmatprep.subr.mxu0 0.0
    %4376 = vmatpush2.msra.mxu0 0.0
    %4377 = vmatprep.subr.mxu0 0.0
    %4378 = vmatpush2.msra.mxu0 0.0
    %4379 = vmatprep.subr.mxu0 0.0
    %4380 = vmatpush2.msra.mxu0 0.0
    %4381 = vmatprep.subr.mxu0 0.0
    %4382 = vmatpush2.msra.mxu0 0.0
    %4383 = vmatprep.subr.mxu0 0.0
    %4384 = vmatpush2.msra.mxu0 0.0
    %4385 = vmatprep.subr.mxu0 0.0
    %4386 = vmatpush2.msra.mxu0 0.0
    %4387 = vmatprep.subr.mxu0 0.0
    %4388 = vmatpush2.msra.mxu0 0.0
    %4389 = vmatprep.subr.mxu0 0.0
    %4390 = vmatpush2.msra.mxu0 0.0
    %4391 = vmatprep.subr.mxu0 0.0
    %4392 = vmatpush2.msra.mxu0 0.0
    %4393 = vmatprep.subr.mxu0 0.0
    %4394 = vmatpush2.msra.mxu0 0.0
    %4395 = vmatprep.subr.mxu0 0.0
    %4396 = vmatpush2.msra.mxu0 0.0
    %4397 = vmatprep.subr.mxu0 0.0
    %4398 = vmatpush2.msra.mxu0 0.0
    %4399 = vmatprep.mubr.f32.mxu0 0.0
    %4400 = vmatmul.mubr.f32.gmra.mxu0 %v4317
    %v4401 = vpop.f32.mrf.mxu0
    %v4402 = vadd.f32 0.0, %v4401
    %v4403 = vpop.f32.mrf.mxu0
    %4404 = vdwg.mxu0
    %v4405 = vadd.f32 %v4318, %v4402
    %4406 = vst [vmem:[%s2393] sm:$0x3] %v4405
    %v4407 = vld [vmem:[%s1711] sm:$0x3]
    %v4408 = vld [vmem:[#allocation8] sm:$0xff]
    %v4409 = vld [vmem:[#allocation8 + $0x8] sm:$0xff]
    %v4410 = vld [vmem:[#allocation8 + $0x10] sm:$0xff]
    %v4411 = vld [vmem:[#allocation8 + $0x18] sm:$0xff]
    %v4412 = vld [vmem:[#allocation8 + $0x20] sm:$0xff]
    %v4413 = vld [vmem:[#allocation8 + $0x28] sm:$0xff]
    %v4414 = vld [vmem:[#allocation8 + $0x30] sm:$0xff]
    %v4415 = vld [vmem:[#allocation8 + $0x38] sm:$0xff]
    %v4416 = vld [vmem:[#allocation8 + $0x40] sm:$0xff]
    %v4417 = vld [vmem:[#allocation8 + $0x48] sm:$0xff]
    %v4418 = vld [vmem:[#allocation8 + $0x50] sm:$0xff]
    %v4419 = vld [vmem:[#allocation8 + $0x58] sm:$0xff]
    %v4420 = vld [vmem:[#allocation8 + $0x60] sm:$0xff]
    %v4421 = vld [vmem:[#allocation8 + $0x68] sm:$0xff]
    %v4422 = vld [vmem:[#allocation8 + $0x70] sm:$0xff]
    %v4423 = vld [vmem:[#allocation8 + $0x78] sm:$0xff]
    %v4424 = vld [vmem:[#allocation8 + $0x80] sm:$0xff]
    %v4425 = vld [vmem:[#allocation8 + $0x88] sm:$0xff]
    %v4426 = vld [vmem:[#allocation8 + $0x90] sm:$0xff]
    %v4427 = vld [vmem:[#allocation8 + $0x98] sm:$0xff]
    %v4428 = vld [vmem:[#allocation8 + $0xa0] sm:$0xff]
    %v4429 = vld [vmem:[#allocation8 + $0xa8] sm:$0xff]
    %v4430 = vld [vmem:[#allocation8 + $0xb0] sm:$0xff]
    %v4431 = vld [vmem:[#allocation8 + $0xb8] sm:$0xff]
    %v4432 = vld [vmem:[#allocation8 + $0xc0] sm:$0xff]
    %v4433 = vld [vmem:[#allocation8 + $0xc8] sm:$0xff]
    %v4434 = vld [vmem:[#allocation8 + $0xd0] sm:$0xff]
    %v4435 = vld [vmem:[#allocation8 + $0xd8] sm:$0xff]
    %v4436 = vld [vmem:[#allocation8 + $0xe0] sm:$0xff]
    %v4437 = vld [vmem:[#allocation8 + $0xe8] sm:$0xff]
    %v4438 = vld [vmem:[#allocation8 + $0xf0] sm:$0xff]
    %v4439 = vld [vmem:[#allocation8 + $0xf8] sm:$0xff]
    %v4440 = vld [vmem:[#allocation8 + $0x100] sm:$0xff]
    %v4441 = vld [vmem:[#allocation8 + $0x108] sm:$0xff]
    %v4442 = vld [vmem:[#allocation8 + $0x110] sm:$0xff]
    %v4443 = vld [vmem:[#allocation8 + $0x118] sm:$0xff]
    %v4444 = vld [vmem:[#allocation8 + $0x120] sm:$0xff]
    %v4445 = vld [vmem:[#allocation8 + $0x128] sm:$0xff]
    %v4446 = vld [vmem:[#allocation8 + $0x130] sm:$0xff]
    %v4447 = vld [vmem:[#allocation8 + $0x138] sm:$0xff]
    %v4448 = vld [vmem:[#allocation8 + $0x140] sm:$0xff]
    %v4449 = vld [vmem:[#allocation8 + $0x148] sm:$0xff]
    %v4450 = vld [vmem:[#allocation8 + $0x150] sm:$0xff]
    %v4451 = vld [vmem:[#allocation8 + $0x158] sm:$0xff]
    %v4452 = vld [vmem:[#allocation8 + $0x160] sm:$0xff]
    %v4453 = vld [vmem:[#allocation8 + $0x168] sm:$0xff]
    %v4454 = vld [vmem:[#allocation8 + $0x170] sm:$0xff]
    %v4455 = vld [vmem:[#allocation8 + $0x178] sm:$0xff]
    %v4456 = vld [vmem:[#allocation8 + $0x180] sm:$0xff]
    %v4457 = vld [vmem:[#allocation8 + $0x188] sm:$0xff]
    %v4458 = vld [vmem:[#allocation8 + $0x190] sm:$0xff]
    %v4459 = vld [vmem:[#allocation8 + $0x198] sm:$0xff]
    %v4460 = vld [vmem:[#allocation8 + $0x1a0] sm:$0xff]
    %v4461 = vld [vmem:[#allocation8 + $0x1a8] sm:$0xff]
    %v4462 = vld [vmem:[#allocation8 + $0x1b0] sm:$0xff]
    %v4463 = vld [vmem:[#allocation8 + $0x1b8] sm:$0xff]
    %v4464 = vld [vmem:[#allocation8 + $0x1c0] sm:$0xff]
    %v4465 = vld [vmem:[#allocation8 + $0x1c8] sm:$0xff]
    %v4466 = vld [vmem:[#allocation8 + $0x1d0] sm:$0xff]
    %v4467 = vld [vmem:[#allocation8 + $0x1d8] sm:$0xff]
    %v4468 = vld [vmem:[#allocation8 + $0x1e0] sm:$0xff]
    %v4469 = vld [vmem:[#allocation8 + $0x1e8] sm:$0xff]
    %v4470 = vld [vmem:[#allocation8 + $0x1f0] sm:$0xff]
    %v4471 = vld [vmem:[#allocation8 + $0x1f8] sm:$0xff]
    %v4472 = vld [vmem:[#allocation8 + $0x200] sm:$0xff]
    %v4473 = vld [vmem:[#allocation8 + $0x208] sm:$0xff]
    %v4474 = vld [vmem:[#allocation8 + $0x210] sm:$0xff]
    %v4475 = vld [vmem:[#allocation8 + $0x218] sm:$0xff]
    %v4476 = vld [vmem:[#allocation8 + $0x220] sm:$0xff]
    %v4477 = vld [vmem:[#allocation8 + $0x228] sm:$0xff]
    %v4478 = vld [vmem:[#allocation8 + $0x230] sm:$0xff]
    %v4479 = vld [vmem:[#allocation8 + $0x238] sm:$0xff]
    %v4480 = vld [vmem:[#allocation8 + $0x240] sm:$0xff]
    %v4481 = vld [vmem:[#allocation8 + $0x248] sm:$0xff]
    %v4482 = vld [vmem:[#allocation8 + $0x250] sm:$0xff]
    %v4483 = vld [vmem:[#allocation8 + $0x258] sm:$0xff]
    %v4484 = vld [vmem:[#allocation8 + $0x260] sm:$0xff]
    %v4485 = vld [vmem:[#allocation8 + $0x268] sm:$0xff]
    %v4486 = vld [vmem:[#allocation8 + $0x270] sm:$0xff]
    %v4487 = vld [vmem:[#allocation8 + $0x278] sm:$0xff]
    %v4488 = vld [vmem:[#allocation8 + $0x280] sm:$0xff]
    %v4489 = vld [vmem:[#allocation8 + $0x288] sm:$0xff]
    %v4490 = vld [vmem:[#allocation8 + $0x290] sm:$0xff]
    %v4491 = vld [vmem:[#allocation8 + $0x298] sm:$0xff]
    %v4492 = vld [vmem:[#allocation8 + $0x2a0] sm:$0xff]
    %v4493 = vld [vmem:[#allocation8 + $0x2a8] sm:$0xff]
    %v4494 = vld [vmem:[#allocation8 + $0x2b0] sm:$0xff]
    %v4495 = vld [vmem:[#allocation8 + $0x2b8] sm:$0xff]
    %v4496 = vld [vmem:[#allocation8 + $0x2c0] sm:$0xff]
    %v4497 = vld [vmem:[#allocation8 + $0x2c8] sm:$0xff]
    %v4498 = vld [vmem:[#allocation8 + $0x2d0] sm:$0xff]
    %v4499 = vld [vmem:[#allocation8 + $0x2d8] sm:$0xff]
    %v4500 = vld [vmem:[#allocation8 + $0x2e0] sm:$0xff]
    %v4501 = vld [vmem:[#allocation8 + $0x2e8] sm:$0xff]
    %v4502 = vld [vmem:[#allocation8 + $0x2f0] sm:$0xff]
    %v4503 = vld [vmem:[#allocation8 + $0x2f8] sm:$0xff]
    %v4504 = vld [vmem:[#allocation8 + $0x300] sm:$0xff]
    %v4505 = vld [vmem:[#allocation8 + $0x308] sm:$0xff]
    %v4506 = vld [vmem:[#allocation8 + $0x310] sm:$0xff]
    %v4507 = vld [vmem:[#allocation8 + $0x318] sm:$0xff]
    %v4508 = vld [vmem:[#allocation8 + $0x320] sm:$0xff]
    %v4509 = vld [vmem:[#allocation8 + $0x328] sm:$0xff]
    %v4510 = vld [vmem:[#allocation8 + $0x330] sm:$0xff]
    %v4511 = vld [vmem:[#allocation8 + $0x338] sm:$0xff]
    %v4512 = vld [vmem:[#allocation8 + $0x340] sm:$0xff]
    %v4513 = vld [vmem:[#allocation8 + $0x348] sm:$0xff]
    %v4514 = vld [vmem:[#allocation8 + $0x350] sm:$0xff]
    %v4515 = vld [vmem:[#allocation8 + $0x358] sm:$0xff]
    %v4516 = vld [vmem:[#allocation8 + $0x360] sm:$0xff]
    %v4517 = vld [vmem:[#allocation8 + $0x368] sm:$0xff]
    %v4518 = vld [vmem:[#allocation8 + $0x370] sm:$0xff]
    %v4519 = vld [vmem:[#allocation8 + $0x378] sm:$0xff]
    %v4520 = vld [vmem:[#allocation8 + $0x380] sm:$0xff]
    %v4521 = vld [vmem:[#allocation8 + $0x388] sm:$0xff]
    %v4522 = vld [vmem:[#allocation8 + $0x390] sm:$0xff]
    %v4523 = vld [vmem:[#allocation8 + $0x398] sm:$0xff]
    %v4524 = vld [vmem:[#allocation8 + $0x3a0] sm:$0xff]
    %v4525 = vld [vmem:[#allocation8 + $0x3a8] sm:$0xff]
    %v4526 = vld [vmem:[#allocation8 + $0x3b0] sm:$0xff]
    %v4527 = vld [vmem:[#allocation8 + $0x3b8] sm:$0xff]
    %v4528 = vld [vmem:[#allocation8 + $0x3c0] sm:$0xff]
    %v4529 = vld [vmem:[#allocation8 + $0x3c8] sm:$0xff]
    %v4530 = vld [vmem:[#allocation8 + $0x3d0] sm:$0xff]
    %v4531 = vld [vmem:[#allocation8 + $0x3d8] sm:$0xff]
    %v4532 = vld [vmem:[#allocation8 + $0x3e0] sm:$0xff]
    %v4533 = vld [vmem:[#allocation8 + $0x3e8] sm:$0xff]
    %v4534 = vld [vmem:[#allocation8 + $0x3f0] sm:$0xff]
    %v4535 = vld [vmem:[#allocation8 + $0x3f8] sm:$0xff]
    %4536 = vmatprep.subr.mxu0 %v4469
    %4537 = vmatpush1.msra.mxu0 %v4468
    %4538 = vmatprep.subr.mxu0 %v4465
    %4539 = vmatpush1.msra.mxu0 %v4464
    %4540 = vmatprep.subr.mxu0 %v4461
    %4541 = vmatpush1.msra.mxu0 %v4460
    %4542 = vmatprep.subr.mxu0 %v4457
    %4543 = vmatpush1.msra.mxu0 %v4456
    %4544 = vmatprep.subr.mxu0 %v4453
    %4545 = vmatpush1.msra.mxu0 %v4452
    %4546 = vmatprep.subr.mxu0 %v4449
    %4547 = vmatpush1.msra.mxu0 %v4448
    %4548 = vmatprep.subr.mxu0 %v4445
    %4549 = vmatpush1.msra.mxu0 %v4444
    %4550 = vmatprep.subr.mxu0 %v4441
    %4551 = vmatpush1.msra.mxu0 %v4440
    %4552 = vmatprep.subr.mxu0 %v4437
    %4553 = vmatpush1.msra.mxu0 %v4436
    %4554 = vmatprep.subr.mxu0 %v4433
    %4555 = vmatpush1.msra.mxu0 %v4432
    %4556 = vmatprep.subr.mxu0 %v4429
    %4557 = vmatpush1.msra.mxu0 %v4428
    %4558 = vmatprep.subr.mxu0 %v4425
    %4559 = vmatpush1.msra.mxu0 %v4424
    %4560 = vmatprep.subr.mxu0 %v4421
    %4561 = vmatpush1.msra.mxu0 %v4420
    %4562 = vmatprep.subr.mxu0 %v4417
    %4563 = vmatpush1.msra.mxu0 %v4416
    %4564 = vmatprep.subr.mxu0 %v4413
    %4565 = vmatpush1.msra.mxu0 %v4412
    %4566 = vmatprep.subr.mxu0 %v4409
    %4567 = vmatpush1.msra.mxu0 %v4408
    %4568 = vmatprep.subr.mxu0 %v4533
    %4569 = vmatpush2.msra.mxu0 %v4532
    %4570 = vmatprep.subr.mxu0 %v4529
    %4571 = vmatpush2.msra.mxu0 %v4528
    %4572 = vmatprep.subr.mxu0 %v4525
    %4573 = vmatpush2.msra.mxu0 %v4524
    %4574 = vmatprep.subr.mxu0 %v4521
    %4575 = vmatpush2.msra.mxu0 %v4520
    %4576 = vmatprep.subr.mxu0 %v4517
    %4577 = vmatpush2.msra.mxu0 %v4516
    %4578 = vmatprep.subr.mxu0 %v4513
    %4579 = vmatpush2.msra.mxu0 %v4512
    %4580 = vmatprep.subr.mxu0 %v4509
    %4581 = vmatpush2.msra.mxu0 %v4508
    %4582 = vmatprep.subr.mxu0 %v4505
    %4583 = vmatpush2.msra.mxu0 %v4504
    %4584 = vmatprep.subr.mxu0 %v4501
    %4585 = vmatpush2.msra.mxu0 %v4500
    %4586 = vmatprep.subr.mxu0 %v4497
    %4587 = vmatpush2.msra.mxu0 %v4496
    %4588 = vmatprep.subr.mxu0 %v4493
    %4589 = vmatpush2.msra.mxu0 %v4492
    %4590 = vmatprep.subr.mxu0 %v4489
    %4591 = vmatpush2.msra.mxu0 %v4488
    %4592 = vmatprep.subr.mxu0 %v4485
    %4593 = vmatpush2.msra.mxu0 %v4484
    %4594 = vmatprep.subr.mxu0 %v4481
    %4595 = vmatpush2.msra.mxu0 %v4480
    %4596 = vmatprep.subr.mxu0 %v4477
    %4597 = vmatpush2.msra.mxu0 %v4476
    %4598 = vmatprep.subr.mxu0 %v4473
    %4599 = vmatpush2.msra.mxu0 %v4472
    %4600 = vmatprep.mubr.f32.mxu0 %v3933
    %4601 = vmatmul.mubr.f32.gmra.mxu0 %v4407
    %v4602 = vpop.f32.mrf.mxu0
    %v4603 = vadd.f32 %v137, %v4602
    %v4604 = vpop.f32.mrf.mxu0
    %v4605 = vadd.f32 %v141, %v4604
    %4606 = vdwg.mxu0
    %4607 = vmatprep.subr.mxu0 %v4471
    %4608 = vmatpush1.msra.mxu0 %v4470
    %4609 = vmatprep.subr.mxu0 %v4467
    %4610 = vmatpush1.msra.mxu0 %v4466
    %4611 = vmatprep.subr.mxu0 %v4463
    %4612 = vmatpush1.msra.mxu0 %v4462
    %4613 = vmatprep.subr.mxu0 %v4459
    %4614 = vmatpush1.msra.mxu0 %v4458
    %4615 = vmatprep.subr.mxu0 %v4455
    %4616 = vmatpush1.msra.mxu0 %v4454
    %4617 = vmatprep.subr.mxu0 %v4451
    %4618 = vmatpush1.msra.mxu0 %v4450
    %4619 = vmatprep.subr.mxu0 %v4447
    %4620 = vmatpush1.msra.mxu0 %v4446
    %4621 = vmatprep.subr.mxu0 %v4443
    %4622 = vmatpush1.msra.mxu0 %v4442
    %4623 = vmatprep.subr.mxu0 %v4439
    %4624 = vmatpush1.msra.mxu0 %v4438
    %4625 = vmatprep.subr.mxu0 %v4435
    %4626 = vmatpush1.msra.mxu0 %v4434
    %4627 = vmatprep.subr.mxu0 %v4431
    %4628 = vmatpush1.msra.mxu0 %v4430
    %4629 = vmatprep.subr.mxu0 %v4427
    %4630 = vmatpush1.msra.mxu0 %v4426
    %4631 = vmatprep.subr.mxu0 %v4423
    %4632 = vmatpush1.msra.mxu0 %v4422
    %4633 = vmatprep.subr.mxu0 %v4419
    %4634 = vmatpush1.msra.mxu0 %v4418
    %4635 = vmatprep.subr.mxu0 %v4415
    %4636 = vmatpush1.msra.mxu0 %v4414
    %4637 = vmatprep.subr.mxu0 %v4411
    %4638 = vmatpush1.msra.mxu0 %v4410
    %4639 = vmatprep.subr.mxu0 %v4535
    %4640 = vmatpush2.msra.mxu0 %v4534
    %4641 = vmatprep.subr.mxu0 %v4531
    %4642 = vmatpush2.msra.mxu0 %v4530
    %4643 = vmatprep.subr.mxu0 %v4527
    %4644 = vmatpush2.msra.mxu0 %v4526
    %4645 = vmatprep.subr.mxu0 %v4523
    %4646 = vmatpush2.msra.mxu0 %v4522
    %4647 = vmatprep.subr.mxu0 %v4519
    %4648 = vmatpush2.msra.mxu0 %v4518
    %4649 = vmatprep.subr.mxu0 %v4515
    %4650 = vmatpush2.msra.mxu0 %v4514
    %4651 = vmatprep.subr.mxu0 %v4511
    %4652 = vmatpush2.msra.mxu0 %v4510
    %4653 = vmatprep.subr.mxu0 %v4507
    %4654 = vmatpush2.msra.mxu0 %v4506
    %4655 = vmatprep.subr.mxu0 %v4503
    %4656 = vmatpush2.msra.mxu0 %v4502
    %4657 = vmatprep.subr.mxu0 %v4499
    %4658 = vmatpush2.msra.mxu0 %v4498
    %4659 = vmatprep.subr.mxu0 %v4495
    %4660 = vmatpush2.msra.mxu0 %v4494
    %4661 = vmatprep.subr.mxu0 %v4491
    %4662 = vmatpush2.msra.mxu0 %v4490
    %4663 = vmatprep.subr.mxu0 %v4487
    %4664 = vmatpush2.msra.mxu0 %v4486
    %4665 = vmatprep.subr.mxu0 %v4483
    %4666 = vmatpush2.msra.mxu0 %v4482
    %4667 = vmatprep.subr.mxu0 %v4479
    %4668 = vmatpush2.msra.mxu0 %v4478
    %4669 = vmatprep.subr.mxu0 %v4475
    %4670 = vmatpush2.msra.mxu0 %v4474
    %4671 = vmatprep.mubr.f32.mxu0 %v3933
    %4672 = vmatmul.mubr.f32.gmra.mxu0 %v4407
    %v4673 = vpop.f32.mrf.mxu0
    %v4674 = vadd.f32 %v145, %v4673
    %v4675 = vpop.f32.mrf.mxu0
    %v4676 = vadd.f32 %v149, %v4675
    %4677 = vdwg.mxu0
    %v4678 = vxor.u32 %v4603, 2147483648
    %v4679 = vmul.f32 %v4678, 1.442695
    %v4680 = vpow.pop %v4679
    %v4681 = vadd.f32 %v4680, 1.0
    %v4682 = vrcp.pop %v4681
    %v4683 = vmul.f32 1.0, %v4682
    %v4684 = vxor.u32 %v4605, 2147483648
    %v4685 = vmul.f32 %v4684, 1.442695
    %v4686 = vpow.pop %v4685
    %v4687 = vadd.f32 %v4686, 1.0
    %v4688 = vrcp.pop %v4687
    %v4689 = vmul.f32 1.0, %v4688
    %v4690 = vtanh.pop %v4674
    %v4691 = vxor.u32 %v4676, 2147483648
    %v4692 = vmul.f32 %v4691, 1.442695
    %v4693 = vpow.pop %v4692
    %v4694 = vadd.f32 %v4693, 1.0
    %v4695 = vrcp.pop %v4694
    %v4696 = vmul.f32 1.0, %v4695
    %v4697 = vmul.f32 %v4689, %v3931
    %v4698 = vmul.f32 %v4683, %v4690
    %v4699 = vadd.f32 %v4697, %v4698
    %v4700 = vtanh.pop %v4699
    %v4701 = vmul.f32 %v4696, %v4700
    %v4702 = vld [vmem:[%s2007] sm:$0x3]
    %v4703 = vld [vmem:[#allocation11] sm:$0xff]
    %v4704 = vld [vmem:[#allocation11 + $0x8] sm:$0xff]
    %v4705 = vld [vmem:[#allocation11 + $0x10] sm:$0xff]
    %v4706 = vld [vmem:[#allocation11 + $0x18] sm:$0xff]
    %v4707 = vld [vmem:[#allocation11 + $0x20] sm:$0xff]
    %v4708 = vld [vmem:[#allocation11 + $0x28] sm:$0xff]
    %v4709 = vld [vmem:[#allocation11 + $0x30] sm:$0xff]
    %v4710 = vld [vmem:[#allocation11 + $0x38] sm:$0xff]
    %v4711 = vld [vmem:[#allocation11 + $0x40] sm:$0xff]
    %v4712 = vld [vmem:[#allocation11 + $0x48] sm:$0xff]
    %v4713 = vld [vmem:[#allocation11 + $0x50] sm:$0xff]
    %v4714 = vld [vmem:[#allocation11 + $0x58] sm:$0xff]
    %v4715 = vld [vmem:[#allocation11 + $0x60] sm:$0xff]
    %v4716 = vld [vmem:[#allocation11 + $0x68] sm:$0xff]
    %v4717 = vld [vmem:[#allocation11 + $0x70] sm:$0xff]
    %v4718 = vld [vmem:[#allocation11 + $0x78] sm:$0xff]
    %4719 = vmatprep.subr.mxu0 0.0
    %4720 = vmatpush1.msra.mxu0 %v4718
    %4721 = vmatprep.subr.mxu0 0.0
    %4722 = vmatpush1.msra.mxu0 %v4717
    %4723 = vmatprep.subr.mxu0 0.0
    %4724 = vmatpush1.msra.mxu0 %v4716
    %4725 = vmatprep.subr.mxu0 0.0
    %4726 = vmatpush1.msra.mxu0 %v4715
    %4727 = vmatprep.subr.mxu0 0.0
    %4728 = vmatpush1.msra.mxu0 %v4714
    %4729 = vmatprep.subr.mxu0 0.0
    %4730 = vmatpush1.msra.mxu0 %v4713
    %4731 = vmatprep.subr.mxu0 0.0
    %4732 = vmatpush1.msra.mxu0 %v4712
    %4733 = vmatprep.subr.mxu0 0.0
    %4734 = vmatpush1.msra.mxu0 %v4711
    %4735 = vmatprep.subr.mxu0 0.0
    %4736 = vmatpush1.msra.mxu0 %v4710
    %4737 = vmatprep.subr.mxu0 0.0
    %4738 = vmatpush1.msra.mxu0 %v4709
    %4739 = vmatprep.subr.mxu0 0.0
    %4740 = vmatpush1.msra.mxu0 %v4708
    %4741 = vmatprep.subr.mxu0 0.0
    %4742 = vmatpush1.msra.mxu0 %v4707
    %4743 = vmatprep.subr.mxu0 0.0
    %4744 = vmatpush1.msra.mxu0 %v4706
    %4745 = vmatprep.subr.mxu0 0.0
    %4746 = vmatpush1.msra.mxu0 %v4705
    %4747 = vmatprep.subr.mxu0 0.0
    %4748 = vmatpush1.msra.mxu0 %v4704
    %4749 = vmatprep.subr.mxu0 0.0
    %4750 = vmatpush1.msra.mxu0 %v4703
    %4751 = vmatprep.subr.mxu0 0.0
    %4752 = vmatpush2.msra.mxu0 0.0
    %4753 = vmatprep.subr.mxu0 0.0
    %4754 = vmatpush2.msra.mxu0 0.0
    %4755 = vmatprep.subr.mxu0 0.0
    %4756 = vmatpush2.msra.mxu0 0.0
    %4757 = vmatprep.subr.mxu0 0.0
    %4758 = vmatpush2.msra.mxu0 0.0
    %4759 = vmatprep.subr.mxu0 0.0
    %4760 = vmatpush2.msra.mxu0 0.0
    %4761 = vmatprep.subr.mxu0 0.0
    %4762 = vmatpush2.msra.mxu0 0.0
    %4763 = vmatprep.subr.mxu0 0.0
    %4764 = vmatpush2.msra.mxu0 0.0
    %4765 = vmatprep.subr.mxu0 0.0
    %4766 = vmatpush2.msra.mxu0 0.0
    %4767 = vmatprep.subr.mxu0 0.0
    %4768 = vmatpush2.msra.mxu0 0.0
    %4769 = vmatprep.subr.mxu0 0.0
    %4770 = vmatpush2.msra.mxu0 0.0
    %4771 = vmatprep.subr.mxu0 0.0
    %4772 = vmatpush2.msra.mxu0 0.0
    %4773 = vmatprep.subr.mxu0 0.0
    %4774 = vmatpush2.msra.mxu0 0.0
    %4775 = vmatprep.subr.mxu0 0.0
    %4776 = vmatpush2.msra.mxu0 0.0
    %4777 = vmatprep.subr.mxu0 0.0
    %4778 = vmatpush2.msra.mxu0 0.0
    %4779 = vmatprep.subr.mxu0 0.0
    %4780 = vmatpush2.msra.mxu0 0.0
    %4781 = vmatprep.subr.mxu0 0.0
    %4782 = vmatpush2.msra.mxu0 0.0
    %4783 = vmatprep.mubr.f32.mxu0 0.0
    %4784 = vmatmul.mubr.f32.gmra.mxu0 %v4701
    %v4785 = vpop.f32.mrf.mxu0
    %v4786 = vadd.f32 0.0, %v4785
    %v4787 = vpop.f32.mrf.mxu0
    %4788 = vdwg.mxu0
    %v4789 = vadd.f32 %v4702, %v4786
    %4790 = vst [vmem:[%s2007] sm:$0x3] %v4789
    %v4791 = vld [vmem:[%s1325] sm:$0x3]
    %v4792 = vld [vmem:[#allocation5] sm:$0xff]
    %v4793 = vld [vmem:[#allocation5 + $0x8] sm:$0xff]
    %v4794 = vld [vmem:[#allocation5 + $0x10] sm:$0xff]
    %v4795 = vld [vmem:[#allocation5 + $0x18] sm:$0xff]
    %v4796 = vld [vmem:[#allocation5 + $0x20] sm:$0xff]
    %v4797 = vld [vmem:[#allocation5 + $0x28] sm:$0xff]
    %v4798 = vld [vmem:[#allocation5 + $0x30] sm:$0xff]
    %v4799 = vld [vmem:[#allocation5 + $0x38] sm:$0xff]
    %v4800 = vld [vmem:[#allocation5 + $0x40] sm:$0xff]
    %v4801 = vld [vmem:[#allocation5 + $0x48] sm:$0xff]
    %v4802 = vld [vmem:[#allocation5 + $0x50] sm:$0xff]
    %v4803 = vld [vmem:[#allocation5 + $0x58] sm:$0xff]
    %v4804 = vld [vmem:[#allocation5 + $0x60] sm:$0xff]
    %v4805 = vld [vmem:[#allocation5 + $0x68] sm:$0xff]
    %v4806 = vld [vmem:[#allocation5 + $0x70] sm:$0xff]
    %v4807 = vld [vmem:[#allocation5 + $0x78] sm:$0xff]
    %v4808 = vld [vmem:[#allocation5 + $0x80] sm:$0xff]
    %v4809 = vld [vmem:[#allocation5 + $0x88] sm:$0xff]
    %v4810 = vld [vmem:[#allocation5 + $0x90] sm:$0xff]
    %v4811 = vld [vmem:[#allocation5 + $0x98] sm:$0xff]
    %v4812 = vld [vmem:[#allocation5 + $0xa0] sm:$0xff]
    %v4813 = vld [vmem:[#allocation5 + $0xa8] sm:$0xff]
    %v4814 = vld [vmem:[#allocation5 + $0xb0] sm:$0xff]
    %v4815 = vld [vmem:[#allocation5 + $0xb8] sm:$0xff]
    %v4816 = vld [vmem:[#allocation5 + $0xc0] sm:$0xff]
    %v4817 = vld [vmem:[#allocation5 + $0xc8] sm:$0xff]
    %v4818 = vld [vmem:[#allocation5 + $0xd0] sm:$0xff]
    %v4819 = vld [vmem:[#allocation5 + $0xd8] sm:$0xff]
    %v4820 = vld [vmem:[#allocation5 + $0xe0] sm:$0xff]
    %v4821 = vld [vmem:[#allocation5 + $0xe8] sm:$0xff]
    %v4822 = vld [vmem:[#allocation5 + $0xf0] sm:$0xff]
    %v4823 = vld [vmem:[#allocation5 + $0xf8] sm:$0xff]
    %v4824 = vld [vmem:[#allocation5 + $0x100] sm:$0xff]
    %v4825 = vld [vmem:[#allocation5 + $0x108] sm:$0xff]
    %v4826 = vld [vmem:[#allocation5 + $0x110] sm:$0xff]
    %v4827 = vld [vmem:[#allocation5 + $0x118] sm:$0xff]
    %v4828 = vld [vmem:[#allocation5 + $0x120] sm:$0xff]
    %v4829 = vld [vmem:[#allocation5 + $0x128] sm:$0xff]
    %v4830 = vld [vmem:[#allocation5 + $0x130] sm:$0xff]
    %v4831 = vld [vmem:[#allocation5 + $0x138] sm:$0xff]
    %v4832 = vld [vmem:[#allocation5 + $0x140] sm:$0xff]
    %v4833 = vld [vmem:[#allocation5 + $0x148] sm:$0xff]
    %v4834 = vld [vmem:[#allocation5 + $0x150] sm:$0xff]
    %v4835 = vld [vmem:[#allocation5 + $0x158] sm:$0xff]
    %v4836 = vld [vmem:[#allocation5 + $0x160] sm:$0xff]
    %v4837 = vld [vmem:[#allocation5 + $0x168] sm:$0xff]
    %v4838 = vld [vmem:[#allocation5 + $0x170] sm:$0xff]
    %v4839 = vld [vmem:[#allocation5 + $0x178] sm:$0xff]
    %v4840 = vld [vmem:[#allocation5 + $0x180] sm:$0xff]
    %v4841 = vld [vmem:[#allocation5 + $0x188] sm:$0xff]
    %v4842 = vld [vmem:[#allocation5 + $0x190] sm:$0xff]
    %v4843 = vld [vmem:[#allocation5 + $0x198] sm:$0xff]
    %v4844 = vld [vmem:[#allocation5 + $0x1a0] sm:$0xff]
    %v4845 = vld [vmem:[#allocation5 + $0x1a8] sm:$0xff]
    %v4846 = vld [vmem:[#allocation5 + $0x1b0] sm:$0xff]
    %v4847 = vld [vmem:[#allocation5 + $0x1b8] sm:$0xff]
    %v4848 = vld [vmem:[#allocation5 + $0x1c0] sm:$0xff]
    %v4849 = vld [vmem:[#allocation5 + $0x1c8] sm:$0xff]
    %v4850 = vld [vmem:[#allocation5 + $0x1d0] sm:$0xff]
    %v4851 = vld [vmem:[#allocation5 + $0x1d8] sm:$0xff]
    %v4852 = vld [vmem:[#allocation5 + $0x1e0] sm:$0xff]
    %v4853 = vld [vmem:[#allocation5 + $0x1e8] sm:$0xff]
    %v4854 = vld [vmem:[#allocation5 + $0x1f0] sm:$0xff]
    %v4855 = vld [vmem:[#allocation5 + $0x1f8] sm:$0xff]
    %v4856 = vld [vmem:[#allocation5 + $0x200] sm:$0xff]
    %v4857 = vld [vmem:[#allocation5 + $0x208] sm:$0xff]
    %v4858 = vld [vmem:[#allocation5 + $0x210] sm:$0xff]
    %v4859 = vld [vmem:[#allocation5 + $0x218] sm:$0xff]
    %v4860 = vld [vmem:[#allocation5 + $0x220] sm:$0xff]
    %v4861 = vld [vmem:[#allocation5 + $0x228] sm:$0xff]
    %v4862 = vld [vmem:[#allocation5 + $0x230] sm:$0xff]
    %v4863 = vld [vmem:[#allocation5 + $0x238] sm:$0xff]
    %v4864 = vld [vmem:[#allocation5 + $0x240] sm:$0xff]
    %v4865 = vld [vmem:[#allocation5 + $0x248] sm:$0xff]
    %v4866 = vld [vmem:[#allocation5 + $0x250] sm:$0xff]
    %v4867 = vld [vmem:[#allocation5 + $0x258] sm:$0xff]
    %v4868 = vld [vmem:[#allocation5 + $0x260] sm:$0xff]
    %v4869 = vld [vmem:[#allocation5 + $0x268] sm:$0xff]
    %v4870 = vld [vmem:[#allocation5 + $0x270] sm:$0xff]
    %v4871 = vld [vmem:[#allocation5 + $0x278] sm:$0xff]
    %v4872 = vld [vmem:[#allocation5 + $0x280] sm:$0xff]
    %v4873 = vld [vmem:[#allocation5 + $0x288] sm:$0xff]
    %v4874 = vld [vmem:[#allocation5 + $0x290] sm:$0xff]
    %v4875 = vld [vmem:[#allocation5 + $0x298] sm:$0xff]
    %v4876 = vld [vmem:[#allocation5 + $0x2a0] sm:$0xff]
    %v4877 = vld [vmem:[#allocation5 + $0x2a8] sm:$0xff]
    %v4878 = vld [vmem:[#allocation5 + $0x2b0] sm:$0xff]
    %v4879 = vld [vmem:[#allocation5 + $0x2b8] sm:$0xff]
    %v4880 = vld [vmem:[#allocation5 + $0x2c0] sm:$0xff]
    %v4881 = vld [vmem:[#allocation5 + $0x2c8] sm:$0xff]
    %v4882 = vld [vmem:[#allocation5 + $0x2d0] sm:$0xff]
    %v4883 = vld [vmem:[#allocation5 + $0x2d8] sm:$0xff]
    %v4884 = vld [vmem:[#allocation5 + $0x2e0] sm:$0xff]
    %v4885 = vld [vmem:[#allocation5 + $0x2e8] sm:$0xff]
    %v4886 = vld [vmem:[#allocation5 + $0x2f0] sm:$0xff]
    %v4887 = vld [vmem:[#allocation5 + $0x2f8] sm:$0xff]
    %v4888 = vld [vmem:[#allocation5 + $0x300] sm:$0xff]
    %v4889 = vld [vmem:[#allocation5 + $0x308] sm:$0xff]
    %v4890 = vld [vmem:[#allocation5 + $0x310] sm:$0xff]
    %v4891 = vld [vmem:[#allocation5 + $0x318] sm:$0xff]
    %v4892 = vld [vmem:[#allocation5 + $0x320] sm:$0xff]
    %v4893 = vld [vmem:[#allocation5 + $0x328] sm:$0xff]
    %v4894 = vld [vmem:[#allocation5 + $0x330] sm:$0xff]
    %v4895 = vld [vmem:[#allocation5 + $0x338] sm:$0xff]
    %v4896 = vld [vmem:[#allocation5 + $0x340] sm:$0xff]
    %v4897 = vld [vmem:[#allocation5 + $0x348] sm:$0xff]
    %v4898 = vld [vmem:[#allocation5 + $0x350] sm:$0xff]
    %v4899 = vld [vmem:[#allocation5 + $0x358] sm:$0xff]
    %v4900 = vld [vmem:[#allocation5 + $0x360] sm:$0xff]
    %v4901 = vld [vmem:[#allocation5 + $0x368] sm:$0xff]
    %v4902 = vld [vmem:[#allocation5 + $0x370] sm:$0xff]
    %v4903 = vld [vmem:[#allocation5 + $0x378] sm:$0xff]
    %v4904 = vld [vmem:[#allocation5 + $0x380] sm:$0xff]
    %v4905 = vld [vmem:[#allocation5 + $0x388] sm:$0xff]
    %v4906 = vld [vmem:[#allocation5 + $0x390] sm:$0xff]
    %v4907 = vld [vmem:[#allocation5 + $0x398] sm:$0xff]
    %v4908 = vld [vmem:[#allocation5 + $0x3a0] sm:$0xff]
    %v4909 = vld [vmem:[#allocation5 + $0x3a8] sm:$0xff]
    %v4910 = vld [vmem:[#allocation5 + $0x3b0] sm:$0xff]
    %v4911 = vld [vmem:[#allocation5 + $0x3b8] sm:$0xff]
    %v4912 = vld [vmem:[#allocation5 + $0x3c0] sm:$0xff]
    %v4913 = vld [vmem:[#allocation5 + $0x3c8] sm:$0xff]
    %v4914 = vld [vmem:[#allocation5 + $0x3d0] sm:$0xff]
    %v4915 = vld [vmem:[#allocation5 + $0x3d8] sm:$0xff]
    %v4916 = vld [vmem:[#allocation5 + $0x3e0] sm:$0xff]
    %v4917 = vld [vmem:[#allocation5 + $0x3e8] sm:$0xff]
    %v4918 = vld [vmem:[#allocation5 + $0x3f0] sm:$0xff]
    %v4919 = vld [vmem:[#allocation5 + $0x3f8] sm:$0xff]
    %4920 = vmatprep.subr.mxu0 %v4853
    %4921 = vmatpush1.msra.mxu0 %v4852
    %4922 = vmatprep.subr.mxu0 %v4849
    %4923 = vmatpush1.msra.mxu0 %v4848
    %4924 = vmatprep.subr.mxu0 %v4845
    %4925 = vmatpush1.msra.mxu0 %v4844
    %4926 = vmatprep.subr.mxu0 %v4841
    %4927 = vmatpush1.msra.mxu0 %v4840
    %4928 = vmatprep.subr.mxu0 %v4837
    %4929 = vmatpush1.msra.mxu0 %v4836
    %4930 = vmatprep.subr.mxu0 %v4833
    %4931 = vmatpush1.msra.mxu0 %v4832
    %4932 = vmatprep.subr.mxu0 %v4829
    %4933 = vmatpush1.msra.mxu0 %v4828
    %4934 = vmatprep.subr.mxu0 %v4825
    %4935 = vmatpush1.msra.mxu0 %v4824
    %4936 = vmatprep.subr.mxu0 %v4821
    %4937 = vmatpush1.msra.mxu0 %v4820
    %4938 = vmatprep.subr.mxu0 %v4817
    %4939 = vmatpush1.msra.mxu0 %v4816
    %4940 = vmatprep.subr.mxu0 %v4813
    %4941 = vmatpush1.msra.mxu0 %v4812
    %4942 = vmatprep.subr.mxu0 %v4809
    %4943 = vmatpush1.msra.mxu0 %v4808
    %4944 = vmatprep.subr.mxu0 %v4805
    %4945 = vmatpush1.msra.mxu0 %v4804
    %4946 = vmatprep.subr.mxu0 %v4801
    %4947 = vmatpush1.msra.mxu0 %v4800
    %4948 = vmatprep.subr.mxu0 %v4797
    %4949 = vmatpush1.msra.mxu0 %v4796
    %4950 = vmatprep.subr.mxu0 %v4793
    %4951 = vmatpush1.msra.mxu0 %v4792
    %4952 = vmatprep.subr.mxu0 %v4917
    %4953 = vmatpush2.msra.mxu0 %v4916
    %4954 = vmatprep.subr.mxu0 %v4913
    %4955 = vmatpush2.msra.mxu0 %v4912
    %4956 = vmatprep.subr.mxu0 %v4909
    %4957 = vmatpush2.msra.mxu0 %v4908
    %4958 = vmatprep.subr.mxu0 %v4905
    %4959 = vmatpush2.msra.mxu0 %v4904
    %4960 = vmatprep.subr.mxu0 %v4901
    %4961 = vmatpush2.msra.mxu0 %v4900
    %4962 = vmatprep.subr.mxu0 %v4897
    %4963 = vmatpush2.msra.mxu0 %v4896
    %4964 = vmatprep.subr.mxu0 %v4893
    %4965 = vmatpush2.msra.mxu0 %v4892
    %4966 = vmatprep.subr.mxu0 %v4889
    %4967 = vmatpush2.msra.mxu0 %v4888
    %4968 = vmatprep.subr.mxu0 %v4885
    %4969 = vmatpush2.msra.mxu0 %v4884
    %4970 = vmatprep.subr.mxu0 %v4881
    %4971 = vmatpush2.msra.mxu0 %v4880
    %4972 = vmatprep.subr.mxu0 %v4877
    %4973 = vmatpush2.msra.mxu0 %v4876
    %4974 = vmatprep.subr.mxu0 %v4873
    %4975 = vmatpush2.msra.mxu0 %v4872
    %4976 = vmatprep.subr.mxu0 %v4869
    %4977 = vmatpush2.msra.mxu0 %v4868
    %4978 = vmatprep.subr.mxu0 %v4865
    %4979 = vmatpush2.msra.mxu0 %v4864
    %4980 = vmatprep.subr.mxu0 %v4861
    %4981 = vmatpush2.msra.mxu0 %v4860
    %4982 = vmatprep.subr.mxu0 %v4857
    %4983 = vmatpush2.msra.mxu0 %v4856
    %4984 = vmatprep.mubr.f32.mxu0 %v4317
    %4985 = vmatmul.mubr.f32.gmra.mxu0 %v4791
    %v4986 = vpop.f32.mrf.mxu0
    %v4987 = vadd.f32 %v115, %v4986
    %v4988 = vpop.f32.mrf.mxu0
    %v4989 = vadd.f32 %v119, %v4988
    %4990 = vdwg.mxu0
    %4991 = vmatprep.subr.mxu0 %v4855
    %4992 = vmatpush1.msra.mxu0 %v4854
    %4993 = vmatprep.subr.mxu0 %v4851
    %4994 = vmatpush1.msra.mxu0 %v4850
    %4995 = vmatprep.subr.mxu0 %v4847
    %4996 = vmatpush1.msra.mxu0 %v4846
    %4997 = vmatprep.subr.mxu0 %v4843
    %4998 = vmatpush1.msra.mxu0 %v4842
    %4999 = vmatprep.subr.mxu0 %v4839
    %5000 = vmatpush1.msra.mxu0 %v4838
    %5001 = vmatprep.subr.mxu0 %v4835
    %5002 = vmatpush1.msra.mxu0 %v4834
    %5003 = vmatprep.subr.mxu0 %v4831
    %5004 = vmatpush1.msra.mxu0 %v4830
    %5005 = vmatprep.subr.mxu0 %v4827
    %5006 = vmatpush1.msra.mxu0 %v4826
    %5007 = vmatprep.subr.mxu0 %v4823
    %5008 = vmatpush1.msra.mxu0 %v4822
    %5009 = vmatprep.subr.mxu0 %v4819
    %5010 = vmatpush1.msra.mxu0 %v4818
    %5011 = vmatprep.subr.mxu0 %v4815
    %5012 = vmatpush1.msra.mxu0 %v4814
    %5013 = vmatprep.subr.mxu0 %v4811
    %5014 = vmatpush1.msra.mxu0 %v4810
    %5015 = vmatprep.subr.mxu0 %v4807
    %5016 = vmatpush1.msra.mxu0 %v4806
    %5017 = vmatprep.subr.mxu0 %v4803
    %5018 = vmatpush1.msra.mxu0 %v4802
    %5019 = vmatprep.subr.mxu0 %v4799
    %5020 = vmatpush1.msra.mxu0 %v4798
    %5021 = vmatprep.subr.mxu0 %v4795
    %5022 = vmatpush1.msra.mxu0 %v4794
    %5023 = vmatprep.subr.mxu0 %v4919
    %5024 = vmatpush2.msra.mxu0 %v4918
    %5025 = vmatprep.subr.mxu0 %v4915
    %5026 = vmatpush2.msra.mxu0 %v4914
    %5027 = vmatprep.subr.mxu0 %v4911
    %5028 = vmatpush2.msra.mxu0 %v4910
    %5029 = vmatprep.subr.mxu0 %v4907
    %5030 = vmatpush2.msra.mxu0 %v4906
    %5031 = vmatprep.subr.mxu0 %v4903
    %5032 = vmatpush2.msra.mxu0 %v4902
    %5033 = vmatprep.subr.mxu0 %v4899
    %5034 = vmatpush2.msra.mxu0 %v4898
    %5035 = vmatprep.subr.mxu0 %v4895
    %5036 = vmatpush2.msra.mxu0 %v4894
    %5037 = vmatprep.subr.mxu0 %v4891
    %5038 = vmatpush2.msra.mxu0 %v4890
    %5039 = vmatprep.subr.mxu0 %v4887
    %5040 = vmatpush2.msra.mxu0 %v4886
    %5041 = vmatprep.subr.mxu0 %v4883
    %5042 = vmatpush2.msra.mxu0 %v4882
    %5043 = vmatprep.subr.mxu0 %v4879
    %5044 = vmatpush2.msra.mxu0 %v4878
    %5045 = vmatprep.subr.mxu0 %v4875
    %5046 = vmatpush2.msra.mxu0 %v4874
    %5047 = vmatprep.subr.mxu0 %v4871
    %5048 = vmatpush2.msra.mxu0 %v4870
    %5049 = vmatprep.subr.mxu0 %v4867
    %5050 = vmatpush2.msra.mxu0 %v4866
    %5051 = vmatprep.subr.mxu0 %v4863
    %5052 = vmatpush2.msra.mxu0 %v4862
    %5053 = vmatprep.subr.mxu0 %v4859
    %5054 = vmatpush2.msra.mxu0 %v4858
    %5055 = vmatprep.mubr.f32.mxu0 %v4317
    %5056 = vmatmul.mubr.f32.gmra.mxu0 %v4791
    %v5057 = vpop.f32.mrf.mxu0
    %v5058 = vadd.f32 %v123, %v5057
    %v5059 = vpop.f32.mrf.mxu0
    %v5060 = vadd.f32 %v127, %v5059
    %5061 = vdwg.mxu0
    %v5062 = vxor.u32 %v4987, 2147483648
    %v5063 = vmul.f32 %v5062, 1.442695
    %v5064 = vpow.pop %v5063
    %v5065 = vadd.f32 %v5064, 1.0
    %v5066 = vrcp.pop %v5065
    %v5067 = vmul.f32 1.0, %v5066
    %v5068 = vxor.u32 %v4989, 2147483648
    %v5069 = vmul.f32 %v5068, 1.442695
    %v5070 = vpow.pop %v5069
    %v5071 = vadd.f32 %v5070, 1.0
    %v5072 = vrcp.pop %v5071
    %v5073 = vmul.f32 1.0, %v5072
    %v5074 = vtanh.pop %v5058
    %v5075 = vxor.u32 %v5060, 2147483648
    %v5076 = vmul.f32 %v5075, 1.442695
    %v5077 = vpow.pop %v5076
    %v5078 = vadd.f32 %v5077, 1.0
    %v5079 = vrcp.pop %v5078
    %v5080 = vmul.f32 1.0, %v5079
    %v5081 = vmul.f32 %v5073, %v4315
    %v5082 = vmul.f32 %v5067, %v5074
    %v5083 = vadd.f32 %v5081, %v5082
    %v5084 = vtanh.pop %v5083
    %v5085 = vmul.f32 %v5080, %v5084
    %v5086 = vld [vmem:[%s1621] sm:$0x3]
    %v5087 = vld [vmem:[#allocation10] sm:$0xff]
    %v5088 = vld [vmem:[#allocation10 + $0x8] sm:$0xff]
    %v5089 = vld [vmem:[#allocation10 + $0x10] sm:$0xff]
    %v5090 = vld [vmem:[#allocation10 + $0x18] sm:$0xff]
    %v5091 = vld [vmem:[#allocation10 + $0x20] sm:$0xff]
    %v5092 = vld [vmem:[#allocation10 + $0x28] sm:$0xff]
    %v5093 = vld [vmem:[#allocation10 + $0x30] sm:$0xff]
    %v5094 = vld [vmem:[#allocation10 + $0x38] sm:$0xff]
    %v5095 = vld [vmem:[#allocation10 + $0x40] sm:$0xff]
    %v5096 = vld [vmem:[#allocation10 + $0x48] sm:$0xff]
    %v5097 = vld [vmem:[#allocation10 + $0x50] sm:$0xff]
    %v5098 = vld [vmem:[#allocation10 + $0x58] sm:$0xff]
    %v5099 = vld [vmem:[#allocation10 + $0x60] sm:$0xff]
    %v5100 = vld [vmem:[#allocation10 + $0x68] sm:$0xff]
    %v5101 = vld [vmem:[#allocation10 + $0x70] sm:$0xff]
    %v5102 = vld [vmem:[#allocation10 + $0x78] sm:$0xff]
    %5103 = vmatprep.subr.mxu0 0.0
    %5104 = vmatpush1.msra.mxu0 %v5102
    %5105 = vmatprep.subr.mxu0 0.0
    %5106 = vmatpush1.msra.mxu0 %v5101
    %5107 = vmatprep.subr.mxu0 0.0
    %5108 = vmatpush1.msra.mxu0 %v5100
    %5109 = vmatprep.subr.mxu0 0.0
    %5110 = vmatpush1.msra.mxu0 %v5099
    %5111 = vmatprep.subr.mxu0 0.0
    %5112 = vmatpush1.msra.mxu0 %v5098
    %5113 = vmatprep.subr.mxu0 0.0
    %5114 = vmatpush1.msra.mxu0 %v5097
    %5115 = vmatprep.subr.mxu0 0.0
    %5116 = vmatpush1.msra.mxu0 %v5096
    %5117 = vmatprep.subr.mxu0 0.0
    %5118 = vmatpush1.msra.mxu0 %v5095
    %5119 = vmatprep.subr.mxu0 0.0
    %5120 = vmatpush1.msra.mxu0 %v5094
    %5121 = vmatprep.subr.mxu0 0.0
    %5122 = vmatpush1.msra.mxu0 %v5093
    %5123 = vmatprep.subr.mxu0 0.0
    %5124 = vmatpush1.msra.mxu0 %v5092
    %5125 = vmatprep.subr.mxu0 0.0
    %5126 = vmatpush1.msra.mxu0 %v5091
    %5127 = vmatprep.subr.mxu0 0.0
    %5128 = vmatpush1.msra.mxu0 %v5090
    %5129 = vmatprep.subr.mxu0 0.0
    %5130 = vmatpush1.msra.mxu0 %v5089
    %5131 = vmatprep.subr.mxu0 0.0
    %5132 = vmatpush1.msra.mxu0 %v5088
    %5133 = vmatprep.subr.mxu0 0.0
    %5134 = vmatpush1.msra.mxu0 %v5087
    %5135 = vmatprep.subr.mxu0 0.0
    %5136 = vmatpush2.msra.mxu0 0.0
    %5137 = vmatprep.subr.mxu0 0.0
    %5138 = vmatpush2.msra.mxu0 0.0
    %5139 = vmatprep.subr.mxu0 0.0
    %5140 = vmatpush2.msra.mxu0 0.0
    %5141 = vmatprep.subr.mxu0 0.0
    %5142 = vmatpush2.msra.mxu0 0.0
    %5143 = vmatprep.subr.mxu0 0.0
    %5144 = vmatpush2.msra.mxu0 0.0
    %5145 = vmatprep.subr.mxu0 0.0
    %5146 = vmatpush2.msra.mxu0 0.0
    %5147 = vmatprep.subr.mxu0 0.0
    %5148 = vmatpush2.msra.mxu0 0.0
    %5149 = vmatprep.subr.mxu0 0.0
    %5150 = vmatpush2.msra.mxu0 0.0
    %5151 = vmatprep.subr.mxu0 0.0
    %5152 = vmatpush2.msra.mxu0 0.0
    %5153 = vmatprep.subr.mxu0 0.0
    %5154 = vmatpush2.msra.mxu0 0.0
    %5155 = vmatprep.subr.mxu0 0.0
    %5156 = vmatpush2.msra.mxu0 0.0
    %5157 = vmatprep.subr.mxu0 0.0
    %5158 = vmatpush2.msra.mxu0 0.0
    %5159 = vmatprep.subr.mxu0 0.0
    %5160 = vmatpush2.msra.mxu0 0.0
    %5161 = vmatprep.subr.mxu0 0.0
    %5162 = vmatpush2.msra.mxu0 0.0
    %5163 = vmatprep.subr.mxu0 0.0
    %5164 = vmatpush2.msra.mxu0 0.0
    %5165 = vmatprep.subr.mxu0 0.0
    %5166 = vmatpush2.msra.mxu0 0.0
    %5167 = vmatprep.mubr.f32.mxu0 0.0
    %5168 = vmatmul.mubr.f32.gmra.mxu0 %v5085
    %v5169 = vpop.f32.mrf.mxu0
    %v5170 = vadd.f32 0.0, %v5169
    %v5171 = vpop.f32.mrf.mxu0
    %5172 = vdwg.mxu0
    %v5173 = vadd.f32 %v5086, %v5170
    %5174 = vst [vmem:[%s1621] sm:$0x3] %v5173
    %v5175 = vld [vmem:[%s939] sm:$0x3]
    %v5176 = vld [vmem:[#allocation8] sm:$0xff]
    %v5177 = vld [vmem:[#allocation8 + $0x8] sm:$0xff]
    %v5178 = vld [vmem:[#allocation8 + $0x10] sm:$0xff]
    %v5179 = vld [vmem:[#allocation8 + $0x18] sm:$0xff]
    %v5180 = vld [vmem:[#allocation8 + $0x20] sm:$0xff]
    %v5181 = vld [vmem:[#allocation8 + $0x28] sm:$0xff]
    %v5182 = vld [vmem:[#allocation8 + $0x30] sm:$0xff]
    %v5183 = vld [vmem:[#allocation8 + $0x38] sm:$0xff]
    %v5184 = vld [vmem:[#allocation8 + $0x40] sm:$0xff]
    %v5185 = vld [vmem:[#allocation8 + $0x48] sm:$0xff]
    %v5186 = vld [vmem:[#allocation8 + $0x50] sm:$0xff]
    %v5187 = vld [vmem:[#allocation8 + $0x58] sm:$0xff]
    %v5188 = vld [vmem:[#allocation8 + $0x60] sm:$0xff]
    %v5189 = vld [vmem:[#allocation8 + $0x68] sm:$0xff]
    %v5190 = vld [vmem:[#allocation8 + $0x70] sm:$0xff]
    %v5191 = vld [vmem:[#allocation8 + $0x78] sm:$0xff]
    %v5192 = vld [vmem:[#allocation8 + $0x80] sm:$0xff]
    %v5193 = vld [vmem:[#allocation8 + $0x88] sm:$0xff]
    %v5194 = vld [vmem:[#allocation8 + $0x90] sm:$0xff]
    %v5195 = vld [vmem:[#allocation8 + $0x98] sm:$0xff]
    %v5196 = vld [vmem:[#allocation8 + $0xa0] sm:$0xff]
    %v5197 = vld [vmem:[#allocation8 + $0xa8] sm:$0xff]
    %v5198 = vld [vmem:[#allocation8 + $0xb0] sm:$0xff]
    %v5199 = vld [vmem:[#allocation8 + $0xb8] sm:$0xff]
    %v5200 = vld [vmem:[#allocation8 + $0xc0] sm:$0xff]
    %v5201 = vld [vmem:[#allocation8 + $0xc8] sm:$0xff]
    %v5202 = vld [vmem:[#allocation8 + $0xd0] sm:$0xff]
    %v5203 = vld [vmem:[#allocation8 + $0xd8] sm:$0xff]
    %v5204 = vld [vmem:[#allocation8 + $0xe0] sm:$0xff]
    %v5205 = vld [vmem:[#allocation8 + $0xe8] sm:$0xff]
    %v5206 = vld [vmem:[#allocation8 + $0xf0] sm:$0xff]
    %v5207 = vld [vmem:[#allocation8 + $0xf8] sm:$0xff]
    %v5208 = vld [vmem:[#allocation8 + $0x100] sm:$0xff]
    %v5209 = vld [vmem:[#allocation8 + $0x108] sm:$0xff]
    %v5210 = vld [vmem:[#allocation8 + $0x110] sm:$0xff]
    %v5211 = vld [vmem:[#allocation8 + $0x118] sm:$0xff]
    %v5212 = vld [vmem:[#allocation8 + $0x120] sm:$0xff]
    %v5213 = vld [vmem:[#allocation8 + $0x128] sm:$0xff]
    %v5214 = vld [vmem:[#allocation8 + $0x130] sm:$0xff]
    %v5215 = vld [vmem:[#allocation8 + $0x138] sm:$0xff]
    %v5216 = vld [vmem:[#allocation8 + $0x140] sm:$0xff]
    %v5217 = vld [vmem:[#allocation8 + $0x148] sm:$0xff]
    %v5218 = vld [vmem:[#allocation8 + $0x150] sm:$0xff]
    %v5219 = vld [vmem:[#allocation8 + $0x158] sm:$0xff]
    %v5220 = vld [vmem:[#allocation8 + $0x160] sm:$0xff]
    %v5221 = vld [vmem:[#allocation8 + $0x168] sm:$0xff]
    %v5222 = vld [vmem:[#allocation8 + $0x170] sm:$0xff]
    %v5223 = vld [vmem:[#allocation8 + $0x178] sm:$0xff]
    %v5224 = vld [vmem:[#allocation8 + $0x180] sm:$0xff]
    %v5225 = vld [vmem:[#allocation8 + $0x188] sm:$0xff]
    %v5226 = vld [vmem:[#allocation8 + $0x190] sm:$0xff]
    %v5227 = vld [vmem:[#allocation8 + $0x198] sm:$0xff]
    %v5228 = vld [vmem:[#allocation8 + $0x1a0] sm:$0xff]
    %v5229 = vld [vmem:[#allocation8 + $0x1a8] sm:$0xff]
    %v5230 = vld [vmem:[#allocation8 + $0x1b0] sm:$0xff]
    %v5231 = vld [vmem:[#allocation8 + $0x1b8] sm:$0xff]
    %v5232 = vld [vmem:[#allocation8 + $0x1c0] sm:$0xff]
    %v5233 = vld [vmem:[#allocation8 + $0x1c8] sm:$0xff]
    %v5234 = vld [vmem:[#allocation8 + $0x1d0] sm:$0xff]
    %v5235 = vld [vmem:[#allocation8 + $0x1d8] sm:$0xff]
    %v5236 = vld [vmem:[#allocation8 + $0x1e0] sm:$0xff]
    %v5237 = vld [vmem:[#allocation8 + $0x1e8] sm:$0xff]
    %v5238 = vld [vmem:[#allocation8 + $0x1f0] sm:$0xff]
    %v5239 = vld [vmem:[#allocation8 + $0x1f8] sm:$0xff]
    %v5240 = vld [vmem:[#allocation8 + $0x200] sm:$0xff]
    %v5241 = vld [vmem:[#allocation8 + $0x208] sm:$0xff]
    %v5242 = vld [vmem:[#allocation8 + $0x210] sm:$0xff]
    %v5243 = vld [vmem:[#allocation8 + $0x218] sm:$0xff]
    %v5244 = vld [vmem:[#allocation8 + $0x220] sm:$0xff]
    %v5245 = vld [vmem:[#allocation8 + $0x228] sm:$0xff]
    %v5246 = vld [vmem:[#allocation8 + $0x230] sm:$0xff]
    %v5247 = vld [vmem:[#allocation8 + $0x238] sm:$0xff]
    %v5248 = vld [vmem:[#allocation8 + $0x240] sm:$0xff]
    %v5249 = vld [vmem:[#allocation8 + $0x248] sm:$0xff]
    %v5250 = vld [vmem:[#allocation8 + $0x250] sm:$0xff]
    %v5251 = vld [vmem:[#allocation8 + $0x258] sm:$0xff]
    %v5252 = vld [vmem:[#allocation8 + $0x260] sm:$0xff]
    %v5253 = vld [vmem:[#allocation8 + $0x268] sm:$0xff]
    %v5254 = vld [vmem:[#allocation8 + $0x270] sm:$0xff]
    %v5255 = vld [vmem:[#allocation8 + $0x278] sm:$0xff]
    %v5256 = vld [vmem:[#allocation8 + $0x280] sm:$0xff]
    %v5257 = vld [vmem:[#allocation8 + $0x288] sm:$0xff]
    %v5258 = vld [vmem:[#allocation8 + $0x290] sm:$0xff]
    %v5259 = vld [vmem:[#allocation8 + $0x298] sm:$0xff]
    %v5260 = vld [vmem:[#allocation8 + $0x2a0] sm:$0xff]
    %v5261 = vld [vmem:[#allocation8 + $0x2a8] sm:$0xff]
    %v5262 = vld [vmem:[#allocation8 + $0x2b0] sm:$0xff]
    %v5263 = vld [vmem:[#allocation8 + $0x2b8] sm:$0xff]
    %v5264 = vld [vmem:[#allocation8 + $0x2c0] sm:$0xff]
    %v5265 = vld [vmem:[#allocation8 + $0x2c8] sm:$0xff]
    %v5266 = vld [vmem:[#allocation8 + $0x2d0] sm:$0xff]
    %v5267 = vld [vmem:[#allocation8 + $0x2d8] sm:$0xff]
    %v5268 = vld [vmem:[#allocation8 + $0x2e0] sm:$0xff]
    %v5269 = vld [vmem:[#allocation8 + $0x2e8] sm:$0xff]
    %v5270 = vld [vmem:[#allocation8 + $0x2f0] sm:$0xff]
    %v5271 = vld [vmem:[#allocation8 + $0x2f8] sm:$0xff]
    %v5272 = vld [vmem:[#allocation8 + $0x300] sm:$0xff]
    %v5273 = vld [vmem:[#allocation8 + $0x308] sm:$0xff]
    %v5274 = vld [vmem:[#allocation8 + $0x310] sm:$0xff]
    %v5275 = vld [vmem:[#allocation8 + $0x318] sm:$0xff]
    %v5276 = vld [vmem:[#allocation8 + $0x320] sm:$0xff]
    %v5277 = vld [vmem:[#allocation8 + $0x328] sm:$0xff]
    %v5278 = vld [vmem:[#allocation8 + $0x330] sm:$0xff]
    %v5279 = vld [vmem:[#allocation8 + $0x338] sm:$0xff]
    %v5280 = vld [vmem:[#allocation8 + $0x340] sm:$0xff]
    %v5281 = vld [vmem:[#allocation8 + $0x348] sm:$0xff]
    %v5282 = vld [vmem:[#allocation8 + $0x350] sm:$0xff]
    %v5283 = vld [vmem:[#allocation8 + $0x358] sm:$0xff]
    %v5284 = vld [vmem:[#allocation8 + $0x360] sm:$0xff]
    %v5285 = vld [vmem:[#allocation8 + $0x368] sm:$0xff]
    %v5286 = vld [vmem:[#allocation8 + $0x370] sm:$0xff]
    %v5287 = vld [vmem:[#allocation8 + $0x378] sm:$0xff]
    %v5288 = vld [vmem:[#allocation8 + $0x380] sm:$0xff]
    %v5289 = vld [vmem:[#allocation8 + $0x388] sm:$0xff]
    %v5290 = vld [vmem:[#allocation8 + $0x390] sm:$0xff]
    %v5291 = vld [vmem:[#allocation8 + $0x398] sm:$0xff]
    %v5292 = vld [vmem:[#allocation8 + $0x3a0] sm:$0xff]
    %v5293 = vld [vmem:[#allocation8 + $0x3a8] sm:$0xff]
    %v5294 = vld [vmem:[#allocation8 + $0x3b0] sm:$0xff]
    %v5295 = vld [vmem:[#allocation8 + $0x3b8] sm:$0xff]
    %v5296 = vld [vmem:[#allocation8 + $0x3c0] sm:$0xff]
    %v5297 = vld [vmem:[#allocation8 + $0x3c8] sm:$0xff]
    %v5298 = vld [vmem:[#allocation8 + $0x3d0] sm:$0xff]
    %v5299 = vld [vmem:[#allocation8 + $0x3d8] sm:$0xff]
    %v5300 = vld [vmem:[#allocation8 + $0x3e0] sm:$0xff]
    %v5301 = vld [vmem:[#allocation8 + $0x3e8] sm:$0xff]
    %v5302 = vld [vmem:[#allocation8 + $0x3f0] sm:$0xff]
    %v5303 = vld [vmem:[#allocation8 + $0x3f8] sm:$0xff]
    %5304 = vmatprep.subr.mxu0 %v5237
    %5305 = vmatpush1.msra.mxu0 %v5236
    %5306 = vmatprep.subr.mxu0 %v5233
    %5307 = vmatpush1.msra.mxu0 %v5232
    %5308 = vmatprep.subr.mxu0 %v5229
    %5309 = vmatpush1.msra.mxu0 %v5228
    %5310 = vmatprep.subr.mxu0 %v5225
    %5311 = vmatpush1.msra.mxu0 %v5224
    %5312 = vmatprep.subr.mxu0 %v5221
    %5313 = vmatpush1.msra.mxu0 %v5220
    %5314 = vmatprep.subr.mxu0 %v5217
    %5315 = vmatpush1.msra.mxu0 %v5216
    %5316 = vmatprep.subr.mxu0 %v5213
    %5317 = vmatpush1.msra.mxu0 %v5212
    %5318 = vmatprep.subr.mxu0 %v5209
    %5319 = vmatpush1.msra.mxu0 %v5208
    %5320 = vmatprep.subr.mxu0 %v5205
    %5321 = vmatpush1.msra.mxu0 %v5204
    %5322 = vmatprep.subr.mxu0 %v5201
    %5323 = vmatpush1.msra.mxu0 %v5200
    %5324 = vmatprep.subr.mxu0 %v5197
    %5325 = vmatpush1.msra.mxu0 %v5196
    %5326 = vmatprep.subr.mxu0 %v5193
    %5327 = vmatpush1.msra.mxu0 %v5192
    %5328 = vmatprep.subr.mxu0 %v5189
    %5329 = vmatpush1.msra.mxu0 %v5188
    %5330 = vmatprep.subr.mxu0 %v5185
    %5331 = vmatpush1.msra.mxu0 %v5184
    %5332 = vmatprep.subr.mxu0 %v5181
    %5333 = vmatpush1.msra.mxu0 %v5180
    %5334 = vmatprep.subr.mxu0 %v5177
    %5335 = vmatpush1.msra.mxu0 %v5176
    %5336 = vmatprep.subr.mxu0 %v5301
    %5337 = vmatpush2.msra.mxu0 %v5300
    %5338 = vmatprep.subr.mxu0 %v5297
    %5339 = vmatpush2.msra.mxu0 %v5296
    %5340 = vmatprep.subr.mxu0 %v5293
    %5341 = vmatpush2.msra.mxu0 %v5292
    %5342 = vmatprep.subr.mxu0 %v5289
    %5343 = vmatpush2.msra.mxu0 %v5288
    %5344 = vmatprep.subr.mxu0 %v5285
    %5345 = vmatpush2.msra.mxu0 %v5284
    %5346 = vmatprep.subr.mxu0 %v5281
    %5347 = vmatpush2.msra.mxu0 %v5280
    %5348 = vmatprep.subr.mxu0 %v5277
    %5349 = vmatpush2.msra.mxu0 %v5276
    %5350 = vmatprep.subr.mxu0 %v5273
    %5351 = vmatpush2.msra.mxu0 %v5272
    %5352 = vmatprep.subr.mxu0 %v5269
    %5353 = vmatpush2.msra.mxu0 %v5268
    %5354 = vmatprep.subr.mxu0 %v5265
    %5355 = vmatpush2.msra.mxu0 %v5264
    %5356 = vmatprep.subr.mxu0 %v5261
    %5357 = vmatpush2.msra.mxu0 %v5260
    %5358 = vmatprep.subr.mxu0 %v5257
    %5359 = vmatpush2.msra.mxu0 %v5256
    %5360 = vmatprep.subr.mxu0 %v5253
    %5361 = vmatpush2.msra.mxu0 %v5252
    %5362 = vmatprep.subr.mxu0 %v5249
    %5363 = vmatpush2.msra.mxu0 %v5248
    %5364 = vmatprep.subr.mxu0 %v5245
    %5365 = vmatpush2.msra.mxu0 %v5244
    %5366 = vmatprep.subr.mxu0 %v5241
    %5367 = vmatpush2.msra.mxu0 %v5240
    %5368 = vmatprep.mubr.f32.mxu0 %v4701
    %5369 = vmatmul.mubr.f32.gmra.mxu0 %v5175
    %v5370 = vpop.f32.mrf.mxu0
    %v5371 = vadd.f32 %v137, %v5370
    %v5372 = vpop.f32.mrf.mxu0
    %v5373 = vadd.f32 %v141, %v5372
    %5374 = vdwg.mxu0
    %5375 = vmatprep.subr.mxu0 %v5239
    %5376 = vmatpush1.msra.mxu0 %v5238
    %5377 = vmatprep.subr.mxu0 %v5235
    %5378 = vmatpush1.msra.mxu0 %v5234
    %5379 = vmatprep.subr.mxu0 %v5231
    %5380 = vmatpush1.msra.mxu0 %v5230
    %5381 = vmatprep.subr.mxu0 %v5227
    %5382 = vmatpush1.msra.mxu0 %v5226
    %5383 = vmatprep.subr.mxu0 %v5223
    %5384 = vmatpush1.msra.mxu0 %v5222
    %5385 = vmatprep.subr.mxu0 %v5219
    %5386 = vmatpush1.msra.mxu0 %v5218
    %5387 = vmatprep.subr.mxu0 %v5215
    %5388 = vmatpush1.msra.mxu0 %v5214
    %5389 = vmatprep.subr.mxu0 %v5211
    %5390 = vmatpush1.msra.mxu0 %v5210
    %5391 = vmatprep.subr.mxu0 %v5207
    %5392 = vmatpush1.msra.mxu0 %v5206
    %5393 = vmatprep.subr.mxu0 %v5203
    %5394 = vmatpush1.msra.mxu0 %v5202
    %5395 = vmatprep.subr.mxu0 %v5199
    %5396 = vmatpush1.msra.mxu0 %v5198
    %5397 = vmatprep.subr.mxu0 %v5195
    %5398 = vmatpush1.msra.mxu0 %v5194
    %5399 = vmatprep.subr.mxu0 %v5191
    %5400 = vmatpush1.msra.mxu0 %v5190
    %5401 = vmatprep.subr.mxu0 %v5187
    %5402 = vmatpush1.msra.mxu0 %v5186
    %5403 = vmatprep.subr.mxu0 %v5183
    %5404 = vmatpush1.msra.mxu0 %v5182
    %5405 = vmatprep.subr.mxu0 %v5179
    %5406 = vmatpush1.msra.mxu0 %v5178
    %5407 = vmatprep.subr.mxu0 %v5303
    %5408 = vmatpush2.msra.mxu0 %v5302
    %5409 = vmatprep.subr.mxu0 %v5299
    %5410 = vmatpush2.msra.mxu0 %v5298
    %5411 = vmatprep.subr.mxu0 %v5295
    %5412 = vmatpush2.msra.mxu0 %v5294
    %5413 = vmatprep.subr.mxu0 %v5291
    %5414 = vmatpush2.msra.mxu0 %v5290
    %5415 = vmatprep.subr.mxu0 %v5287
    %5416 = vmatpush2.msra.mxu0 %v5286
    %5417 = vmatprep.subr.mxu0 %v5283
    %5418 = vmatpush2.msra.mxu0 %v5282
    %5419 = vmatprep.subr.mxu0 %v5279
    %5420 = vmatpush2.msra.mxu0 %v5278
    %5421 = vmatprep.subr.mxu0 %v5275
    %5422 = vmatpush2.msra.mxu0 %v5274
    %5423 = vmatprep.subr.mxu0 %v5271
    %5424 = vmatpush2.msra.mxu0 %v5270
    %5425 = vmatprep.subr.mxu0 %v5267
    %5426 = vmatpush2.msra.mxu0 %v5266
    %5427 = vmatprep.subr.mxu0 %v5263
    %5428 = vmatpush2.msra.mxu0 %v5262
    %5429 = vmatprep.subr.mxu0 %v5259
    %5430 = vmatpush2.msra.mxu0 %v5258
    %5431 = vmatprep.subr.mxu0 %v5255
    %5432 = vmatpush2.msra.mxu0 %v5254
    %5433 = vmatprep.subr.mxu0 %v5251
    %5434 = vmatpush2.msra.mxu0 %v5250
    %5435 = vmatprep.subr.mxu0 %v5247
    %5436 = vmatpush2.msra.mxu0 %v5246
    %5437 = vmatprep.subr.mxu0 %v5243
    %5438 = vmatpush2.msra.mxu0 %v5242
    %5439 = vmatprep.mubr.f32.mxu0 %v4701
    %5440 = vmatmul.mubr.f32.gmra.mxu0 %v5175
    %v5441 = vpop.f32.mrf.mxu0
    %v5442 = vadd.f32 %v145, %v5441
    %v5443 = vpop.f32.mrf.mxu0
    %v5444 = vadd.f32 %v149, %v5443
    %5445 = vdwg.mxu0
    %v5446 = vxor.u32 %v5371, 2147483648
    %v5447 = vmul.f32 %v5446, 1.442695
    %v5448 = vpow.pop %v5447
    %v5449 = vadd.f32 %v5448, 1.0
    %v5450 = vrcp.pop %v5449
    %v5451 = vmul.f32 1.0, %v5450
    %v5452 = vxor.u32 %v5373, 2147483648
    %v5453 = vmul.f32 %v5452, 1.442695
    %v5454 = vpow.pop %v5453
    %v5455 = vadd.f32 %v5454, 1.0
    %v5456 = vrcp.pop %v5455
    %v5457 = vmul.f32 1.0, %v5456
    %v5458 = vtanh.pop %v5442
    %v5459 = vxor.u32 %v5444, 2147483648
    %v5460 = vmul.f32 %v5459, 1.442695
    %v5461 = vpow.pop %v5460
    %v5462 = vadd.f32 %v5461, 1.0
    %v5463 = vrcp.pop %v5462
    %v5464 = vmul.f32 1.0, %v5463
    %v5465 = vmul.f32 %v5457, %v4699
    %v5466 = vmul.f32 %v5451, %v5458
    %v5467 = vadd.f32 %v5465, %v5466
    %v5468 = vtanh.pop %v5467
    %v5469 = vmul.f32 %v5464, %v5468
    %v5470 = vld [vmem:[%s1235] sm:$0x3]
    %v5471 = vld [vmem:[#allocation11] sm:$0xff]
    %v5472 = vld [vmem:[#allocation11 + $0x8] sm:$0xff]
    %v5473 = vld [vmem:[#allocation11 + $0x10] sm:$0xff]
    %v5474 = vld [vmem:[#allocation11 + $0x18] sm:$0xff]
    %v5475 = vld [vmem:[#allocation11 + $0x20] sm:$0xff]
    %v5476 = vld [vmem:[#allocation11 + $0x28] sm:$0xff]
    %v5477 = vld [vmem:[#allocation11 + $0x30] sm:$0xff]
    %v5478 = vld [vmem:[#allocation11 + $0x38] sm:$0xff]
    %v5479 = vld [vmem:[#allocation11 + $0x40] sm:$0xff]
    %v5480 = vld [vmem:[#allocation11 + $0x48] sm:$0xff]
    %v5481 = vld [vmem:[#allocation11 + $0x50] sm:$0xff]
    %v5482 = vld [vmem:[#allocation11 + $0x58] sm:$0xff]
    %v5483 = vld [vmem:[#allocation11 + $0x60] sm:$0xff]
    %v5484 = vld [vmem:[#allocation11 + $0x68] sm:$0xff]
    %v5485 = vld [vmem:[#allocation11 + $0x70] sm:$0xff]
    %v5486 = vld [vmem:[#allocation11 + $0x78] sm:$0xff]
    %5487 = vmatprep.subr.mxu0 0.0
    %5488 = vmatpush1.msra.mxu0 %v5486
    %5489 = vmatprep.subr.mxu0 0.0
    %5490 = vmatpush1.msra.mxu0 %v5485
    %5491 = vmatprep.subr.mxu0 0.0
    %5492 = vmatpush1.msra.mxu0 %v5484
    %5493 = vmatprep.subr.mxu0 0.0
    %5494 = vmatpush1.msra.mxu0 %v5483
    %5495 = vmatprep.subr.mxu0 0.0
    %5496 = vmatpush1.msra.mxu0 %v5482
    %5497 = vmatprep.subr.mxu0 0.0
    %5498 = vmatpush1.msra.mxu0 %v5481
    %5499 = vmatprep.subr.mxu0 0.0
    %5500 = vmatpush1.msra.mxu0 %v5480
    %5501 = vmatprep.subr.mxu0 0.0
    %5502 = vmatpush1.msra.mxu0 %v5479
    %5503 = vmatprep.subr.mxu0 0.0
    %5504 = vmatpush1.msra.mxu0 %v5478
    %5505 = vmatprep.subr.mxu0 0.0
    %5506 = vmatpush1.msra.mxu0 %v5477
    %5507 = vmatprep.subr.mxu0 0.0
    %5508 = vmatpush1.msra.mxu0 %v5476
    %5509 = vmatprep.subr.mxu0 0.0
    %5510 = vmatpush1.msra.mxu0 %v5475
    %5511 = vmatprep.subr.mxu0 0.0
    %5512 = vmatpush1.msra.mxu0 %v5474
    %5513 = vmatprep.subr.mxu0 0.0
    %5514 = vmatpush1.msra.mxu0 %v5473
    %5515 = vmatprep.subr.mxu0 0.0
    %5516 = vmatpush1.msra.mxu0 %v5472
    %5517 = vmatprep.subr.mxu0 0.0
    %5518 = vmatpush1.msra.mxu0 %v5471
    %5519 = vmatprep.subr.mxu0 0.0
    %5520 = vmatpush2.msra.mxu0 0.0
    %5521 = vmatprep.subr.mxu0 0.0
    %5522 = vmatpush2.msra.mxu0 0.0
    %5523 = vmatprep.subr.mxu0 0.0
    %5524 = vmatpush2.msra.mxu0 0.0
    %5525 = vmatprep.subr.mxu0 0.0
    %5526 = vmatpush2.msra.mxu0 0.0
    %5527 = vmatprep.subr.mxu0 0.0
    %5528 = vmatpush2.msra.mxu0 0.0
    %5529 = vmatprep.subr.mxu0 0.0
    %5530 = vmatpush2.msra.mxu0 0.0
    %5531 = vmatprep.subr.mxu0 0.0
    %5532 = vmatpush2.msra.mxu0 0.0
    %5533 = vmatprep.subr.mxu0 0.0
    %5534 = vmatpush2.msra.mxu0 0.0
    %5535 = vmatprep.subr.mxu0 0.0
    %5536 = vmatpush2.msra.mxu0 0.0
    %5537 = vmatprep.subr.mxu0 0.0
    %5538 = vmatpush2.msra.mxu0 0.0
    %5539 = vmatprep.subr.mxu0 0.0
    %5540 = vmatpush2.msra.mxu0 0.0
    %5541 = vmatprep.subr.mxu0 0.0
    %5542 = vmatpush2.msra.mxu0 0.0
    %5543 = vmatprep.subr.mxu0 0.0
    %5544 = vmatpush2.msra.mxu0 0.0
    %5545 = vmatprep.subr.mxu0 0.0
    %5546 = vmatpush2.msra.mxu0 0.0
    %5547 = vmatprep.subr.mxu0 0.0
    %5548 = vmatpush2.msra.mxu0 0.0
    %5549 = vmatprep.subr.mxu0 0.0
    %5550 = vmatpush2.msra.mxu0 0.0
    %5551 = vmatprep.mubr.f32.mxu0 0.0
    %5552 = vmatmul.mubr.f32.gmra.mxu0 %v5469
    %v5553 = vpop.f32.mrf.mxu0
    %v5554 = vadd.f32 0.0, %v5553
    %v5555 = vpop.f32.mrf.mxu0
    %5556 = vdwg.mxu0
    %v5557 = vadd.f32 %v5470, %v5554
    %5558 = vst [vmem:[%s1235] sm:$0x3] %v5557
    %v5559 = vld [vmem:[%s553] sm:$0x3]
    %v5560 = vld [vmem:[#allocation5] sm:$0xff]
    %v5561 = vld [vmem:[#allocation5 + $0x8] sm:$0xff]
    %v5562 = vld [vmem:[#allocation5 + $0x10] sm:$0xff]
    %v5563 = vld [vmem:[#allocation5 + $0x18] sm:$0xff]
    %v5564 = vld [vmem:[#allocation5 + $0x20] sm:$0xff]
    %v5565 = vld [vmem:[#allocation5 + $0x28] sm:$0xff]
    %v5566 = vld [vmem:[#allocation5 + $0x30] sm:$0xff]
    %v5567 = vld [vmem:[#allocation5 + $0x38] sm:$0xff]
    %v5568 = vld [vmem:[#allocation5 + $0x40] sm:$0xff]
    %v5569 = vld [vmem:[#allocation5 + $0x48] sm:$0xff]
    %v5570 = vld [vmem:[#allocation5 + $0x50] sm:$0xff]
    %v5571 = vld [vmem:[#allocation5 + $0x58] sm:$0xff]
    %v5572 = vld [vmem:[#allocation5 + $0x60] sm:$0xff]
    %v5573 = vld [vmem:[#allocation5 + $0x68] sm:$0xff]
    %v5574 = vld [vmem:[#allocation5 + $0x70] sm:$0xff]
    %v5575 = vld [vmem:[#allocation5 + $0x78] sm:$0xff]
    %v5576 = vld [vmem:[#allocation5 + $0x80] sm:$0xff]
    %v5577 = vld [vmem:[#allocation5 + $0x88] sm:$0xff]
    %v5578 = vld [vmem:[#allocation5 + $0x90] sm:$0xff]
    %v5579 = vld [vmem:[#allocation5 + $0x98] sm:$0xff]
    %v5580 = vld [vmem:[#allocation5 + $0xa0] sm:$0xff]
    %v5581 = vld [vmem:[#allocation5 + $0xa8] sm:$0xff]
    %v5582 = vld [vmem:[#allocation5 + $0xb0] sm:$0xff]
    %v5583 = vld [vmem:[#allocation5 + $0xb8] sm:$0xff]
    %v5584 = vld [vmem:[#allocation5 + $0xc0] sm:$0xff]
    %v5585 = vld [vmem:[#allocation5 + $0xc8] sm:$0xff]
    %v5586 = vld [vmem:[#allocation5 + $0xd0] sm:$0xff]
    %v5587 = vld [vmem:[#allocation5 + $0xd8] sm:$0xff]
    %v5588 = vld [vmem:[#allocation5 + $0xe0] sm:$0xff]
    %v5589 = vld [vmem:[#allocation5 + $0xe8] sm:$0xff]
    %v5590 = vld [vmem:[#allocation5 + $0xf0] sm:$0xff]
    %v5591 = vld [vmem:[#allocation5 + $0xf8] sm:$0xff]
    %v5592 = vld [vmem:[#allocation5 + $0x100] sm:$0xff]
    %v5593 = vld [vmem:[#allocation5 + $0x108] sm:$0xff]
    %v5594 = vld [vmem:[#allocation5 + $0x110] sm:$0xff]
    %v5595 = vld [vmem:[#allocation5 + $0x118] sm:$0xff]
    %v5596 = vld [vmem:[#allocation5 + $0x120] sm:$0xff]
    %v5597 = vld [vmem:[#allocation5 + $0x128] sm:$0xff]
    %v5598 = vld [vmem:[#allocation5 + $0x130] sm:$0xff]
    %v5599 = vld [vmem:[#allocation5 + $0x138] sm:$0xff]
    %v5600 = vld [vmem:[#allocation5 + $0x140] sm:$0xff]
    %v5601 = vld [vmem:[#allocation5 + $0x148] sm:$0xff]
    %v5602 = vld [vmem:[#allocation5 + $0x150] sm:$0xff]
    %v5603 = vld [vmem:[#allocation5 + $0x158] sm:$0xff]
    %v5604 = vld [vmem:[#allocation5 + $0x160] sm:$0xff]
    %v5605 = vld [vmem:[#allocation5 + $0x168] sm:$0xff]
    %v5606 = vld [vmem:[#allocation5 + $0x170] sm:$0xff]
    %v5607 = vld [vmem:[#allocation5 + $0x178] sm:$0xff]
    %v5608 = vld [vmem:[#allocation5 + $0x180] sm:$0xff]
    %v5609 = vld [vmem:[#allocation5 + $0x188] sm:$0xff]
    %v5610 = vld [vmem:[#allocation5 + $0x190] sm:$0xff]
    %v5611 = vld [vmem:[#allocation5 + $0x198] sm:$0xff]
    %v5612 = vld [vmem:[#allocation5 + $0x1a0] sm:$0xff]
    %v5613 = vld [vmem:[#allocation5 + $0x1a8] sm:$0xff]
    %v5614 = vld [vmem:[#allocation5 + $0x1b0] sm:$0xff]
    %v5615 = vld [vmem:[#allocation5 + $0x1b8] sm:$0xff]
    %v5616 = vld [vmem:[#allocation5 + $0x1c0] sm:$0xff]
    %v5617 = vld [vmem:[#allocation5 + $0x1c8] sm:$0xff]
    %v5618 = vld [vmem:[#allocation5 + $0x1d0] sm:$0xff]
    %v5619 = vld [vmem:[#allocation5 + $0x1d8] sm:$0xff]
    %v5620 = vld [vmem:[#allocation5 + $0x1e0] sm:$0xff]
    %v5621 = vld [vmem:[#allocation5 + $0x1e8] sm:$0xff]
    %v5622 = vld [vmem:[#allocation5 + $0x1f0] sm:$0xff]
    %v5623 = vld [vmem:[#allocation5 + $0x1f8] sm:$0xff]
    %v5624 = vld [vmem:[#allocation5 + $0x200] sm:$0xff]
    %v5625 = vld [vmem:[#allocation5 + $0x208] sm:$0xff]
    %v5626 = vld [vmem:[#allocation5 + $0x210] sm:$0xff]
    %v5627 = vld [vmem:[#allocation5 + $0x218] sm:$0xff]
    %v5628 = vld [vmem:[#allocation5 + $0x220] sm:$0xff]
    %v5629 = vld [vmem:[#allocation5 + $0x228] sm:$0xff]
    %v5630 = vld [vmem:[#allocation5 + $0x230] sm:$0xff]
    %v5631 = vld [vmem:[#allocation5 + $0x238] sm:$0xff]
    %v5632 = vld [vmem:[#allocation5 + $0x240] sm:$0xff]
    %v5633 = vld [vmem:[#allocation5 + $0x248] sm:$0xff]
    %v5634 = vld [vmem:[#allocation5 + $0x250] sm:$0xff]
    %v5635 = vld [vmem:[#allocation5 + $0x258] sm:$0xff]
    %v5636 = vld [vmem:[#allocation5 + $0x260] sm:$0xff]
    %v5637 = vld [vmem:[#allocation5 + $0x268] sm:$0xff]
    %v5638 = vld [vmem:[#allocation5 + $0x270] sm:$0xff]
    %v5639 = vld [vmem:[#allocation5 + $0x278] sm:$0xff]
    %v5640 = vld [vmem:[#allocation5 + $0x280] sm:$0xff]
    %v5641 = vld [vmem:[#allocation5 + $0x288] sm:$0xff]
    %v5642 = vld [vmem:[#allocation5 + $0x290] sm:$0xff]
    %v5643 = vld [vmem:[#allocation5 + $0x298] sm:$0xff]
    %v5644 = vld [vmem:[#allocation5 + $0x2a0] sm:$0xff]
    %v5645 = vld [vmem:[#allocation5 + $0x2a8] sm:$0xff]
    %v5646 = vld [vmem:[#allocation5 + $0x2b0] sm:$0xff]
    %v5647 = vld [vmem:[#allocation5 + $0x2b8] sm:$0xff]
    %v5648 = vld [vmem:[#allocation5 + $0x2c0] sm:$0xff]
    %v5649 = vld [vmem:[#allocation5 + $0x2c8] sm:$0xff]
    %v5650 = vld [vmem:[#allocation5 + $0x2d0] sm:$0xff]
    %v5651 = vld [vmem:[#allocation5 + $0x2d8] sm:$0xff]
    %v5652 = vld [vmem:[#allocation5 + $0x2e0] sm:$0xff]
    %v5653 = vld [vmem:[#allocation5 + $0x2e8] sm:$0xff]
    %v5654 = vld [vmem:[#allocation5 + $0x2f0] sm:$0xff]
    %v5655 = vld [vmem:[#allocation5 + $0x2f8] sm:$0xff]
    %v5656 = vld [vmem:[#allocation5 + $0x300] sm:$0xff]
    %v5657 = vld [vmem:[#allocation5 + $0x308] sm:$0xff]
    %v5658 = vld [vmem:[#allocation5 + $0x310] sm:$0xff]
    %v5659 = vld [vmem:[#allocation5 + $0x318] sm:$0xff]
    %v5660 = vld [vmem:[#allocation5 + $0x320] sm:$0xff]
    %v5661 = vld [vmem:[#allocation5 + $0x328] sm:$0xff]
    %v5662 = vld [vmem:[#allocation5 + $0x330] sm:$0xff]
    %v5663 = vld [vmem:[#allocation5 + $0x338] sm:$0xff]
    %v5664 = vld [vmem:[#allocation5 + $0x340] sm:$0xff]
    %v5665 = vld [vmem:[#allocation5 + $0x348] sm:$0xff]
    %v5666 = vld [vmem:[#allocation5 + $0x350] sm:$0xff]
    %v5667 = vld [vmem:[#allocation5 + $0x358] sm:$0xff]
    %v5668 = vld [vmem:[#allocation5 + $0x360] sm:$0xff]
    %v5669 = vld [vmem:[#allocation5 + $0x368] sm:$0xff]
    %v5670 = vld [vmem:[#allocation5 + $0x370] sm:$0xff]
    %v5671 = vld [vmem:[#allocation5 + $0x378] sm:$0xff]
    %v5672 = vld [vmem:[#allocation5 + $0x380] sm:$0xff]
    %v5673 = vld [vmem:[#allocation5 + $0x388] sm:$0xff]
    %v5674 = vld [vmem:[#allocation5 + $0x390] sm:$0xff]
    %v5675 = vld [vmem:[#allocation5 + $0x398] sm:$0xff]
    %v5676 = vld [vmem:[#allocation5 + $0x3a0] sm:$0xff]
    %v5677 = vld [vmem:[#allocation5 + $0x3a8] sm:$0xff]
    %v5678 = vld [vmem:[#allocation5 + $0x3b0] sm:$0xff]
    %v5679 = vld [vmem:[#allocation5 + $0x3b8] sm:$0xff]
    %v5680 = vld [vmem:[#allocation5 + $0x3c0] sm:$0xff]
    %v5681 = vld [vmem:[#allocation5 + $0x3c8] sm:$0xff]
    %v5682 = vld [vmem:[#allocation5 + $0x3d0] sm:$0xff]
    %v5683 = vld [vmem:[#allocation5 + $0x3d8] sm:$0xff]
    %v5684 = vld [vmem:[#allocation5 + $0x3e0] sm:$0xff]
    %v5685 = vld [vmem:[#allocation5 + $0x3e8] sm:$0xff]
    %v5686 = vld [vmem:[#allocation5 + $0x3f0] sm:$0xff]
    %v5687 = vld [vmem:[#allocation5 + $0x3f8] sm:$0xff]
    %5688 = vmatprep.subr.mxu0 %v5621
    %5689 = vmatpush1.msra.mxu0 %v5620
    %5690 = vmatprep.subr.mxu0 %v5617
    %5691 = vmatpush1.msra.mxu0 %v5616
    %5692 = vmatprep.subr.mxu0 %v5613
    %5693 = vmatpush1.msra.mxu0 %v5612
    %5694 = vmatprep.subr.mxu0 %v5609
    %5695 = vmatpush1.msra.mxu0 %v5608
    %5696 = vmatprep.subr.mxu0 %v5605
    %5697 = vmatpush1.msra.mxu0 %v5604
    %5698 = vmatprep.subr.mxu0 %v5601
    %5699 = vmatpush1.msra.mxu0 %v5600
    %5700 = vmatprep.subr.mxu0 %v5597
    %5701 = vmatpush1.msra.mxu0 %v5596
    %5702 = vmatprep.subr.mxu0 %v5593
    %5703 = vmatpush1.msra.mxu0 %v5592
    %5704 = vmatprep.subr.mxu0 %v5589
    %5705 = vmatpush1.msra.mxu0 %v5588
    %5706 = vmatprep.subr.mxu0 %v5585
    %5707 = vmatpush1.msra.mxu0 %v5584
    %5708 = vmatprep.subr.mxu0 %v5581
    %5709 = vmatpush1.msra.mxu0 %v5580
    %5710 = vmatprep.subr.mxu0 %v5577
    %5711 = vmatpush1.msra.mxu0 %v5576
    %5712 = vmatprep.subr.mxu0 %v5573
    %5713 = vmatpush1.msra.mxu0 %v5572
    %5714 = vmatprep.subr.mxu0 %v5569
    %5715 = vmatpush1.msra.mxu0 %v5568
    %5716 = vmatprep.subr.mxu0 %v5565
    %5717 = vmatpush1.msra.mxu0 %v5564
    %5718 = vmatprep.subr.mxu0 %v5561
    %5719 = vmatpush1.msra.mxu0 %v5560
    %5720 = vmatprep.subr.mxu0 %v5685
    %5721 = vmatpush2.msra.mxu0 %v5684
    %5722 = vmatprep.subr.mxu0 %v5681
    %5723 = vmatpush2.msra.mxu0 %v5680
    %5724 = vmatprep.subr.mxu0 %v5677
    %5725 = vmatpush2.msra.mxu0 %v5676
    %5726 = vmatprep.subr.mxu0 %v5673
    %5727 = vmatpush2.msra.mxu0 %v5672
    %5728 = vmatprep.subr.mxu0 %v5669
    %5729 = vmatpush2.msra.mxu0 %v5668
    %5730 = vmatprep.subr.mxu0 %v5665
    %5731 = vmatpush2.msra.mxu0 %v5664
    %5732 = vmatprep.subr.mxu0 %v5661
    %5733 = vmatpush2.msra.mxu0 %v5660
    %5734 = vmatprep.subr.mxu0 %v5657
    %5735 = vmatpush2.msra.mxu0 %v5656
    %5736 = vmatprep.subr.mxu0 %v5653
    %5737 = vmatpush2.msra.mxu0 %v5652
    %5738 = vmatprep.subr.mxu0 %v5649
    %5739 = vmatpush2.msra.mxu0 %v5648
    %5740 = vmatprep.subr.mxu0 %v5645
    %5741 = vmatpush2.msra.mxu0 %v5644
    %5742 = vmatprep.subr.mxu0 %v5641
    %5743 = vmatpush2.msra.mxu0 %v5640
    %5744 = vmatprep.subr.mxu0 %v5637
    %5745 = vmatpush2.msra.mxu0 %v5636
    %5746 = vmatprep.subr.mxu0 %v5633
    %5747 = vmatpush2.msra.mxu0 %v5632
    %5748 = vmatprep.subr.mxu0 %v5629
    %5749 = vmatpush2.msra.mxu0 %v5628
    %5750 = vmatprep.subr.mxu0 %v5625
    %5751 = vmatpush2.msra.mxu0 %v5624
    %5752 = vmatprep.mubr.f32.mxu0 %v5085
    %5753 = vmatmul.mubr.f32.gmra.mxu0 %v5559
    %v5754 = vpop.f32.mrf.mxu0
    %v5755 = vadd.f32 %v115, %v5754
    %v5756 = vpop.f32.mrf.mxu0
    %v5757 = vadd.f32 %v119, %v5756
    %5758 = vdwg.mxu0
    %5759 = vmatprep.subr.mxu0 %v5623
    %5760 = vmatpush1.msra.mxu0 %v5622
    %5761 = vmatprep.subr.mxu0 %v5619
    %5762 = vmatpush1.msra.mxu0 %v5618
    %5763 = vmatprep.subr.mxu0 %v5615
    %5764 = vmatpush1.msra.mxu0 %v5614
    %5765 = vmatprep.subr.mxu0 %v5611
    %5766 = vmatpush1.msra.mxu0 %v5610
    %5767 = vmatprep.subr.mxu0 %v5607
    %5768 = vmatpush1.msra.mxu0 %v5606
    %5769 = vmatprep.subr.mxu0 %v5603
    %5770 = vmatpush1.msra.mxu0 %v5602
    %5771 = vmatprep.subr.mxu0 %v5599
    %5772 = vmatpush1.msra.mxu0 %v5598
    %5773 = vmatprep.subr.mxu0 %v5595
    %5774 = vmatpush1.msra.mxu0 %v5594
    %5775 = vmatprep.subr.mxu0 %v5591
    %5776 = vmatpush1.msra.mxu0 %v5590
    %5777 = vmatprep.subr.mxu0 %v5587
    %5778 = vmatpush1.msra.mxu0 %v5586
    %5779 = vmatprep.subr.mxu0 %v5583
    %5780 = vmatpush1.msra.mxu0 %v5582
    %5781 = vmatprep.subr.mxu0 %v5579
    %5782 = vmatpush1.msra.mxu0 %v5578
    %5783 = vmatprep.subr.mxu0 %v5575
    %5784 = vmatpush1.msra.mxu0 %v5574
    %5785 = vmatprep.subr.mxu0 %v5571
    %5786 = vmatpush1.msra.mxu0 %v5570
    %5787 = vmatprep.subr.mxu0 %v5567
    %5788 = vmatpush1.msra.mxu0 %v5566
    %5789 = vmatprep.subr.mxu0 %v5563
    %5790 = vmatpush1.msra.mxu0 %v5562
    %5791 = vmatprep.subr.mxu0 %v5687
    %5792 = vmatpush2.msra.mxu0 %v5686
    %5793 = vmatprep.subr.mxu0 %v5683
    %5794 = vmatpush2.msra.mxu0 %v5682
    %5795 = vmatprep.subr.mxu0 %v5679
    %5796 = vmatpush2.msra.mxu0 %v5678
    %5797 = vmatprep.subr.mxu0 %v5675
    %5798 = vmatpush2.msra.mxu0 %v5674
    %5799 = vmatprep.subr.mxu0 %v5671
    %5800 = vmatpush2.msra.mxu0 %v5670
    %5801 = vmatprep.subr.mxu0 %v5667
    %5802 = vmatpush2.msra.mxu0 %v5666
    %5803 = vmatprep.subr.mxu0 %v5663
    %5804 = vmatpush2.msra.mxu0 %v5662
    %5805 = vmatprep.subr.mxu0 %v5659
    %5806 = vmatpush2.msra.mxu0 %v5658
    %5807 = vmatprep.subr.mxu0 %v5655
    %5808 = vmatpush2.msra.mxu0 %v5654
    %5809 = vmatprep.subr.mxu0 %v5651
    %5810 = vmatpush2.msra.mxu0 %v5650
    %5811 = vmatprep.subr.mxu0 %v5647
    %5812 = vmatpush2.msra.mxu0 %v5646
    %5813 = vmatprep.subr.mxu0 %v5643
    %5814 = vmatpush2.msra.mxu0 %v5642
    %5815 = vmatprep.subr.mxu0 %v5639
    %5816 = vmatpush2.msra.mxu0 %v5638
    %5817 = vmatprep.subr.mxu0 %v5635
    %5818 = vmatpush2.msra.mxu0 %v5634
    %5819 = vmatprep.subr.mxu0 %v5631
    %5820 = vmatpush2.msra.mxu0 %v5630
    %5821 = vmatprep.subr.mxu0 %v5627
    %5822 = vmatpush2.msra.mxu0 %v5626
    %5823 = vmatprep.mubr.f32.mxu0 %v5085
    %5824 = vmatmul.mubr.f32.gmra.mxu0 %v5559
    %v5825 = vpop.f32.mrf.mxu0
    %v5826 = vadd.f32 %v123, %v5825
    %v5827 = vpop.f32.mrf.mxu0
    %v5828 = vadd.f32 %v127, %v5827
    %5829 = vdwg.mxu0
    %v5830 = vxor.u32 %v5755, 2147483648
    %v5831 = vmul.f32 %v5830, 1.442695
    %v5832 = vpow.pop %v5831
    %v5833 = vadd.f32 %v5832, 1.0
    %v5834 = vrcp.pop %v5833
    %v5835 = vmul.f32 1.0, %v5834
    %v5836 = vxor.u32 %v5757, 2147483648
    %v5837 = vmul.f32 %v5836, 1.442695
    %v5838 = vpow.pop %v5837
    %v5839 = vadd.f32 %v5838, 1.0
    %v5840 = vrcp.pop %v5839
    %v5841 = vmul.f32 1.0, %v5840
    %v5842 = vtanh.pop %v5826
    %v5843 = vxor.u32 %v5828, 2147483648
    %v5844 = vmul.f32 %v5843, 1.442695
    %v5845 = vpow.pop %v5844
    %v5846 = vadd.f32 %v5845, 1.0
    %v5847 = vrcp.pop %v5846
    %v5848 = vmul.f32 1.0, %v5847
    %v5849 = vmul.f32 %v5841, %v5083
    %v5850 = vmul.f32 %v5835, %v5842
    %v5851 = vadd.f32 %v5849, %v5850
    %v5852 = vtanh.pop %v5851
    %v5853 = vmul.f32 %v5848, %v5852
    %v5854 = vld [vmem:[%s849] sm:$0x3]
    %v5855 = vld [vmem:[#allocation10] sm:$0xff]
    %v5856 = vld [vmem:[#allocation10 + $0x8] sm:$0xff]
    %v5857 = vld [vmem:[#allocation10 + $0x10] sm:$0xff]
    %v5858 = vld [vmem:[#allocation10 + $0x18] sm:$0xff]
    %v5859 = vld [vmem:[#allocation10 + $0x20] sm:$0xff]
    %v5860 = vld [vmem:[#allocation10 + $0x28] sm:$0xff]
    %v5861 = vld [vmem:[#allocation10 + $0x30] sm:$0xff]
    %v5862 = vld [vmem:[#allocation10 + $0x38] sm:$0xff]
    %v5863 = vld [vmem:[#allocation10 + $0x40] sm:$0xff]
    %v5864 = vld [vmem:[#allocation10 + $0x48] sm:$0xff]
    %v5865 = vld [vmem:[#allocation10 + $0x50] sm:$0xff]
    %v5866 = vld [vmem:[#allocation10 + $0x58] sm:$0xff]
    %v5867 = vld [vmem:[#allocation10 + $0x60] sm:$0xff]
    %v5868 = vld [vmem:[#allocation10 + $0x68] sm:$0xff]
    %v5869 = vld [vmem:[#allocation10 + $0x70] sm:$0xff]
    %v5870 = vld [vmem:[#allocation10 + $0x78] sm:$0xff]
    %5871 = vmatprep.subr.mxu0 0.0
    %5872 = vmatpush1.msra.mxu0 %v5870
    %5873 = vmatprep.subr.mxu0 0.0
    %5874 = vmatpush1.msra.mxu0 %v5869
    %5875 = vmatprep.subr.mxu0 0.0
    %5876 = vmatpush1.msra.mxu0 %v5868
    %5877 = vmatprep.subr.mxu0 0.0
    %5878 = vmatpush1.msra.mxu0 %v5867
    %5879 = vmatprep.subr.mxu0 0.0
    %5880 = vmatpush1.msra.mxu0 %v5866
    %5881 = vmatprep.subr.mxu0 0.0
    %5882 = vmatpush1.msra.mxu0 %v5865
    %5883 = vmatprep.subr.mxu0 0.0
    %5884 = vmatpush1.msra.mxu0 %v5864
    %5885 = vmatprep.subr.mxu0 0.0
    %5886 = vmatpush1.msra.mxu0 %v5863
    %5887 = vmatprep.subr.mxu0 0.0
    %5888 = vmatpush1.msra.mxu0 %v5862
    %5889 = vmatprep.subr.mxu0 0.0
    %5890 = vmatpush1.msra.mxu0 %v5861
    %5891 = vmatprep.subr.mxu0 0.0
    %5892 = vmatpush1.msra.mxu0 %v5860
    %5893 = vmatprep.subr.mxu0 0.0
    %5894 = vmatpush1.msra.mxu0 %v5859
    %5895 = vmatprep.subr.mxu0 0.0
    %5896 = vmatpush1.msra.mxu0 %v5858
    %5897 = vmatprep.subr.mxu0 0.0
    %5898 = vmatpush1.msra.mxu0 %v5857
    %5899 = vmatprep.subr.mxu0 0.0
    %5900 = vmatpush1.msra.mxu0 %v5856
    %5901 = vmatprep.subr.mxu0 0.0
    %5902 = vmatpush1.msra.mxu0 %v5855
    %5903 = vmatprep.subr.mxu0 0.0
    %5904 = vmatpush2.msra.mxu0 0.0
    %5905 = vmatprep.subr.mxu0 0.0
    %5906 = vmatpush2.msra.mxu0 0.0
    %5907 = vmatprep.subr.mxu0 0.0
    %5908 = vmatpush2.msra.mxu0 0.0
    %5909 = vmatprep.subr.mxu0 0.0
    %5910 = vmatpush2.msra.mxu0 0.0
    %5911 = vmatprep.subr.mxu0 0.0
    %5912 = vmatpush2.msra.mxu0 0.0
    %5913 = vmatprep.subr.mxu0 0.0
    %5914 = vmatpush2.msra.mxu0 0.0
    %5915 = vmatprep.subr.mxu0 0.0
    %5916 = vmatpush2.msra.mxu0 0.0
    %5917 = vmatprep.subr.mxu0 0.0
    %5918 = vmatpush2.msra.mxu0 0.0
    %5919 = vmatprep.subr.mxu0 0.0
    %5920 = vmatpush2.msra.mxu0 0.0
    %5921 = vmatprep.subr.mxu0 0.0
    %5922 = vmatpush2.msra.mxu0 0.0
    %5923 = vmatprep.subr.mxu0 0.0
    %5924 = vmatpush2.msra.mxu0 0.0
    %5925 = vmatprep.subr.mxu0 0.0
    %5926 = vmatpush2.msra.mxu0 0.0
    %5927 = vmatprep.subr.mxu0 0.0
    %5928 = vmatpush2.msra.mxu0 0.0
    %5929 = vmatprep.subr.mxu0 0.0
    %5930 = vmatpush2.msra.mxu0 0.0
    %5931 = vmatprep.subr.mxu0 0.0
    %5932 = vmatpush2.msra.mxu0 0.0
    %5933 = vmatprep.subr.mxu0 0.0
    %5934 = vmatpush2.msra.mxu0 0.0
    %5935 = vmatprep.mubr.f32.mxu0 0.0
    %5936 = vmatmul.mubr.f32.gmra.mxu0 %v5853
    %v5937 = vpop.f32.mrf.mxu0
    %v5938 = vadd.f32 0.0, %v5937
    %v5939 = vpop.f32.mrf.mxu0
    %5940 = vdwg.mxu0
    %v5941 = vadd.f32 %v5854, %v5938
    %5942 = vst [vmem:[%s849] sm:$0x3] %v5941
    %v5943 = vld [vmem:[#allocation2] sm:$0x3]
    %v5944 = vld [vmem:[#allocation8] sm:$0xff]
    %v5945 = vld [vmem:[#allocation8 + $0x8] sm:$0xff]
    %v5946 = vld [vmem:[#allocation8 + $0x10] sm:$0xff]
    %v5947 = vld [vmem:[#allocation8 + $0x18] sm:$0xff]
    %v5948 = vld [vmem:[#allocation8 + $0x20] sm:$0xff]
    %v5949 = vld [vmem:[#allocation8 + $0x28] sm:$0xff]
    %v5950 = vld [vmem:[#allocation8 + $0x30] sm:$0xff]
    %v5951 = vld [vmem:[#allocation8 + $0x38] sm:$0xff]
    %v5952 = vld [vmem:[#allocation8 + $0x40] sm:$0xff]
    %v5953 = vld [vmem:[#allocation8 + $0x48] sm:$0xff]
    %v5954 = vld [vmem:[#allocation8 + $0x50] sm:$0xff]
    %v5955 = vld [vmem:[#allocation8 + $0x58] sm:$0xff]
    %v5956 = vld [vmem:[#allocation8 + $0x60] sm:$0xff]
    %v5957 = vld [vmem:[#allocation8 + $0x68] sm:$0xff]
    %v5958 = vld [vmem:[#allocation8 + $0x70] sm:$0xff]
    %v5959 = vld [vmem:[#allocation8 + $0x78] sm:$0xff]
    %v5960 = vld [vmem:[#allocation8 + $0x80] sm:$0xff]
    %v5961 = vld [vmem:[#allocation8 + $0x88] sm:$0xff]
    %v5962 = vld [vmem:[#allocation8 + $0x90] sm:$0xff]
    %v5963 = vld [vmem:[#allocation8 + $0x98] sm:$0xff]
    %v5964 = vld [vmem:[#allocation8 + $0xa0] sm:$0xff]
    %v5965 = vld [vmem:[#allocation8 + $0xa8] sm:$0xff]
    %v5966 = vld [vmem:[#allocation8 + $0xb0] sm:$0xff]
    %v5967 = vld [vmem:[#allocation8 + $0xb8] sm:$0xff]
    %v5968 = vld [vmem:[#allocation8 + $0xc0] sm:$0xff]
    %v5969 = vld [vmem:[#allocation8 + $0xc8] sm:$0xff]
    %v5970 = vld [vmem:[#allocation8 + $0xd0] sm:$0xff]
    %v5971 = vld [vmem:[#allocation8 + $0xd8] sm:$0xff]
    %v5972 = vld [vmem:[#allocation8 + $0xe0] sm:$0xff]
    %v5973 = vld [vmem:[#allocation8 + $0xe8] sm:$0xff]
    %v5974 = vld [vmem:[#allocation8 + $0xf0] sm:$0xff]
    %v5975 = vld [vmem:[#allocation8 + $0xf8] sm:$0xff]
    %v5976 = vld [vmem:[#allocation8 + $0x100] sm:$0xff]
    %v5977 = vld [vmem:[#allocation8 + $0x108] sm:$0xff]
    %v5978 = vld [vmem:[#allocation8 + $0x110] sm:$0xff]
    %v5979 = vld [vmem:[#allocation8 + $0x118] sm:$0xff]
    %v5980 = vld [vmem:[#allocation8 + $0x120] sm:$0xff]
    %v5981 = vld [vmem:[#allocation8 + $0x128] sm:$0xff]
    %v5982 = vld [vmem:[#allocation8 + $0x130] sm:$0xff]
    %v5983 = vld [vmem:[#allocation8 + $0x138] sm:$0xff]
    %v5984 = vld [vmem:[#allocation8 + $0x140] sm:$0xff]
    %v5985 = vld [vmem:[#allocation8 + $0x148] sm:$0xff]
    %v5986 = vld [vmem:[#allocation8 + $0x150] sm:$0xff]
    %v5987 = vld [vmem:[#allocation8 + $0x158] sm:$0xff]
    %v5988 = vld [vmem:[#allocation8 + $0x160] sm:$0xff]
    %v5989 = vld [vmem:[#allocation8 + $0x168] sm:$0xff]
    %v5990 = vld [vmem:[#allocation8 + $0x170] sm:$0xff]
    %v5991 = vld [vmem:[#allocation8 + $0x178] sm:$0xff]
    %v5992 = vld [vmem:[#allocation8 + $0x180] sm:$0xff]
    %v5993 = vld [vmem:[#allocation8 + $0x188] sm:$0xff]
    %v5994 = vld [vmem:[#allocation8 + $0x190] sm:$0xff]
    %v5995 = vld [vmem:[#allocation8 + $0x198] sm:$0xff]
    %v5996 = vld [vmem:[#allocation8 + $0x1a0] sm:$0xff]
    %v5997 = vld [vmem:[#allocation8 + $0x1a8] sm:$0xff]
    %v5998 = vld [vmem:[#allocation8 + $0x1b0] sm:$0xff]
    %v5999 = vld [vmem:[#allocation8 + $0x1b8] sm:$0xff]
    %v6000 = vld [vmem:[#allocation8 + $0x1c0] sm:$0xff]
    %v6001 = vld [vmem:[#allocation8 + $0x1c8] sm:$0xff]
    %v6002 = vld [vmem:[#allocation8 + $0x1d0] sm:$0xff]
    %v6003 = vld [vmem:[#allocation8 + $0x1d8] sm:$0xff]
    %v6004 = vld [vmem:[#allocation8 + $0x1e0] sm:$0xff]
    %v6005 = vld [vmem:[#allocation8 + $0x1e8] sm:$0xff]
    %v6006 = vld [vmem:[#allocation8 + $0x1f0] sm:$0xff]
    %v6007 = vld [vmem:[#allocation8 + $0x1f8] sm:$0xff]
    %v6008 = vld [vmem:[#allocation8 + $0x200] sm:$0xff]
    %v6009 = vld [vmem:[#allocation8 + $0x208] sm:$0xff]
    %v6010 = vld [vmem:[#allocation8 + $0x210] sm:$0xff]
    %v6011 = vld [vmem:[#allocation8 + $0x218] sm:$0xff]
    %v6012 = vld [vmem:[#allocation8 + $0x220] sm:$0xff]
    %v6013 = vld [vmem:[#allocation8 + $0x228] sm:$0xff]
    %v6014 = vld [vmem:[#allocation8 + $0x230] sm:$0xff]
    %v6015 = vld [vmem:[#allocation8 + $0x238] sm:$0xff]
    %v6016 = vld [vmem:[#allocation8 + $0x240] sm:$0xff]
    %v6017 = vld [vmem:[#allocation8 + $0x248] sm:$0xff]
    %v6018 = vld [vmem:[#allocation8 + $0x250] sm:$0xff]
    %v6019 = vld [vmem:[#allocation8 + $0x258] sm:$0xff]
    %v6020 = vld [vmem:[#allocation8 + $0x260] sm:$0xff]
    %v6021 = vld [vmem:[#allocation8 + $0x268] sm:$0xff]
    %v6022 = vld [vmem:[#allocation8 + $0x270] sm:$0xff]
    %v6023 = vld [vmem:[#allocation8 + $0x278] sm:$0xff]
    %v6024 = vld [vmem:[#allocation8 + $0x280] sm:$0xff]
    %v6025 = vld [vmem:[#allocation8 + $0x288] sm:$0xff]
    %v6026 = vld [vmem:[#allocation8 + $0x290] sm:$0xff]
    %v6027 = vld [vmem:[#allocation8 + $0x298] sm:$0xff]
    %v6028 = vld [vmem:[#allocation8 + $0x2a0] sm:$0xff]
    %v6029 = vld [vmem:[#allocation8 + $0x2a8] sm:$0xff]
    %v6030 = vld [vmem:[#allocation8 + $0x2b0] sm:$0xff]
    %v6031 = vld [vmem:[#allocation8 + $0x2b8] sm:$0xff]
    %v6032 = vld [vmem:[#allocation8 + $0x2c0] sm:$0xff]
    %v6033 = vld [vmem:[#allocation8 + $0x2c8] sm:$0xff]
    %v6034 = vld [vmem:[#allocation8 + $0x2d0] sm:$0xff]
    %v6035 = vld [vmem:[#allocation8 + $0x2d8] sm:$0xff]
    %v6036 = vld [vmem:[#allocation8 + $0x2e0] sm:$0xff]
    %v6037 = vld [vmem:[#allocation8 + $0x2e8] sm:$0xff]
    %v6038 = vld [vmem:[#allocation8 + $0x2f0] sm:$0xff]
    %v6039 = vld [vmem:[#allocation8 + $0x2f8] sm:$0xff]
    %v6040 = vld [vmem:[#allocation8 + $0x300] sm:$0xff]
    %v6041 = vld [vmem:[#allocation8 + $0x308] sm:$0xff]
    %v6042 = vld [vmem:[#allocation8 + $0x310] sm:$0xff]
    %v6043 = vld [vmem:[#allocation8 + $0x318] sm:$0xff]
    %v6044 = vld [vmem:[#allocation8 + $0x320] sm:$0xff]
    %v6045 = vld [vmem:[#allocation8 + $0x328] sm:$0xff]
    %v6046 = vld [vmem:[#allocation8 + $0x330] sm:$0xff]
    %v6047 = vld [vmem:[#allocation8 + $0x338] sm:$0xff]
    %v6048 = vld [vmem:[#allocation8 + $0x340] sm:$0xff]
    %v6049 = vld [vmem:[#allocation8 + $0x348] sm:$0xff]
    %v6050 = vld [vmem:[#allocation8 + $0x350] sm:$0xff]
    %v6051 = vld [vmem:[#allocation8 + $0x358] sm:$0xff]
    %v6052 = vld [vmem:[#allocation8 + $0x360] sm:$0xff]
    %v6053 = vld [vmem:[#allocation8 + $0x368] sm:$0xff]
    %v6054 = vld [vmem:[#allocation8 + $0x370] sm:$0xff]
    %v6055 = vld [vmem:[#allocation8 + $0x378] sm:$0xff]
    %v6056 = vld [vmem:[#allocation8 + $0x380] sm:$0xff]
    %v6057 = vld [vmem:[#allocation8 + $0x388] sm:$0xff]
    %v6058 = vld [vmem:[#allocation8 + $0x390] sm:$0xff]
    %v6059 = vld [vmem:[#allocation8 + $0x398] sm:$0xff]
    %v6060 = vld [vmem:[#allocation8 + $0x3a0] sm:$0xff]
    %v6061 = vld [vmem:[#allocation8 + $0x3a8] sm:$0xff]
    %v6062 = vld [vmem:[#allocation8 + $0x3b0] sm:$0xff]
    %v6063 = vld [vmem:[#allocation8 + $0x3b8] sm:$0xff]
    %v6064 = vld [vmem:[#allocation8 + $0x3c0] sm:$0xff]
    %v6065 = vld [vmem:[#allocation8 + $0x3c8] sm:$0xff]
    %v6066 = vld [vmem:[#allocation8 + $0x3d0] sm:$0xff]
    %v6067 = vld [vmem:[#allocation8 + $0x3d8] sm:$0xff]
    %v6068 = vld [vmem:[#allocation8 + $0x3e0] sm:$0xff]
    %v6069 = vld [vmem:[#allocation8 + $0x3e8] sm:$0xff]
    %v6070 = vld [vmem:[#allocation8 + $0x3f0] sm:$0xff]
    %v6071 = vld [vmem:[#allocation8 + $0x3f8] sm:$0xff]
    %6072 = vmatprep.subr.mxu0 %v6005
    %6073 = vmatpush1.msra.mxu0 %v6004
    %6074 = vmatprep.subr.mxu0 %v6001
    %6075 = vmatpush1.msra.mxu0 %v6000
    %6076 = vmatprep.subr.mxu0 %v5997
    %6077 = vmatpush1.msra.mxu0 %v5996
    %6078 = vmatprep.subr.mxu0 %v5993
    %6079 = vmatpush1.msra.mxu0 %v5992
    %6080 = vmatprep.subr.mxu0 %v5989
    %6081 = vmatpush1.msra.mxu0 %v5988
    %6082 = vmatprep.subr.mxu0 %v5985
    %6083 = vmatpush1.msra.mxu0 %v5984
    %6084 = vmatprep.subr.mxu0 %v5981
    %6085 = vmatpush1.msra.mxu0 %v5980
    %6086 = vmatprep.subr.mxu0 %v5977
    %6087 = vmatpush1.msra.mxu0 %v5976
    %6088 = vmatprep.subr.mxu0 %v5973
    %6089 = vmatpush1.msra.mxu0 %v5972
    %6090 = vmatprep.subr.mxu0 %v5969
    %6091 = vmatpush1.msra.mxu0 %v5968
    %6092 = vmatprep.subr.mxu0 %v5965
    %6093 = vmatpush1.msra.mxu0 %v5964
    %6094 = vmatprep.subr.mxu0 %v5961
    %6095 = vmatpush1.msra.mxu0 %v5960
    %6096 = vmatprep.subr.mxu0 %v5957
    %6097 = vmatpush1.msra.mxu0 %v5956
    %6098 = vmatprep.subr.mxu0 %v5953
    %6099 = vmatpush1.msra.mxu0 %v5952
    %6100 = vmatprep.subr.mxu0 %v5949
    %6101 = vmatpush1.msra.mxu0 %v5948
    %6102 = vmatprep.subr.mxu0 %v5945
    %6103 = vmatpush1.msra.mxu0 %v5944
    %6104 = vmatprep.subr.mxu0 %v6069
    %6105 = vmatpush2.msra.mxu0 %v6068
    %6106 = vmatprep.subr.mxu0 %v6065
    %6107 = vmatpush2.msra.mxu0 %v6064
    %6108 = vmatprep.subr.mxu0 %v6061
    %6109 = vmatpush2.msra.mxu0 %v6060
    %6110 = vmatprep.subr.mxu0 %v6057
    %6111 = vmatpush2.msra.mxu0 %v6056
    %6112 = vmatprep.subr.mxu0 %v6053
    %6113 = vmatpush2.msra.mxu0 %v6052
    %6114 = vmatprep.subr.mxu0 %v6049
    %6115 = vmatpush2.msra.mxu0 %v6048
    %6116 = vmatprep.subr.mxu0 %v6045
    %6117 = vmatpush2.msra.mxu0 %v6044
    %6118 = vmatprep.subr.mxu0 %v6041
    %6119 = vmatpush2.msra.mxu0 %v6040
    %6120 = vmatprep.subr.mxu0 %v6037
    %6121 = vmatpush2.msra.mxu0 %v6036
    %6122 = vmatprep.subr.mxu0 %v6033
    %6123 = vmatpush2.msra.mxu0 %v6032
    %6124 = vmatprep.subr.mxu0 %v6029
    %6125 = vmatpush2.msra.mxu0 %v6028
    %6126 = vmatprep.subr.mxu0 %v6025
    %6127 = vmatpush2.msra.mxu0 %v6024
    %6128 = vmatprep.subr.mxu0 %v6021
    %6129 = vmatpush2.msra.mxu0 %v6020
    %6130 = vmatprep.subr.mxu0 %v6017
    %6131 = vmatpush2.msra.mxu0 %v6016
    %6132 = vmatprep.subr.mxu0 %v6013
    %6133 = vmatpush2.msra.mxu0 %v6012
    %6134 = vmatprep.subr.mxu0 %v6009
    %6135 = vmatpush2.msra.mxu0 %v6008
    %6136 = vmatprep.mubr.f32.mxu0 %v5469
    %6137 = vmatmul.mubr.f32.gmra.mxu0 %v5943
    %v6138 = vpop.f32.mrf.mxu0
    %v6139 = vadd.f32 %v137, %v6138
    %v6140 = vpop.f32.mrf.mxu0
    %v6141 = vadd.f32 %v141, %v6140
    %6142 = vdwg.mxu0
    %6143 = vmatprep.subr.mxu0 %v6007
    %6144 = vmatpush1.msra.mxu0 %v6006
    %6145 = vmatprep.subr.mxu0 %v6003
    %6146 = vmatpush1.msra.mxu0 %v6002
    %6147 = vmatprep.subr.mxu0 %v5999
    %6148 = vmatpush1.msra.mxu0 %v5998
    %6149 = vmatprep.subr.mxu0 %v5995
    %6150 = vmatpush1.msra.mxu0 %v5994
    %6151 = vmatprep.subr.mxu0 %v5991
    %6152 = vmatpush1.msra.mxu0 %v5990
    %6153 = vmatprep.subr.mxu0 %v5987
    %6154 = vmatpush1.msra.mxu0 %v5986
    %6155 = vmatprep.subr.mxu0 %v5983
    %6156 = vmatpush1.msra.mxu0 %v5982
    %6157 = vmatprep.subr.mxu0 %v5979
    %6158 = vmatpush1.msra.mxu0 %v5978
    %6159 = vmatprep.subr.mxu0 %v5975
    %6160 = vmatpush1.msra.mxu0 %v5974
    %6161 = vmatprep.subr.mxu0 %v5971
    %6162 = vmatpush1.msra.mxu0 %v5970
    %6163 = vmatprep.subr.mxu0 %v5967
    %6164 = vmatpush1.msra.mxu0 %v5966
    %6165 = vmatprep.subr.mxu0 %v5963
    %6166 = vmatpush1.msra.mxu0 %v5962
    %6167 = vmatprep.subr.mxu0 %v5959
    %6168 = vmatpush1.msra.mxu0 %v5958
    %6169 = vmatprep.subr.mxu0 %v5955
    %6170 = vmatpush1.msra.mxu0 %v5954
    %6171 = vmatprep.subr.mxu0 %v5951
    %6172 = vmatpush1.msra.mxu0 %v5950
    %6173 = vmatprep.subr.mxu0 %v5947
    %6174 = vmatpush1.msra.mxu0 %v5946
    %6175 = vmatprep.subr.mxu0 %v6071
    %6176 = vmatpush2.msra.mxu0 %v6070
    %6177 = vmatprep.subr.mxu0 %v6067
    %6178 = vmatpush2.msra.mxu0 %v6066
    %6179 = vmatprep.subr.mxu0 %v6063
    %6180 = vmatpush2.msra.mxu0 %v6062
    %6181 = vmatprep.subr.mxu0 %v6059
    %6182 = vmatpush2.msra.mxu0 %v6058
    %6183 = vmatprep.subr.mxu0 %v6055
    %6184 = vmatpush2.msra.mxu0 %v6054
    %6185 = vmatprep.subr.mxu0 %v6051
    %6186 = vmatpush2.msra.mxu0 %v6050
    %6187 = vmatprep.subr.mxu0 %v6047
    %6188 = vmatpush2.msra.mxu0 %v6046
    %6189 = vmatprep.subr.mxu0 %v6043
    %6190 = vmatpush2.msra.mxu0 %v6042
    %6191 = vmatprep.subr.mxu0 %v6039
    %6192 = vmatpush2.msra.mxu0 %v6038
    %6193 = vmatprep.subr.mxu0 %v6035
    %6194 = vmatpush2.msra.mxu0 %v6034
    %6195 = vmatprep.subr.mxu0 %v6031
    %6196 = vmatpush2.msra.mxu0 %v6030
    %6197 = vmatprep.subr.mxu0 %v6027
    %6198 = vmatpush2.msra.mxu0 %v6026
    %6199 = vmatprep.subr.mxu0 %v6023
    %6200 = vmatpush2.msra.mxu0 %v6022
    %6201 = vmatprep.subr.mxu0 %v6019
    %6202 = vmatpush2.msra.mxu0 %v6018
    %6203 = vmatprep.subr.mxu0 %v6015
    %6204 = vmatpush2.msra.mxu0 %v6014
    %6205 = vmatprep.subr.mxu0 %v6011
    %6206 = vmatpush2.msra.mxu0 %v6010
    %6207 = vmatprep.mubr.f32.mxu0 %v5469
    %6208 = vmatmul.mubr.f32.gmra.mxu0 %v5943
    %v6209 = vpop.f32.mrf.mxu0
    %v6210 = vadd.f32 %v145, %v6209
    %v6211 = vpop.f32.mrf.mxu0
    %v6212 = vadd.f32 %v149, %v6211
    %6213 = vdwg.mxu0
    %v6214 = vxor.u32 %v6139, 2147483648
    %v6215 = vmul.f32 %v6214, 1.442695
    %v6216 = vpow.pop %v6215
    %v6217 = vadd.f32 %v6216, 1.0
    %v6218 = vrcp.pop %v6217
    %v6219 = vmul.f32 1.0, %v6218
    %v6220 = vxor.u32 %v6141, 2147483648
    %v6221 = vmul.f32 %v6220, 1.442695
    %v6222 = vpow.pop %v6221
    %v6223 = vadd.f32 %v6222, 1.0
    %v6224 = vrcp.pop %v6223
    %v6225 = vmul.f32 1.0, %v6224
    %v6226 = vtanh.pop %v6210
    %v6227 = vxor.u32 %v6212, 2147483648
    %v6228 = vmul.f32 %v6227, 1.442695
    %v6229 = vpow.pop %v6228
    %v6230 = vadd.f32 %v6229, 1.0
    %v6231 = vrcp.pop %v6230
    %v6232 = vmul.f32 1.0, %v6231
    %v6233 = vmul.f32 %v6225, %v5467
    %v6234 = vmul.f32 %v6219, %v6226
    %v6235 = vadd.f32 %v6233, %v6234
    %v6236 = vtanh.pop %v6235
    %v6237 = vmul.f32 %v6232, %v6236
    %v6238 = vld [vmem:[#allocation13] sm:$0x3]
    %v6239 = vld [vmem:[#allocation11] sm:$0xff]
    %v6240 = vld [vmem:[#allocation11 + $0x8] sm:$0xff]
    %v6241 = vld [vmem:[#allocation11 + $0x10] sm:$0xff]
    %v6242 = vld [vmem:[#allocation11 + $0x18] sm:$0xff]
    %v6243 = vld [vmem:[#allocation11 + $0x20] sm:$0xff]
    %v6244 = vld [vmem:[#allocation11 + $0x28] sm:$0xff]
    %v6245 = vld [vmem:[#allocation11 + $0x30] sm:$0xff]
    %v6246 = vld [vmem:[#allocation11 + $0x38] sm:$0xff]
    %v6247 = vld [vmem:[#allocation11 + $0x40] sm:$0xff]
    %v6248 = vld [vmem:[#allocation11 + $0x48] sm:$0xff]
    %v6249 = vld [vmem:[#allocation11 + $0x50] sm:$0xff]
    %v6250 = vld [vmem:[#allocation11 + $0x58] sm:$0xff]
    %v6251 = vld [vmem:[#allocation11 + $0x60] sm:$0xff]
    %v6252 = vld [vmem:[#allocation11 + $0x68] sm:$0xff]
    %v6253 = vld [vmem:[#allocation11 + $0x70] sm:$0xff]
    %v6254 = vld [vmem:[#allocation11 + $0x78] sm:$0xff]
    %6255 = vmatprep.subr.mxu0 0.0
    %6256 = vmatpush1.msra.mxu0 %v6254
    %6257 = vmatprep.subr.mxu0 0.0
    %6258 = vmatpush1.msra.mxu0 %v6253
    %6259 = vmatprep.subr.mxu0 0.0
    %6260 = vmatpush1.msra.mxu0 %v6252
    %6261 = vmatprep.subr.mxu0 0.0
    %6262 = vmatpush1.msra.mxu0 %v6251
    %6263 = vmatprep.subr.mxu0 0.0
    %6264 = vmatpush1.msra.mxu0 %v6250
    %6265 = vmatprep.subr.mxu0 0.0
    %6266 = vmatpush1.msra.mxu0 %v6249
    %6267 = vmatprep.subr.mxu0 0.0
    %6268 = vmatpush1.msra.mxu0 %v6248
    %6269 = vmatprep.subr.mxu0 0.0
    %6270 = vmatpush1.msra.mxu0 %v6247
    %6271 = vmatprep.subr.mxu0 0.0
    %6272 = vmatpush1.msra.mxu0 %v6246
    %6273 = vmatprep.subr.mxu0 0.0
    %6274 = vmatpush1.msra.mxu0 %v6245
    %6275 = vmatprep.subr.mxu0 0.0
    %6276 = vmatpush1.msra.mxu0 %v6244
    %6277 = vmatprep.subr.mxu0 0.0
    %6278 = vmatpush1.msra.mxu0 %v6243
    %6279 = vmatprep.subr.mxu0 0.0
    %6280 = vmatpush1.msra.mxu0 %v6242
    %6281 = vmatprep.subr.mxu0 0.0
    %6282 = vmatpush1.msra.mxu0 %v6241
    %6283 = vmatprep.subr.mxu0 0.0
    %6284 = vmatpush1.msra.mxu0 %v6240
    %6285 = vmatprep.subr.mxu0 0.0
    %6286 = vmatpush1.msra.mxu0 %v6239
    %6287 = vmatprep.subr.mxu0 0.0
    %6288 = vmatpush2.msra.mxu0 0.0
    %6289 = vmatprep.subr.mxu0 0.0
    %6290 = vmatpush2.msra.mxu0 0.0
    %6291 = vmatprep.subr.mxu0 0.0
    %6292 = vmatpush2.msra.mxu0 0.0
    %6293 = vmatprep.subr.mxu0 0.0
    %6294 = vmatpush2.msra.mxu0 0.0
    %6295 = vmatprep.subr.mxu0 0.0
    %6296 = vmatpush2.msra.mxu0 0.0
    %6297 = vmatprep.subr.mxu0 0.0
    %6298 = vmatpush2.msra.mxu0 0.0
    %6299 = vmatprep.subr.mxu0 0.0
    %6300 = vmatpush2.msra.mxu0 0.0
    %6301 = vmatprep.subr.mxu0 0.0
    %6302 = vmatpush2.msra.mxu0 0.0
    %6303 = vmatprep.subr.mxu0 0.0
    %6304 = vmatpush2.msra.mxu0 0.0
    %6305 = vmatprep.subr.mxu0 0.0
    %6306 = vmatpush2.msra.mxu0 0.0
    %6307 = vmatprep.subr.mxu0 0.0
    %6308 = vmatpush2.msra.mxu0 0.0
    %6309 = vmatprep.subr.mxu0 0.0
    %6310 = vmatpush2.msra.mxu0 0.0
    %6311 = vmatprep.subr.mxu0 0.0
    %6312 = vmatpush2.msra.mxu0 0.0
    %6313 = vmatprep.subr.mxu0 0.0
    %6314 = vmatpush2.msra.mxu0 0.0
    %6315 = vmatprep.subr.mxu0 0.0
    %6316 = vmatpush2.msra.mxu0 0.0
    %6317 = vmatprep.subr.mxu0 0.0
    %6318 = vmatpush2.msra.mxu0 0.0
    %6319 = vmatprep.mubr.f32.mxu0 0.0
    %6320 = vmatmul.mubr.f32.gmra.mxu0 %v6237
    %v6321 = vpop.f32.mrf.mxu0
    %v6322 = vadd.f32 0.0, %v6321
    %v6323 = vpop.f32.mrf.mxu0
    %6324 = vdwg.mxu0
    %v6325 = vadd.f32 %v6238, %v6322
    %6326 = vst [vmem:[#allocation13] sm:$0x3] %v6325
    // Predicated region
    $region58: #{tpu_custom_call.1} parent=1 // pred_check
      _
    $region59: #{tpu_custom_call.1} parent=1 // pred_check_branch
      %6328 = sbr.rel (0) target = $region61
    $region60: #{tpu_custom_call.1} parent=1 // pred_region
      %s6330 = ssub.s32 256, 256
      %6331 = vsyncadd [#allocation4], %s6330
      %s6332 = sshll.u32 [#allocation13], 4
      %s6333 = int_to_ptr.vmem [resolvable:$true] %s6332
      %6338 = dma.vmem_to_hbm [thread:$0]  %s6333, 256, %s8, [#allocation4], 32, 32, 2
    $region61: #{tpu_custom_call.1} parent=1 // pred_fallthru
      _
    // Predicated region
    $region62: #{tpu_custom_call.1} parent=1 // pred_check
      _
    $region63: #{tpu_custom_call.1} parent=1 // pred_check_branch
      %6340 = sbr.rel (0) target = $region65
    $region64: #{tpu_custom_call.1} parent=1 // pred_region
      %6341 = dma.done [#allocation4], 256
    $region65: #{tpu_custom_call.1} parent=1 // pred_fallthru
      _
    %6342 = vsyncpa [#allocation3], 1
    %6343 = vsyncpa [#allocation6], 1
    %6344 = vsyncpa [#allocation9], 1
    %6345 = vsyncpa [#allocation12], 1
    %6346 = vsyncpa [#allocation4], 1

</llo_original>
